<compile_context>
chip_gen: v5e
topology: v5e:2x2
jax: 0.10.0
libtpu: 0.0.40
codegen_flags: <defaults>
</compile_context>

<pallas_src>
import numpy as np

import jax
import jax.numpy as jnp
from jax.experimental import pallas as pl
from jax.experimental.pallas import tpu as pltpu

# ----------------------------- model config (small) -------------------------
B        = 2      # batch
T_ENC    = 8      # encoder (text) length
VOCAB    = 40     # symbol vocabulary
EMB      = 32     # embedding / encoder dim
ENC_K    = 5      # encoder conv kernel
H_HALF   = 16     # BiLSTM hidden per direction (2*H_HALF == EMB)
N_MELS   = 16     # mel channels
PRENET   = 32     # prenet dim
ATTN_RNN = 32     # attention-RNN dim
DEC_RNN  = 32     # decoder-RNN dim
A_DIM    = 16     # attention dim
LOC_F    = 8      # location conv filters
LOC_K    = 5      # location conv kernel
N_DEC    = 6      # fixed number of decoder steps
POST_C   = 32     # postnet channels
POST_K   = 5      # postnet kernel


# ----------------------------- kernel helpers --------------------------------
def _sigmoid(x):
    # exact (review flagged approx reciprocal inside the recurrences)
    return 1.0 / (1.0 + jnp.exp(-x))


def _lstm_gates(g, c, h_dim):
    """Whole-gate-vector nonlinearities (one sigmoid + one tanh pass), then slice."""
    s = _sigmoid(g)
    t = jnp.tanh(g)
    c_new = s[:, h_dim:2 * h_dim] * c + s[:, 0:h_dim] * t[:, 2 * h_dim:3 * h_dim]
    h_new = s[:, 3 * h_dim:4 * h_dim] * jnp.tanh(c_new)
    return h_new, c_new


# ----------------------------- the fused kernel -------------------------------
def _taco_kernel(x_ref, mask_ref,
                 cw0_ref, cw1_ref, cw2_ref, enc_cb_ref,
                 w_bi_ref, b_bi_ref,
                 pm_op_ref, w_attpre_ref, v_op_ref,
                 pw1_ref, pw2_ref, pre_b_ref,
                 w_arnn_ref, w_drnn_ref, rnn_b_ref,
                 w_proj_ref, proj_b_ref,
                 post_w0_ref, post_w1_ref, post_w2_ref, post_w3_ref, post_w4_ref,
                 post_b_ref,
                 out_ref):
    """One batch row per grid program: encoder -> decoder -> postnet, all in VMEM."""
    f32 = jnp.float32
    H = H_HALF

    # ---------------- encoder: 3 convs (folded BN + ReLU) as dense operators ----
    x = x_ref[...]                                               # (1, T*EMB)
    for i, w_ref in enumerate((cw0_ref, cw1_ref, cw2_ref)):
        x = jnp.maximum(
            jnp.dot(x, w_ref[...], preferred_element_type=f32) + enc_cb_ref[i], 0.0)

    # ---------------- encoder BiLSTM: fwd+bwd cells fused into 1 matmul / step --
    # TODO(synk): runs over the padded length (no packed-sequence semantics).
    w_bi = w_bi_ref[...]                                         # (96, 128) block-diag
    b_bi = b_bi_ref[...]                                         # (1, 128)
    h_f = jnp.zeros((1, H), f32); c_f = jnp.zeros((1, H), f32)
    h_b = jnp.zeros((1, H), f32); c_b = jnp.zeros((1, H), f32)
    hs_f = [None] * T_ENC
    hs_b = [None] * T_ENC
    for s in range(T_ENC):
        tf = s
        tb = T_ENC - 1 - s
        xin = jnp.concatenate(
            [x[:, tf * EMB:(tf + 1) * EMB], h_f,
             x[:, tb * EMB:(tb + 1) * EMB], h_b], axis=1)        # (1, 96)
        g = jnp.dot(xin, w_bi, preferred_element_type=f32) + b_bi  # (1, 128)
        sg = _sigmoid(g)
        tg = jnp.tanh(g)
        # forward cell (gates i,f,g,o in cols 0:4H)
        c_f = sg[:, H:2 * H] * c_f + sg[:, 0:H] * tg[:, 2 * H:3 * H]
        h_f = sg[:, 3 * H:4 * H] * jnp.tanh(c_f)
        # backward cell (gates in cols 4H:8H)
        c_b = sg[:, 5 * H:6 * H] * c_b + sg[:, 4 * H:5 * H] * tg[:, 6 * H:7 * H]
        h_b = sg[:, 7 * H:8 * H] * jnp.tanh(c_b)
        hs_f[tf] = h_f
        hs_b[tb] = h_b

    # memory in lane-dense (1, T*EMB) layout: [h_fwd[t], h_bwd[t]] per time step
    pieces = []
    for t in range(T_ENC):
        pieces += [hs_f[t], hs_b[t]]
    mem = jnp.concatenate(pieces, axis=1)                        # (1, T*EMB)

    # ---------------- decoder (N_DEC unrolled steps) -----------------------------
    pm = jnp.dot(mem, pm_op_ref[...], preferred_element_type=f32)   # (1, T*A)
    mask = mask_ref[...]                                         # (1, T)
    w_attpre = w_attpre_ref[...]
    v_op = v_op_ref[...]
    w_arnn = w_arnn_ref[...]
    w_drnn = w_drnn_ref[...]
    w_proj = w_proj_ref[...]
    pw1 = pw1_ref[...]
    pw2 = pw2_ref[...]
    pre_b1 = pre_b_ref[0]
    pre_b2 = pre_b_ref[1]
    arnn_b = rnn_b_ref[0]
    drnn_b = rnn_b_ref[1]
    proj_b = proj_b_ref[...]

    ah = jnp.zeros((1, ATTN_RNN), f32); ac = jnp.zeros((1, ATTN_RNN), f32)
    dh = jnp.zeros((1, DEC_RNN), f32);  dc = jnp.zeros((1, DEC_RNN), f32)
    aw = jnp.zeros((1, T_ENC), f32)      # attention weights
    awcum = jnp.zeros((1, T_ENC), f32)   # cumulative attention weights
    ctx = jnp.zeros((1, EMB), f32)       # attention context
    prev = jnp.zeros((1, N_MELS), f32)   # previous mel frame (go-frame)
    mels = []

    for _step in range(N_DEC):
        # prenet
        # TODO(synk): reference prenet keeps dropout active at inference; disabled
        #             here for determinism.
        z = jnp.maximum(jnp.dot(prev, pw1, preferred_element_type=f32) + pre_b1, 0.0)
        z = jnp.maximum(jnp.dot(z, pw2, preferred_element_type=f32) + pre_b2, 0.0)

        # attention-RNN cell: single matmul on [prenet_out, ctx, h]
        g = jnp.dot(jnp.concatenate([z, ctx, ah], axis=1), w_arnn,
                    preferred_element_type=f32) + arnn_b
        ah, ac = _lstm_gates(g, ac, ATTN_RNN)

        # location-sensitive attention: single stacked pre-activation matmul
        pre = jnp.dot(jnp.concatenate([ah, aw, awcum], axis=1), w_attpre,
                      preferred_element_type=f32) + pm
        e = jnp.tanh(pre)                                        # (1, T*A)
        energies = jnp.dot(e, v_op, preferred_element_type=f32) + mask   # (1, T)
        m = jnp.max(energies, axis=-1, keepdims=True)
        pexp = jnp.exp(energies - m)
        w_att = pexp / jnp.sum(pexp, axis=-1, keepdims=True)
        aw = w_att
        awcum = awcum + w_att

        # attention context from lane slices of the flat memory (VPU MACs)
        ctx = w_att[:, 0:1] * mem[:, 0:EMB]
        for t in range(1, T_ENC):
            ctx = ctx + w_att[:, t:t + 1] * mem[:, t * EMB:(t + 1) * EMB]

        # decoder-RNN cell: single matmul on [ah, ctx, dh]
        g = jnp.dot(jnp.concatenate([ah, ctx, dh], axis=1), w_drnn,
                    preferred_element_type=f32) + drnn_b
        dh, dc = _lstm_gates(g, dc, DEC_RNN)

        # mel projection: single matmul on [dh, ctx]
        mel = jnp.dot(jnp.concatenate([dh, ctx], axis=1), w_proj,
                      preferred_element_type=f32) + proj_b
        mels.append(mel)
        prev = mel
        # TODO(synk): gate-based dynamic stopping of `infer` not implemented; decoder
        #             runs a fixed N_DEC steps and the gate head is dropped entirely.

    mel_flat = jnp.concatenate(mels, axis=1)                     # (1, N_DEC*N_MELS)

    # ---------------- postnet (5 convs as dense operators) + residual ------------
    chans = (N_MELS, POST_C, POST_C, POST_C, POST_C, N_MELS)
    y = mel_flat
    post_ws = (post_w0_ref, post_w1_ref, post_w2_ref, post_w3_ref, post_w4_ref)
    for l, w_ref in enumerate(post_ws):
        ncols = N_DEC * chans[l + 1]
        y = (jnp.dot(y, w_ref[...], preferred_element_type=f32)
             + post_b_ref[l][:, 0:ncols])
        if l < len(post_ws) - 1:
            y = jnp.tanh(y)

    out_ref[...] = mel_flat + y                                  # one wide store


# ----------------------------- pallas_call wrapper ----------------------------
def _full_spec(arr):
    zeros = (0,) * arr.ndim
    return pl.BlockSpec(arr.shape, lambda b, _z=zeros: _z)


def tacotron2_pallas(x_flat, mask_add, q):
    weights = [q["enc_cw0"], q["enc_cw1"], q["enc_cw2"], q["enc_cb"],
               q["w_bilstm"], q["b_bilstm"],
               q["pm_op"], q["w_attpre"], q["v_op"],
               q["prenet_w1"], q["prenet_w2"], q["prenet_b"],
               q["w_arnn"], q["w_drnn"], q["rnn_b"],
               q["w_proj"], q["proj_b"],
               q["post_w0"], q["post_w1"], q["post_w2"], q["post_w3"], q["post_w4"],
               q["post_b"]]
    in_specs = [pl.BlockSpec((None, 1, T_ENC * EMB), lambda b: (b, 0, 0)),
                pl.BlockSpec((None, 1, T_ENC), lambda b: (b, 0, 0))]
    in_specs += [_full_spec(w) for w in weights]
    out_specs = pl.BlockSpec((None, 1, N_DEC * N_MELS), lambda b: (b, 0, 0))
    return pl.pallas_call(
        _taco_kernel,
        grid=(B,),
        out_shape=jax.ShapeDtypeStruct((B, 1, N_DEC * N_MELS), jnp.float32),
        in_specs=in_specs,
        out_specs=out_specs,
        compiler_params=pltpu.CompilerParams(dimension_semantics=("parallel",)),
    )(x_flat, mask_add, *weights)


# ----------------------------- parameters ------------------------------------
def _fold_bn(w, b, gamma, beta, mean, var, eps=1e-5):
    scale = gamma / jnp.sqrt(var + eps)
    return w * scale[None, None, :], (b - mean) * scale + beta


def make_params(key):
    keys = iter(jax.random.split(key, 128))

    def nrm(shape, scale=0.1):
        return scale * jax.random.normal(next(keys), shape, dtype=jnp.float32)

    p = {}
    p["embedding"] = nrm((VOCAB, EMB), 0.3)

    # encoder: 3 x (conv + folded BN + ReLU)
    p["enc_convs"] = []
    for _ in range(3):
        w = nrm((ENC_K, EMB, EMB))
        b = nrm((EMB,))
        gamma = 1.0 + nrm((EMB,))
        beta = nrm((EMB,))
        mean = nrm((EMB,))
        var = 1.0 + jnp.abs(nrm((EMB,)))
        p["enc_convs"].append(_fold_bn(w, b, gamma, beta, mean, var))

    # encoder BiLSTM
    for d in ("f", "b"):
        p[f"enc_lstm_wih_{d}"] = nrm((EMB, 4 * H_HALF))
        p[f"enc_lstm_whh_{d}"] = nrm((H_HALF, 4 * H_HALF))
        p[f"enc_lstm_b_{d}"] = nrm((4 * H_HALF,))

    # location-sensitive attention
    p["query_w"] = nrm((ATTN_RNN, A_DIM))
    p["memory_w"] = nrm((EMB, A_DIM))
    p["v"] = nrm((A_DIM,))
    p["loc_conv_w"] = nrm((LOC_K, 2, LOC_F))
    p["loc_lin_w"] = nrm((LOC_F, A_DIM))

    # prenet
    p["prenet_w1"] = nrm((N_MELS, PRENET))
    p["prenet_b1"] = nrm((PRENET,))
    p["prenet_w2"] = nrm((PRENET, PRENET))
    p["prenet_b2"] = nrm((PRENET,))

    # attention RNN / decoder RNN
    p["attn_rnn_wih"] = nrm((PRENET + EMB, 4 * ATTN_RNN))
    p["attn_rnn_whh"] = nrm((ATTN_RNN, 4 * ATTN_RNN))
    p["attn_rnn_b"] = nrm((4 * ATTN_RNN,))
    p["dec_rnn_wih"] = nrm((ATTN_RNN + EMB, 4 * DEC_RNN))
    p["dec_rnn_whh"] = nrm((DEC_RNN, 4 * DEC_RNN))
    p["dec_rnn_b"] = nrm((4 * DEC_RNN,))

    # mel projection + gate (gate kept for parity with the torch module, unused)
    p["proj_w"] = nrm((DEC_RNN + EMB, N_MELS))
    p["proj_b"] = nrm((N_MELS,))
    p["gate_w"] = nrm((DEC_RNN + EMB, 1))
    p["gate_b"] = nrm((1,))

    # postnet: 5 x (conv + folded BN), tanh except last
    p["postnet_convs"] = []
    chans = [N_MELS, POST_C, POST_C, POST_C, POST_C, N_MELS]
    for i in range(5):
        cin, cout = chans[i], chans[i + 1]
        w = nrm((POST_K, cin, cout))
        b = nrm((cout,))
        gamma = 1.0 + nrm((cout,))
        beta = nrm((cout,))
        mean = nrm((cout,))
        var = 1.0 + jnp.abs(nrm((cout,)))
        p["postnet_convs"].append(_fold_bn(w, b, gamma, beta, mean, var))
    return p


# ----------------------- parameter prep (plain-JAX glue) ----------------------
def _tap_select(K, T):
    """sel[k, u, t] = 1 iff input position u feeds output position t through tap k."""
    pad = (K - 1) // 2
    sel = np.zeros((K, T, T), np.float32)
    for k in range(K):
        for t in range(T):
            u = t + k - pad
            if 0 <= u < T:
                sel[k, u, t] = 1.0
    return jnp.asarray(sel)


def _conv_as_dense(w, b, T):
    """Fold a 'same' 1-D conv (K, Cin, Cout) into a dense (T*Cin, T*Cout) operator."""
    K, cin, cout = w.shape
    sel = _tap_select(K, T)
    op = jnp.einsum("kut,kio->uito", sel, w).reshape(T * cin, T * cout)
    return op, jnp.tile(b, T).reshape(1, T * cout)


def prepare_params(p):
    """Pre-fold convs / attention projections and pre-stack the per-step weights."""
    q = {"embedding": p["embedding"]}

    # encoder convs (dense operators), biases stacked into one slab
    cw, cb = [], []
    for (w, b) in p["enc_convs"]:
        op, bt = _conv_as_dense(w, b, T_ENC)
        cw.append(op)
        cb.append(bt)
    q["enc_cw0"], q["enc_cw1"], q["enc_cw2"] = cw
    q["enc_cb"] = jnp.stack(cb)                                  # (3, 1, T*EMB)

    # BiLSTM: block-diagonal [wih_f;whh_f | wih_b;whh_b] merged weight (96, 128)
    w_bi = jnp.zeros((2 * (EMB + H_HALF), 8 * H_HALF), jnp.float32)
    w_bi = w_bi.at[0:EMB, 0:4 * H_HALF].set(p["enc_lstm_wih_f"])
    w_bi = w_bi.at[EMB:EMB + H_HALF, 0:4 * H_HALF].set(p["enc_lstm_whh_f"])
    w_bi = w_bi.at[EMB + H_HALF:2 * EMB + H_HALF, 4 * H_HALF:].set(p["enc_lstm_wih_b"])
    w_bi = w_bi.at[2 * EMB + H_HALF:, 4 * H_HALF:].set(p["enc_lstm_whh_b"])
    q["w_bilstm"] = w_bi
    q["b_bilstm"] = jnp.concatenate(
        [p["enc_lstm_b_f"], p["enc_lstm_b_b"]]).reshape(1, 8 * H_HALF)

    # attention operators in the flattened (1, T*A) layout
    q["pm_op"] = jnp.kron(jnp.eye(T_ENC, dtype=jnp.float32), p["memory_w"])  # (T*E,T*A)
    wq_tiled = jnp.tile(p["query_w"], (1, T_ENC))                            # (ATTN,T*A)
    sel = _tap_select(LOC_K, T_ENC)
    qmat = jnp.einsum("kcf,fa->kca", p["loc_conv_w"], p["loc_lin_w"])        # (K, 2, A)
    wloc = jnp.einsum("kut,kca->cuta", sel, qmat)                            # (2,T,T,A)
    q["w_attpre"] = jnp.concatenate(
        [wq_tiled,
         wloc[0].reshape(T_ENC, T_ENC * A_DIM),
         wloc[1].reshape(T_ENC, T_ENC * A_DIM)], axis=0)                     # (48, T*A)
    q["v_op"] = jnp.kron(jnp.eye(T_ENC, dtype=jnp.float32),
                         p["v"].reshape(A_DIM, 1))                           # (T*A, T)

    # prenet
    q["prenet_w1"] = p["prenet_w1"]
    q["prenet_w2"] = p["prenet_w2"]
    q["prenet_b"] = jnp.stack([p["prenet_b1"].reshape(1, PRENET),
                               p["prenet_b2"].reshape(1, PRENET)])           # (2,1,P)

    # attention RNN / decoder RNN: [wih; whh] stacked -> single matmul per cell
    q["w_arnn"] = jnp.concatenate([p["attn_rnn_wih"], p["attn_rnn_whh"]], axis=0)
    q["w_drnn"] = jnp.concatenate([p["dec_rnn_wih"], p["dec_rnn_whh"]], axis=0)
    q["rnn_b"] = jnp.stack([p["attn_rnn_b"].reshape(1, 4 * ATTN_RNN),
                            p["dec_rnn_b"].reshape(1, 4 * DEC_RNN)])         # (2,1,128)

    # mel projection ([dh, ctx] rows already in order)
    q["w_proj"] = p["proj_w"]
    q["proj_b"] = p["proj_b"].reshape(1, N_MELS)
    # TODO(synk): gate head (p["gate_w"], p["gate_b"]) intentionally dropped: its output
    #             was unused with the fixed-length decoder loop.

    # postnet (dense operators), biases zero-padded and stacked into one slab
    pw, pb = [], []
    for (w, b) in p["postnet_convs"]:
        op, bt = _conv_as_dense(w, b, N_DEC)
        pw.append(op)
        pb.append(bt)
    q["post_w0"], q["post_w1"], q["post_w2"], q["post_w3"], q["post_w4"] = pw
    max_c = N_DEC * POST_C
    pb_pad = [jnp.pad(x, ((0, 0), (0, max_c - x.shape[1]))) for x in pb]
    q["post_b"] = jnp.stack(pb_pad)                                          # (5,1,192)
    return q


# ----------------------------- model forward ---------------------------------
@jax.jit
def tacotron2_forward(params, tokens, lengths):
    """tokens: (B, T_enc) int32, lengths: (B,) int32 -> spec (B, n_mels, T_dec)."""
    # TODO(synk): torchaudio phoneme text processor has no Pallas equivalent; the
    #             kernel consumes pre-tokenized integer ids.
    emb = params["embedding"][tokens]                          # (B, T, EMB) gather
    x_flat = emb.reshape(B, 1, T_ENC * EMB)                    # lane-dense slab
    mask_add = jnp.where(jnp.arange(T_ENC)[None, :] < lengths[:, None],
                         0.0, -1e9).astype(jnp.float32).reshape(B, 1, T_ENC)
    spec_flat = tacotron2_pallas(x_flat, mask_add, params)     # (B, 1, N_DEC*N_MELS)
    spec = spec_flat.reshape(B, N_DEC, N_MELS)
    return jnp.transpose(spec, (0, 2, 1))                      # (B, n_mels, T_dec)


# ----------------------------- main ------------------------------------------
if __name__ == "__main__":
    key = jax.random.PRNGKey(0)
    pkey, tkey = jax.random.split(key)
    raw_params = make_params(pkey)
    params = prepare_params(raw_params)                        # one-time, outside jit
    tokens = jax.random.randint(tkey, (B, T_ENC), 0, VOCAB, dtype=jnp.int32)
    lengths = jnp.array([T_ENC, T_ENC - 2], dtype=jnp.int32)

    spec = tacotron2_forward(params, tokens, lengths)
    spec = jax.block_until_ready(spec)
    assert spec.shape == (B, N_MELS, N_DEC), spec.shape
    assert spec.dtype == jnp.float32
    assert bool(jnp.all(jnp.isfinite(spec)))
    print("KERNEL_OK")
</pallas_src>

<mosaic_0001>
module attributes {stable_mosaic.version = 11 : i64} {
  func.func @_taco_kernel(%arg0: i32, %arg1: memref<1x1x256xf32, #tpu.memory_space<vmem>>, %arg2: memref<1x1x8xf32, #tpu.memory_space<vmem>>, %arg3: memref<256x256xf32, #tpu.memory_space<vmem>>, %arg4: memref<256x256xf32, #tpu.memory_space<vmem>>, %arg5: memref<256x256xf32, #tpu.memory_space<vmem>>, %arg6: memref<3x1x256xf32, #tpu.memory_space<vmem>>, %arg7: memref<96x128xf32, #tpu.memory_space<vmem>>, %arg8: memref<1x128xf32, #tpu.memory_space<vmem>>, %arg9: memref<256x128xf32, #tpu.memory_space<vmem>>, %arg10: memref<48x128xf32, #tpu.memory_space<vmem>>, %arg11: memref<128x8xf32, #tpu.memory_space<vmem>>, %arg12: memref<16x32xf32, #tpu.memory_space<vmem>>, %arg13: memref<32x32xf32, #tpu.memory_space<vmem>>, %arg14: memref<2x1x32xf32, #tpu.memory_space<vmem>>, %arg15: memref<96x128xf32, #tpu.memory_space<vmem>>, %arg16: memref<96x128xf32, #tpu.memory_space<vmem>>, %arg17: memref<2x1x128xf32, #tpu.memory_space<vmem>>, %arg18: memref<64x16xf32, #tpu.memory_space<vmem>>, %arg19: memref<1x16xf32, #tpu.memory_space<vmem>>, %arg20: memref<96x192xf32, #tpu.memory_space<vmem>>, %arg21: memref<192x192xf32, #tpu.memory_space<vmem>>, %arg22: memref<192x192xf32, #tpu.memory_space<vmem>>, %arg23: memref<192x192xf32, #tpu.memory_space<vmem>>, %arg24: memref<192x96xf32, #tpu.memory_space<vmem>>, %arg25: memref<5x1x192xf32, #tpu.memory_space<vmem>>, %arg26: memref<1x1x96xf32, #tpu.memory_space<vmem>>) attributes {dimension_semantics = [#tpu.dimension_semantics<parallel>], iteration_bounds = array<i64: 2>, scalar_prefetch = 0 : i64, scratch_operands = 0 : i64, tpu.core_type = #tpu.core_type<tc>, window_params = [{transform_indices = @transform_0, window_bounds = array<i64: 1, 1, 256>}, {transform_indices = @transform_1, window_bounds = array<i64: 1, 1, 8>}, {pipeline_mode = #tpu.pipeline_mode<synchronous>, transform_indices = @transform_2, window_bounds = array<i64: 256, 256>}, {pipeline_mode = #tpu.pipeline_mode<synchronous>, transform_indices = @transform_3, window_bounds = array<i64: 256, 256>}, {pipeline_mode = #tpu.pipeline_mode<synchronous>, transform_indices = @transform_4, window_bounds = array<i64: 256, 256>}, {pipeline_mode = #tpu.pipeline_mode<synchronous>, transform_indices = @transform_5, window_bounds = array<i64: 3, 1, 256>}, {pipeline_mode = #tpu.pipeline_mode<synchronous>, transform_indices = @transform_6, window_bounds = array<i64: 96, 128>}, {pipeline_mode = #tpu.pipeline_mode<synchronous>, transform_indices = @transform_7, window_bounds = array<i64: 1, 128>}, {pipeline_mode = #tpu.pipeline_mode<synchronous>, transform_indices = @transform_8, window_bounds = array<i64: 256, 128>}, {pipeline_mode = #tpu.pipeline_mode<synchronous>, transform_indices = @transform_9, window_bounds = array<i64: 48, 128>}, {pipeline_mode = #tpu.pipeline_mode<synchronous>, transform_indices = @transform_10, window_bounds = array<i64: 128, 8>}, {pipeline_mode = #tpu.pipeline_mode<synchronous>, transform_indices = @transform_11, window_bounds = array<i64: 16, 32>}, {pipeline_mode = #tpu.pipeline_mode<synchronous>, transform_indices = @transform_12, window_bounds = array<i64: 32, 32>}, {pipeline_mode = #tpu.pipeline_mode<synchronous>, transform_indices = @transform_13, window_bounds = array<i64: 2, 1, 32>}, {pipeline_mode = #tpu.pipeline_mode<synchronous>, transform_indices = @transform_14, window_bounds = array<i64: 96, 128>}, {pipeline_mode = #tpu.pipeline_mode<synchronous>, transform_indices = @transform_15, window_bounds = array<i64: 96, 128>}, {pipeline_mode = #tpu.pipeline_mode<synchronous>, transform_indices = @transform_16, window_bounds = array<i64: 2, 1, 128>}, {pipeline_mode = #tpu.pipeline_mode<synchronous>, transform_indices = @transform_17, window_bounds = array<i64: 64, 16>}, {pipeline_mode = #tpu.pipeline_mode<synchronous>, transform_indices = @transform_18, window_bounds = array<i64: 1, 16>}, {pipeline_mode = #tpu.pipeline_mode<synchronous>, transform_indices = @transform_19, window_bounds = array<i64: 96, 192>}, {pipeline_mode = #tpu.pipeline_mode<synchronous>, transform_indices = @transform_20, window_bounds = array<i64: 192, 192>}, {pipeline_mode = #tpu.pipeline_mode<synchronous>, transform_indices = @transform_21, window_bounds = array<i64: 192, 192>}, {pipeline_mode = #tpu.pipeline_mode<synchronous>, transform_indices = @transform_22, window_bounds = array<i64: 192, 192>}, {pipeline_mode = #tpu.pipeline_mode<synchronous>, transform_indices = @transform_23, window_bounds = array<i64: 192, 96>}, {pipeline_mode = #tpu.pipeline_mode<synchronous>, transform_indices = @transform_24, window_bounds = array<i64: 5, 1, 192>}, {transform_indices = @transform_25, window_bounds = array<i64: 1, 1, 96>}]} {
    %c0 = arith.constant 0 : index
    %c0_0 = arith.constant 0 : index
    %c0_1 = arith.constant 0 : index
    %0 = vector.load %arg1[%c0, %c0_0, %c0_1] : memref<1x1x256xf32, #tpu.memory_space<vmem>>, vector<1x1x256xf32>
    %1 = vector.shape_cast %0 : vector<1x1x256xf32> to vector<1x256xf32>
    %c0_2 = arith.constant 0 : index
    %c0_3 = arith.constant 0 : index
    %2 = vector.load %arg3[%c0_2, %c0_3] : memref<256x256xf32, #tpu.memory_space<vmem>>, vector<256x256xf32>
    %cst = arith.constant dense<0.000000e+00> : vector<1x256xf32>
    %3 = tpu.matmul %1, %2, %cst {dimension_numbers = #tpu.dot_dimension_numbers<[1], [0], [0], [1], [0, 0, 1, 1], [], []>} : vector<1x256xf32>, vector<256x256xf32>, vector<1x256xf32> -> vector<1x256xf32>
    %c0_4 = arith.constant 0 : index
    %c0_5 = arith.constant 0 : index
    %c0_6 = arith.constant 0 : index
    %4 = vector.load %arg6[%c0_4, %c0_5, %c0_6] : memref<3x1x256xf32, #tpu.memory_space<vmem>>, vector<1x1x256xf32>
    %5 = vector.shape_cast %4 : vector<1x1x256xf32> to vector<1x256xf32>
    %6 = arith.addf %3, %5 : vector<1x256xf32>
    %cst_7 = arith.constant 0.000000e+00 : f32
    %7 = vector.broadcast %cst_7 : f32 to vector<1x256xf32>
    %8 = arith.maximumf %6, %7 : vector<1x256xf32>
    %c0_8 = arith.constant 0 : index
    %c0_9 = arith.constant 0 : index
    %9 = vector.load %arg4[%c0_8, %c0_9] : memref<256x256xf32, #tpu.memory_space<vmem>>, vector<256x256xf32>
    %cst_10 = arith.constant dense<0.000000e+00> : vector<1x256xf32>
    %10 = tpu.matmul %8, %9, %cst_10 {dimension_numbers = #tpu.dot_dimension_numbers<[1], [0], [0], [1], [0, 0, 1, 1], [], []>} : vector<1x256xf32>, vector<256x256xf32>, vector<1x256xf32> -> vector<1x256xf32>
    %c1 = arith.constant 1 : index
    %c0_11 = arith.constant 0 : index
    %c0_12 = arith.constant 0 : index
    %11 = vector.load %arg6[%c1, %c0_11, %c0_12] : memref<3x1x256xf32, #tpu.memory_space<vmem>>, vector<1x1x256xf32>
    %12 = vector.shape_cast %11 : vector<1x1x256xf32> to vector<1x256xf32>
    %13 = arith.addf %10, %12 : vector<1x256xf32>
    %cst_13 = arith.constant 0.000000e+00 : f32
    %14 = vector.broadcast %cst_13 : f32 to vector<1x256xf32>
    %15 = arith.maximumf %13, %14 : vector<1x256xf32>
    %c0_14 = arith.constant 0 : index
    %c0_15 = arith.constant 0 : index
    %16 = vector.load %arg5[%c0_14, %c0_15] : memref<256x256xf32, #tpu.memory_space<vmem>>, vector<256x256xf32>
    %cst_16 = arith.constant dense<0.000000e+00> : vector<1x256xf32>
    %17 = tpu.matmul %15, %16, %cst_16 {dimension_numbers = #tpu.dot_dimension_numbers<[1], [0], [0], [1], [0, 0, 1, 1], [], []>} : vector<1x256xf32>, vector<256x256xf32>, vector<1x256xf32> -> vector<1x256xf32>
    %c2 = arith.constant 2 : index
    %c0_17 = arith.constant 0 : index
    %c0_18 = arith.constant 0 : index
    %18 = vector.load %arg6[%c2, %c0_17, %c0_18] : memref<3x1x256xf32, #tpu.memory_space<vmem>>, vector<1x1x256xf32>
    %19 = vector.shape_cast %18 : vector<1x1x256xf32> to vector<1x256xf32>
    %20 = arith.addf %17, %19 : vector<1x256xf32>
    %cst_19 = arith.constant 0.000000e+00 : f32
    %21 = vector.broadcast %cst_19 : f32 to vector<1x256xf32>
    %22 = arith.maximumf %20, %21 : vector<1x256xf32>
    %c0_20 = arith.constant 0 : index
    %c0_21 = arith.constant 0 : index
    %23 = vector.load %arg7[%c0_20, %c0_21] : memref<96x128xf32, #tpu.memory_space<vmem>>, vector<96x128xf32>
    %c0_22 = arith.constant 0 : index
    %c0_23 = arith.constant 0 : index
    %24 = vector.load %arg8[%c0_22, %c0_23] : memref<1x128xf32, #tpu.memory_space<vmem>>, vector<1x128xf32>
    %cst_24 = arith.constant 0.000000e+00 : f32
    %25 = vector.broadcast %cst_24 : f32 to vector<1x16xf32>
    %cst_25 = arith.constant 0.000000e+00 : f32
    %26 = vector.broadcast %cst_25 : f32 to vector<1x16xf32>
    %cst_26 = arith.constant 0.000000e+00 : f32
    %27 = vector.broadcast %cst_26 : f32 to vector<1x16xf32>
    %cst_27 = arith.constant 0.000000e+00 : f32
    %28 = vector.broadcast %cst_27 : f32 to vector<1x16xf32>
    %29 = vector.extract_strided_slice %22 {offsets = [0, 0], sizes = [1, 32], strides = [1, 1]} : vector<1x256xf32> to vector<1x32xf32>
    %30 = vector.extract_strided_slice %22 {offsets = [0, 224], sizes = [1, 32], strides = [1, 1]} : vector<1x256xf32> to vector<1x32xf32>
    %31 = tpu.concatenate %29, %25, %30, %27 in 1 : vector<1x32xf32>, vector<1x16xf32>, vector<1x32xf32>, vector<1x16xf32> -> vector<1x96xf32>
    %cst_28 = arith.constant dense<0.000000e+00> : vector<1x128xf32>
    %32 = tpu.matmul %31, %23, %cst_28 {dimension_numbers = #tpu.dot_dimension_numbers<[1], [0], [0], [1], [0, 0, 1, 1], [], []>} : vector<1x96xf32>, vector<96x128xf32>, vector<1x128xf32> -> vector<1x128xf32>
    %33 = arith.addf %32, %24 : vector<1x128xf32>
    %cst_29 = arith.constant 0.000000e+00 : f32
    %34 = vector.broadcast %cst_29 : f32 to vector<1x128xf32>
    %35 = arith.subf %34, %33 : vector<1x128xf32>
    %36 = math.exp %35 : vector<1x128xf32>
    %cst_30 = arith.constant 1.000000e+00 : f32
    %37 = vector.broadcast %cst_30 : f32 to vector<1x128xf32>
    %38 = arith.addf %37, %36 : vector<1x128xf32>
    %cst_31 = arith.constant 1.000000e+00 : f32
    %39 = vector.broadcast %cst_31 : f32 to vector<1x128xf32>
    %40 = arith.divf %39, %38 : vector<1x128xf32>
    %41 = math.tanh %33 : vector<1x128xf32>
    %42 = vector.extract_strided_slice %40 {offsets = [0, 16], sizes = [1, 16], strides = [1, 1]} : vector<1x128xf32> to vector<1x16xf32>
    %43 = arith.mulf %42, %26 : vector<1x16xf32>
    %44 = vector.extract_strided_slice %40 {offsets = [0, 0], sizes = [1, 16], strides = [1, 1]} : vector<1x128xf32> to vector<1x16xf32>
    %45 = vector.extract_strided_slice %41 {offsets = [0, 32], sizes = [1, 16], strides = [1, 1]} : vector<1x128xf32> to vector<1x16xf32>
    %46 = arith.mulf %44, %45 : vector<1x16xf32>
    %47 = arith.addf %43, %46 : vector<1x16xf32>
    %48 = vector.extract_strided_slice %40 {offsets = [0, 48], sizes = [1, 16], strides = [1, 1]} : vector<1x128xf32> to vector<1x16xf32>
    %49 = math.tanh %47 : vector<1x16xf32>
    %50 = arith.mulf %48, %49 : vector<1x16xf32>
    %51 = vector.extract_strided_slice %40 {offsets = [0, 80], sizes = [1, 16], strides = [1, 1]} : vector<1x128xf32> to vector<1x16xf32>
    %52 = arith.mulf %51, %28 : vector<1x16xf32>
    %53 = vector.extract_strided_slice %40 {offsets = [0, 64], sizes = [1, 16], strides = [1, 1]} : vector<1x128xf32> to vector<1x16xf32>
    %54 = vector.extract_strided_slice %41 {offsets = [0, 96], sizes = [1, 16], strides = [1, 1]} : vector<1x128xf32> to vector<1x16xf32>
    %55 = arith.mulf %53, %54 : vector<1x16xf32>
    %56 = arith.addf %52, %55 : vector<1x16xf32>
    %57 = vector.extract_strided_slice %40 {offsets = [0, 112], sizes = [1, 16], strides = [1, 1]} : vector<1x128xf32> to vector<1x16xf32>
    %58 = math.tanh %56 : vector<1x16xf32>
    %59 = arith.mulf %57, %58 : vector<1x16xf32>
    %60 = vector.extract_strided_slice %22 {offsets = [0, 32], sizes = [1, 32], strides = [1, 1]} : vector<1x256xf32> to vector<1x32xf32>
    %61 = vector.extract_strided_slice %22 {offsets = [0, 192], sizes = [1, 32], strides = [1, 1]} : vector<1x256xf32> to vector<1x32xf32>
    %62 = tpu.concatenate %60, %50, %61, %59 in 1 : vector<1x32xf32>, vector<1x16xf32>, vector<1x32xf32>, vector<1x16xf32> -> vector<1x96xf32>
    %cst_32 = arith.constant dense<0.000000e+00> : vector<1x128xf32>
    %63 = tpu.matmul %62, %23, %cst_32 {dimension_numbers = #tpu.dot_dimension_numbers<[1], [0], [0], [1], [0, 0, 1, 1], [], []>} : vector<1x96xf32>, vector<96x128xf32>, vector<1x128xf32> -> vector<1x128xf32>
    %64 = arith.addf %63, %24 : vector<1x128xf32>
    %cst_33 = arith.constant 0.000000e+00 : f32
    %65 = vector.broadcast %cst_33 : f32 to vector<1x128xf32>
    %66 = arith.subf %65, %64 : vector<1x128xf32>
    %67 = math.exp %66 : vector<1x128xf32>
    %cst_34 = arith.constant 1.000000e+00 : f32
    %68 = vector.broadcast %cst_34 : f32 to vector<1x128xf32>
    %69 = arith.addf %68, %67 : vector<1x128xf32>
    %cst_35 = arith.constant 1.000000e+00 : f32
    %70 = vector.broadcast %cst_35 : f32 to vector<1x128xf32>
    %71 = arith.divf %70, %69 : vector<1x128xf32>
    %72 = math.tanh %64 : vector<1x128xf32>
    %73 = vector.extract_strided_slice %71 {offsets = [0, 16], sizes = [1, 16], strides = [1, 1]} : vector<1x128xf32> to vector<1x16xf32>
    %74 = arith.mulf %73, %47 : vector<1x16xf32>
    %75 = vector.extract_strided_slice %71 {offsets = [0, 0], sizes = [1, 16], strides = [1, 1]} : vector<1x128xf32> to vector<1x16xf32>
    %76 = vector.extract_strided_slice %72 {offsets = [0, 32], sizes = [1, 16], strides = [1, 1]} : vector<1x128xf32> to vector<1x16xf32>
    %77 = arith.mulf %75, %76 : vector<1x16xf32>
    %78 = arith.addf %74, %77 : vector<1x16xf32>
    %79 = vector.extract_strided_slice %71 {offsets = [0, 48], sizes = [1, 16], strides = [1, 1]} : vector<1x128xf32> to vector<1x16xf32>
    %80 = math.tanh %78 : vector<1x16xf32>
    %81 = arith.mulf %79, %80 : vector<1x16xf32>
    %82 = vector.extract_strided_slice %71 {offsets = [0, 80], sizes = [1, 16], strides = [1, 1]} : vector<1x128xf32> to vector<1x16xf32>
    %83 = arith.mulf %82, %56 : vector<1x16xf32>
    %84 = vector.extract_strided_slice %71 {offsets = [0, 64], sizes = [1, 16], strides = [1, 1]} : vector<1x128xf32> to vector<1x16xf32>
    %85 = vector.extract_strided_slice %72 {offsets = [0, 96], sizes = [1, 16], strides = [1, 1]} : vector<1x128xf32> to vector<1x16xf32>
    %86 = arith.mulf %84, %85 : vector<1x16xf32>
    %87 = arith.addf %83, %86 : vector<1x16xf32>
    %88 = vector.extract_strided_slice %71 {offsets = [0, 112], sizes = [1, 16], strides = [1, 1]} : vector<1x128xf32> to vector<1x16xf32>
    %89 = math.tanh %87 : vector<1x16xf32>
    %90 = arith.mulf %88, %89 : vector<1x16xf32>
    %91 = vector.extract_strided_slice %22 {offsets = [0, 64], sizes = [1, 32], strides = [1, 1]} : vector<1x256xf32> to vector<1x32xf32>
    %92 = vector.extract_strided_slice %22 {offsets = [0, 160], sizes = [1, 32], strides = [1, 1]} : vector<1x256xf32> to vector<1x32xf32>
    %93 = tpu.concatenate %91, %81, %92, %90 in 1 : vector<1x32xf32>, vector<1x16xf32>, vector<1x32xf32>, vector<1x16xf32> -> vector<1x96xf32>
    %cst_36 = arith.constant dense<0.000000e+00> : vector<1x128xf32>
    %94 = tpu.matmul %93, %23, %cst_36 {dimension_numbers = #tpu.dot_dimension_numbers<[1], [0], [0], [1], [0, 0, 1, 1], [], []>} : vector<1x96xf32>, vector<96x128xf32>, vector<1x128xf32> -> vector<1x128xf32>
    %95 = arith.addf %94, %24 : vector<1x128xf32>
    %cst_37 = arith.constant 0.000000e+00 : f32
    %96 = vector.broadcast %cst_37 : f32 to vector<1x128xf32>
    %97 = arith.subf %96, %95 : vector<1x128xf32>
    %98 = math.exp %97 : vector<1x128xf32>
    %cst_38 = arith.constant 1.000000e+00 : f32
    %99 = vector.broadcast %cst_38 : f32 to vector<1x128xf32>
    %100 = arith.addf %99, %98 : vector<1x128xf32>
    %cst_39 = arith.constant 1.000000e+00 : f32
    %101 = vector.broadcast %cst_39 : f32 to vector<1x128xf32>
    %102 = arith.divf %101, %100 : vector<1x128xf32>
    %103 = math.tanh %95 : vector<1x128xf32>
    %104 = vector.extract_strided_slice %102 {offsets = [0, 16], sizes = [1, 16], strides = [1, 1]} : vector<1x128xf32> to vector<1x16xf32>
    %105 = arith.mulf %104, %78 : vector<1x16xf32>
    %106 = vector.extract_strided_slice %102 {offsets = [0, 0], sizes = [1, 16], strides = [1, 1]} : vector<1x128xf32> to vector<1x16xf32>
    %107 = vector.extract_strided_slice %103 {offsets = [0, 32], sizes = [1, 16], strides = [1, 1]} : vector<1x128xf32> to vector<1x16xf32>
    %108 = arith.mulf %106, %107 : vector<1x16xf32>
    %109 = arith.addf %105, %108 : vector<1x16xf32>
    %110 = vector.extract_strided_slice %102 {offsets = [0, 48], sizes = [1, 16], strides = [1, 1]} : vector<1x128xf32> to vector<1x16xf32>
    %111 = math.tanh %109 : vector<1x16xf32>
    %112 = arith.mulf %110, %111 : vector<1x16xf32>
    %113 = vector.extract_strided_slice %102 {offsets = [0, 80], sizes = [1, 16], strides = [1, 1]} : vector<1x128xf32> to vector<1x16xf32>
    %114 = arith.mulf %113, %87 : vector<1x16xf32>
    %115 = vector.extract_strided_slice %102 {offsets = [0, 64], sizes = [1, 16], strides = [1, 1]} : vector<1x128xf32> to vector<1x16xf32>
    %116 = vector.extract_strided_slice %103 {offsets = [0, 96], sizes = [1, 16], strides = [1, 1]} : vector<1x128xf32> to vector<1x16xf32>
    %117 = arith.mulf %115, %116 : vector<1x16xf32>
    %118 = arith.addf %114, %117 : vector<1x16xf32>
    %119 = vector.extract_strided_slice %102 {offsets = [0, 112], sizes = [1, 16], strides = [1, 1]} : vector<1x128xf32> to vector<1x16xf32>
    %120 = math.tanh %118 : vector<1x16xf32>
    %121 = arith.mulf %119, %120 : vector<1x16xf32>
    %122 = vector.extract_strided_slice %22 {offsets = [0, 96], sizes = [1, 32], strides = [1, 1]} : vector<1x256xf32> to vector<1x32xf32>
    %123 = vector.extract_strided_slice %22 {offsets = [0, 128], sizes = [1, 32], strides = [1, 1]} : vector<1x256xf32> to vector<1x32xf32>
    %124 = tpu.concatenate %122, %112, %123, %121 in 1 : vector<1x32xf32>, vector<1x16xf32>, vector<1x32xf32>, vector<1x16xf32> -> vector<1x96xf32>
    %cst_40 = arith.constant dense<0.000000e+00> : vector<1x128xf32>
    %125 = tpu.matmul %124, %23, %cst_40 {dimension_numbers = #tpu.dot_dimension_numbers<[1], [0], [0], [1], [0, 0, 1, 1], [], []>} : vector<1x96xf32>, vector<96x128xf32>, vector<1x128xf32> -> vector<1x128xf32>
    %126 = arith.addf %125, %24 : vector<1x128xf32>
    %cst_41 = arith.constant 0.000000e+00 : f32
    %127 = vector.broadcast %cst_41 : f32 to vector<1x128xf32>
    %128 = arith.subf %127, %126 : vector<1x128xf32>
    %129 = math.exp %128 : vector<1x128xf32>
    %cst_42 = arith.constant 1.000000e+00 : f32
    %130 = vector.broadcast %cst_42 : f32 to vector<1x128xf32>
    %131 = arith.addf %130, %129 : vector<1x128xf32>
    %cst_43 = arith.constant 1.000000e+00 : f32
    %132 = vector.broadcast %cst_43 : f32 to vector<1x128xf32>
    %133 = arith.divf %132, %131 : vector<1x128xf32>
    %134 = math.tanh %126 : vector<1x128xf32>
    %135 = vector.extract_strided_slice %133 {offsets = [0, 16], sizes = [1, 16], strides = [1, 1]} : vector<1x128xf32> to vector<1x16xf32>
    %136 = arith.mulf %135, %109 : vector<1x16xf32>
    %137 = vector.extract_strided_slice %133 {offsets = [0, 0], sizes = [1, 16], strides = [1, 1]} : vector<1x128xf32> to vector<1x16xf32>
    %138 = vector.extract_strided_slice %134 {offsets = [0, 32], sizes = [1, 16], strides = [1, 1]} : vector<1x128xf32> to vector<1x16xf32>
    %139 = arith.mulf %137, %138 : vector<1x16xf32>
    %140 = arith.addf %136, %139 : vector<1x16xf32>
    %141 = vector.extract_strided_slice %133 {offsets = [0, 48], sizes = [1, 16], strides = [1, 1]} : vector<1x128xf32> to vector<1x16xf32>
    %142 = math.tanh %140 : vector<1x16xf32>
    %143 = arith.mulf %141, %142 : vector<1x16xf32>
    %144 = vector.extract_strided_slice %133 {offsets = [0, 80], sizes = [1, 16], strides = [1, 1]} : vector<1x128xf32> to vector<1x16xf32>
    %145 = arith.mulf %144, %118 : vector<1x16xf32>
    %146 = vector.extract_strided_slice %133 {offsets = [0, 64], sizes = [1, 16], strides = [1, 1]} : vector<1x128xf32> to vector<1x16xf32>
    %147 = vector.extract_strided_slice %134 {offsets = [0, 96], sizes = [1, 16], strides = [1, 1]} : vector<1x128xf32> to vector<1x16xf32>
    %148 = arith.mulf %146, %147 : vector<1x16xf32>
    %149 = arith.addf %145, %148 : vector<1x16xf32>
    %150 = vector.extract_strided_slice %133 {offsets = [0, 112], sizes = [1, 16], strides = [1, 1]} : vector<1x128xf32> to vector<1x16xf32>
    %151 = math.tanh %149 : vector<1x16xf32>
    %152 = arith.mulf %150, %151 : vector<1x16xf32>
    %153 = vector.extract_strided_slice %22 {offsets = [0, 128], sizes = [1, 32], strides = [1, 1]} : vector<1x256xf32> to vector<1x32xf32>
    %154 = vector.extract_strided_slice %22 {offsets = [0, 96], sizes = [1, 32], strides = [1, 1]} : vector<1x256xf32> to vector<1x32xf32>
    %155 = tpu.concatenate %153, %143, %154, %152 in 1 : vector<1x32xf32>, vector<1x16xf32>, vector<1x32xf32>, vector<1x16xf32> -> vector<1x96xf32>
    %cst_44 = arith.constant dense<0.000000e+00> : vector<1x128xf32>
    %156 = tpu.matmul %155, %23, %cst_44 {dimension_numbers = #tpu.dot_dimension_numbers<[1], [0], [0], [1], [0, 0, 1, 1], [], []>} : vector<1x96xf32>, vector<96x128xf32>, vector<1x128xf32> -> vector<1x128xf32>
    %157 = arith.addf %156, %24 : vector<1x128xf32>
    %cst_45 = arith.constant 0.000000e+00 : f32
    %158 = vector.broadcast %cst_45 : f32 to vector<1x128xf32>
    %159 = arith.subf %158, %157 : vector<1x128xf32>
    %160 = math.exp %159 : vector<1x128xf32>
    %cst_46 = arith.constant 1.000000e+00 : f32
    %161 = vector.broadcast %cst_46 : f32 to vector<1x128xf32>
    %162 = arith.addf %161, %160 : vector<1x128xf32>
    %cst_47 = arith.constant 1.000000e+00 : f32
    %163 = vector.broadcast %cst_47 : f32 to vector<1x128xf32>
    %164 = arith.divf %163, %162 : vector<1x128xf32>
    %165 = math.tanh %157 : vector<1x128xf32>
    %166 = vector.extract_strided_slice %164 {offsets = [0, 16], sizes = [1, 16], strides = [1, 1]} : vector<1x128xf32> to vector<1x16xf32>
    %167 = arith.mulf %166, %140 : vector<1x16xf32>
    %168 = vector.extract_strided_slice %164 {offsets = [0, 0], sizes = [1, 16], strides = [1, 1]} : vector<1x128xf32> to vector<1x16xf32>
    %169 = vector.extract_strided_slice %165 {offsets = [0, 32], sizes = [1, 16], strides = [1, 1]} : vector<1x128xf32> to vector<1x16xf32>
    %170 = arith.mulf %168, %169 : vector<1x16xf32>
    %171 = arith.addf %167, %170 : vector<1x16xf32>
    %172 = vector.extract_strided_slice %164 {offsets = [0, 48], sizes = [1, 16], strides = [1, 1]} : vector<1x128xf32> to vector<1x16xf32>
    %173 = math.tanh %171 : vector<1x16xf32>
    %174 = arith.mulf %172, %173 : vector<1x16xf32>
    %175 = vector.extract_strided_slice %164 {offsets = [0, 80], sizes = [1, 16], strides = [1, 1]} : vector<1x128xf32> to vector<1x16xf32>
    %176 = arith.mulf %175, %149 : vector<1x16xf32>
    %177 = vector.extract_strided_slice %164 {offsets = [0, 64], sizes = [1, 16], strides = [1, 1]} : vector<1x128xf32> to vector<1x16xf32>
    %178 = vector.extract_strided_slice %165 {offsets = [0, 96], sizes = [1, 16], strides = [1, 1]} : vector<1x128xf32> to vector<1x16xf32>
    %179 = arith.mulf %177, %178 : vector<1x16xf32>
    %180 = arith.addf %176, %179 : vector<1x16xf32>
    %181 = vector.extract_strided_slice %164 {offsets = [0, 112], sizes = [1, 16], strides = [1, 1]} : vector<1x128xf32> to vector<1x16xf32>
    %182 = math.tanh %180 : vector<1x16xf32>
    %183 = arith.mulf %181, %182 : vector<1x16xf32>
    %184 = vector.extract_strided_slice %22 {offsets = [0, 160], sizes = [1, 32], strides = [1, 1]} : vector<1x256xf32> to vector<1x32xf32>
    %185 = vector.extract_strided_slice %22 {offsets = [0, 64], sizes = [1, 32], strides = [1, 1]} : vector<1x256xf32> to vector<1x32xf32>
    %186 = tpu.concatenate %184, %174, %185, %183 in 1 : vector<1x32xf32>, vector<1x16xf32>, vector<1x32xf32>, vector<1x16xf32> -> vector<1x96xf32>
    %cst_48 = arith.constant dense<0.000000e+00> : vector<1x128xf32>
    %187 = tpu.matmul %186, %23, %cst_48 {dimension_numbers = #tpu.dot_dimension_numbers<[1], [0], [0], [1], [0, 0, 1, 1], [], []>} : vector<1x96xf32>, vector<96x128xf32>, vector<1x128xf32> -> vector<1x128xf32>
    %188 = arith.addf %187, %24 : vector<1x128xf32>
    %cst_49 = arith.constant 0.000000e+00 : f32
    %189 = vector.broadcast %cst_49 : f32 to vector<1x128xf32>
    %190 = arith.subf %189, %188 : vector<1x128xf32>
    %191 = math.exp %190 : vector<1x128xf32>
    %cst_50 = arith.constant 1.000000e+00 : f32
    %192 = vector.broadcast %cst_50 : f32 to vector<1x128xf32>
    %193 = arith.addf %192, %191 : vector<1x128xf32>
    %cst_51 = arith.constant 1.000000e+00 : f32
    %194 = vector.broadcast %cst_51 : f32 to vector<1x128xf32>
    %195 = arith.divf %194, %193 : vector<1x128xf32>
    %196 = math.tanh %188 : vector<1x128xf32>
    %197 = vector.extract_strided_slice %195 {offsets = [0, 16], sizes = [1, 16], strides = [1, 1]} : vector<1x128xf32> to vector<1x16xf32>
    %198 = arith.mulf %197, %171 : vector<1x16xf32>
    %199 = vector.extract_strided_slice %195 {offsets = [0, 0], sizes = [1, 16], strides = [1, 1]} : vector<1x128xf32> to vector<1x16xf32>
    %200 = vector.extract_strided_slice %196 {offsets = [0, 32], sizes = [1, 16], strides = [1, 1]} : vector<1x128xf32> to vector<1x16xf32>
    %201 = arith.mulf %199, %200 : vector<1x16xf32>
    %202 = arith.addf %198, %201 : vector<1x16xf32>
    %203 = vector.extract_strided_slice %195 {offsets = [0, 48], sizes = [1, 16], strides = [1, 1]} : vector<1x128xf32> to vector<1x16xf32>
    %204 = math.tanh %202 : vector<1x16xf32>
    %205 = arith.mulf %203, %204 : vector<1x16xf32>
    %206 = vector.extract_strided_slice %195 {offsets = [0, 80], sizes = [1, 16], strides = [1, 1]} : vector<1x128xf32> to vector<1x16xf32>
    %207 = arith.mulf %206, %180 : vector<1x16xf32>
    %208 = vector.extract_strided_slice %195 {offsets = [0, 64], sizes = [1, 16], strides = [1, 1]} : vector<1x128xf32> to vector<1x16xf32>
    %209 = vector.extract_strided_slice %196 {offsets = [0, 96], sizes = [1, 16], strides = [1, 1]} : vector<1x128xf32> to vector<1x16xf32>
    %210 = arith.mulf %208, %209 : vector<1x16xf32>
    %211 = arith.addf %207, %210 : vector<1x16xf32>
    %212 = vector.extract_strided_slice %195 {offsets = [0, 112], sizes = [1, 16], strides = [1, 1]} : vector<1x128xf32> to vector<1x16xf32>
    %213 = math.tanh %211 : vector<1x16xf32>
    %214 = arith.mulf %212, %213 : vector<1x16xf32>
    %215 = vector.extract_strided_slice %22 {offsets = [0, 192], sizes = [1, 32], strides = [1, 1]} : vector<1x256xf32> to vector<1x32xf32>
    %216 = vector.extract_strided_slice %22 {offsets = [0, 32], sizes = [1, 32], strides = [1, 1]} : vector<1x256xf32> to vector<1x32xf32>
    %217 = tpu.concatenate %215, %205, %216, %214 in 1 : vector<1x32xf32>, vector<1x16xf32>, vector<1x32xf32>, vector<1x16xf32> -> vector<1x96xf32>
    %cst_52 = arith.constant dense<0.000000e+00> : vector<1x128xf32>
    %218 = tpu.matmul %217, %23, %cst_52 {dimension_numbers = #tpu.dot_dimension_numbers<[1], [0], [0], [1], [0, 0, 1, 1], [], []>} : vector<1x96xf32>, vector<96x128xf32>, vector<1x128xf32> -> vector<1x128xf32>
    %219 = arith.addf %218, %24 : vector<1x128xf32>
    %cst_53 = arith.constant 0.000000e+00 : f32
    %220 = vector.broadcast %cst_53 : f32 to vector<1x128xf32>
    %221 = arith.subf %220, %219 : vector<1x128xf32>
    %222 = math.exp %221 : vector<1x128xf32>
    %cst_54 = arith.constant 1.000000e+00 : f32
    %223 = vector.broadcast %cst_54 : f32 to vector<1x128xf32>
    %224 = arith.addf %223, %222 : vector<1x128xf32>
    %cst_55 = arith.constant 1.000000e+00 : f32
    %225 = vector.broadcast %cst_55 : f32 to vector<1x128xf32>
    %226 = arith.divf %225, %224 : vector<1x128xf32>
    %227 = math.tanh %219 : vector<1x128xf32>
    %228 = vector.extract_strided_slice %226 {offsets = [0, 16], sizes = [1, 16], strides = [1, 1]} : vector<1x128xf32> to vector<1x16xf32>
    %229 = arith.mulf %228, %202 : vector<1x16xf32>
    %230 = vector.extract_strided_slice %226 {offsets = [0, 0], sizes = [1, 16], strides = [1, 1]} : vector<1x128xf32> to vector<1x16xf32>
    %231 = vector.extract_strided_slice %227 {offsets = [0, 32], sizes = [1, 16], strides = [1, 1]} : vector<1x128xf32> to vector<1x16xf32>
    %232 = arith.mulf %230, %231 : vector<1x16xf32>
    %233 = arith.addf %229, %232 : vector<1x16xf32>
    %234 = vector.extract_strided_slice %226 {offsets = [0, 48], sizes = [1, 16], strides = [1, 1]} : vector<1x128xf32> to vector<1x16xf32>
    %235 = math.tanh %233 : vector<1x16xf32>
    %236 = arith.mulf %234, %235 : vector<1x16xf32>
    %237 = vector.extract_strided_slice %226 {offsets = [0, 80], sizes = [1, 16], strides = [1, 1]} : vector<1x128xf32> to vector<1x16xf32>
    %238 = arith.mulf %237, %211 : vector<1x16xf32>
    %239 = vector.extract_strided_slice %226 {offsets = [0, 64], sizes = [1, 16], strides = [1, 1]} : vector<1x128xf32> to vector<1x16xf32>
    %240 = vector.extract_strided_slice %227 {offsets = [0, 96], sizes = [1, 16], strides = [1, 1]} : vector<1x128xf32> to vector<1x16xf32>
    %241 = arith.mulf %239, %240 : vector<1x16xf32>
    %242 = arith.addf %238, %241 : vector<1x16xf32>
    %243 = vector.extract_strided_slice %226 {offsets = [0, 112], sizes = [1, 16], strides = [1, 1]} : vector<1x128xf32> to vector<1x16xf32>
    %244 = math.tanh %242 : vector<1x16xf32>
    %245 = arith.mulf %243, %244 : vector<1x16xf32>
    %246 = vector.extract_strided_slice %22 {offsets = [0, 224], sizes = [1, 32], strides = [1, 1]} : vector<1x256xf32> to vector<1x32xf32>
    %247 = vector.extract_strided_slice %22 {offsets = [0, 0], sizes = [1, 32], strides = [1, 1]} : vector<1x256xf32> to vector<1x32xf32>
    %248 = tpu.concatenate %246, %236, %247, %245 in 1 : vector<1x32xf32>, vector<1x16xf32>, vector<1x32xf32>, vector<1x16xf32> -> vector<1x96xf32>
    %cst_56 = arith.constant dense<0.000000e+00> : vector<1x128xf32>
    %249 = tpu.matmul %248, %23, %cst_56 {dimension_numbers = #tpu.dot_dimension_numbers<[1], [0], [0], [1], [0, 0, 1, 1], [], []>} : vector<1x96xf32>, vector<96x128xf32>, vector<1x128xf32> -> vector<1x128xf32>
    %250 = arith.addf %249, %24 : vector<1x128xf32>
    %cst_57 = arith.constant 0.000000e+00 : f32
    %251 = vector.broadcast %cst_57 : f32 to vector<1x128xf32>
    %252 = arith.subf %251, %250 : vector<1x128xf32>
    %253 = math.exp %252 : vector<1x128xf32>
    %cst_58 = arith.constant 1.000000e+00 : f32
    %254 = vector.broadcast %cst_58 : f32 to vector<1x128xf32>
    %255 = arith.addf %254, %253 : vector<1x128xf32>
    %cst_59 = arith.constant 1.000000e+00 : f32
    %256 = vector.broadcast %cst_59 : f32 to vector<1x128xf32>
    %257 = arith.divf %256, %255 : vector<1x128xf32>
    %258 = math.tanh %250 : vector<1x128xf32>
    %259 = vector.extract_strided_slice %257 {offsets = [0, 16], sizes = [1, 16], strides = [1, 1]} : vector<1x128xf32> to vector<1x16xf32>
    %260 = arith.mulf %259, %233 : vector<1x16xf32>
    %261 = vector.extract_strided_slice %257 {offsets = [0, 0], sizes = [1, 16], strides = [1, 1]} : vector<1x128xf32> to vector<1x16xf32>
    %262 = vector.extract_strided_slice %258 {offsets = [0, 32], sizes = [1, 16], strides = [1, 1]} : vector<1x128xf32> to vector<1x16xf32>
    %263 = arith.mulf %261, %262 : vector<1x16xf32>
    %264 = arith.addf %260, %263 : vector<1x16xf32>
    %265 = vector.extract_strided_slice %257 {offsets = [0, 48], sizes = [1, 16], strides = [1, 1]} : vector<1x128xf32> to vector<1x16xf32>
    %266 = math.tanh %264 : vector<1x16xf32>
    %267 = arith.mulf %265, %266 : vector<1x16xf32>
    %268 = vector.extract_strided_slice %257 {offsets = [0, 80], sizes = [1, 16], strides = [1, 1]} : vector<1x128xf32> to vector<1x16xf32>
    %269 = arith.mulf %268, %242 : vector<1x16xf32>
    %270 = vector.extract_strided_slice %257 {offsets = [0, 64], sizes = [1, 16], strides = [1, 1]} : vector<1x128xf32> to vector<1x16xf32>
    %271 = vector.extract_strided_slice %258 {offsets = [0, 96], sizes = [1, 16], strides = [1, 1]} : vector<1x128xf32> to vector<1x16xf32>
    %272 = arith.mulf %270, %271 : vector<1x16xf32>
    %273 = arith.addf %269, %272 : vector<1x16xf32>
    %274 = vector.extract_strided_slice %257 {offsets = [0, 112], sizes = [1, 16], strides = [1, 1]} : vector<1x128xf32> to vector<1x16xf32>
    %275 = math.tanh %273 : vector<1x16xf32>
    %276 = arith.mulf %274, %275 : vector<1x16xf32>
    %277 = tpu.concatenate %50, %276, %81, %245, %112, %214, %143, %183, %174, %152, %205, %121, %236, %90, %267, %59 in 1 : vector<1x16xf32>, vector<1x16xf32>, vector<1x16xf32>, vector<1x16xf32>, vector<1x16xf32>, vector<1x16xf32>, vector<1x16xf32>, vector<1x16xf32>, vector<1x16xf32>, vector<1x16xf32>, vector<1x16xf32>, vector<1x16xf32>, vector<1x16xf32>, vector<1x16xf32>, vector<1x16xf32>, vector<1x16xf32> -> vector<1x256xf32>
    %c0_60 = arith.constant 0 : index
    %c0_61 = arith.constant 0 : index
    %278 = vector.load %arg9[%c0_60, %c0_61] : memref<256x128xf32, #tpu.memory_space<vmem>>, vector<256x128xf32>
    %cst_62 = arith.constant dense<0.000000e+00> : vector<1x128xf32>
    %279 = tpu.matmul %277, %278, %cst_62 {dimension_numbers = #tpu.dot_dimension_numbers<[1], [0], [0], [1], [0, 0, 1, 1], [], []>} : vector<1x256xf32>, vector<256x128xf32>, vector<1x128xf32> -> vector<1x128xf32>
    %c0_63 = arith.constant 0 : index
    %c0_64 = arith.constant 0 : index
    %c0_65 = arith.constant 0 : index
    %280 = vector.load %arg2[%c0_63, %c0_64, %c0_65] : memref<1x1x8xf32, #tpu.memory_space<vmem>>, vector<1x1x8xf32>
    %281 = vector.shape_cast %280 : vector<1x1x8xf32> to vector<1x8xf32>
    %c0_66 = arith.constant 0 : index
    %c0_67 = arith.constant 0 : index
    %282 = vector.load %arg10[%c0_66, %c0_67] : memref<48x128xf32, #tpu.memory_space<vmem>>, vector<48x128xf32>
    %c0_68 = arith.constant 0 : index
    %c0_69 = arith.constant 0 : index
    %283 = vector.load %arg11[%c0_68, %c0_69] : memref<128x8xf32, #tpu.memory_space<vmem>>, vector<128x8xf32>
    %c0_70 = arith.constant 0 : index
    %c0_71 = arith.constant 0 : index
    %284 = vector.load %arg15[%c0_70, %c0_71] : memref<96x128xf32, #tpu.memory_space<vmem>>, vector<96x128xf32>
    %c0_72 = arith.constant 0 : index
    %c0_73 = arith.constant 0 : index
    %285 = vector.load %arg16[%c0_72, %c0_73] : memref<96x128xf32, #tpu.memory_space<vmem>>, vector<96x128xf32>
    %c0_74 = arith.constant 0 : index
    %c0_75 = arith.constant 0 : index
    %286 = vector.load %arg18[%c0_74, %c0_75] : memref<64x16xf32, #tpu.memory_space<vmem>>, vector<64x16xf32>
    %c0_76 = arith.constant 0 : index
    %c0_77 = arith.constant 0 : index
    %287 = vector.load %arg12[%c0_76, %c0_77] : memref<16x32xf32, #tpu.memory_space<vmem>>, vector<16x32xf32>
    %c0_78 = arith.constant 0 : index
    %c0_79 = arith.constant 0 : index
    %288 = vector.load %arg13[%c0_78, %c0_79] : memref<32x32xf32, #tpu.memory_space<vmem>>, vector<32x32xf32>
    %c0_80 = arith.constant 0 : index
    %c0_81 = arith.constant 0 : index
    %c0_82 = arith.constant 0 : index
    %289 = vector.load %arg14[%c0_80, %c0_81, %c0_82] : memref<2x1x32xf32, #tpu.memory_space<vmem>>, vector<1x1x32xf32>
    %290 = vector.shape_cast %289 : vector<1x1x32xf32> to vector<1x32xf32>
    %c1_83 = arith.constant 1 : index
    %c0_84 = arith.constant 0 : index
    %c0_85 = arith.constant 0 : index
    %291 = vector.load %arg14[%c1_83, %c0_84, %c0_85] : memref<2x1x32xf32, #tpu.memory_space<vmem>>, vector<1x1x32xf32>
    %292 = vector.shape_cast %291 : vector<1x1x32xf32> to vector<1x32xf32>
    %c0_86 = arith.constant 0 : index
    %c0_87 = arith.constant 0 : index
    %c0_88 = arith.constant 0 : index
    %293 = vector.load %arg17[%c0_86, %c0_87, %c0_88] : memref<2x1x128xf32, #tpu.memory_space<vmem>>, vector<1x1x128xf32>
    %294 = vector.shape_cast %293 : vector<1x1x128xf32> to vector<1x128xf32>
    %c1_89 = arith.constant 1 : index
    %c0_90 = arith.constant 0 : index
    %c0_91 = arith.constant 0 : index
    %295 = vector.load %arg17[%c1_89, %c0_90, %c0_91] : memref<2x1x128xf32, #tpu.memory_space<vmem>>, vector<1x1x128xf32>
    %296 = vector.shape_cast %295 : vector<1x1x128xf32> to vector<1x128xf32>
    %c0_92 = arith.constant 0 : index
    %c0_93 = arith.constant 0 : index
    %297 = vector.load %arg19[%c0_92, %c0_93] : memref<1x16xf32, #tpu.memory_space<vmem>>, vector<1x16xf32>
    %cst_94 = arith.constant 0.000000e+00 : f32
    %298 = vector.broadcast %cst_94 : f32 to vector<1x32xf32>
    %cst_95 = arith.constant 0.000000e+00 : f32
    %299 = vector.broadcast %cst_95 : f32 to vector<1x32xf32>
    %cst_96 = arith.constant 0.000000e+00 : f32
    %300 = vector.broadcast %cst_96 : f32 to vector<1x32xf32>
    %cst_97 = arith.constant 0.000000e+00 : f32
    %301 = vector.broadcast %cst_97 : f32 to vector<1x32xf32>
    %cst_98 = arith.constant 0.000000e+00 : f32
    %302 = vector.broadcast %cst_98 : f32 to vector<1x8xf32>
    %cst_99 = arith.constant 0.000000e+00 : f32
    %303 = vector.broadcast %cst_99 : f32 to vector<1x8xf32>
    %cst_100 = arith.constant 0.000000e+00 : f32
    %304 = vector.broadcast %cst_100 : f32 to vector<1x32xf32>
    %cst_101 = arith.constant 0.000000e+00 : f32
    %305 = vector.broadcast %cst_101 : f32 to vector<1x16xf32>
    %cst_102 = arith.constant dense<0.000000e+00> : vector<1x32xf32>
    %306 = tpu.matmul %305, %287, %cst_102 {dimension_numbers = #tpu.dot_dimension_numbers<[1], [0], [0], [1], [0, 0, 1, 1], [], []>} : vector<1x16xf32>, vector<16x32xf32>, vector<1x32xf32> -> vector<1x32xf32>
    %307 = arith.addf %306, %290 : vector<1x32xf32>
    %cst_103 = arith.constant 0.000000e+00 : f32
    %308 = vector.broadcast %cst_103 : f32 to vector<1x32xf32>
    %309 = arith.maximumf %307, %308 : vector<1x32xf32>
    %cst_104 = arith.constant dense<0.000000e+00> : vector<1x32xf32>
    %310 = tpu.matmul %309, %288, %cst_104 {dimension_numbers = #tpu.dot_dimension_numbers<[1], [0], [0], [1], [0, 0, 1, 1], [], []>} : vector<1x32xf32>, vector<32x32xf32>, vector<1x32xf32> -> vector<1x32xf32>
    %311 = arith.addf %310, %292 : vector<1x32xf32>
    %cst_105 = arith.constant 0.000000e+00 : f32
    %312 = vector.broadcast %cst_105 : f32 to vector<1x32xf32>
    %313 = arith.maximumf %311, %312 : vector<1x32xf32>
    %314 = tpu.concatenate %313, %304, %298 in 1 : vector<1x32xf32>, vector<1x32xf32>, vector<1x32xf32> -> vector<1x96xf32>
    %cst_106 = arith.constant dense<0.000000e+00> : vector<1x128xf32>
    %315 = tpu.matmul %314, %284, %cst_106 {dimension_numbers = #tpu.dot_dimension_numbers<[1], [0], [0], [1], [0, 0, 1, 1], [], []>} : vector<1x96xf32>, vector<96x128xf32>, vector<1x128xf32> -> vector<1x128xf32>
    %316 = arith.addf %315, %294 : vector<1x128xf32>
    %cst_107 = arith.constant 0.000000e+00 : f32
    %317 = vector.broadcast %cst_107 : f32 to vector<1x128xf32>
    %318 = arith.subf %317, %316 : vector<1x128xf32>
    %319 = math.exp %318 : vector<1x128xf32>
    %cst_108 = arith.constant 1.000000e+00 : f32
    %320 = vector.broadcast %cst_108 : f32 to vector<1x128xf32>
    %321 = arith.addf %320, %319 : vector<1x128xf32>
    %cst_109 = arith.constant 1.000000e+00 : f32
    %322 = vector.broadcast %cst_109 : f32 to vector<1x128xf32>
    %323 = arith.divf %322, %321 : vector<1x128xf32>
    %324 = math.tanh %316 : vector<1x128xf32>
    %325 = vector.extract_strided_slice %323 {offsets = [0, 32], sizes = [1, 32], strides = [1, 1]} : vector<1x128xf32> to vector<1x32xf32>
    %326 = arith.mulf %325, %299 : vector<1x32xf32>
    %327 = vector.extract_strided_slice %323 {offsets = [0, 0], sizes = [1, 32], strides = [1, 1]} : vector<1x128xf32> to vector<1x32xf32>
    %328 = vector.extract_strided_slice %324 {offsets = [0, 64], sizes = [1, 32], strides = [1, 1]} : vector<1x128xf32> to vector<1x32xf32>
    %329 = arith.mulf %327, %328 : vector<1x32xf32>
    %330 = arith.addf %326, %329 : vector<1x32xf32>
    %331 = vector.extract_strided_slice %323 {offsets = [0, 96], sizes = [1, 32], strides = [1, 1]} : vector<1x128xf32> to vector<1x32xf32>
    %332 = math.tanh %330 : vector<1x32xf32>
    %333 = arith.mulf %331, %332 : vector<1x32xf32>
    %334 = tpu.concatenate %333, %302, %303 in 1 : vector<1x32xf32>, vector<1x8xf32>, vector<1x8xf32> -> vector<1x48xf32>
    %cst_110 = arith.constant dense<0.000000e+00> : vector<1x128xf32>
    %335 = tpu.matmul %334, %282, %cst_110 {dimension_numbers = #tpu.dot_dimension_numbers<[1], [0], [0], [1], [0, 0, 1, 1], [], []>} : vector<1x48xf32>, vector<48x128xf32>, vector<1x128xf32> -> vector<1x128xf32>
    %336 = arith.addf %335, %279 : vector<1x128xf32>
    %337 = math.tanh %336 : vector<1x128xf32>
    %cst_111 = arith.constant dense<0.000000e+00> : vector<1x8xf32>
    %338 = tpu.matmul %337, %283, %cst_111 {dimension_numbers = #tpu.dot_dimension_numbers<[1], [0], [0], [1], [0, 0, 1, 1], [], []>} : vector<1x128xf32>, vector<128x8xf32>, vector<1x8xf32> -> vector<1x8xf32>
    %339 = arith.addf %338, %281 : vector<1x8xf32>
    %cst_112 = arith.constant dense<0xFF800000> : vector<1xf32>
    %340 = vector.multi_reduction <maximumf>, %339, %cst_112 [1] : vector<1x8xf32> to vector<1xf32>
    %341 = vector.shape_cast %340 : vector<1xf32> to vector<1x1xf32>
    %342 = vector.broadcast %341 : vector<1x1xf32> to vector<1x8xf32>
    %343 = arith.subf %339, %342 : vector<1x8xf32>
    %344 = math.exp %343 : vector<1x8xf32>
    %cst_113 = arith.constant dense<0.000000e+00> : vector<1xf32>
    %345 = vector.multi_reduction <add>, %344, %cst_113 [1] : vector<1x8xf32> to vector<1xf32>
    %346 = vector.shape_cast %345 : vector<1xf32> to vector<1x1xf32>
    %347 = vector.broadcast %346 : vector<1x1xf32> to vector<1x8xf32>
    %348 = arith.divf %344, %347 : vector<1x8xf32>
    %349 = arith.addf %303, %348 : vector<1x8xf32>
    %350 = vector.extract_strided_slice %348 {offsets = [0, 0], sizes = [1, 1], strides = [1, 1]} : vector<1x8xf32> to vector<1x1xf32>
    %351 = vector.extract_strided_slice %277 {offsets = [0, 0], sizes = [1, 32], strides = [1, 1]} : vector<1x256xf32> to vector<1x32xf32>
    %352 = vector.broadcast %350 : vector<1x1xf32> to vector<1x32xf32>
    %353 = arith.mulf %352, %351 : vector<1x32xf32>
    %354 = vector.extract_strided_slice %348 {offsets = [0, 1], sizes = [1, 1], strides = [1, 1]} : vector<1x8xf32> to vector<1x1xf32>
    %355 = vector.extract_strided_slice %277 {offsets = [0, 32], sizes = [1, 32], strides = [1, 1]} : vector<1x256xf32> to vector<1x32xf32>
    %356 = vector.broadcast %354 : vector<1x1xf32> to vector<1x32xf32>
    %357 = arith.mulf %356, %355 : vector<1x32xf32>
    %358 = arith.addf %353, %357 : vector<1x32xf32>
    %359 = vector.extract_strided_slice %348 {offsets = [0, 2], sizes = [1, 1], strides = [1, 1]} : vector<1x8xf32> to vector<1x1xf32>
    %360 = vector.extract_strided_slice %277 {offsets = [0, 64], sizes = [1, 32], strides = [1, 1]} : vector<1x256xf32> to vector<1x32xf32>
    %361 = vector.broadcast %359 : vector<1x1xf32> to vector<1x32xf32>
    %362 = arith.mulf %361, %360 : vector<1x32xf32>
    %363 = arith.addf %358, %362 : vector<1x32xf32>
    %364 = vector.extract_strided_slice %348 {offsets = [0, 3], sizes = [1, 1], strides = [1, 1]} : vector<1x8xf32> to vector<1x1xf32>
    %365 = vector.extract_strided_slice %277 {offsets = [0, 96], sizes = [1, 32], strides = [1, 1]} : vector<1x256xf32> to vector<1x32xf32>
    %366 = vector.broadcast %364 : vector<1x1xf32> to vector<1x32xf32>
    %367 = arith.mulf %366, %365 : vector<1x32xf32>
    %368 = arith.addf %363, %367 : vector<1x32xf32>
    %369 = vector.extract_strided_slice %348 {offsets = [0, 4], sizes = [1, 1], strides = [1, 1]} : vector<1x8xf32> to vector<1x1xf32>
    %370 = vector.extract_strided_slice %277 {offsets = [0, 128], sizes = [1, 32], strides = [1, 1]} : vector<1x256xf32> to vector<1x32xf32>
    %371 = vector.broadcast %369 : vector<1x1xf32> to vector<1x32xf32>
    %372 = arith.mulf %371, %370 : vector<1x32xf32>
    %373 = arith.addf %368, %372 : vector<1x32xf32>
    %374 = vector.extract_strided_slice %348 {offsets = [0, 5], sizes = [1, 1], strides = [1, 1]} : vector<1x8xf32> to vector<1x1xf32>
    %375 = vector.extract_strided_slice %277 {offsets = [0, 160], sizes = [1, 32], strides = [1, 1]} : vector<1x256xf32> to vector<1x32xf32>
    %376 = vector.broadcast %374 : vector<1x1xf32> to vector<1x32xf32>
    %377 = arith.mulf %376, %375 : vector<1x32xf32>
    %378 = arith.addf %373, %377 : vector<1x32xf32>
    %379 = vector.extract_strided_slice %348 {offsets = [0, 6], sizes = [1, 1], strides = [1, 1]} : vector<1x8xf32> to vector<1x1xf32>
    %380 = vector.extract_strided_slice %277 {offsets = [0, 192], sizes = [1, 32], strides = [1, 1]} : vector<1x256xf32> to vector<1x32xf32>
    %381 = vector.broadcast %379 : vector<1x1xf32> to vector<1x32xf32>
    %382 = arith.mulf %381, %380 : vector<1x32xf32>
    %383 = arith.addf %378, %382 : vector<1x32xf32>
    %384 = vector.extract_strided_slice %348 {offsets = [0, 7], sizes = [1, 1], strides = [1, 1]} : vector<1x8xf32> to vector<1x1xf32>
    %385 = vector.extract_strided_slice %277 {offsets = [0, 224], sizes = [1, 32], strides = [1, 1]} : vector<1x256xf32> to vector<1x32xf32>
    %386 = vector.broadcast %384 : vector<1x1xf32> to vector<1x32xf32>
    %387 = arith.mulf %386, %385 : vector<1x32xf32>
    %388 = arith.addf %383, %387 : vector<1x32xf32>
    %389 = tpu.concatenate %333, %388, %300 in 1 : vector<1x32xf32>, vector<1x32xf32>, vector<1x32xf32> -> vector<1x96xf32>
    %cst_114 = arith.constant dense<0.000000e+00> : vector<1x128xf32>
    %390 = tpu.matmul %389, %285, %cst_114 {dimension_numbers = #tpu.dot_dimension_numbers<[1], [0], [0], [1], [0, 0, 1, 1], [], []>} : vector<1x96xf32>, vector<96x128xf32>, vector<1x128xf32> -> vector<1x128xf32>
    %391 = arith.addf %390, %296 : vector<1x128xf32>
    %cst_115 = arith.constant 0.000000e+00 : f32
    %392 = vector.broadcast %cst_115 : f32 to vector<1x128xf32>
    %393 = arith.subf %392, %391 : vector<1x128xf32>
    %394 = math.exp %393 : vector<1x128xf32>
    %cst_116 = arith.constant 1.000000e+00 : f32
    %395 = vector.broadcast %cst_116 : f32 to vector<1x128xf32>
    %396 = arith.addf %395, %394 : vector<1x128xf32>
    %cst_117 = arith.constant 1.000000e+00 : f32
    %397 = vector.broadcast %cst_117 : f32 to vector<1x128xf32>
    %398 = arith.divf %397, %396 : vector<1x128xf32>
    %399 = math.tanh %391 : vector<1x128xf32>
    %400 = vector.extract_strided_slice %398 {offsets = [0, 32], sizes = [1, 32], strides = [1, 1]} : vector<1x128xf32> to vector<1x32xf32>
    %401 = arith.mulf %400, %301 : vector<1x32xf32>
    %402 = vector.extract_strided_slice %398 {offsets = [0, 0], sizes = [1, 32], strides = [1, 1]} : vector<1x128xf32> to vector<1x32xf32>
    %403 = vector.extract_strided_slice %399 {offsets = [0, 64], sizes = [1, 32], strides = [1, 1]} : vector<1x128xf32> to vector<1x32xf32>
    %404 = arith.mulf %402, %403 : vector<1x32xf32>
    %405 = arith.addf %401, %404 : vector<1x32xf32>
    %406 = vector.extract_strided_slice %398 {offsets = [0, 96], sizes = [1, 32], strides = [1, 1]} : vector<1x128xf32> to vector<1x32xf32>
    %407 = math.tanh %405 : vector<1x32xf32>
    %408 = arith.mulf %406, %407 : vector<1x32xf32>
    %409 = tpu.concatenate %408, %388 in 1 : vector<1x32xf32>, vector<1x32xf32> -> vector<1x64xf32>
    %cst_118 = arith.constant dense<0.000000e+00> : vector<1x16xf32>
    %410 = tpu.matmul %409, %286, %cst_118 {dimension_numbers = #tpu.dot_dimension_numbers<[1], [0], [0], [1], [0, 0, 1, 1], [], []>} : vector<1x64xf32>, vector<64x16xf32>, vector<1x16xf32> -> vector<1x16xf32>
    %411 = arith.addf %410, %297 : vector<1x16xf32>
    %cst_119 = arith.constant dense<0.000000e+00> : vector<1x32xf32>
    %412 = tpu.matmul %411, %287, %cst_119 {dimension_numbers = #tpu.dot_dimension_numbers<[1], [0], [0], [1], [0, 0, 1, 1], [], []>} : vector<1x16xf32>, vector<16x32xf32>, vector<1x32xf32> -> vector<1x32xf32>
    %413 = arith.addf %412, %290 : vector<1x32xf32>
    %cst_120 = arith.constant 0.000000e+00 : f32
    %414 = vector.broadcast %cst_120 : f32 to vector<1x32xf32>
    %415 = arith.maximumf %413, %414 : vector<1x32xf32>
    %cst_121 = arith.constant dense<0.000000e+00> : vector<1x32xf32>
    %416 = tpu.matmul %415, %288, %cst_121 {dimension_numbers = #tpu.dot_dimension_numbers<[1], [0], [0], [1], [0, 0, 1, 1], [], []>} : vector<1x32xf32>, vector<32x32xf32>, vector<1x32xf32> -> vector<1x32xf32>
    %417 = arith.addf %416, %292 : vector<1x32xf32>
    %cst_122 = arith.constant 0.000000e+00 : f32
    %418 = vector.broadcast %cst_122 : f32 to vector<1x32xf32>
    %419 = arith.maximumf %417, %418 : vector<1x32xf32>
    %420 = tpu.concatenate %419, %388, %333 in 1 : vector<1x32xf32>, vector<1x32xf32>, vector<1x32xf32> -> vector<1x96xf32>
    %cst_123 = arith.constant dense<0.000000e+00> : vector<1x128xf32>
    %421 = tpu.matmul %420, %284, %cst_123 {dimension_numbers = #tpu.dot_dimension_numbers<[1], [0], [0], [1], [0, 0, 1, 1], [], []>} : vector<1x96xf32>, vector<96x128xf32>, vector<1x128xf32> -> vector<1x128xf32>
    %422 = arith.addf %421, %294 : vector<1x128xf32>
    %cst_124 = arith.constant 0.000000e+00 : f32
    %423 = vector.broadcast %cst_124 : f32 to vector<1x128xf32>
    %424 = arith.subf %423, %422 : vector<1x128xf32>
    %425 = math.exp %424 : vector<1x128xf32>
    %cst_125 = arith.constant 1.000000e+00 : f32
    %426 = vector.broadcast %cst_125 : f32 to vector<1x128xf32>
    %427 = arith.addf %426, %425 : vector<1x128xf32>
    %cst_126 = arith.constant 1.000000e+00 : f32
    %428 = vector.broadcast %cst_126 : f32 to vector<1x128xf32>
    %429 = arith.divf %428, %427 : vector<1x128xf32>
    %430 = math.tanh %422 : vector<1x128xf32>
    %431 = vector.extract_strided_slice %429 {offsets = [0, 32], sizes = [1, 32], strides = [1, 1]} : vector<1x128xf32> to vector<1x32xf32>
    %432 = arith.mulf %431, %330 : vector<1x32xf32>
    %433 = vector.extract_strided_slice %429 {offsets = [0, 0], sizes = [1, 32], strides = [1, 1]} : vector<1x128xf32> to vector<1x32xf32>
    %434 = vector.extract_strided_slice %430 {offsets = [0, 64], sizes = [1, 32], strides = [1, 1]} : vector<1x128xf32> to vector<1x32xf32>
    %435 = arith.mulf %433, %434 : vector<1x32xf32>
    %436 = arith.addf %432, %435 : vector<1x32xf32>
    %437 = vector.extract_strided_slice %429 {offsets = [0, 96], sizes = [1, 32], strides = [1, 1]} : vector<1x128xf32> to vector<1x32xf32>
    %438 = math.tanh %436 : vector<1x32xf32>
    %439 = arith.mulf %437, %438 : vector<1x32xf32>
    %440 = tpu.concatenate %439, %348, %349 in 1 : vector<1x32xf32>, vector<1x8xf32>, vector<1x8xf32> -> vector<1x48xf32>
    %cst_127 = arith.constant dense<0.000000e+00> : vector<1x128xf32>
    %441 = tpu.matmul %440, %282, %cst_127 {dimension_numbers = #tpu.dot_dimension_numbers<[1], [0], [0], [1], [0, 0, 1, 1], [], []>} : vector<1x48xf32>, vector<48x128xf32>, vector<1x128xf32> -> vector<1x128xf32>
    %442 = arith.addf %441, %279 : vector<1x128xf32>
    %443 = math.tanh %442 : vector<1x128xf32>
    %cst_128 = arith.constant dense<0.000000e+00> : vector<1x8xf32>
    %444 = tpu.matmul %443, %283, %cst_128 {dimension_numbers = #tpu.dot_dimension_numbers<[1], [0], [0], [1], [0, 0, 1, 1], [], []>} : vector<1x128xf32>, vector<128x8xf32>, vector<1x8xf32> -> vector<1x8xf32>
    %445 = arith.addf %444, %281 : vector<1x8xf32>
    %cst_129 = arith.constant dense<0xFF800000> : vector<1xf32>
    %446 = vector.multi_reduction <maximumf>, %445, %cst_129 [1] : vector<1x8xf32> to vector<1xf32>
    %447 = vector.shape_cast %446 : vector<1xf32> to vector<1x1xf32>
    %448 = vector.broadcast %447 : vector<1x1xf32> to vector<1x8xf32>
    %449 = arith.subf %445, %448 : vector<1x8xf32>
    %450 = math.exp %449 : vector<1x8xf32>
    %cst_130 = arith.constant dense<0.000000e+00> : vector<1xf32>
    %451 = vector.multi_reduction <add>, %450, %cst_130 [1] : vector<1x8xf32> to vector<1xf32>
    %452 = vector.shape_cast %451 : vector<1xf32> to vector<1x1xf32>
    %453 = vector.broadcast %452 : vector<1x1xf32> to vector<1x8xf32>
    %454 = arith.divf %450, %453 : vector<1x8xf32>
    %455 = arith.addf %349, %454 : vector<1x8xf32>
    %456 = vector.extract_strided_slice %454 {offsets = [0, 0], sizes = [1, 1], strides = [1, 1]} : vector<1x8xf32> to vector<1x1xf32>
    %457 = vector.extract_strided_slice %277 {offsets = [0, 0], sizes = [1, 32], strides = [1, 1]} : vector<1x256xf32> to vector<1x32xf32>
    %458 = vector.broadcast %456 : vector<1x1xf32> to vector<1x32xf32>
    %459 = arith.mulf %458, %457 : vector<1x32xf32>
    %460 = vector.extract_strided_slice %454 {offsets = [0, 1], sizes = [1, 1], strides = [1, 1]} : vector<1x8xf32> to vector<1x1xf32>
    %461 = vector.extract_strided_slice %277 {offsets = [0, 32], sizes = [1, 32], strides = [1, 1]} : vector<1x256xf32> to vector<1x32xf32>
    %462 = vector.broadcast %460 : vector<1x1xf32> to vector<1x32xf32>
    %463 = arith.mulf %462, %461 : vector<1x32xf32>
    %464 = arith.addf %459, %463 : vector<1x32xf32>
    %465 = vector.extract_strided_slice %454 {offsets = [0, 2], sizes = [1, 1], strides = [1, 1]} : vector<1x8xf32> to vector<1x1xf32>
    %466 = vector.extract_strided_slice %277 {offsets = [0, 64], sizes = [1, 32], strides = [1, 1]} : vector<1x256xf32> to vector<1x32xf32>
    %467 = vector.broadcast %465 : vector<1x1xf32> to vector<1x32xf32>
    %468 = arith.mulf %467, %466 : vector<1x32xf32>
    %469 = arith.addf %464, %468 : vector<1x32xf32>
    %470 = vector.extract_strided_slice %454 {offsets = [0, 3], sizes = [1, 1], strides = [1, 1]} : vector<1x8xf32> to vector<1x1xf32>
    %471 = vector.extract_strided_slice %277 {offsets = [0, 96], sizes = [1, 32], strides = [1, 1]} : vector<1x256xf32> to vector<1x32xf32>
    %472 = vector.broadcast %470 : vector<1x1xf32> to vector<1x32xf32>
    %473 = arith.mulf %472, %471 : vector<1x32xf32>
    %474 = arith.addf %469, %473 : vector<1x32xf32>
    %475 = vector.extract_strided_slice %454 {offsets = [0, 4], sizes = [1, 1], strides = [1, 1]} : vector<1x8xf32> to vector<1x1xf32>
    %476 = vector.extract_strided_slice %277 {offsets = [0, 128], sizes = [1, 32], strides = [1, 1]} : vector<1x256xf32> to vector<1x32xf32>
    %477 = vector.broadcast %475 : vector<1x1xf32> to vector<1x32xf32>
    %478 = arith.mulf %477, %476 : vector<1x32xf32>
    %479 = arith.addf %474, %478 : vector<1x32xf32>
    %480 = vector.extract_strided_slice %454 {offsets = [0, 5], sizes = [1, 1], strides = [1, 1]} : vector<1x8xf32> to vector<1x1xf32>
    %481 = vector.extract_strided_slice %277 {offsets = [0, 160], sizes = [1, 32], strides = [1, 1]} : vector<1x256xf32> to vector<1x32xf32>
    %482 = vector.broadcast %480 : vector<1x1xf32> to vector<1x32xf32>
    %483 = arith.mulf %482, %481 : vector<1x32xf32>
    %484 = arith.addf %479, %483 : vector<1x32xf32>
    %485 = vector.extract_strided_slice %454 {offsets = [0, 6], sizes = [1, 1], strides = [1, 1]} : vector<1x8xf32> to vector<1x1xf32>
    %486 = vector.extract_strided_slice %277 {offsets = [0, 192], sizes = [1, 32], strides = [1, 1]} : vector<1x256xf32> to vector<1x32xf32>
    %487 = vector.broadcast %485 : vector<1x1xf32> to vector<1x32xf32>
    %488 = arith.mulf %487, %486 : vector<1x32xf32>
    %489 = arith.addf %484, %488 : vector<1x32xf32>
    %490 = vector.extract_strided_slice %454 {offsets = [0, 7], sizes = [1, 1], strides = [1, 1]} : vector<1x8xf32> to vector<1x1xf32>
    %491 = vector.extract_strided_slice %277 {offsets = [0, 224], sizes = [1, 32], strides = [1, 1]} : vector<1x256xf32> to vector<1x32xf32>
    %492 = vector.broadcast %490 : vector<1x1xf32> to vector<1x32xf32>
    %493 = arith.mulf %492, %491 : vector<1x32xf32>
    %494 = arith.addf %489, %493 : vector<1x32xf32>
    %495 = tpu.concatenate %439, %494, %408 in 1 : vector<1x32xf32>, vector<1x32xf32>, vector<1x32xf32> -> vector<1x96xf32>
    %cst_131 = arith.constant dense<0.000000e+00> : vector<1x128xf32>
    %496 = tpu.matmul %495, %285, %cst_131 {dimension_numbers = #tpu.dot_dimension_numbers<[1], [0], [0], [1], [0, 0, 1, 1], [], []>} : vector<1x96xf32>, vector<96x128xf32>, vector<1x128xf32> -> vector<1x128xf32>
    %497 = arith.addf %496, %296 : vector<1x128xf32>
    %cst_132 = arith.constant 0.000000e+00 : f32
    %498 = vector.broadcast %cst_132 : f32 to vector<1x128xf32>
    %499 = arith.subf %498, %497 : vector<1x128xf32>
    %500 = math.exp %499 : vector<1x128xf32>
    %cst_133 = arith.constant 1.000000e+00 : f32
    %501 = vector.broadcast %cst_133 : f32 to vector<1x128xf32>
    %502 = arith.addf %501, %500 : vector<1x128xf32>
    %cst_134 = arith.constant 1.000000e+00 : f32
    %503 = vector.broadcast %cst_134 : f32 to vector<1x128xf32>
    %504 = arith.divf %503, %502 : vector<1x128xf32>
    %505 = math.tanh %497 : vector<1x128xf32>
    %506 = vector.extract_strided_slice %504 {offsets = [0, 32], sizes = [1, 32], strides = [1, 1]} : vector<1x128xf32> to vector<1x32xf32>
    %507 = arith.mulf %506, %405 : vector<1x32xf32>
    %508 = vector.extract_strided_slice %504 {offsets = [0, 0], sizes = [1, 32], strides = [1, 1]} : vector<1x128xf32> to vector<1x32xf32>
    %509 = vector.extract_strided_slice %505 {offsets = [0, 64], sizes = [1, 32], strides = [1, 1]} : vector<1x128xf32> to vector<1x32xf32>
    %510 = arith.mulf %508, %509 : vector<1x32xf32>
    %511 = arith.addf %507, %510 : vector<1x32xf32>
    %512 = vector.extract_strided_slice %504 {offsets = [0, 96], sizes = [1, 32], strides = [1, 1]} : vector<1x128xf32> to vector<1x32xf32>
    %513 = math.tanh %511 : vector<1x32xf32>
    %514 = arith.mulf %512, %513 : vector<1x32xf32>
    %515 = tpu.concatenate %514, %494 in 1 : vector<1x32xf32>, vector<1x32xf32> -> vector<1x64xf32>
    %cst_135 = arith.constant dense<0.000000e+00> : vector<1x16xf32>
    %516 = tpu.matmul %515, %286, %cst_135 {dimension_numbers = #tpu.dot_dimension_numbers<[1], [0], [0], [1], [0, 0, 1, 1], [], []>} : vector<1x64xf32>, vector<64x16xf32>, vector<1x16xf32> -> vector<1x16xf32>
    %517 = arith.addf %516, %297 : vector<1x16xf32>
    %cst_136 = arith.constant dense<0.000000e+00> : vector<1x32xf32>
    %518 = tpu.matmul %517, %287, %cst_136 {dimension_numbers = #tpu.dot_dimension_numbers<[1], [0], [0], [1], [0, 0, 1, 1], [], []>} : vector<1x16xf32>, vector<16x32xf32>, vector<1x32xf32> -> vector<1x32xf32>
    %519 = arith.addf %518, %290 : vector<1x32xf32>
    %cst_137 = arith.constant 0.000000e+00 : f32
    %520 = vector.broadcast %cst_137 : f32 to vector<1x32xf32>
    %521 = arith.maximumf %519, %520 : vector<1x32xf32>
    %cst_138 = arith.constant dense<0.000000e+00> : vector<1x32xf32>
    %522 = tpu.matmul %521, %288, %cst_138 {dimension_numbers = #tpu.dot_dimension_numbers<[1], [0], [0], [1], [0, 0, 1, 1], [], []>} : vector<1x32xf32>, vector<32x32xf32>, vector<1x32xf32> -> vector<1x32xf32>
    %523 = arith.addf %522, %292 : vector<1x32xf32>
    %cst_139 = arith.constant 0.000000e+00 : f32
    %524 = vector.broadcast %cst_139 : f32 to vector<1x32xf32>
    %525 = arith.maximumf %523, %524 : vector<1x32xf32>
    %526 = tpu.concatenate %525, %494, %439 in 1 : vector<1x32xf32>, vector<1x32xf32>, vector<1x32xf32> -> vector<1x96xf32>
    %cst_140 = arith.constant dense<0.000000e+00> : vector<1x128xf32>
    %527 = tpu.matmul %526, %284, %cst_140 {dimension_numbers = #tpu.dot_dimension_numbers<[1], [0], [0], [1], [0, 0, 1, 1], [], []>} : vector<1x96xf32>, vector<96x128xf32>, vector<1x128xf32> -> vector<1x128xf32>
    %528 = arith.addf %527, %294 : vector<1x128xf32>
    %cst_141 = arith.constant 0.000000e+00 : f32
    %529 = vector.broadcast %cst_141 : f32 to vector<1x128xf32>
    %530 = arith.subf %529, %528 : vector<1x128xf32>
    %531 = math.exp %530 : vector<1x128xf32>
    %cst_142 = arith.constant 1.000000e+00 : f32
    %532 = vector.broadcast %cst_142 : f32 to vector<1x128xf32>
    %533 = arith.addf %532, %531 : vector<1x128xf32>
    %cst_143 = arith.constant 1.000000e+00 : f32
    %534 = vector.broadcast %cst_143 : f32 to vector<1x128xf32>
    %535 = arith.divf %534, %533 : vector<1x128xf32>
    %536 = math.tanh %528 : vector<1x128xf32>
    %537 = vector.extract_strided_slice %535 {offsets = [0, 32], sizes = [1, 32], strides = [1, 1]} : vector<1x128xf32> to vector<1x32xf32>
    %538 = arith.mulf %537, %436 : vector<1x32xf32>
    %539 = vector.extract_strided_slice %535 {offsets = [0, 0], sizes = [1, 32], strides = [1, 1]} : vector<1x128xf32> to vector<1x32xf32>
    %540 = vector.extract_strided_slice %536 {offsets = [0, 64], sizes = [1, 32], strides = [1, 1]} : vector<1x128xf32> to vector<1x32xf32>
    %541 = arith.mulf %539, %540 : vector<1x32xf32>
    %542 = arith.addf %538, %541 : vector<1x32xf32>
    %543 = vector.extract_strided_slice %535 {offsets = [0, 96], sizes = [1, 32], strides = [1, 1]} : vector<1x128xf32> to vector<1x32xf32>
    %544 = math.tanh %542 : vector<1x32xf32>
    %545 = arith.mulf %543, %544 : vector<1x32xf32>
    %546 = tpu.concatenate %545, %454, %455 in 1 : vector<1x32xf32>, vector<1x8xf32>, vector<1x8xf32> -> vector<1x48xf32>
    %cst_144 = arith.constant dense<0.000000e+00> : vector<1x128xf32>
    %547 = tpu.matmul %546, %282, %cst_144 {dimension_numbers = #tpu.dot_dimension_numbers<[1], [0], [0], [1], [0, 0, 1, 1], [], []>} : vector<1x48xf32>, vector<48x128xf32>, vector<1x128xf32> -> vector<1x128xf32>
    %548 = arith.addf %547, %279 : vector<1x128xf32>
    %549 = math.tanh %548 : vector<1x128xf32>
    %cst_145 = arith.constant dense<0.000000e+00> : vector<1x8xf32>
    %550 = tpu.matmul %549, %283, %cst_145 {dimension_numbers = #tpu.dot_dimension_numbers<[1], [0], [0], [1], [0, 0, 1, 1], [], []>} : vector<1x128xf32>, vector<128x8xf32>, vector<1x8xf32> -> vector<1x8xf32>
    %551 = arith.addf %550, %281 : vector<1x8xf32>
    %cst_146 = arith.constant dense<0xFF800000> : vector<1xf32>
    %552 = vector.multi_reduction <maximumf>, %551, %cst_146 [1] : vector<1x8xf32> to vector<1xf32>
    %553 = vector.shape_cast %552 : vector<1xf32> to vector<1x1xf32>
    %554 = vector.broadcast %553 : vector<1x1xf32> to vector<1x8xf32>
    %555 = arith.subf %551, %554 : vector<1x8xf32>
    %556 = math.exp %555 : vector<1x8xf32>
    %cst_147 = arith.constant dense<0.000000e+00> : vector<1xf32>
    %557 = vector.multi_reduction <add>, %556, %cst_147 [1] : vector<1x8xf32> to vector<1xf32>
    %558 = vector.shape_cast %557 : vector<1xf32> to vector<1x1xf32>
    %559 = vector.broadcast %558 : vector<1x1xf32> to vector<1x8xf32>
    %560 = arith.divf %556, %559 : vector<1x8xf32>
    %561 = arith.addf %455, %560 : vector<1x8xf32>
    %562 = vector.extract_strided_slice %560 {offsets = [0, 0], sizes = [1, 1], strides = [1, 1]} : vector<1x8xf32> to vector<1x1xf32>
    %563 = vector.extract_strided_slice %277 {offsets = [0, 0], sizes = [1, 32], strides = [1, 1]} : vector<1x256xf32> to vector<1x32xf32>
    %564 = vector.broadcast %562 : vector<1x1xf32> to vector<1x32xf32>
    %565 = arith.mulf %564, %563 : vector<1x32xf32>
    %566 = vector.extract_strided_slice %560 {offsets = [0, 1], sizes = [1, 1], strides = [1, 1]} : vector<1x8xf32> to vector<1x1xf32>
    %567 = vector.extract_strided_slice %277 {offsets = [0, 32], sizes = [1, 32], strides = [1, 1]} : vector<1x256xf32> to vector<1x32xf32>
    %568 = vector.broadcast %566 : vector<1x1xf32> to vector<1x32xf32>
    %569 = arith.mulf %568, %567 : vector<1x32xf32>
    %570 = arith.addf %565, %569 : vector<1x32xf32>
    %571 = vector.extract_strided_slice %560 {offsets = [0, 2], sizes = [1, 1], strides = [1, 1]} : vector<1x8xf32> to vector<1x1xf32>
    %572 = vector.extract_strided_slice %277 {offsets = [0, 64], sizes = [1, 32], strides = [1, 1]} : vector<1x256xf32> to vector<1x32xf32>
    %573 = vector.broadcast %571 : vector<1x1xf32> to vector<1x32xf32>
    %574 = arith.mulf %573, %572 : vector<1x32xf32>
    %575 = arith.addf %570, %574 : vector<1x32xf32>
    %576 = vector.extract_strided_slice %560 {offsets = [0, 3], sizes = [1, 1], strides = [1, 1]} : vector<1x8xf32> to vector<1x1xf32>
    %577 = vector.extract_strided_slice %277 {offsets = [0, 96], sizes = [1, 32], strides = [1, 1]} : vector<1x256xf32> to vector<1x32xf32>
    %578 = vector.broadcast %576 : vector<1x1xf32> to vector<1x32xf32>
    %579 = arith.mulf %578, %577 : vector<1x32xf32>
    %580 = arith.addf %575, %579 : vector<1x32xf32>
    %581 = vector.extract_strided_slice %560 {offsets = [0, 4], sizes = [1, 1], strides = [1, 1]} : vector<1x8xf32> to vector<1x1xf32>
    %582 = vector.extract_strided_slice %277 {offsets = [0, 128], sizes = [1, 32], strides = [1, 1]} : vector<1x256xf32> to vector<1x32xf32>
    %583 = vector.broadcast %581 : vector<1x1xf32> to vector<1x32xf32>
    %584 = arith.mulf %583, %582 : vector<1x32xf32>
    %585 = arith.addf %580, %584 : vector<1x32xf32>
    %586 = vector.extract_strided_slice %560 {offsets = [0, 5], sizes = [1, 1], strides = [1, 1]} : vector<1x8xf32> to vector<1x1xf32>
    %587 = vector.extract_strided_slice %277 {offsets = [0, 160], sizes = [1, 32], strides = [1, 1]} : vector<1x256xf32> to vector<1x32xf32>
    %588 = vector.broadcast %586 : vector<1x1xf32> to vector<1x32xf32>
    %589 = arith.mulf %588, %587 : vector<1x32xf32>
    %590 = arith.addf %585, %589 : vector<1x32xf32>
    %591 = vector.extract_strided_slice %560 {offsets = [0, 6], sizes = [1, 1], strides = [1, 1]} : vector<1x8xf32> to vector<1x1xf32>
    %592 = vector.extract_strided_slice %277 {offsets = [0, 192], sizes = [1, 32], strides = [1, 1]} : vector<1x256xf32> to vector<1x32xf32>
    %593 = vector.broadcast %591 : vector<1x1xf32> to vector<1x32xf32>
    %594 = arith.mulf %593, %592 : vector<1x32xf32>
    %595 = arith.addf %590, %594 : vector<1x32xf32>
    %596 = vector.extract_strided_slice %560 {offsets = [0, 7], sizes = [1, 1], strides = [1, 1]} : vector<1x8xf32> to vector<1x1xf32>
    %597 = vector.extract_strided_slice %277 {offsets = [0, 224], sizes = [1, 32], strides = [1, 1]} : vector<1x256xf32> to vector<1x32xf32>
    %598 = vector.broadcast %596 : vector<1x1xf32> to vector<1x32xf32>
    %599 = arith.mulf %598, %597 : vector<1x32xf32>
    %600 = arith.addf %595, %599 : vector<1x32xf32>
    %601 = tpu.concatenate %545, %600, %514 in 1 : vector<1x32xf32>, vector<1x32xf32>, vector<1x32xf32> -> vector<1x96xf32>
    %cst_148 = arith.constant dense<0.000000e+00> : vector<1x128xf32>
    %602 = tpu.matmul %601, %285, %cst_148 {dimension_numbers = #tpu.dot_dimension_numbers<[1], [0], [0], [1], [0, 0, 1, 1], [], []>} : vector<1x96xf32>, vector<96x128xf32>, vector<1x128xf32> -> vector<1x128xf32>
    %603 = arith.addf %602, %296 : vector<1x128xf32>
    %cst_149 = arith.constant 0.000000e+00 : f32
    %604 = vector.broadcast %cst_149 : f32 to vector<1x128xf32>
    %605 = arith.subf %604, %603 : vector<1x128xf32>
    %606 = math.exp %605 : vector<1x128xf32>
    %cst_150 = arith.constant 1.000000e+00 : f32
    %607 = vector.broadcast %cst_150 : f32 to vector<1x128xf32>
    %608 = arith.addf %607, %606 : vector<1x128xf32>
    %cst_151 = arith.constant 1.000000e+00 : f32
    %609 = vector.broadcast %cst_151 : f32 to vector<1x128xf32>
    %610 = arith.divf %609, %608 : vector<1x128xf32>
    %611 = math.tanh %603 : vector<1x128xf32>
    %612 = vector.extract_strided_slice %610 {offsets = [0, 32], sizes = [1, 32], strides = [1, 1]} : vector<1x128xf32> to vector<1x32xf32>
    %613 = arith.mulf %612, %511 : vector<1x32xf32>
    %614 = vector.extract_strided_slice %610 {offsets = [0, 0], sizes = [1, 32], strides = [1, 1]} : vector<1x128xf32> to vector<1x32xf32>
    %615 = vector.extract_strided_slice %611 {offsets = [0, 64], sizes = [1, 32], strides = [1, 1]} : vector<1x128xf32> to vector<1x32xf32>
    %616 = arith.mulf %614, %615 : vector<1x32xf32>
    %617 = arith.addf %613, %616 : vector<1x32xf32>
    %618 = vector.extract_strided_slice %610 {offsets = [0, 96], sizes = [1, 32], strides = [1, 1]} : vector<1x128xf32> to vector<1x32xf32>
    %619 = math.tanh %617 : vector<1x32xf32>
    %620 = arith.mulf %618, %619 : vector<1x32xf32>
    %621 = tpu.concatenate %620, %600 in 1 : vector<1x32xf32>, vector<1x32xf32> -> vector<1x64xf32>
    %cst_152 = arith.constant dense<0.000000e+00> : vector<1x16xf32>
    %622 = tpu.matmul %621, %286, %cst_152 {dimension_numbers = #tpu.dot_dimension_numbers<[1], [0], [0], [1], [0, 0, 1, 1], [], []>} : vector<1x64xf32>, vector<64x16xf32>, vector<1x16xf32> -> vector<1x16xf32>
    %623 = arith.addf %622, %297 : vector<1x16xf32>
    %cst_153 = arith.constant dense<0.000000e+00> : vector<1x32xf32>
    %624 = tpu.matmul %623, %287, %cst_153 {dimension_numbers = #tpu.dot_dimension_numbers<[1], [0], [0], [1], [0, 0, 1, 1], [], []>} : vector<1x16xf32>, vector<16x32xf32>, vector<1x32xf32> -> vector<1x32xf32>
    %625 = arith.addf %624, %290 : vector<1x32xf32>
    %cst_154 = arith.constant 0.000000e+00 : f32
    %626 = vector.broadcast %cst_154 : f32 to vector<1x32xf32>
    %627 = arith.maximumf %625, %626 : vector<1x32xf32>
    %cst_155 = arith.constant dense<0.000000e+00> : vector<1x32xf32>
    %628 = tpu.matmul %627, %288, %cst_155 {dimension_numbers = #tpu.dot_dimension_numbers<[1], [0], [0], [1], [0, 0, 1, 1], [], []>} : vector<1x32xf32>, vector<32x32xf32>, vector<1x32xf32> -> vector<1x32xf32>
    %629 = arith.addf %628, %292 : vector<1x32xf32>
    %cst_156 = arith.constant 0.000000e+00 : f32
    %630 = vector.broadcast %cst_156 : f32 to vector<1x32xf32>
    %631 = arith.maximumf %629, %630 : vector<1x32xf32>
    %632 = tpu.concatenate %631, %600, %545 in 1 : vector<1x32xf32>, vector<1x32xf32>, vector<1x32xf32> -> vector<1x96xf32>
    %cst_157 = arith.constant dense<0.000000e+00> : vector<1x128xf32>
    %633 = tpu.matmul %632, %284, %cst_157 {dimension_numbers = #tpu.dot_dimension_numbers<[1], [0], [0], [1], [0, 0, 1, 1], [], []>} : vector<1x96xf32>, vector<96x128xf32>, vector<1x128xf32> -> vector<1x128xf32>
    %634 = arith.addf %633, %294 : vector<1x128xf32>
    %cst_158 = arith.constant 0.000000e+00 : f32
    %635 = vector.broadcast %cst_158 : f32 to vector<1x128xf32>
    %636 = arith.subf %635, %634 : vector<1x128xf32>
    %637 = math.exp %636 : vector<1x128xf32>
    %cst_159 = arith.constant 1.000000e+00 : f32
    %638 = vector.broadcast %cst_159 : f32 to vector<1x128xf32>
    %639 = arith.addf %638, %637 : vector<1x128xf32>
    %cst_160 = arith.constant 1.000000e+00 : f32
    %640 = vector.broadcast %cst_160 : f32 to vector<1x128xf32>
    %641 = arith.divf %640, %639 : vector<1x128xf32>
    %642 = math.tanh %634 : vector<1x128xf32>
    %643 = vector.extract_strided_slice %641 {offsets = [0, 32], sizes = [1, 32], strides = [1, 1]} : vector<1x128xf32> to vector<1x32xf32>
    %644 = arith.mulf %643, %542 : vector<1x32xf32>
    %645 = vector.extract_strided_slice %641 {offsets = [0, 0], sizes = [1, 32], strides = [1, 1]} : vector<1x128xf32> to vector<1x32xf32>
    %646 = vector.extract_strided_slice %642 {offsets = [0, 64], sizes = [1, 32], strides = [1, 1]} : vector<1x128xf32> to vector<1x32xf32>
    %647 = arith.mulf %645, %646 : vector<1x32xf32>
    %648 = arith.addf %644, %647 : vector<1x32xf32>
    %649 = vector.extract_strided_slice %641 {offsets = [0, 96], sizes = [1, 32], strides = [1, 1]} : vector<1x128xf32> to vector<1x32xf32>
    %650 = math.tanh %648 : vector<1x32xf32>
    %651 = arith.mulf %649, %650 : vector<1x32xf32>
    %652 = tpu.concatenate %651, %560, %561 in 1 : vector<1x32xf32>, vector<1x8xf32>, vector<1x8xf32> -> vector<1x48xf32>
    %cst_161 = arith.constant dense<0.000000e+00> : vector<1x128xf32>
    %653 = tpu.matmul %652, %282, %cst_161 {dimension_numbers = #tpu.dot_dimension_numbers<[1], [0], [0], [1], [0, 0, 1, 1], [], []>} : vector<1x48xf32>, vector<48x128xf32>, vector<1x128xf32> -> vector<1x128xf32>
    %654 = arith.addf %653, %279 : vector<1x128xf32>
    %655 = math.tanh %654 : vector<1x128xf32>
    %cst_162 = arith.constant dense<0.000000e+00> : vector<1x8xf32>
    %656 = tpu.matmul %655, %283, %cst_162 {dimension_numbers = #tpu.dot_dimension_numbers<[1], [0], [0], [1], [0, 0, 1, 1], [], []>} : vector<1x128xf32>, vector<128x8xf32>, vector<1x8xf32> -> vector<1x8xf32>
    %657 = arith.addf %656, %281 : vector<1x8xf32>
    %cst_163 = arith.constant dense<0xFF800000> : vector<1xf32>
    %658 = vector.multi_reduction <maximumf>, %657, %cst_163 [1] : vector<1x8xf32> to vector<1xf32>
    %659 = vector.shape_cast %658 : vector<1xf32> to vector<1x1xf32>
    %660 = vector.broadcast %659 : vector<1x1xf32> to vector<1x8xf32>
    %661 = arith.subf %657, %660 : vector<1x8xf32>
    %662 = math.exp %661 : vector<1x8xf32>
    %cst_164 = arith.constant dense<0.000000e+00> : vector<1xf32>
    %663 = vector.multi_reduction <add>, %662, %cst_164 [1] : vector<1x8xf32> to vector<1xf32>
    %664 = vector.shape_cast %663 : vector<1xf32> to vector<1x1xf32>
    %665 = vector.broadcast %664 : vector<1x1xf32> to vector<1x8xf32>
    %666 = arith.divf %662, %665 : vector<1x8xf32>
    %667 = arith.addf %561, %666 : vector<1x8xf32>
    %668 = vector.extract_strided_slice %666 {offsets = [0, 0], sizes = [1, 1], strides = [1, 1]} : vector<1x8xf32> to vector<1x1xf32>
    %669 = vector.extract_strided_slice %277 {offsets = [0, 0], sizes = [1, 32], strides = [1, 1]} : vector<1x256xf32> to vector<1x32xf32>
    %670 = vector.broadcast %668 : vector<1x1xf32> to vector<1x32xf32>
    %671 = arith.mulf %670, %669 : vector<1x32xf32>
    %672 = vector.extract_strided_slice %666 {offsets = [0, 1], sizes = [1, 1], strides = [1, 1]} : vector<1x8xf32> to vector<1x1xf32>
    %673 = vector.extract_strided_slice %277 {offsets = [0, 32], sizes = [1, 32], strides = [1, 1]} : vector<1x256xf32> to vector<1x32xf32>
    %674 = vector.broadcast %672 : vector<1x1xf32> to vector<1x32xf32>
    %675 = arith.mulf %674, %673 : vector<1x32xf32>
    %676 = arith.addf %671, %675 : vector<1x32xf32>
    %677 = vector.extract_strided_slice %666 {offsets = [0, 2], sizes = [1, 1], strides = [1, 1]} : vector<1x8xf32> to vector<1x1xf32>
    %678 = vector.extract_strided_slice %277 {offsets = [0, 64], sizes = [1, 32], strides = [1, 1]} : vector<1x256xf32> to vector<1x32xf32>
    %679 = vector.broadcast %677 : vector<1x1xf32> to vector<1x32xf32>
    %680 = arith.mulf %679, %678 : vector<1x32xf32>
    %681 = arith.addf %676, %680 : vector<1x32xf32>
    %682 = vector.extract_strided_slice %666 {offsets = [0, 3], sizes = [1, 1], strides = [1, 1]} : vector<1x8xf32> to vector<1x1xf32>
    %683 = vector.extract_strided_slice %277 {offsets = [0, 96], sizes = [1, 32], strides = [1, 1]} : vector<1x256xf32> to vector<1x32xf32>
    %684 = vector.broadcast %682 : vector<1x1xf32> to vector<1x32xf32>
    %685 = arith.mulf %684, %683 : vector<1x32xf32>
    %686 = arith.addf %681, %685 : vector<1x32xf32>
    %687 = vector.extract_strided_slice %666 {offsets = [0, 4], sizes = [1, 1], strides = [1, 1]} : vector<1x8xf32> to vector<1x1xf32>
    %688 = vector.extract_strided_slice %277 {offsets = [0, 128], sizes = [1, 32], strides = [1, 1]} : vector<1x256xf32> to vector<1x32xf32>
    %689 = vector.broadcast %687 : vector<1x1xf32> to vector<1x32xf32>
    %690 = arith.mulf %689, %688 : vector<1x32xf32>
    %691 = arith.addf %686, %690 : vector<1x32xf32>
    %692 = vector.extract_strided_slice %666 {offsets = [0, 5], sizes = [1, 1], strides = [1, 1]} : vector<1x8xf32> to vector<1x1xf32>
    %693 = vector.extract_strided_slice %277 {offsets = [0, 160], sizes = [1, 32], strides = [1, 1]} : vector<1x256xf32> to vector<1x32xf32>
    %694 = vector.broadcast %692 : vector<1x1xf32> to vector<1x32xf32>
    %695 = arith.mulf %694, %693 : vector<1x32xf32>
    %696 = arith.addf %691, %695 : vector<1x32xf32>
    %697 = vector.extract_strided_slice %666 {offsets = [0, 6], sizes = [1, 1], strides = [1, 1]} : vector<1x8xf32> to vector<1x1xf32>
    %698 = vector.extract_strided_slice %277 {offsets = [0, 192], sizes = [1, 32], strides = [1, 1]} : vector<1x256xf32> to vector<1x32xf32>
    %699 = vector.broadcast %697 : vector<1x1xf32> to vector<1x32xf32>
    %700 = arith.mulf %699, %698 : vector<1x32xf32>
    %701 = arith.addf %696, %700 : vector<1x32xf32>
    %702 = vector.extract_strided_slice %666 {offsets = [0, 7], sizes = [1, 1], strides = [1, 1]} : vector<1x8xf32> to vector<1x1xf32>
    %703 = vector.extract_strided_slice %277 {offsets = [0, 224], sizes = [1, 32], strides = [1, 1]} : vector<1x256xf32> to vector<1x32xf32>
    %704 = vector.broadcast %702 : vector<1x1xf32> to vector<1x32xf32>
    %705 = arith.mulf %704, %703 : vector<1x32xf32>
    %706 = arith.addf %701, %705 : vector<1x32xf32>
    %707 = tpu.concatenate %651, %706, %620 in 1 : vector<1x32xf32>, vector<1x32xf32>, vector<1x32xf32> -> vector<1x96xf32>
    %cst_165 = arith.constant dense<0.000000e+00> : vector<1x128xf32>
    %708 = tpu.matmul %707, %285, %cst_165 {dimension_numbers = #tpu.dot_dimension_numbers<[1], [0], [0], [1], [0, 0, 1, 1], [], []>} : vector<1x96xf32>, vector<96x128xf32>, vector<1x128xf32> -> vector<1x128xf32>
    %709 = arith.addf %708, %296 : vector<1x128xf32>
    %cst_166 = arith.constant 0.000000e+00 : f32
    %710 = vector.broadcast %cst_166 : f32 to vector<1x128xf32>
    %711 = arith.subf %710, %709 : vector<1x128xf32>
    %712 = math.exp %711 : vector<1x128xf32>
    %cst_167 = arith.constant 1.000000e+00 : f32
    %713 = vector.broadcast %cst_167 : f32 to vector<1x128xf32>
    %714 = arith.addf %713, %712 : vector<1x128xf32>
    %cst_168 = arith.constant 1.000000e+00 : f32
    %715 = vector.broadcast %cst_168 : f32 to vector<1x128xf32>
    %716 = arith.divf %715, %714 : vector<1x128xf32>
    %717 = math.tanh %709 : vector<1x128xf32>
    %718 = vector.extract_strided_slice %716 {offsets = [0, 32], sizes = [1, 32], strides = [1, 1]} : vector<1x128xf32> to vector<1x32xf32>
    %719 = arith.mulf %718, %617 : vector<1x32xf32>
    %720 = vector.extract_strided_slice %716 {offsets = [0, 0], sizes = [1, 32], strides = [1, 1]} : vector<1x128xf32> to vector<1x32xf32>
    %721 = vector.extract_strided_slice %717 {offsets = [0, 64], sizes = [1, 32], strides = [1, 1]} : vector<1x128xf32> to vector<1x32xf32>
    %722 = arith.mulf %720, %721 : vector<1x32xf32>
    %723 = arith.addf %719, %722 : vector<1x32xf32>
    %724 = vector.extract_strided_slice %716 {offsets = [0, 96], sizes = [1, 32], strides = [1, 1]} : vector<1x128xf32> to vector<1x32xf32>
    %725 = math.tanh %723 : vector<1x32xf32>
    %726 = arith.mulf %724, %725 : vector<1x32xf32>
    %727 = tpu.concatenate %726, %706 in 1 : vector<1x32xf32>, vector<1x32xf32> -> vector<1x64xf32>
    %cst_169 = arith.constant dense<0.000000e+00> : vector<1x16xf32>
    %728 = tpu.matmul %727, %286, %cst_169 {dimension_numbers = #tpu.dot_dimension_numbers<[1], [0], [0], [1], [0, 0, 1, 1], [], []>} : vector<1x64xf32>, vector<64x16xf32>, vector<1x16xf32> -> vector<1x16xf32>
    %729 = arith.addf %728, %297 : vector<1x16xf32>
    %cst_170 = arith.constant dense<0.000000e+00> : vector<1x32xf32>
    %730 = tpu.matmul %729, %287, %cst_170 {dimension_numbers = #tpu.dot_dimension_numbers<[1], [0], [0], [1], [0, 0, 1, 1], [], []>} : vector<1x16xf32>, vector<16x32xf32>, vector<1x32xf32> -> vector<1x32xf32>
    %731 = arith.addf %730, %290 : vector<1x32xf32>
    %cst_171 = arith.constant 0.000000e+00 : f32
    %732 = vector.broadcast %cst_171 : f32 to vector<1x32xf32>
    %733 = arith.maximumf %731, %732 : vector<1x32xf32>
    %cst_172 = arith.constant dense<0.000000e+00> : vector<1x32xf32>
    %734 = tpu.matmul %733, %288, %cst_172 {dimension_numbers = #tpu.dot_dimension_numbers<[1], [0], [0], [1], [0, 0, 1, 1], [], []>} : vector<1x32xf32>, vector<32x32xf32>, vector<1x32xf32> -> vector<1x32xf32>
    %735 = arith.addf %734, %292 : vector<1x32xf32>
    %cst_173 = arith.constant 0.000000e+00 : f32
    %736 = vector.broadcast %cst_173 : f32 to vector<1x32xf32>
    %737 = arith.maximumf %735, %736 : vector<1x32xf32>
    %738 = tpu.concatenate %737, %706, %651 in 1 : vector<1x32xf32>, vector<1x32xf32>, vector<1x32xf32> -> vector<1x96xf32>
    %cst_174 = arith.constant dense<0.000000e+00> : vector<1x128xf32>
    %739 = tpu.matmul %738, %284, %cst_174 {dimension_numbers = #tpu.dot_dimension_numbers<[1], [0], [0], [1], [0, 0, 1, 1], [], []>} : vector<1x96xf32>, vector<96x128xf32>, vector<1x128xf32> -> vector<1x128xf32>
    %740 = arith.addf %739, %294 : vector<1x128xf32>
    %cst_175 = arith.constant 0.000000e+00 : f32
    %741 = vector.broadcast %cst_175 : f32 to vector<1x128xf32>
    %742 = arith.subf %741, %740 : vector<1x128xf32>
    %743 = math.exp %742 : vector<1x128xf32>
    %cst_176 = arith.constant 1.000000e+00 : f32
    %744 = vector.broadcast %cst_176 : f32 to vector<1x128xf32>
    %745 = arith.addf %744, %743 : vector<1x128xf32>
    %cst_177 = arith.constant 1.000000e+00 : f32
    %746 = vector.broadcast %cst_177 : f32 to vector<1x128xf32>
    %747 = arith.divf %746, %745 : vector<1x128xf32>
    %748 = math.tanh %740 : vector<1x128xf32>
    %749 = vector.extract_strided_slice %747 {offsets = [0, 32], sizes = [1, 32], strides = [1, 1]} : vector<1x128xf32> to vector<1x32xf32>
    %750 = arith.mulf %749, %648 : vector<1x32xf32>
    %751 = vector.extract_strided_slice %747 {offsets = [0, 0], sizes = [1, 32], strides = [1, 1]} : vector<1x128xf32> to vector<1x32xf32>
    %752 = vector.extract_strided_slice %748 {offsets = [0, 64], sizes = [1, 32], strides = [1, 1]} : vector<1x128xf32> to vector<1x32xf32>
    %753 = arith.mulf %751, %752 : vector<1x32xf32>
    %754 = arith.addf %750, %753 : vector<1x32xf32>
    %755 = vector.extract_strided_slice %747 {offsets = [0, 96], sizes = [1, 32], strides = [1, 1]} : vector<1x128xf32> to vector<1x32xf32>
    %756 = math.tanh %754 : vector<1x32xf32>
    %757 = arith.mulf %755, %756 : vector<1x32xf32>
    %758 = tpu.concatenate %757, %666, %667 in 1 : vector<1x32xf32>, vector<1x8xf32>, vector<1x8xf32> -> vector<1x48xf32>
    %cst_178 = arith.constant dense<0.000000e+00> : vector<1x128xf32>
    %759 = tpu.matmul %758, %282, %cst_178 {dimension_numbers = #tpu.dot_dimension_numbers<[1], [0], [0], [1], [0, 0, 1, 1], [], []>} : vector<1x48xf32>, vector<48x128xf32>, vector<1x128xf32> -> vector<1x128xf32>
    %760 = arith.addf %759, %279 : vector<1x128xf32>
    %761 = math.tanh %760 : vector<1x128xf32>
    %cst_179 = arith.constant dense<0.000000e+00> : vector<1x8xf32>
    %762 = tpu.matmul %761, %283, %cst_179 {dimension_numbers = #tpu.dot_dimension_numbers<[1], [0], [0], [1], [0, 0, 1, 1], [], []>} : vector<1x128xf32>, vector<128x8xf32>, vector<1x8xf32> -> vector<1x8xf32>
    %763 = arith.addf %762, %281 : vector<1x8xf32>
    %cst_180 = arith.constant dense<0xFF800000> : vector<1xf32>
    %764 = vector.multi_reduction <maximumf>, %763, %cst_180 [1] : vector<1x8xf32> to vector<1xf32>
    %765 = vector.shape_cast %764 : vector<1xf32> to vector<1x1xf32>
    %766 = vector.broadcast %765 : vector<1x1xf32> to vector<1x8xf32>
    %767 = arith.subf %763, %766 : vector<1x8xf32>
    %768 = math.exp %767 : vector<1x8xf32>
    %cst_181 = arith.constant dense<0.000000e+00> : vector<1xf32>
    %769 = vector.multi_reduction <add>, %768, %cst_181 [1] : vector<1x8xf32> to vector<1xf32>
    %770 = vector.shape_cast %769 : vector<1xf32> to vector<1x1xf32>
    %771 = vector.broadcast %770 : vector<1x1xf32> to vector<1x8xf32>
    %772 = arith.divf %768, %771 : vector<1x8xf32>
    %773 = arith.addf %667, %772 : vector<1x8xf32>
    %774 = vector.extract_strided_slice %772 {offsets = [0, 0], sizes = [1, 1], strides = [1, 1]} : vector<1x8xf32> to vector<1x1xf32>
    %775 = vector.extract_strided_slice %277 {offsets = [0, 0], sizes = [1, 32], strides = [1, 1]} : vector<1x256xf32> to vector<1x32xf32>
    %776 = vector.broadcast %774 : vector<1x1xf32> to vector<1x32xf32>
    %777 = arith.mulf %776, %775 : vector<1x32xf32>
    %778 = vector.extract_strided_slice %772 {offsets = [0, 1], sizes = [1, 1], strides = [1, 1]} : vector<1x8xf32> to vector<1x1xf32>
    %779 = vector.extract_strided_slice %277 {offsets = [0, 32], sizes = [1, 32], strides = [1, 1]} : vector<1x256xf32> to vector<1x32xf32>
    %780 = vector.broadcast %778 : vector<1x1xf32> to vector<1x32xf32>
    %781 = arith.mulf %780, %779 : vector<1x32xf32>
    %782 = arith.addf %777, %781 : vector<1x32xf32>
    %783 = vector.extract_strided_slice %772 {offsets = [0, 2], sizes = [1, 1], strides = [1, 1]} : vector<1x8xf32> to vector<1x1xf32>
    %784 = vector.extract_strided_slice %277 {offsets = [0, 64], sizes = [1, 32], strides = [1, 1]} : vector<1x256xf32> to vector<1x32xf32>
    %785 = vector.broadcast %783 : vector<1x1xf32> to vector<1x32xf32>
    %786 = arith.mulf %785, %784 : vector<1x32xf32>
    %787 = arith.addf %782, %786 : vector<1x32xf32>
    %788 = vector.extract_strided_slice %772 {offsets = [0, 3], sizes = [1, 1], strides = [1, 1]} : vector<1x8xf32> to vector<1x1xf32>
    %789 = vector.extract_strided_slice %277 {offsets = [0, 96], sizes = [1, 32], strides = [1, 1]} : vector<1x256xf32> to vector<1x32xf32>
    %790 = vector.broadcast %788 : vector<1x1xf32> to vector<1x32xf32>
    %791 = arith.mulf %790, %789 : vector<1x32xf32>
    %792 = arith.addf %787, %791 : vector<1x32xf32>
    %793 = vector.extract_strided_slice %772 {offsets = [0, 4], sizes = [1, 1], strides = [1, 1]} : vector<1x8xf32> to vector<1x1xf32>
    %794 = vector.extract_strided_slice %277 {offsets = [0, 128], sizes = [1, 32], strides = [1, 1]} : vector<1x256xf32> to vector<1x32xf32>
    %795 = vector.broadcast %793 : vector<1x1xf32> to vector<1x32xf32>
    %796 = arith.mulf %795, %794 : vector<1x32xf32>
    %797 = arith.addf %792, %796 : vector<1x32xf32>
    %798 = vector.extract_strided_slice %772 {offsets = [0, 5], sizes = [1, 1], strides = [1, 1]} : vector<1x8xf32> to vector<1x1xf32>
    %799 = vector.extract_strided_slice %277 {offsets = [0, 160], sizes = [1, 32], strides = [1, 1]} : vector<1x256xf32> to vector<1x32xf32>
    %800 = vector.broadcast %798 : vector<1x1xf32> to vector<1x32xf32>
    %801 = arith.mulf %800, %799 : vector<1x32xf32>
    %802 = arith.addf %797, %801 : vector<1x32xf32>
    %803 = vector.extract_strided_slice %772 {offsets = [0, 6], sizes = [1, 1], strides = [1, 1]} : vector<1x8xf32> to vector<1x1xf32>
    %804 = vector.extract_strided_slice %277 {offsets = [0, 192], sizes = [1, 32], strides = [1, 1]} : vector<1x256xf32> to vector<1x32xf32>
    %805 = vector.broadcast %803 : vector<1x1xf32> to vector<1x32xf32>
    %806 = arith.mulf %805, %804 : vector<1x32xf32>
    %807 = arith.addf %802, %806 : vector<1x32xf32>
    %808 = vector.extract_strided_slice %772 {offsets = [0, 7], sizes = [1, 1], strides = [1, 1]} : vector<1x8xf32> to vector<1x1xf32>
    %809 = vector.extract_strided_slice %277 {offsets = [0, 224], sizes = [1, 32], strides = [1, 1]} : vector<1x256xf32> to vector<1x32xf32>
    %810 = vector.broadcast %808 : vector<1x1xf32> to vector<1x32xf32>
    %811 = arith.mulf %810, %809 : vector<1x32xf32>
    %812 = arith.addf %807, %811 : vector<1x32xf32>
    %813 = tpu.concatenate %757, %812, %726 in 1 : vector<1x32xf32>, vector<1x32xf32>, vector<1x32xf32> -> vector<1x96xf32>
    %cst_182 = arith.constant dense<0.000000e+00> : vector<1x128xf32>
    %814 = tpu.matmul %813, %285, %cst_182 {dimension_numbers = #tpu.dot_dimension_numbers<[1], [0], [0], [1], [0, 0, 1, 1], [], []>} : vector<1x96xf32>, vector<96x128xf32>, vector<1x128xf32> -> vector<1x128xf32>
    %815 = arith.addf %814, %296 : vector<1x128xf32>
    %cst_183 = arith.constant 0.000000e+00 : f32
    %816 = vector.broadcast %cst_183 : f32 to vector<1x128xf32>
    %817 = arith.subf %816, %815 : vector<1x128xf32>
    %818 = math.exp %817 : vector<1x128xf32>
    %cst_184 = arith.constant 1.000000e+00 : f32
    %819 = vector.broadcast %cst_184 : f32 to vector<1x128xf32>
    %820 = arith.addf %819, %818 : vector<1x128xf32>
    %cst_185 = arith.constant 1.000000e+00 : f32
    %821 = vector.broadcast %cst_185 : f32 to vector<1x128xf32>
    %822 = arith.divf %821, %820 : vector<1x128xf32>
    %823 = math.tanh %815 : vector<1x128xf32>
    %824 = vector.extract_strided_slice %822 {offsets = [0, 32], sizes = [1, 32], strides = [1, 1]} : vector<1x128xf32> to vector<1x32xf32>
    %825 = arith.mulf %824, %723 : vector<1x32xf32>
    %826 = vector.extract_strided_slice %822 {offsets = [0, 0], sizes = [1, 32], strides = [1, 1]} : vector<1x128xf32> to vector<1x32xf32>
    %827 = vector.extract_strided_slice %823 {offsets = [0, 64], sizes = [1, 32], strides = [1, 1]} : vector<1x128xf32> to vector<1x32xf32>
    %828 = arith.mulf %826, %827 : vector<1x32xf32>
    %829 = arith.addf %825, %828 : vector<1x32xf32>
    %830 = vector.extract_strided_slice %822 {offsets = [0, 96], sizes = [1, 32], strides = [1, 1]} : vector<1x128xf32> to vector<1x32xf32>
    %831 = math.tanh %829 : vector<1x32xf32>
    %832 = arith.mulf %830, %831 : vector<1x32xf32>
    %833 = tpu.concatenate %832, %812 in 1 : vector<1x32xf32>, vector<1x32xf32> -> vector<1x64xf32>
    %cst_186 = arith.constant dense<0.000000e+00> : vector<1x16xf32>
    %834 = tpu.matmul %833, %286, %cst_186 {dimension_numbers = #tpu.dot_dimension_numbers<[1], [0], [0], [1], [0, 0, 1, 1], [], []>} : vector<1x64xf32>, vector<64x16xf32>, vector<1x16xf32> -> vector<1x16xf32>
    %835 = arith.addf %834, %297 : vector<1x16xf32>
    %cst_187 = arith.constant dense<0.000000e+00> : vector<1x32xf32>
    %836 = tpu.matmul %835, %287, %cst_187 {dimension_numbers = #tpu.dot_dimension_numbers<[1], [0], [0], [1], [0, 0, 1, 1], [], []>} : vector<1x16xf32>, vector<16x32xf32>, vector<1x32xf32> -> vector<1x32xf32>
    %837 = arith.addf %836, %290 : vector<1x32xf32>
    %cst_188 = arith.constant 0.000000e+00 : f32
    %838 = vector.broadcast %cst_188 : f32 to vector<1x32xf32>
    %839 = arith.maximumf %837, %838 : vector<1x32xf32>
    %cst_189 = arith.constant dense<0.000000e+00> : vector<1x32xf32>
    %840 = tpu.matmul %839, %288, %cst_189 {dimension_numbers = #tpu.dot_dimension_numbers<[1], [0], [0], [1], [0, 0, 1, 1], [], []>} : vector<1x32xf32>, vector<32x32xf32>, vector<1x32xf32> -> vector<1x32xf32>
    %841 = arith.addf %840, %292 : vector<1x32xf32>
    %cst_190 = arith.constant 0.000000e+00 : f32
    %842 = vector.broadcast %cst_190 : f32 to vector<1x32xf32>
    %843 = arith.maximumf %841, %842 : vector<1x32xf32>
    %844 = tpu.concatenate %843, %812, %757 in 1 : vector<1x32xf32>, vector<1x32xf32>, vector<1x32xf32> -> vector<1x96xf32>
    %cst_191 = arith.constant dense<0.000000e+00> : vector<1x128xf32>
    %845 = tpu.matmul %844, %284, %cst_191 {dimension_numbers = #tpu.dot_dimension_numbers<[1], [0], [0], [1], [0, 0, 1, 1], [], []>} : vector<1x96xf32>, vector<96x128xf32>, vector<1x128xf32> -> vector<1x128xf32>
    %846 = arith.addf %845, %294 : vector<1x128xf32>
    %cst_192 = arith.constant 0.000000e+00 : f32
    %847 = vector.broadcast %cst_192 : f32 to vector<1x128xf32>
    %848 = arith.subf %847, %846 : vector<1x128xf32>
    %849 = math.exp %848 : vector<1x128xf32>
    %cst_193 = arith.constant 1.000000e+00 : f32
    %850 = vector.broadcast %cst_193 : f32 to vector<1x128xf32>
    %851 = arith.addf %850, %849 : vector<1x128xf32>
    %cst_194 = arith.constant 1.000000e+00 : f32
    %852 = vector.broadcast %cst_194 : f32 to vector<1x128xf32>
    %853 = arith.divf %852, %851 : vector<1x128xf32>
    %854 = math.tanh %846 : vector<1x128xf32>
    %855 = vector.extract_strided_slice %853 {offsets = [0, 32], sizes = [1, 32], strides = [1, 1]} : vector<1x128xf32> to vector<1x32xf32>
    %856 = arith.mulf %855, %754 : vector<1x32xf32>
    %857 = vector.extract_strided_slice %853 {offsets = [0, 0], sizes = [1, 32], strides = [1, 1]} : vector<1x128xf32> to vector<1x32xf32>
    %858 = vector.extract_strided_slice %854 {offsets = [0, 64], sizes = [1, 32], strides = [1, 1]} : vector<1x128xf32> to vector<1x32xf32>
    %859 = arith.mulf %857, %858 : vector<1x32xf32>
    %860 = arith.addf %856, %859 : vector<1x32xf32>
    %861 = vector.extract_strided_slice %853 {offsets = [0, 96], sizes = [1, 32], strides = [1, 1]} : vector<1x128xf32> to vector<1x32xf32>
    %862 = math.tanh %860 : vector<1x32xf32>
    %863 = arith.mulf %861, %862 : vector<1x32xf32>
    %864 = tpu.concatenate %863, %772, %773 in 1 : vector<1x32xf32>, vector<1x8xf32>, vector<1x8xf32> -> vector<1x48xf32>
    %cst_195 = arith.constant dense<0.000000e+00> : vector<1x128xf32>
    %865 = tpu.matmul %864, %282, %cst_195 {dimension_numbers = #tpu.dot_dimension_numbers<[1], [0], [0], [1], [0, 0, 1, 1], [], []>} : vector<1x48xf32>, vector<48x128xf32>, vector<1x128xf32> -> vector<1x128xf32>
    %866 = arith.addf %865, %279 : vector<1x128xf32>
    %867 = math.tanh %866 : vector<1x128xf32>
    %cst_196 = arith.constant dense<0.000000e+00> : vector<1x8xf32>
    %868 = tpu.matmul %867, %283, %cst_196 {dimension_numbers = #tpu.dot_dimension_numbers<[1], [0], [0], [1], [0, 0, 1, 1], [], []>} : vector<1x128xf32>, vector<128x8xf32>, vector<1x8xf32> -> vector<1x8xf32>
    %869 = arith.addf %868, %281 : vector<1x8xf32>
    %cst_197 = arith.constant dense<0xFF800000> : vector<1xf32>
    %870 = vector.multi_reduction <maximumf>, %869, %cst_197 [1] : vector<1x8xf32> to vector<1xf32>
    %871 = vector.shape_cast %870 : vector<1xf32> to vector<1x1xf32>
    %872 = vector.broadcast %871 : vector<1x1xf32> to vector<1x8xf32>
    %873 = arith.subf %869, %872 : vector<1x8xf32>
    %874 = math.exp %873 : vector<1x8xf32>
    %cst_198 = arith.constant dense<0.000000e+00> : vector<1xf32>
    %875 = vector.multi_reduction <add>, %874, %cst_198 [1] : vector<1x8xf32> to vector<1xf32>
    %876 = vector.shape_cast %875 : vector<1xf32> to vector<1x1xf32>
    %877 = vector.broadcast %876 : vector<1x1xf32> to vector<1x8xf32>
    %878 = arith.divf %874, %877 : vector<1x8xf32>
    %879 = vector.extract_strided_slice %878 {offsets = [0, 0], sizes = [1, 1], strides = [1, 1]} : vector<1x8xf32> to vector<1x1xf32>
    %880 = vector.extract_strided_slice %277 {offsets = [0, 0], sizes = [1, 32], strides = [1, 1]} : vector<1x256xf32> to vector<1x32xf32>
    %881 = vector.broadcast %879 : vector<1x1xf32> to vector<1x32xf32>
    %882 = arith.mulf %881, %880 : vector<1x32xf32>
    %883 = vector.extract_strided_slice %878 {offsets = [0, 1], sizes = [1, 1], strides = [1, 1]} : vector<1x8xf32> to vector<1x1xf32>
    %884 = vector.extract_strided_slice %277 {offsets = [0, 32], sizes = [1, 32], strides = [1, 1]} : vector<1x256xf32> to vector<1x32xf32>
    %885 = vector.broadcast %883 : vector<1x1xf32> to vector<1x32xf32>
    %886 = arith.mulf %885, %884 : vector<1x32xf32>
    %887 = arith.addf %882, %886 : vector<1x32xf32>
    %888 = vector.extract_strided_slice %878 {offsets = [0, 2], sizes = [1, 1], strides = [1, 1]} : vector<1x8xf32> to vector<1x1xf32>
    %889 = vector.extract_strided_slice %277 {offsets = [0, 64], sizes = [1, 32], strides = [1, 1]} : vector<1x256xf32> to vector<1x32xf32>
    %890 = vector.broadcast %888 : vector<1x1xf32> to vector<1x32xf32>
    %891 = arith.mulf %890, %889 : vector<1x32xf32>
    %892 = arith.addf %887, %891 : vector<1x32xf32>
    %893 = vector.extract_strided_slice %878 {offsets = [0, 3], sizes = [1, 1], strides = [1, 1]} : vector<1x8xf32> to vector<1x1xf32>
    %894 = vector.extract_strided_slice %277 {offsets = [0, 96], sizes = [1, 32], strides = [1, 1]} : vector<1x256xf32> to vector<1x32xf32>
    %895 = vector.broadcast %893 : vector<1x1xf32> to vector<1x32xf32>
    %896 = arith.mulf %895, %894 : vector<1x32xf32>
    %897 = arith.addf %892, %896 : vector<1x32xf32>
    %898 = vector.extract_strided_slice %878 {offsets = [0, 4], sizes = [1, 1], strides = [1, 1]} : vector<1x8xf32> to vector<1x1xf32>
    %899 = vector.extract_strided_slice %277 {offsets = [0, 128], sizes = [1, 32], strides = [1, 1]} : vector<1x256xf32> to vector<1x32xf32>
    %900 = vector.broadcast %898 : vector<1x1xf32> to vector<1x32xf32>
    %901 = arith.mulf %900, %899 : vector<1x32xf32>
    %902 = arith.addf %897, %901 : vector<1x32xf32>
    %903 = vector.extract_strided_slice %878 {offsets = [0, 5], sizes = [1, 1], strides = [1, 1]} : vector<1x8xf32> to vector<1x1xf32>
    %904 = vector.extract_strided_slice %277 {offsets = [0, 160], sizes = [1, 32], strides = [1, 1]} : vector<1x256xf32> to vector<1x32xf32>
    %905 = vector.broadcast %903 : vector<1x1xf32> to vector<1x32xf32>
    %906 = arith.mulf %905, %904 : vector<1x32xf32>
    %907 = arith.addf %902, %906 : vector<1x32xf32>
    %908 = vector.extract_strided_slice %878 {offsets = [0, 6], sizes = [1, 1], strides = [1, 1]} : vector<1x8xf32> to vector<1x1xf32>
    %909 = vector.extract_strided_slice %277 {offsets = [0, 192], sizes = [1, 32], strides = [1, 1]} : vector<1x256xf32> to vector<1x32xf32>
    %910 = vector.broadcast %908 : vector<1x1xf32> to vector<1x32xf32>
    %911 = arith.mulf %910, %909 : vector<1x32xf32>
    %912 = arith.addf %907, %911 : vector<1x32xf32>
    %913 = vector.extract_strided_slice %878 {offsets = [0, 7], sizes = [1, 1], strides = [1, 1]} : vector<1x8xf32> to vector<1x1xf32>
    %914 = vector.extract_strided_slice %277 {offsets = [0, 224], sizes = [1, 32], strides = [1, 1]} : vector<1x256xf32> to vector<1x32xf32>
    %915 = vector.broadcast %913 : vector<1x1xf32> to vector<1x32xf32>
    %916 = arith.mulf %915, %914 : vector<1x32xf32>
    %917 = arith.addf %912, %916 : vector<1x32xf32>
    %918 = tpu.concatenate %863, %917, %832 in 1 : vector<1x32xf32>, vector<1x32xf32>, vector<1x32xf32> -> vector<1x96xf32>
    %cst_199 = arith.constant dense<0.000000e+00> : vector<1x128xf32>
    %919 = tpu.matmul %918, %285, %cst_199 {dimension_numbers = #tpu.dot_dimension_numbers<[1], [0], [0], [1], [0, 0, 1, 1], [], []>} : vector<1x96xf32>, vector<96x128xf32>, vector<1x128xf32> -> vector<1x128xf32>
    %920 = arith.addf %919, %296 : vector<1x128xf32>
    %cst_200 = arith.constant 0.000000e+00 : f32
    %921 = vector.broadcast %cst_200 : f32 to vector<1x128xf32>
    %922 = arith.subf %921, %920 : vector<1x128xf32>
    %923 = math.exp %922 : vector<1x128xf32>
    %cst_201 = arith.constant 1.000000e+00 : f32
    %924 = vector.broadcast %cst_201 : f32 to vector<1x128xf32>
    %925 = arith.addf %924, %923 : vector<1x128xf32>
    %cst_202 = arith.constant 1.000000e+00 : f32
    %926 = vector.broadcast %cst_202 : f32 to vector<1x128xf32>
    %927 = arith.divf %926, %925 : vector<1x128xf32>
    %928 = math.tanh %920 : vector<1x128xf32>
    %929 = vector.extract_strided_slice %927 {offsets = [0, 32], sizes = [1, 32], strides = [1, 1]} : vector<1x128xf32> to vector<1x32xf32>
    %930 = arith.mulf %929, %829 : vector<1x32xf32>
    %931 = vector.extract_strided_slice %927 {offsets = [0, 0], sizes = [1, 32], strides = [1, 1]} : vector<1x128xf32> to vector<1x32xf32>
    %932 = vector.extract_strided_slice %928 {offsets = [0, 64], sizes = [1, 32], strides = [1, 1]} : vector<1x128xf32> to vector<1x32xf32>
    %933 = arith.mulf %931, %932 : vector<1x32xf32>
    %934 = arith.addf %930, %933 : vector<1x32xf32>
    %935 = vector.extract_strided_slice %927 {offsets = [0, 96], sizes = [1, 32], strides = [1, 1]} : vector<1x128xf32> to vector<1x32xf32>
    %936 = math.tanh %934 : vector<1x32xf32>
    %937 = arith.mulf %935, %936 : vector<1x32xf32>
    %938 = tpu.concatenate %937, %917 in 1 : vector<1x32xf32>, vector<1x32xf32> -> vector<1x64xf32>
    %cst_203 = arith.constant dense<0.000000e+00> : vector<1x16xf32>
    %939 = tpu.matmul %938, %286, %cst_203 {dimension_numbers = #tpu.dot_dimension_numbers<[1], [0], [0], [1], [0, 0, 1, 1], [], []>} : vector<1x64xf32>, vector<64x16xf32>, vector<1x16xf32> -> vector<1x16xf32>
    %940 = arith.addf %939, %297 : vector<1x16xf32>
    %941 = tpu.concatenate %411, %517, %623, %729, %835, %940 in 1 : vector<1x16xf32>, vector<1x16xf32>, vector<1x16xf32>, vector<1x16xf32>, vector<1x16xf32>, vector<1x16xf32> -> vector<1x96xf32>
    %c0_204 = arith.constant 0 : index
    %c0_205 = arith.constant 0 : index
    %942 = vector.load %arg20[%c0_204, %c0_205] : memref<96x192xf32, #tpu.memory_space<vmem>>, vector<96x192xf32>
    %cst_206 = arith.constant dense<0.000000e+00> : vector<1x192xf32>
    %943 = tpu.matmul %941, %942, %cst_206 {dimension_numbers = #tpu.dot_dimension_numbers<[1], [0], [0], [1], [0, 0, 1, 1], [], []>} : vector<1x96xf32>, vector<96x192xf32>, vector<1x192xf32> -> vector<1x192xf32>
    %c0_207 = arith.constant 0 : index
    %c0_208 = arith.constant 0 : index
    %c0_209 = arith.constant 0 : index
    %944 = vector.load %arg25[%c0_207, %c0_208, %c0_209] : memref<5x1x192xf32, #tpu.memory_space<vmem>>, vector<1x1x192xf32>
    %945 = vector.shape_cast %944 : vector<1x1x192xf32> to vector<1x192xf32>
    %946 = arith.addf %943, %945 : vector<1x192xf32>
    %947 = math.tanh %946 : vector<1x192xf32>
    %c0_210 = arith.constant 0 : index
    %c0_211 = arith.constant 0 : index
    %948 = vector.load %arg21[%c0_210, %c0_211] : memref<192x192xf32, #tpu.memory_space<vmem>>, vector<192x192xf32>
    %cst_212 = arith.constant dense<0.000000e+00> : vector<1x192xf32>
    %949 = tpu.matmul %947, %948, %cst_212 {dimension_numbers = #tpu.dot_dimension_numbers<[1], [0], [0], [1], [0, 0, 1, 1], [], []>} : vector<1x192xf32>, vector<192x192xf32>, vector<1x192xf32> -> vector<1x192xf32>
    %c1_213 = arith.constant 1 : index
    %c0_214 = arith.constant 0 : index
    %c0_215 = arith.constant 0 : index
    %950 = vector.load %arg25[%c1_213, %c0_214, %c0_215] : memref<5x1x192xf32, #tpu.memory_space<vmem>>, vector<1x1x192xf32>
    %951 = vector.shape_cast %950 : vector<1x1x192xf32> to vector<1x192xf32>
    %952 = arith.addf %949, %951 : vector<1x192xf32>
    %953 = math.tanh %952 : vector<1x192xf32>
    %c0_216 = arith.constant 0 : index
    %c0_217 = arith.constant 0 : index
    %954 = vector.load %arg22[%c0_216, %c0_217] : memref<192x192xf32, #tpu.memory_space<vmem>>, vector<192x192xf32>
    %cst_218 = arith.constant dense<0.000000e+00> : vector<1x192xf32>
    %955 = tpu.matmul %953, %954, %cst_218 {dimension_numbers = #tpu.dot_dimension_numbers<[1], [0], [0], [1], [0, 0, 1, 1], [], []>} : vector<1x192xf32>, vector<192x192xf32>, vector<1x192xf32> -> vector<1x192xf32>
    %c2_219 = arith.constant 2 : index
    %c0_220 = arith.constant 0 : index
    %c0_221 = arith.constant 0 : index
    %956 = vector.load %arg25[%c2_219, %c0_220, %c0_221] : memref<5x1x192xf32, #tpu.memory_space<vmem>>, vector<1x1x192xf32>
    %957 = vector.shape_cast %956 : vector<1x1x192xf32> to vector<1x192xf32>
    %958 = arith.addf %955, %957 : vector<1x192xf32>
    %959 = math.tanh %958 : vector<1x192xf32>
    %c0_222 = arith.constant 0 : index
    %c0_223 = arith.constant 0 : index
    %960 = vector.load %arg23[%c0_222, %c0_223] : memref<192x192xf32, #tpu.memory_space<vmem>>, vector<192x192xf32>
    %cst_224 = arith.constant dense<0.000000e+00> : vector<1x192xf32>
    %961 = tpu.matmul %959, %960, %cst_224 {dimension_numbers = #tpu.dot_dimension_numbers<[1], [0], [0], [1], [0, 0, 1, 1], [], []>} : vector<1x192xf32>, vector<192x192xf32>, vector<1x192xf32> -> vector<1x192xf32>
    %c3 = arith.constant 3 : index
    %c0_225 = arith.constant 0 : index
    %c0_226 = arith.constant 0 : index
    %962 = vector.load %arg25[%c3, %c0_225, %c0_226] : memref<5x1x192xf32, #tpu.memory_space<vmem>>, vector<1x1x192xf32>
    %963 = vector.shape_cast %962 : vector<1x1x192xf32> to vector<1x192xf32>
    %964 = arith.addf %961, %963 : vector<1x192xf32>
    %965 = math.tanh %964 : vector<1x192xf32>
    %c0_227 = arith.constant 0 : index
    %c0_228 = arith.constant 0 : index
    %966 = vector.load %arg24[%c0_227, %c0_228] : memref<192x96xf32, #tpu.memory_space<vmem>>, vector<192x96xf32>
    %cst_229 = arith.constant dense<0.000000e+00> : vector<1x96xf32>
    %967 = tpu.matmul %965, %966, %cst_229 {dimension_numbers = #tpu.dot_dimension_numbers<[1], [0], [0], [1], [0, 0, 1, 1], [], []>} : vector<1x192xf32>, vector<192x96xf32>, vector<1x96xf32> -> vector<1x96xf32>
    %c4 = arith.constant 4 : index
    %c0_230 = arith.constant 0 : index
    %c0_231 = arith.constant 0 : index
    %968 = vector.load %arg25[%c4, %c0_230, %c0_231] : memref<5x1x192xf32, #tpu.memory_space<vmem>>, vector<1x1x192xf32>
    %969 = vector.shape_cast %968 : vector<1x1x192xf32> to vector<1x192xf32>
    %970 = vector.extract_strided_slice %969 {offsets = [0, 0], sizes = [1, 96], strides = [1, 1]} : vector<1x192xf32> to vector<1x96xf32>
    %971 = arith.addf %967, %970 : vector<1x96xf32>
    %972 = arith.addf %941, %971 : vector<1x96xf32>
    %c0_232 = arith.constant 0 : index
    %c0_233 = arith.constant 0 : index
    %c0_234 = arith.constant 0 : index
    %973 = vector.load %arg26[%c0_232, %c0_233, %c0_234] : memref<1x1x96xf32, #tpu.memory_space<vmem>>, vector<1x1x96xf32>
    %974 = vector.shape_cast %973 : vector<1x1x96xf32> to vector<1x96xf32>
    %975 = vector.shape_cast %972 : vector<1x96xf32> to vector<1x1x96xf32>
    tpu.vector_store %arg26[%c0_232, %c0_233, %c0_234], %975 {strides = array<i32>} : memref<1x1x96xf32, #tpu.memory_space<vmem>>, vector<1x1x96xf32>,
    return
  }
  func.func @transform_0(%arg0: i32) -> (i32, i32, i32) {
    %c0_i32 = arith.constant 0 : i32
    %c0_i32_0 = arith.constant 0 : i32
    %c0_i32_1 = arith.constant 0 : i32
    return %arg0, %c0_i32, %c0_i32_0 : i32, i32, i32
  }
  func.func @transform_1(%arg0: i32) -> (i32, i32, i32) {
    %c0_i32 = arith.constant 0 : i32
    %c0_i32_0 = arith.constant 0 : i32
    %c0_i32_1 = arith.constant 0 : i32
    return %arg0, %c0_i32, %c0_i32_0 : i32, i32, i32
  }
  func.func @transform_2(%arg0: i32) -> (i32, i32) {
    %c0_i32 = arith.constant 0 : i32
    %c0_i32_0 = arith.constant 0 : i32
    %c0_i32_1 = arith.constant 0 : i32
    return %c0_i32, %c0_i32_0 : i32, i32
  }
  func.func @transform_3(%arg0: i32) -> (i32, i32) {
    %c0_i32 = arith.constant 0 : i32
    %c0_i32_0 = arith.constant 0 : i32
    %c0_i32_1 = arith.constant 0 : i32
    return %c0_i32, %c0_i32_0 : i32, i32
  }
  func.func @transform_4(%arg0: i32) -> (i32, i32) {
    %c0_i32 = arith.constant 0 : i32
    %c0_i32_0 = arith.constant 0 : i32
    %c0_i32_1 = arith.constant 0 : i32
    return %c0_i32, %c0_i32_0 : i32, i32
  }
  func.func @transform_5(%arg0: i32) -> (i32, i32, i32) {
    %c0_i32 = arith.constant 0 : i32
    %c0_i32_0 = arith.constant 0 : i32
    %c0_i32_1 = arith.constant 0 : i32
    %c0_i32_2 = arith.constant 0 : i32
    return %c0_i32, %c0_i32_0, %c0_i32_1 : i32, i32, i32
  }
  func.func @transform_6(%arg0: i32) -> (i32, i32) {
    %c0_i32 = arith.constant 0 : i32
    %c0_i32_0 = arith.constant 0 : i32
    %c0_i32_1 = arith.constant 0 : i32
    return %c0_i32, %c0_i32_0 : i32, i32
  }
  func.func @transform_7(%arg0: i32) -> (i32, i32) {
    %c0_i32 = arith.constant 0 : i32
    %c0_i32_0 = arith.constant 0 : i32
    %c0_i32_1 = arith.constant 0 : i32
    return %c0_i32, %c0_i32_0 : i32, i32
  }
  func.func @transform_8(%arg0: i32) -> (i32, i32) {
    %c0_i32 = arith.constant 0 : i32
    %c0_i32_0 = arith.constant 0 : i32
    %c0_i32_1 = arith.constant 0 : i32
    return %c0_i32, %c0_i32_0 : i32, i32
  }
  func.func @transform_9(%arg0: i32) -> (i32, i32) {
    %c0_i32 = arith.constant 0 : i32
    %c0_i32_0 = arith.constant 0 : i32
    %c0_i32_1 = arith.constant 0 : i32
    return %c0_i32, %c0_i32_0 : i32, i32
  }
  func.func @transform_10(%arg0: i32) -> (i32, i32) {
    %c0_i32 = arith.constant 0 : i32
    %c0_i32_0 = arith.constant 0 : i32
    %c0_i32_1 = arith.constant 0 : i32
    return %c0_i32, %c0_i32_0 : i32, i32
  }
  func.func @transform_11(%arg0: i32) -> (i32, i32) {
    %c0_i32 = arith.constant 0 : i32
    %c0_i32_0 = arith.constant 0 : i32
    %c0_i32_1 = arith.constant 0 : i32
    return %c0_i32, %c0_i32_0 : i32, i32
  }
  func.func @transform_12(%arg0: i32) -> (i32, i32) {
    %c0_i32 = arith.constant 0 : i32
    %c0_i32_0 = arith.constant 0 : i32
    %c0_i32_1 = arith.constant 0 : i32
    return %c0_i32, %c0_i32_0 : i32, i32
  }
  func.func @transform_13(%arg0: i32) -> (i32, i32, i32) {
    %c0_i32 = arith.constant 0 : i32
    %c0_i32_0 = arith.constant 0 : i32
    %c0_i32_1 = arith.constant 0 : i32
    %c0_i32_2 = arith.constant 0 : i32
    return %c0_i32, %c0_i32_0, %c0_i32_1 : i32, i32, i32
  }
  func.func @transform_14(%arg0: i32) -> (i32, i32) {
    %c0_i32 = arith.constant 0 : i32
    %c0_i32_0 = arith.constant 0 : i32
    %c0_i32_1 = arith.constant 0 : i32
    return %c0_i32, %c0_i32_0 : i32, i32
  }
  func.func @transform_15(%arg0: i32) -> (i32, i32) {
    %c0_i32 = arith.constant 0 : i32
    %c0_i32_0 = arith.constant 0 : i32
    %c0_i32_1 = arith.constant 0 : i32
    return %c0_i32, %c0_i32_0 : i32, i32
  }
  func.func @transform_16(%arg0: i32) -> (i32, i32, i32) {
    %c0_i32 = arith.constant 0 : i32
    %c0_i32_0 = arith.constant 0 : i32
    %c0_i32_1 = arith.constant 0 : i32
    %c0_i32_2 = arith.constant 0 : i32
    return %c0_i32, %c0_i32_0, %c0_i32_1 : i32, i32, i32
  }
  func.func @transform_17(%arg0: i32) -> (i32, i32) {
    %c0_i32 = arith.constant 0 : i32
    %c0_i32_0 = arith.constant 0 : i32
    %c0_i32_1 = arith.constant 0 : i32
    return %c0_i32, %c0_i32_0 : i32, i32
  }
  func.func @transform_18(%arg0: i32) -> (i32, i32) {
    %c0_i32 = arith.constant 0 : i32
    %c0_i32_0 = arith.constant 0 : i32
    %c0_i32_1 = arith.constant 0 : i32
    return %c0_i32, %c0_i32_0 : i32, i32
  }
  func.func @transform_19(%arg0: i32) -> (i32, i32) {
    %c0_i32 = arith.constant 0 : i32
    %c0_i32_0 = arith.constant 0 : i32
    %c0_i32_1 = arith.constant 0 : i32
    return %c0_i32, %c0_i32_0 : i32, i32
  }
  func.func @transform_20(%arg0: i32) -> (i32, i32) {
    %c0_i32 = arith.constant 0 : i32
    %c0_i32_0 = arith.constant 0 : i32
    %c0_i32_1 = arith.constant 0 : i32
    return %c0_i32, %c0_i32_0 : i32, i32
  }
  func.func @transform_21(%arg0: i32) -> (i32, i32) {
    %c0_i32 = arith.constant 0 : i32
    %c0_i32_0 = arith.constant 0 : i32
    %c0_i32_1 = arith.constant 0 : i32
    return %c0_i32, %c0_i32_0 : i32, i32
  }
  func.func @transform_22(%arg0: i32) -> (i32, i32) {
    %c0_i32 = arith.constant 0 : i32
    %c0_i32_0 = arith.constant 0 : i32
    %c0_i32_1 = arith.constant 0 : i32
    return %c0_i32, %c0_i32_0 : i32, i32
  }
  func.func @transform_23(%arg0: i32) -> (i32, i32) {
    %c0_i32 = arith.constant 0 : i32
    %c0_i32_0 = arith.constant 0 : i32
    %c0_i32_1 = arith.constant 0 : i32
    return %c0_i32, %c0_i32_0 : i32, i32
  }
  func.func @transform_24(%arg0: i32) -> (i32, i32, i32) {
    %c0_i32 = arith.constant 0 : i32
    %c0_i32_0 = arith.constant 0 : i32
    %c0_i32_1 = arith.constant 0 : i32
    %c0_i32_2 = arith.constant 0 : i32
    return %c0_i32, %c0_i32_0, %c0_i32_1 : i32, i32, i32
  }
  func.func @transform_25(%arg0: i32) -> (i32, i32, i32) {
    %c0_i32 = arith.constant 0 : i32
    %c0_i32_0 = arith.constant 0 : i32
    %c0_i32_1 = arith.constant 0 : i32
    return %arg0, %c0_i32, %c0_i32_0 : i32, i32, i32
  }
}

</mosaic_0001>

<llo_original>
// kernel: tacotron2_forward.1
$region0: #{tacotron2_forward.1}
  #allocation0 [shape = 'u32[]', space=smem, size = 0x4, offset = 0x4, fixed_abs, tag = 'smem constant byte address 0x4 - core index']
  #allocation1 [shape = 'u32[72,128]{1,0:T(1,128)}', space=vmem, size = 0x9000, scoped, tag = 'internal scratch']
  %s0 = inlined_call_operand.vmem [shape: f32[2,1,256], index: 0, kind: input, shape index: {}]
  %s1 = inlined_call_operand.vmem [shape: f32[2,1,8], index: 1, kind: input, shape index: {}]
  %s2 = inlined_call_operand.hbm [shape: f32[256,256], index: 2, kind: input, shape index: {}]
  %s3 = inlined_call_operand.hbm [shape: f32[256,256], index: 3, kind: input, shape index: {}]
  %s4 = inlined_call_operand.hbm [shape: f32[256,256], index: 4, kind: input, shape index: {}]
  %s5 = inlined_call_operand.vmem [shape: f32[3,1,256], index: 5, kind: input, shape index: {}]
  %s6 = inlined_call_operand.vmem [shape: f32[96,128], index: 6, kind: input, shape index: {}]
  %s7 = inlined_call_operand.vmem [shape: f32[1,128], index: 7, kind: input, shape index: {}]
  %s8 = inlined_call_operand.hbm [shape: f32[256,128], index: 8, kind: input, shape index: {}]
  %s9 = inlined_call_operand.vmem [shape: f32[48,128], index: 9, kind: input, shape index: {}]
  %s10 = inlined_call_operand.vmem [shape: f32[128,8], index: 10, kind: input, shape index: {}]
  %s11 = inlined_call_operand.vmem [shape: f32[16,32], index: 11, kind: input, shape index: {}]
  %s12 = inlined_call_operand.vmem [shape: f32[32,32], index: 12, kind: input, shape index: {}]
  %s13 = inlined_call_operand.vmem [shape: f32[2,1,32], index: 13, kind: input, shape index: {}]
  %s14 = inlined_call_operand.hbm [shape: f32[96,128], index: 14, kind: input, shape index: {}]
  %s15 = inlined_call_operand.hbm [shape: f32[96,128], index: 15, kind: input, shape index: {}]
  %s16 = inlined_call_operand.vmem [shape: f32[2,1,128], index: 16, kind: input, shape index: {}]
  %s17 = inlined_call_operand.vmem [shape: f32[64,16], index: 17, kind: input, shape index: {}]
  %s18 = inlined_call_operand.vmem [shape: f32[1,16], index: 18, kind: input, shape index: {}]
  %s19 = inlined_call_operand.vmem [shape: f32[96,192], index: 19, kind: input, shape index: {}]
  %s20 = inlined_call_operand.hbm [shape: f32[192,192], index: 20, kind: input, shape index: {}]
  %s21 = inlined_call_operand.hbm [shape: f32[192,192], index: 21, kind: input, shape index: {}]
  %s22 = inlined_call_operand.hbm [shape: f32[192,192], index: 22, kind: input, shape index: {}]
  %s23 = inlined_call_operand.hbm [shape: f32[192,96], index: 23, kind: input, shape index: {}]
  %s24 = inlined_call_operand.vmem [shape: f32[5,1,192], index: 24, kind: input, shape index: {}]
  %s25 = inlined_call_operand.vmem [shape: f32[2,1,96], index: 25, kind: output, shape index: {}]
  %s26 = sld [smem:[#allocation0]]
  $region173: #{tacotron2_forward.1} parent=0
    _
  %s28 = ssub.s32 1, %s26
  %s29 = scalar_select 0, %s28, %s26
  $region1: #{tacotron2_forward.1} parent=0
    #allocation2 [shape = 'u8[262144]{0}', space=vmem, size = 0x40000, scoped, tag = 'input window, operand 2, single buffered']
    #allocation3 [shape = 's32[2]{0}', space=sflag, size = 0x8, scoped, tag = 'scoped memory for tacotron2_forward.1']
    #allocation4 [shape = 'u8[262144]{0}', space=vmem, size = 0x40000, scoped, tag = 'input window, operand 3, single buffered']
    #allocation5 [shape = 's32[1]{0}', space=sflag, size = 0x4, scoped, tag = 'scoped memory for tacotron2_forward.1']
    #allocation6 [shape = 'u8[262144]{0}', space=vmem, size = 0x40000, scoped, tag = 'input window, operand 4, single buffered']
    #allocation7 [shape = 'u8[131072]{0}', space=vmem, size = 0x20000, scoped, tag = 'input window, operand 8, single buffered']
    #allocation8 [shape = 's32[1]{0}', space=sflag, size = 0x4, scoped, tag = 'scoped memory for tacotron2_forward.1']
    #allocation9 [shape = 'u8[49152]{0}', space=vmem, size = 0xc000, scoped, tag = 'input window, operand 14, single buffered']
    #allocation10 [shape = 'u8[49152]{0}', space=vmem, size = 0xc000, scoped, tag = 'input window, operand 15, single buffered']
    #allocation11 [shape = 's32[1]{0}', space=sflag, size = 0x4, scoped, tag = 'scoped memory for tacotron2_forward.1']
    #allocation12 [shape = 'u8[196608]{0}', space=vmem, size = 0x30000, scoped, tag = 'input window, operand 20, single buffered']
    #allocation13 [shape = 'u8[196608]{0}', space=vmem, size = 0x30000, scoped, tag = 'input window, operand 21, single buffered']
    #allocation14 [shape = 's32[1]{0}', space=sflag, size = 0x4, scoped, tag = 'scoped memory for tacotron2_forward.1']
    #allocation15 [shape = 'u8[196608]{0}', space=vmem, size = 0x30000, scoped, tag = 'input window, operand 22, single buffered']
    #allocation16 [shape = 'u8[98304]{0}', space=vmem, size = 0x18000, scoped, tag = 'input window, operand 23, single buffered']
    #allocation17 [shape = 's32[1]{0}', space=sflag, size = 0x4, scoped, tag = 'scoped memory for tacotron2_forward.1']
    %30 = vsyncpa [#allocation3], 0
    %31 = vsyncpa [#allocation5], 0
    %32 = vsyncpa [#allocation8], 0
    %33 = vsyncpa [#allocation11], 0
    %34 = vsyncpa [#allocation14], 0
    %35 = vsyncpa [#allocation17], 0
    loop: start=0, step=1, limit=4
    $region2: #{tacotron2_forward.1} parent=1 // loop_pre_header
      _
    $region3: #{tacotron2_forward.1} parent=1 // loop_header
      %s37 = sphi 0, %s41
      %p38 = scmp.ge.s32.totalorder %s37, 4
      %s47 = sphi 0, %s49
      %s50 = sphi 0, %s47
      %s51 = sphi 0, %s50
      %s67 = sphi 0, %s51
      %s73 = sphi 0, %s75
      %s76 = sphi 0, %s73
      %s77 = sphi 0, %s76
      %s93 = sphi 0, %s77
      %s97 = sphi 0, %s97
      %s99 = sphi 0, %s97
      %s100 = sphi 0, %s99
      %s114 = sphi 0, %s100
      %s118 = sphi 0, %s118
      %s120 = sphi 0, %s118
      %s121 = sphi 0, %s120
      %s135 = sphi 0, %s121
      %s139 = sphi 0, %s139
      %s141 = sphi 0, %s139
      %s142 = sphi 0, %s141
      %s156 = sphi 0, %s142
      %s160 = sphi 0, %s160
      %s162 = sphi 0, %s160
      %s163 = sphi 0, %s162
      %s177 = sphi 0, %s163
      %s181 = sphi 0, %s181
      %s183 = sphi 0, %s181
      %s184 = sphi 0, %s183
      %s198 = sphi 0, %s184
      %s202 = sphi 0, %s202
      %s204 = sphi 0, %s202
      %s205 = sphi 0, %s204
      %s219 = sphi 0, %s205
      %s223 = sphi 0, %s223
      %s225 = sphi 0, %s223
      %s226 = sphi 0, %s225
      %s240 = sphi 0, %s226
      %s244 = sphi 0, %s244
      %s246 = sphi 0, %s244
      %s247 = sphi 0, %s246
      %s261 = sphi 0, %s247
      %s265 = sphi 0, %s265
      %s267 = sphi 0, %s265
      %s268 = sphi 0, %s267
      %s282 = sphi 0, %s268
      %s286 = sphi 0, %s286
      %s288 = sphi 0, %s286
      %s289 = sphi 0, %s288
      %s303 = sphi 0, %s289
      %s307 = sphi 0, %s307
      %s309 = sphi 0, %s307
      %s310 = sphi 0, %s309
      %s324 = sphi 0, %s310
      %s328 = sphi 0, %s328
      %s330 = sphi 0, %s328
      %s331 = sphi 0, %s330
      %s345 = sphi 0, %s331
      %s349 = sphi 0, %s349
      %s351 = sphi 0, %s349
      %s352 = sphi 0, %s351
      %s366 = sphi 0, %s352
      %s370 = sphi 0, %s370
      %s372 = sphi 0, %s370
      %s373 = sphi 0, %s372
      %s387 = sphi 0, %s373
      %s391 = sphi 0, %s391
      %s393 = sphi 0, %s391
      %s394 = sphi 0, %s393
      %s408 = sphi 0, %s394
      %s412 = sphi 0, %s412
      %s414 = sphi 0, %s412
      %s415 = sphi 0, %s414
      %s429 = sphi 0, %s415
      %s433 = sphi 0, %s433
      %s435 = sphi 0, %s433
      %s436 = sphi 0, %s435
      %s450 = sphi 0, %s436
      %s454 = sphi 0, %s454
      %s456 = sphi 0, %s454
      %s457 = sphi 0, %s456
      %s471 = sphi 0, %s457
      %s475 = sphi 0, %s475
      %s477 = sphi 0, %s475
      %s478 = sphi 0, %s477
      %s492 = sphi 0, %s478
      %s496 = sphi 0, %s496
      %s498 = sphi 0, %s496
      %s499 = sphi 0, %s498
      %s513 = sphi 0, %s499
      %s517 = sphi 0, %s517
      %s519 = sphi 0, %s517
      %s520 = sphi 0, %s519
      %s534 = sphi 0, %s520
      %s538 = sphi 0, %s538
      %s540 = sphi 0, %s538
      %s541 = sphi 0, %s540
      %s555 = sphi 0, %s541
      %s559 = sphi 0, %s559
      %s561 = sphi 0, %s559
      %s562 = sphi 0, %s561
      %s576 = sphi 0, %s562
      %s582 = sphi 0, %s584
      %s585 = sphi 0, %s582
      %s586 = sphi 0, %s585
      %s602 = sphi 0, %s586
    $region4: #{tacotron2_forward.1} parent=1 // loop_header_branch
      %40 = sbr.rel (%p38) target = $region8
    $region5: #{tacotron2_forward.1} parent=1 // loop_body
      %s42 = ssub.s32 %s37, 1
      %s43 = ssub.s32 %s37, 2
      %s44 = sadd.s32 %s37, 1
      %s45 = ssub.s32 %s37, %s44
      %p46 = scmp.eq.s32.totalorder %s45, 0
      %s48 = sadd.s32 %s47, 1
      %s49 = scalar_select %p46, %s47, %s48
      %p52 = pneg %p46
      %p53 = scmp.eq.s32.totalorder %s37, 1
      %p54 = por %p52, %p53
      %p55 = scmp.ne.s32.totalorder %s47, %s50
      %p56 = scmp.eq.s32.totalorder %s37, 0
      %p57 = por %p55, %p56
      %p58 = scmp.ne.s32.totalorder %s47, %s50
      %p59 = scmp.eq.s32.totalorder %s42, 1
      %p60 = por %p58, %p59
      %p61 = scmp.ne.s32.totalorder %s50, %s51
      %p62 = scmp.eq.s32.totalorder %s42, 0
      %p63 = por %p61, %p62
      %p64 = scmp.ne.s32.totalorder %s50, %s51
      %p65 = scmp.eq.s32.totalorder %s43, 1
      %p66 = por %p64, %p65
      %p68 = scmp.ne.s32.totalorder %s51, %s67
      %p69 = scmp.eq.s32.totalorder %s43, 0
      %p70 = por %p68, %p69
      %s71 = ssub.s32 %s37, %s44
      %p72 = scmp.eq.s32.totalorder %s71, 0
      %s74 = sadd.s32 %s73, 1
      %s75 = scalar_select %p72, %s73, %s74
      %p78 = pneg %p72
      %p79 = scmp.eq.s32.totalorder %s37, 1
      %p80 = por %p78, %p79
      %p81 = scmp.ne.s32.totalorder %s73, %s76
      %p82 = scmp.eq.s32.totalorder %s37, 0
      %p83 = por %p81, %p82
      %p84 = scmp.ne.s32.totalorder %s73, %s76
      %p85 = scmp.eq.s32.totalorder %s42, 1
      %p86 = por %p84, %p85
      %p87 = scmp.ne.s32.totalorder %s76, %s77
      %p88 = scmp.eq.s32.totalorder %s42, 0
      %p89 = por %p87, %p88
      %p90 = scmp.ne.s32.totalorder %s76, %s77
      %p91 = scmp.eq.s32.totalorder %s43, 1
      %p92 = por %p90, %p91
      %p94 = scmp.ne.s32.totalorder %s77, %s93
      %p95 = scmp.eq.s32.totalorder %s43, 0
      %p96 = por %p94, %p95
      %s98 = sadd.s32 %s97, 1
      %p101 = scmp.eq.s32.totalorder %s37, 1
      %p102 = scmp.ne.s32.totalorder %s97, %s99
      %p103 = scmp.eq.s32.totalorder %s37, 0
      %p104 = por %p102, %p103
      %p105 = scmp.ne.s32.totalorder %s97, %s99
      %p106 = scmp.eq.s32.totalorder %s42, 1
      %p107 = por %p105, %p106
      %p108 = scmp.ne.s32.totalorder %s99, %s100
      %p109 = scmp.eq.s32.totalorder %s42, 0
      %p110 = por %p108, %p109
      %p111 = scmp.ne.s32.totalorder %s99, %s100
      %p112 = scmp.eq.s32.totalorder %s43, 1
      %p113 = por %p111, %p112
      %p115 = scmp.ne.s32.totalorder %s100, %s114
      %p116 = scmp.eq.s32.totalorder %s43, 0
      %p117 = por %p115, %p116
      %s119 = sadd.s32 %s118, 1
      %p122 = scmp.eq.s32.totalorder %s37, 1
      %p123 = scmp.ne.s32.totalorder %s118, %s120
      %p124 = scmp.eq.s32.totalorder %s37, 0
      %p125 = por %p123, %p124
      %p126 = scmp.ne.s32.totalorder %s118, %s120
      %p127 = scmp.eq.s32.totalorder %s42, 1
      %p128 = por %p126, %p127
      %p129 = scmp.ne.s32.totalorder %s120, %s121
      %p130 = scmp.eq.s32.totalorder %s42, 0
      %p131 = por %p129, %p130
      %p132 = scmp.ne.s32.totalorder %s120, %s121
      %p133 = scmp.eq.s32.totalorder %s43, 1
      %p134 = por %p132, %p133
      %p136 = scmp.ne.s32.totalorder %s121, %s135
      %p137 = scmp.eq.s32.totalorder %s43, 0
      %p138 = por %p136, %p137
      %s140 = sadd.s32 %s139, 1
      %p143 = scmp.eq.s32.totalorder %s37, 1
      %p144 = scmp.ne.s32.totalorder %s139, %s141
      %p145 = scmp.eq.s32.totalorder %s37, 0
      %p146 = por %p144, %p145
      %p147 = scmp.ne.s32.totalorder %s139, %s141
      %p148 = scmp.eq.s32.totalorder %s42, 1
      %p149 = por %p147, %p148
      %p150 = scmp.ne.s32.totalorder %s141, %s142
      %p151 = scmp.eq.s32.totalorder %s42, 0
      %p152 = por %p150, %p151
      %p153 = scmp.ne.s32.totalorder %s141, %s142
      %p154 = scmp.eq.s32.totalorder %s43, 1
      %p155 = por %p153, %p154
      %p157 = scmp.ne.s32.totalorder %s142, %s156
      %p158 = scmp.eq.s32.totalorder %s43, 0
      %p159 = por %p157, %p158
      %s161 = sadd.s32 %s160, 1
      %p164 = scmp.eq.s32.totalorder %s37, 1
      %p165 = scmp.ne.s32.totalorder %s160, %s162
      %p166 = scmp.eq.s32.totalorder %s37, 0
      %p167 = por %p165, %p166
      %p168 = scmp.ne.s32.totalorder %s160, %s162
      %p169 = scmp.eq.s32.totalorder %s42, 1
      %p170 = por %p168, %p169
      %p171 = scmp.ne.s32.totalorder %s162, %s163
      %p172 = scmp.eq.s32.totalorder %s42, 0
      %p173 = por %p171, %p172
      %p174 = scmp.ne.s32.totalorder %s162, %s163
      %p175 = scmp.eq.s32.totalorder %s43, 1
      %p176 = por %p174, %p175
      %p178 = scmp.ne.s32.totalorder %s163, %s177
      %p179 = scmp.eq.s32.totalorder %s43, 0
      %p180 = por %p178, %p179
      %s182 = sadd.s32 %s181, 1
      %p185 = scmp.eq.s32.totalorder %s37, 1
      %p186 = scmp.ne.s32.totalorder %s181, %s183
      %p187 = scmp.eq.s32.totalorder %s37, 0
      %p188 = por %p186, %p187
      %p189 = scmp.ne.s32.totalorder %s181, %s183
      %p190 = scmp.eq.s32.totalorder %s42, 1
      %p191 = por %p189, %p190
      %p192 = scmp.ne.s32.totalorder %s183, %s184
      %p193 = scmp.eq.s32.totalorder %s42, 0
      %p194 = por %p192, %p193
      %p195 = scmp.ne.s32.totalorder %s183, %s184
      %p196 = scmp.eq.s32.totalorder %s43, 1
      %p197 = por %p195, %p196
      %p199 = scmp.ne.s32.totalorder %s184, %s198
      %p200 = scmp.eq.s32.totalorder %s43, 0
      %p201 = por %p199, %p200
      %s203 = sadd.s32 %s202, 1
      %p206 = scmp.eq.s32.totalorder %s37, 1
      %p207 = scmp.ne.s32.totalorder %s202, %s204
      %p208 = scmp.eq.s32.totalorder %s37, 0
      %p209 = por %p207, %p208
      %p210 = scmp.ne.s32.totalorder %s202, %s204
      %p211 = scmp.eq.s32.totalorder %s42, 1
      %p212 = por %p210, %p211
      %p213 = scmp.ne.s32.totalorder %s204, %s205
      %p214 = scmp.eq.s32.totalorder %s42, 0
      %p215 = por %p213, %p214
      %p216 = scmp.ne.s32.totalorder %s204, %s205
      %p217 = scmp.eq.s32.totalorder %s43, 1
      %p218 = por %p216, %p217
      %p220 = scmp.ne.s32.totalorder %s205, %s219
      %p221 = scmp.eq.s32.totalorder %s43, 0
      %p222 = por %p220, %p221
      %s224 = sadd.s32 %s223, 1
      %p227 = scmp.eq.s32.totalorder %s37, 1
      %p228 = scmp.ne.s32.totalorder %s223, %s225
      %p229 = scmp.eq.s32.totalorder %s37, 0
      %p230 = por %p228, %p229
      %p231 = scmp.ne.s32.totalorder %s223, %s225
      %p232 = scmp.eq.s32.totalorder %s42, 1
      %p233 = por %p231, %p232
      %p234 = scmp.ne.s32.totalorder %s225, %s226
      %p235 = scmp.eq.s32.totalorder %s42, 0
      %p236 = por %p234, %p235
      %p237 = scmp.ne.s32.totalorder %s225, %s226
      %p238 = scmp.eq.s32.totalorder %s43, 1
      %p239 = por %p237, %p238
      %p241 = scmp.ne.s32.totalorder %s226, %s240
      %p242 = scmp.eq.s32.totalorder %s43, 0
      %p243 = por %p241, %p242
      %s245 = sadd.s32 %s244, 1
      %p248 = scmp.eq.s32.totalorder %s37, 1
      %p249 = scmp.ne.s32.totalorder %s244, %s246
      %p250 = scmp.eq.s32.totalorder %s37, 0
      %p251 = por %p249, %p250
      %p252 = scmp.ne.s32.totalorder %s244, %s246
      %p253 = scmp.eq.s32.totalorder %s42, 1
      %p254 = por %p252, %p253
      %p255 = scmp.ne.s32.totalorder %s246, %s247
      %p256 = scmp.eq.s32.totalorder %s42, 0
      %p257 = por %p255, %p256
      %p258 = scmp.ne.s32.totalorder %s246, %s247
      %p259 = scmp.eq.s32.totalorder %s43, 1
      %p260 = por %p258, %p259
      %p262 = scmp.ne.s32.totalorder %s247, %s261
      %p263 = scmp.eq.s32.totalorder %s43, 0
      %p264 = por %p262, %p263
      %s266 = sadd.s32 %s265, 1
      %p269 = scmp.eq.s32.totalorder %s37, 1
      %p270 = scmp.ne.s32.totalorder %s265, %s267
      %p271 = scmp.eq.s32.totalorder %s37, 0
      %p272 = por %p270, %p271
      %p273 = scmp.ne.s32.totalorder %s265, %s267
      %p274 = scmp.eq.s32.totalorder %s42, 1
      %p275 = por %p273, %p274
      %p276 = scmp.ne.s32.totalorder %s267, %s268
      %p277 = scmp.eq.s32.totalorder %s42, 0
      %p278 = por %p276, %p277
      %p279 = scmp.ne.s32.totalorder %s267, %s268
      %p280 = scmp.eq.s32.totalorder %s43, 1
      %p281 = por %p279, %p280
      %p283 = scmp.ne.s32.totalorder %s268, %s282
      %p284 = scmp.eq.s32.totalorder %s43, 0
      %p285 = por %p283, %p284
      %s287 = sadd.s32 %s286, 1
      %p290 = scmp.eq.s32.totalorder %s37, 1
      %p291 = scmp.ne.s32.totalorder %s286, %s288
      %p292 = scmp.eq.s32.totalorder %s37, 0
      %p293 = por %p291, %p292
      %p294 = scmp.ne.s32.totalorder %s286, %s288
      %p295 = scmp.eq.s32.totalorder %s42, 1
      %p296 = por %p294, %p295
      %p297 = scmp.ne.s32.totalorder %s288, %s289
      %p298 = scmp.eq.s32.totalorder %s42, 0
      %p299 = por %p297, %p298
      %p300 = scmp.ne.s32.totalorder %s288, %s289
      %p301 = scmp.eq.s32.totalorder %s43, 1
      %p302 = por %p300, %p301
      %p304 = scmp.ne.s32.totalorder %s289, %s303
      %p305 = scmp.eq.s32.totalorder %s43, 0
      %p306 = por %p304, %p305
      %s308 = sadd.s32 %s307, 1
      %p311 = scmp.eq.s32.totalorder %s37, 1
      %p312 = scmp.ne.s32.totalorder %s307, %s309
      %p313 = scmp.eq.s32.totalorder %s37, 0
      %p314 = por %p312, %p313
      %p315 = scmp.ne.s32.totalorder %s307, %s309
      %p316 = scmp.eq.s32.totalorder %s42, 1
      %p317 = por %p315, %p316
      %p318 = scmp.ne.s32.totalorder %s309, %s310
      %p319 = scmp.eq.s32.totalorder %s42, 0
      %p320 = por %p318, %p319
      %p321 = scmp.ne.s32.totalorder %s309, %s310
      %p322 = scmp.eq.s32.totalorder %s43, 1
      %p323 = por %p321, %p322
      %p325 = scmp.ne.s32.totalorder %s310, %s324
      %p326 = scmp.eq.s32.totalorder %s43, 0
      %p327 = por %p325, %p326
      %s329 = sadd.s32 %s328, 1
      %p332 = scmp.eq.s32.totalorder %s37, 1
      %p333 = scmp.ne.s32.totalorder %s328, %s330
      %p334 = scmp.eq.s32.totalorder %s37, 0
      %p335 = por %p333, %p334
      %p336 = scmp.ne.s32.totalorder %s328, %s330
      %p337 = scmp.eq.s32.totalorder %s42, 1
      %p338 = por %p336, %p337
      %p339 = scmp.ne.s32.totalorder %s330, %s331
      %p340 = scmp.eq.s32.totalorder %s42, 0
      %p341 = por %p339, %p340
      %p342 = scmp.ne.s32.totalorder %s330, %s331
      %p343 = scmp.eq.s32.totalorder %s43, 1
      %p344 = por %p342, %p343
      %p346 = scmp.ne.s32.totalorder %s331, %s345
      %p347 = scmp.eq.s32.totalorder %s43, 0
      %p348 = por %p346, %p347
      %s350 = sadd.s32 %s349, 1
      %p353 = scmp.eq.s32.totalorder %s37, 1
      %p354 = scmp.ne.s32.totalorder %s349, %s351
      %p355 = scmp.eq.s32.totalorder %s37, 0
      %p356 = por %p354, %p355
      %p357 = scmp.ne.s32.totalorder %s349, %s351
      %p358 = scmp.eq.s32.totalorder %s42, 1
      %p359 = por %p357, %p358
      %p360 = scmp.ne.s32.totalorder %s351, %s352
      %p361 = scmp.eq.s32.totalorder %s42, 0
      %p362 = por %p360, %p361
      %p363 = scmp.ne.s32.totalorder %s351, %s352
      %p364 = scmp.eq.s32.totalorder %s43, 1
      %p365 = por %p363, %p364
      %p367 = scmp.ne.s32.totalorder %s352, %s366
      %p368 = scmp.eq.s32.totalorder %s43, 0
      %p369 = por %p367, %p368
      %s371 = sadd.s32 %s370, 1
      %p374 = scmp.eq.s32.totalorder %s37, 1
      %p375 = scmp.ne.s32.totalorder %s370, %s372
      %p376 = scmp.eq.s32.totalorder %s37, 0
      %p377 = por %p375, %p376
      %p378 = scmp.ne.s32.totalorder %s370, %s372
      %p379 = scmp.eq.s32.totalorder %s42, 1
      %p380 = por %p378, %p379
      %p381 = scmp.ne.s32.totalorder %s372, %s373
      %p382 = scmp.eq.s32.totalorder %s42, 0
      %p383 = por %p381, %p382
      %p384 = scmp.ne.s32.totalorder %s372, %s373
      %p385 = scmp.eq.s32.totalorder %s43, 1
      %p386 = por %p384, %p385
      %p388 = scmp.ne.s32.totalorder %s373, %s387
      %p389 = scmp.eq.s32.totalorder %s43, 0
      %p390 = por %p388, %p389
      %s392 = sadd.s32 %s391, 1
      %p395 = scmp.eq.s32.totalorder %s37, 1
      %p396 = scmp.ne.s32.totalorder %s391, %s393
      %p397 = scmp.eq.s32.totalorder %s37, 0
      %p398 = por %p396, %p397
      %p399 = scmp.ne.s32.totalorder %s391, %s393
      %p400 = scmp.eq.s32.totalorder %s42, 1
      %p401 = por %p399, %p400
      %p402 = scmp.ne.s32.totalorder %s393, %s394
      %p403 = scmp.eq.s32.totalorder %s42, 0
      %p404 = por %p402, %p403
      %p405 = scmp.ne.s32.totalorder %s393, %s394
      %p406 = scmp.eq.s32.totalorder %s43, 1
      %p407 = por %p405, %p406
      %p409 = scmp.ne.s32.totalorder %s394, %s408
      %p410 = scmp.eq.s32.totalorder %s43, 0
      %p411 = por %p409, %p410
      %s413 = sadd.s32 %s412, 1
      %p416 = scmp.eq.s32.totalorder %s37, 1
      %p417 = scmp.ne.s32.totalorder %s412, %s414
      %p418 = scmp.eq.s32.totalorder %s37, 0
      %p419 = por %p417, %p418
      %p420 = scmp.ne.s32.totalorder %s412, %s414
      %p421 = scmp.eq.s32.totalorder %s42, 1
      %p422 = por %p420, %p421
      %p423 = scmp.ne.s32.totalorder %s414, %s415
      %p424 = scmp.eq.s32.totalorder %s42, 0
      %p425 = por %p423, %p424
      %p426 = scmp.ne.s32.totalorder %s414, %s415
      %p427 = scmp.eq.s32.totalorder %s43, 1
      %p428 = por %p426, %p427
      %p430 = scmp.ne.s32.totalorder %s415, %s429
      %p431 = scmp.eq.s32.totalorder %s43, 0
      %p432 = por %p430, %p431
      %s434 = sadd.s32 %s433, 1
      %p437 = scmp.eq.s32.totalorder %s37, 1
      %p438 = scmp.ne.s32.totalorder %s433, %s435
      %p439 = scmp.eq.s32.totalorder %s37, 0
      %p440 = por %p438, %p439
      %p441 = scmp.ne.s32.totalorder %s433, %s435
      %p442 = scmp.eq.s32.totalorder %s42, 1
      %p443 = por %p441, %p442
      %p444 = scmp.ne.s32.totalorder %s435, %s436
      %p445 = scmp.eq.s32.totalorder %s42, 0
      %p446 = por %p444, %p445
      %p447 = scmp.ne.s32.totalorder %s435, %s436
      %p448 = scmp.eq.s32.totalorder %s43, 1
      %p449 = por %p447, %p448
      %p451 = scmp.ne.s32.totalorder %s436, %s450
      %p452 = scmp.eq.s32.totalorder %s43, 0
      %p453 = por %p451, %p452
      %s455 = sadd.s32 %s454, 1
      %p458 = scmp.eq.s32.totalorder %s37, 1
      %p459 = scmp.ne.s32.totalorder %s454, %s456
      %p460 = scmp.eq.s32.totalorder %s37, 0
      %p461 = por %p459, %p460
      %p462 = scmp.ne.s32.totalorder %s454, %s456
      %p463 = scmp.eq.s32.totalorder %s42, 1
      %p464 = por %p462, %p463
      %p465 = scmp.ne.s32.totalorder %s456, %s457
      %p466 = scmp.eq.s32.totalorder %s42, 0
      %p467 = por %p465, %p466
      %p468 = scmp.ne.s32.totalorder %s456, %s457
      %p469 = scmp.eq.s32.totalorder %s43, 1
      %p470 = por %p468, %p469
      %p472 = scmp.ne.s32.totalorder %s457, %s471
      %p473 = scmp.eq.s32.totalorder %s43, 0
      %p474 = por %p472, %p473
      %s476 = sadd.s32 %s475, 1
      %p479 = scmp.eq.s32.totalorder %s37, 1
      %p480 = scmp.ne.s32.totalorder %s475, %s477
      %p481 = scmp.eq.s32.totalorder %s37, 0
      %p482 = por %p480, %p481
      %p483 = scmp.ne.s32.totalorder %s475, %s477
      %p484 = scmp.eq.s32.totalorder %s42, 1
      %p485 = por %p483, %p484
      %p486 = scmp.ne.s32.totalorder %s477, %s478
      %p487 = scmp.eq.s32.totalorder %s42, 0
      %p488 = por %p486, %p487
      %p489 = scmp.ne.s32.totalorder %s477, %s478
      %p490 = scmp.eq.s32.totalorder %s43, 1
      %p491 = por %p489, %p490
      %p493 = scmp.ne.s32.totalorder %s478, %s492
      %p494 = scmp.eq.s32.totalorder %s43, 0
      %p495 = por %p493, %p494
      %s497 = sadd.s32 %s496, 1
      %p500 = scmp.eq.s32.totalorder %s37, 1
      %p501 = scmp.ne.s32.totalorder %s496, %s498
      %p502 = scmp.eq.s32.totalorder %s37, 0
      %p503 = por %p501, %p502
      %p504 = scmp.ne.s32.totalorder %s496, %s498
      %p505 = scmp.eq.s32.totalorder %s42, 1
      %p506 = por %p504, %p505
      %p507 = scmp.ne.s32.totalorder %s498, %s499
      %p508 = scmp.eq.s32.totalorder %s42, 0
      %p509 = por %p507, %p508
      %p510 = scmp.ne.s32.totalorder %s498, %s499
      %p511 = scmp.eq.s32.totalorder %s43, 1
      %p512 = por %p510, %p511
      %p514 = scmp.ne.s32.totalorder %s499, %s513
      %p515 = scmp.eq.s32.totalorder %s43, 0
      %p516 = por %p514, %p515
      %s518 = sadd.s32 %s517, 1
      %p521 = scmp.eq.s32.totalorder %s37, 1
      %p522 = scmp.ne.s32.totalorder %s517, %s519
      %p523 = scmp.eq.s32.totalorder %s37, 0
      %p524 = por %p522, %p523
      %p525 = scmp.ne.s32.totalorder %s517, %s519
      %p526 = scmp.eq.s32.totalorder %s42, 1
      %p527 = por %p525, %p526
      %p528 = scmp.ne.s32.totalorder %s519, %s520
      %p529 = scmp.eq.s32.totalorder %s42, 0
      %p530 = por %p528, %p529
      %p531 = scmp.ne.s32.totalorder %s519, %s520
      %p532 = scmp.eq.s32.totalorder %s43, 1
      %p533 = por %p531, %p532
      %p535 = scmp.ne.s32.totalorder %s520, %s534
      %p536 = scmp.eq.s32.totalorder %s43, 0
      %p537 = por %p535, %p536
      %s539 = sadd.s32 %s538, 1
      %p542 = scmp.eq.s32.totalorder %s37, 1
      %p543 = scmp.ne.s32.totalorder %s538, %s540
      %p544 = scmp.eq.s32.totalorder %s37, 0
      %p545 = por %p543, %p544
      %p546 = scmp.ne.s32.totalorder %s538, %s540
      %p547 = scmp.eq.s32.totalorder %s42, 1
      %p548 = por %p546, %p547
      %p549 = scmp.ne.s32.totalorder %s540, %s541
      %p550 = scmp.eq.s32.totalorder %s42, 0
      %p551 = por %p549, %p550
      %p552 = scmp.ne.s32.totalorder %s540, %s541
      %p553 = scmp.eq.s32.totalorder %s43, 1
      %p554 = por %p552, %p553
      %p556 = scmp.ne.s32.totalorder %s541, %s555
      %p557 = scmp.eq.s32.totalorder %s43, 0
      %p558 = por %p556, %p557
      %s560 = sadd.s32 %s559, 1
      %p563 = scmp.eq.s32.totalorder %s37, 1
      %p564 = scmp.ne.s32.totalorder %s559, %s561
      %p565 = scmp.eq.s32.totalorder %s37, 0
      %p566 = por %p564, %p565
      %p567 = scmp.ne.s32.totalorder %s559, %s561
      %p568 = scmp.eq.s32.totalorder %s42, 1
      %p569 = por %p567, %p568
      %p570 = scmp.ne.s32.totalorder %s561, %s562
      %p571 = scmp.eq.s32.totalorder %s42, 0
      %p572 = por %p570, %p571
      %p573 = scmp.ne.s32.totalorder %s561, %s562
      %p574 = scmp.eq.s32.totalorder %s43, 1
      %p575 = por %p573, %p574
      %p577 = scmp.ne.s32.totalorder %s562, %s576
      %p578 = scmp.eq.s32.totalorder %s43, 0
      %p579 = por %p577, %p578
      %s580 = ssub.s32 %s37, %s44
      %p581 = scmp.eq.s32.totalorder %s580, 0
      %s583 = sadd.s32 %s582, 1
      %s584 = scalar_select %p581, %s582, %s583
      %p587 = pneg %p581
      %p588 = scmp.eq.s32.totalorder %s37, 1
      %p589 = por %p587, %p588
      %p590 = scmp.ne.s32.totalorder %s582, %s585
      %p591 = scmp.eq.s32.totalorder %s37, 0
      %p592 = por %p590, %p591
      %p593 = scmp.ne.s32.totalorder %s582, %s585
      %p594 = scmp.eq.s32.totalorder %s42, 1
      %p595 = por %p593, %p594
      %p596 = scmp.ne.s32.totalorder %s585, %s586
      %p597 = scmp.eq.s32.totalorder %s42, 0
      %p598 = por %p596, %p597
      %p599 = scmp.ne.s32.totalorder %s585, %s586
      %p600 = scmp.eq.s32.totalorder %s43, 1
      %p601 = por %p599, %p600
      %p603 = scmp.ne.s32.totalorder %s586, %s602
      %p604 = scmp.eq.s32.totalorder %s43, 0
      %p605 = por %p603, %p604
      %p606 = scmp.le.s32.totalorder 1, %s37
      %p607 = scmp.lt.s32.totalorder %s37, 3
      %p608 = pnand %p606, %p607
      %p609 = pneg %p608
      // Predicated region
      $region9: #{tacotron2_forward.1} parent=5 // pred_check
        _
      $region10: #{tacotron2_forward.1} parent=5 // pred_check_branch
        %611 = sbr.rel (%p608) target = $region12
      $region11: #{tacotron2_forward.1} parent=5 // pred_region
        %s612 = ssub.s32 %s37, 1
        // Predicated region
        $region13: #{tacotron2_forward.1} parent=11 // pred_check
          %p613 = pneg %p110
        $region14: #{tacotron2_forward.1} parent=11 // pred_check_branch
          %615 = sbr.rel (%p613) target = $region16
        $region15: #{tacotron2_forward.1} parent=11 // pred_region
          %617 = vsyncadd [#allocation3], 0
          %s618 = sshll.u32 %s2, 4
          %s619 = int_to_ptr.hbm [resolvable:$true] %s618
          %s620 = sshll.u32 [#allocation2], 4
          %s621 = int_to_ptr.vmem [resolvable:$true] %s620
          %626 = dma.hbm_to_vmem [thread:$0]  %s619, 8192, %s621, [#allocation3], 256, 256, 16
        $region16: #{tacotron2_forward.1} parent=11 // pred_fallthru
          _
        // Predicated region
        $region17: #{tacotron2_forward.1} parent=11 // pred_check
          %p627 = pneg %p131
        $region18: #{tacotron2_forward.1} parent=11 // pred_check_branch
          %629 = sbr.rel (%p627) target = $region20
        $region19: #{tacotron2_forward.1} parent=11 // pred_region
          %631 = vsyncadd [#allocation5], 0
          %s632 = sshll.u32 %s3, 4
          %s633 = int_to_ptr.hbm [resolvable:$true] %s632
          %s634 = sshll.u32 [#allocation4], 4
          %s635 = int_to_ptr.vmem [resolvable:$true] %s634
          %640 = dma.hbm_to_vmem [thread:$0]  %s633, 8192, %s635, [#allocation5], 256, 256, 16
        $region20: #{tacotron2_forward.1} parent=11 // pred_fallthru
          _
        // Predicated region
        $region21: #{tacotron2_forward.1} parent=11 // pred_check
          %p641 = pneg %p152
        $region22: #{tacotron2_forward.1} parent=11 // pred_check_branch
          %643 = sbr.rel (%p641) target = $region24
        $region23: #{tacotron2_forward.1} parent=11 // pred_region
          %645 = vsyncadd [#allocation5], 0
          %s646 = sshll.u32 %s4, 4
          %s647 = int_to_ptr.hbm [resolvable:$true] %s646
          %s648 = sshll.u32 [#allocation6], 4
          %s649 = int_to_ptr.vmem [resolvable:$true] %s648
          %654 = dma.hbm_to_vmem [thread:$0]  %s647, 8192, %s649, [#allocation5], 256, 256, 16
        $region24: #{tacotron2_forward.1} parent=11 // pred_fallthru
          _
        // Predicated region
        $region25: #{tacotron2_forward.1} parent=11 // pred_check
          %p655 = pneg %p173
        $region26: #{tacotron2_forward.1} parent=11 // pred_check_branch
          %657 = sbr.rel (%p655) target = $region28
        $region27: #{tacotron2_forward.1} parent=11 // pred_region
          _
        $region28: #{tacotron2_forward.1} parent=11 // pred_fallthru
          _
        // Predicated region
        $region29: #{tacotron2_forward.1} parent=11 // pred_check
          %p658 = pneg %p194
        $region30: #{tacotron2_forward.1} parent=11 // pred_check_branch
          %660 = sbr.rel (%p658) target = $region32
        $region31: #{tacotron2_forward.1} parent=11 // pred_region
          _
        $region32: #{tacotron2_forward.1} parent=11 // pred_fallthru
          _
        // Predicated region
        $region33: #{tacotron2_forward.1} parent=11 // pred_check
          %p661 = pneg %p215
        $region34: #{tacotron2_forward.1} parent=11 // pred_check_branch
          %663 = sbr.rel (%p661) target = $region36
        $region35: #{tacotron2_forward.1} parent=11 // pred_region
          _
        $region36: #{tacotron2_forward.1} parent=11 // pred_fallthru
          _
        // Predicated region
        $region37: #{tacotron2_forward.1} parent=11 // pred_check
          %p664 = pneg %p236
        $region38: #{tacotron2_forward.1} parent=11 // pred_check_branch
          %666 = sbr.rel (%p664) target = $region40
        $region39: #{tacotron2_forward.1} parent=11 // pred_region
          %668 = vsyncadd [#allocation8], 0
          %s669 = sshll.u32 %s8, 4
          %s670 = int_to_ptr.hbm [resolvable:$true] %s669
          %s671 = sshll.u32 [#allocation7], 4
          %s672 = int_to_ptr.vmem [resolvable:$true] %s671
          %677 = dma.hbm_to_vmem [thread:$0]  %s670, 4096, %s672, [#allocation8], 128, 128, 8
        $region40: #{tacotron2_forward.1} parent=11 // pred_fallthru
          _
        // Predicated region
        $region41: #{tacotron2_forward.1} parent=11 // pred_check
          %p678 = pneg %p257
        $region42: #{tacotron2_forward.1} parent=11 // pred_check_branch
          %680 = sbr.rel (%p678) target = $region44
        $region43: #{tacotron2_forward.1} parent=11 // pred_region
          _
        $region44: #{tacotron2_forward.1} parent=11 // pred_fallthru
          _
        // Predicated region
        $region45: #{tacotron2_forward.1} parent=11 // pred_check
          %p681 = pneg %p278
        $region46: #{tacotron2_forward.1} parent=11 // pred_check_branch
          %683 = sbr.rel (%p681) target = $region48
        $region47: #{tacotron2_forward.1} parent=11 // pred_region
          _
        $region48: #{tacotron2_forward.1} parent=11 // pred_fallthru
          _
        // Predicated region
        $region49: #{tacotron2_forward.1} parent=11 // pred_check
          %p684 = pneg %p299
        $region50: #{tacotron2_forward.1} parent=11 // pred_check_branch
          %686 = sbr.rel (%p684) target = $region52
        $region51: #{tacotron2_forward.1} parent=11 // pred_region
          _
        $region52: #{tacotron2_forward.1} parent=11 // pred_fallthru
          _
        // Predicated region
        $region53: #{tacotron2_forward.1} parent=11 // pred_check
          %p687 = pneg %p320
        $region54: #{tacotron2_forward.1} parent=11 // pred_check_branch
          %689 = sbr.rel (%p687) target = $region56
        $region55: #{tacotron2_forward.1} parent=11 // pred_region
          _
        $region56: #{tacotron2_forward.1} parent=11 // pred_fallthru
          _
        // Predicated region
        $region57: #{tacotron2_forward.1} parent=11 // pred_check
          %p690 = pneg %p341
        $region58: #{tacotron2_forward.1} parent=11 // pred_check_branch
          %692 = sbr.rel (%p690) target = $region60
        $region59: #{tacotron2_forward.1} parent=11 // pred_region
          _
        $region60: #{tacotron2_forward.1} parent=11 // pred_fallthru
          _
        // Predicated region
        $region61: #{tacotron2_forward.1} parent=11 // pred_check
          %p693 = pneg %p362
        $region62: #{tacotron2_forward.1} parent=11 // pred_check_branch
          %695 = sbr.rel (%p693) target = $region64
        $region63: #{tacotron2_forward.1} parent=11 // pred_region
          %697 = vsyncadd [#allocation8], 0
          %s698 = sshll.u32 %s14, 4
          %s699 = int_to_ptr.hbm [resolvable:$true] %s698
          %s700 = sshll.u32 [#allocation9], 4
          %s701 = int_to_ptr.vmem [resolvable:$true] %s700
          %706 = dma.hbm_to_vmem [thread:$0]  %s699, 1536, %s701, [#allocation8], 128, 128, 8
        $region64: #{tacotron2_forward.1} parent=11 // pred_fallthru
          _
        // Predicated region
        $region65: #{tacotron2_forward.1} parent=11 // pred_check
          %p707 = pneg %p383
        $region66: #{tacotron2_forward.1} parent=11 // pred_check_branch
          %709 = sbr.rel (%p707) target = $region68
        $region67: #{tacotron2_forward.1} parent=11 // pred_region
          %711 = vsyncadd [#allocation11], 0
          %s712 = sshll.u32 %s15, 4
          %s713 = int_to_ptr.hbm [resolvable:$true] %s712
          %s714 = sshll.u32 [#allocation10], 4
          %s715 = int_to_ptr.vmem [resolvable:$true] %s714
          %720 = dma.hbm_to_vmem [thread:$0]  %s713, 1536, %s715, [#allocation11], 128, 128, 8
        $region68: #{tacotron2_forward.1} parent=11 // pred_fallthru
          _
        // Predicated region
        $region69: #{tacotron2_forward.1} parent=11 // pred_check
          %p721 = pneg %p404
        $region70: #{tacotron2_forward.1} parent=11 // pred_check_branch
          %723 = sbr.rel (%p721) target = $region72
        $region71: #{tacotron2_forward.1} parent=11 // pred_region
          _
        $region72: #{tacotron2_forward.1} parent=11 // pred_fallthru
          _
        // Predicated region
        $region73: #{tacotron2_forward.1} parent=11 // pred_check
          %p724 = pneg %p425
        $region74: #{tacotron2_forward.1} parent=11 // pred_check_branch
          %726 = sbr.rel (%p724) target = $region76
        $region75: #{tacotron2_forward.1} parent=11 // pred_region
          _
        $region76: #{tacotron2_forward.1} parent=11 // pred_fallthru
          _
        // Predicated region
        $region77: #{tacotron2_forward.1} parent=11 // pred_check
          %p727 = pneg %p446
        $region78: #{tacotron2_forward.1} parent=11 // pred_check_branch
          %729 = sbr.rel (%p727) target = $region80
        $region79: #{tacotron2_forward.1} parent=11 // pred_region
          _
        $region80: #{tacotron2_forward.1} parent=11 // pred_fallthru
          _
        // Predicated region
        $region81: #{tacotron2_forward.1} parent=11 // pred_check
          %p730 = pneg %p467
        $region82: #{tacotron2_forward.1} parent=11 // pred_check_branch
          %732 = sbr.rel (%p730) target = $region84
        $region83: #{tacotron2_forward.1} parent=11 // pred_region
          _
        $region84: #{tacotron2_forward.1} parent=11 // pred_fallthru
          _
        // Predicated region
        $region85: #{tacotron2_forward.1} parent=11 // pred_check
          %p733 = pneg %p488
        $region86: #{tacotron2_forward.1} parent=11 // pred_check_branch
          %735 = sbr.rel (%p733) target = $region88
        $region87: #{tacotron2_forward.1} parent=11 // pred_region
          %737 = vsyncadd [#allocation11], 0
          %s738 = sshll.u32 %s20, 4
          %s739 = int_to_ptr.hbm [resolvable:$true] %s738
          %s740 = sshll.u32 [#allocation12], 4
          %s741 = int_to_ptr.vmem [resolvable:$true] %s740
          %746 = dma.hbm_to_vmem [thread:$0]  %s739, 6144, %s741, [#allocation11], 256, 256, 16
        $region88: #{tacotron2_forward.1} parent=11 // pred_fallthru
          _
        // Predicated region
        $region89: #{tacotron2_forward.1} parent=11 // pred_check
          %p747 = pneg %p509
        $region90: #{tacotron2_forward.1} parent=11 // pred_check_branch
          %749 = sbr.rel (%p747) target = $region92
        $region91: #{tacotron2_forward.1} parent=11 // pred_region
          %751 = vsyncadd [#allocation14], 0
          %s752 = sshll.u32 %s21, 4
          %s753 = int_to_ptr.hbm [resolvable:$true] %s752
          %s754 = sshll.u32 [#allocation13], 4
          %s755 = int_to_ptr.vmem [resolvable:$true] %s754
          %760 = dma.hbm_to_vmem [thread:$0]  %s753, 6144, %s755, [#allocation14], 256, 256, 16
        $region92: #{tacotron2_forward.1} parent=11 // pred_fallthru
          _
        // Predicated region
        $region93: #{tacotron2_forward.1} parent=11 // pred_check
          %p761 = pneg %p530
        $region94: #{tacotron2_forward.1} parent=11 // pred_check_branch
          %763 = sbr.rel (%p761) target = $region96
        $region95: #{tacotron2_forward.1} parent=11 // pred_region
          %765 = vsyncadd [#allocation14], 0
          %s766 = sshll.u32 %s22, 4
          %s767 = int_to_ptr.hbm [resolvable:$true] %s766
          %s768 = sshll.u32 [#allocation15], 4
          %s769 = int_to_ptr.vmem [resolvable:$true] %s768
          %774 = dma.hbm_to_vmem [thread:$0]  %s767, 6144, %s769, [#allocation14], 256, 256, 16
        $region96: #{tacotron2_forward.1} parent=11 // pred_fallthru
          _
        // Predicated region
        $region97: #{tacotron2_forward.1} parent=11 // pred_check
          %p775 = pneg %p551
        $region98: #{tacotron2_forward.1} parent=11 // pred_check_branch
          %777 = sbr.rel (%p775) target = $region100
        $region99: #{tacotron2_forward.1} parent=11 // pred_region
          %779 = vsyncadd [#allocation17], 0
          %s780 = sshll.u32 %s23, 4
          %s781 = int_to_ptr.hbm [resolvable:$true] %s780
          %s782 = sshll.u32 [#allocation16], 4
          %s783 = int_to_ptr.vmem [resolvable:$true] %s782
          %788 = dma.hbm_to_vmem [thread:$0]  %s781, 3072, %s783, [#allocation17], 128, 128, 8
        $region100: #{tacotron2_forward.1} parent=11 // pred_fallthru
          _
        // Predicated region
        $region101: #{tacotron2_forward.1} parent=11 // pred_check
          %p789 = pneg %p572
        $region102: #{tacotron2_forward.1} parent=11 // pred_check_branch
          %791 = sbr.rel (%p789) target = $region104
        $region103: #{tacotron2_forward.1} parent=11 // pred_region
          _
        $region104: #{tacotron2_forward.1} parent=11 // pred_fallthru
          _
      $region12: #{tacotron2_forward.1} parent=5 // pred_fallthru
        _
      %p792 = scmp.lt.s32.totalorder %s37, 2
      // Predicated region
      $region105: #{tacotron2_forward.1} parent=5 // pred_check
        %p793 = pneg %p792
      $region106: #{tacotron2_forward.1} parent=5 // pred_check_branch
        %795 = sbr.rel (%p793) target = $region108
      $region107: #{tacotron2_forward.1} parent=5 // pred_region
        // Predicated region
        $region109: #{tacotron2_forward.1} parent=107 // pred_check
          %p796 = pneg %p57
        $region110: #{tacotron2_forward.1} parent=107 // pred_check_branch
          %798 = sbr.rel (%p796) target = $region112
        $region111: #{tacotron2_forward.1} parent=107 // pred_region
          %p799 = scmp.lt.s32.totalorder %s37, 1
          %s800 = scalar_select %p799, %s37, 1
          %s801 = smul.addr %s800, 2
          %s802 = scalar_lea.vmem %s0, %s801
        $region112: #{tacotron2_forward.1} parent=107 // pred_fallthru
          _
        // Predicated region
        $region113: #{tacotron2_forward.1} parent=107 // pred_check
          %p803 = pneg %p83
        $region114: #{tacotron2_forward.1} parent=107 // pred_check_branch
          %805 = sbr.rel (%p803) target = $region116
        $region115: #{tacotron2_forward.1} parent=107 // pred_region
          %p806 = scmp.lt.s32.totalorder %s37, 1
          %s807 = scalar_select %p806, %s37, 1
          %s808 = scalar_lea.vmem %s1, %s807
        $region116: #{tacotron2_forward.1} parent=107 // pred_fallthru
          _
      $region108: #{tacotron2_forward.1} parent=5 // pred_fallthru
        _
      %p809 = scmp.le.s32.totalorder 1, %s37
      %p810 = scmp.lt.s32.totalorder %s37, 3
      %p811 = pnand %p809, %p810
      %p812 = pneg %p811
      // Predicated region
      $region117: #{tacotron2_forward.1} parent=5 // pred_check
        _
      $region118: #{tacotron2_forward.1} parent=5 // pred_check_branch
        %814 = sbr.rel (%p811) target = $region120
      $region119: #{tacotron2_forward.1} parent=5 // pred_region
        %s815 = ssub.s32 %s37, 1
        // Predicated region
        $region121: #{tacotron2_forward.1} parent=119 // pred_check
          %p816 = pneg %p110
        $region122: #{tacotron2_forward.1} parent=119 // pred_check_branch
          %818 = sbr.rel (%p816) target = $region124
        $region123: #{tacotron2_forward.1} parent=119 // pred_region
          %820 = dma.done [#allocation3], 8192
        $region124: #{tacotron2_forward.1} parent=119 // pred_fallthru
          _
        // Predicated region
        $region125: #{tacotron2_forward.1} parent=119 // pred_check
          %p821 = pneg %p131
        $region126: #{tacotron2_forward.1} parent=119 // pred_check_branch
          %823 = sbr.rel (%p821) target = $region128
        $region127: #{tacotron2_forward.1} parent=119 // pred_region
          %825 = dma.done [#allocation5], 8192
        $region128: #{tacotron2_forward.1} parent=119 // pred_fallthru
          _
        // Predicated region
        $region129: #{tacotron2_forward.1} parent=119 // pred_check
          %p826 = pneg %p152
        $region130: #{tacotron2_forward.1} parent=119 // pred_check_branch
          %828 = sbr.rel (%p826) target = $region132
        $region131: #{tacotron2_forward.1} parent=119 // pred_region
          %830 = dma.done [#allocation5], 8192
        $region132: #{tacotron2_forward.1} parent=119 // pred_fallthru
          _
        // Predicated region
        $region133: #{tacotron2_forward.1} parent=119 // pred_check
          %p831 = pneg %p236
        $region134: #{tacotron2_forward.1} parent=119 // pred_check_branch
          %833 = sbr.rel (%p831) target = $region136
        $region135: #{tacotron2_forward.1} parent=119 // pred_region
          %835 = dma.done [#allocation8], 4096
        $region136: #{tacotron2_forward.1} parent=119 // pred_fallthru
          _
        // Predicated region
        $region137: #{tacotron2_forward.1} parent=119 // pred_check
          %p836 = pneg %p362
        $region138: #{tacotron2_forward.1} parent=119 // pred_check_branch
          %838 = sbr.rel (%p836) target = $region140
        $region139: #{tacotron2_forward.1} parent=119 // pred_region
          %840 = dma.done [#allocation8], 1536
        $region140: #{tacotron2_forward.1} parent=119 // pred_fallthru
          _
        // Predicated region
        $region141: #{tacotron2_forward.1} parent=119 // pred_check
          %p841 = pneg %p383
        $region142: #{tacotron2_forward.1} parent=119 // pred_check_branch
          %843 = sbr.rel (%p841) target = $region144
        $region143: #{tacotron2_forward.1} parent=119 // pred_region
          %845 = dma.done [#allocation11], 1536
        $region144: #{tacotron2_forward.1} parent=119 // pred_fallthru
          _
        // Predicated region
        $region145: #{tacotron2_forward.1} parent=119 // pred_check
          %p846 = pneg %p488
        $region146: #{tacotron2_forward.1} parent=119 // pred_check_branch
          %848 = sbr.rel (%p846) target = $region148
        $region147: #{tacotron2_forward.1} parent=119 // pred_region
          %850 = dma.done [#allocation11], 6144
        $region148: #{tacotron2_forward.1} parent=119 // pred_fallthru
          _
        // Predicated region
        $region149: #{tacotron2_forward.1} parent=119 // pred_check
          %p851 = pneg %p509
        $region150: #{tacotron2_forward.1} parent=119 // pred_check_branch
          %853 = sbr.rel (%p851) target = $region152
        $region151: #{tacotron2_forward.1} parent=119 // pred_region
          %855 = dma.done [#allocation14], 6144
        $region152: #{tacotron2_forward.1} parent=119 // pred_fallthru
          _
        // Predicated region
        $region153: #{tacotron2_forward.1} parent=119 // pred_check
          %p856 = pneg %p530
        $region154: #{tacotron2_forward.1} parent=119 // pred_check_branch
          %858 = sbr.rel (%p856) target = $region156
        $region155: #{tacotron2_forward.1} parent=119 // pred_region
          %860 = dma.done [#allocation14], 6144
        $region156: #{tacotron2_forward.1} parent=119 // pred_fallthru
          _
        // Predicated region
        $region157: #{tacotron2_forward.1} parent=119 // pred_check
          %p861 = pneg %p551
        $region158: #{tacotron2_forward.1} parent=119 // pred_check_branch
          %863 = sbr.rel (%p861) target = $region160
        $region159: #{tacotron2_forward.1} parent=119 // pred_region
          %865 = dma.done [#allocation17], 3072
        $region160: #{tacotron2_forward.1} parent=119 // pred_fallthru
          _
        %p866 = scmp.lt.s32.totalorder %s42, 1
        %s867 = scalar_select %p866, %s42, 1
        %s868 = smul.addr %s867, 2
        %s869 = scalar_lea.vmem %s0, %s868
        %p870 = pneg %p63
        %p871 = pneg %p60
        %p872 = scmp.lt.s32.totalorder %s42, 1
        %s873 = scalar_select %p872, %s42, 1
        %s874 = scalar_lea.vmem %s1, %s873
        %p875 = pneg %p89
        %p876 = pneg %p86
        %p877 = pneg %p110
        %p878 = pneg %p107
        %p879 = pneg %p131
        %p880 = pneg %p128
        %p881 = pneg %p152
        %p882 = pneg %p149
        %p883 = pneg %p173
        %p884 = pneg %p170
        %p885 = pneg %p194
        %p886 = pneg %p191
        %p887 = pneg %p215
        %p888 = pneg %p212
        %p889 = pneg %p236
        %p890 = pneg %p233
        %p891 = pneg %p257
        %p892 = pneg %p254
        %p893 = pneg %p278
        %p894 = pneg %p275
        %p895 = pneg %p299
        %p896 = pneg %p296
        %p897 = pneg %p320
        %p898 = pneg %p317
        %p899 = pneg %p341
        %p900 = pneg %p338
        %p901 = pneg %p362
        %p902 = pneg %p359
        %p903 = pneg %p383
        %p904 = pneg %p380
        %p905 = pneg %p404
        %p906 = pneg %p401
        %p907 = pneg %p425
        %p908 = pneg %p422
        %p909 = pneg %p446
        %p910 = pneg %p443
        %p911 = pneg %p467
        %p912 = pneg %p464
        %p913 = pneg %p488
        %p914 = pneg %p485
        %p915 = pneg %p509
        %p916 = pneg %p506
        %p917 = pneg %p530
        %p918 = pneg %p527
        %p919 = pneg %p551
        %p920 = pneg %p548
        %p921 = pneg %p572
        %p922 = pneg %p569
        %p923 = pneg %p598
        %p924 = pneg %p595
        %p925 = scmp.lt.s32.totalorder %s42, 1
        %s926 = scalar_select %p925, %s42, 1
        %s927 = scalar_lea.vmem %s25, %s926
        %p928 = scmp.lt.s32.totalorder %s42, 1
        %s929 = scalar_select %p928, %s42, 1
        %s930 = smul.addr %s929, 2
        %s931 = scalar_lea.vmem %s0, %s930
        %p932 = scmp.lt.s32.totalorder %s42, 1
        %s933 = scalar_select %p932, %s42, 1
        %s934 = scalar_lea.vmem %s1, %s933
        %p935 = scmp.lt.s32.totalorder %s42, 1
        %s936 = scalar_select %p935, %s42, 1
        %s937 = scalar_lea.vmem %s25, %s936
        %v938 = vld [vmem:[%s931] sm:$0x3]
        %v939 = vld [vmem:[#allocation2] sm:$0xff]
        %v940 = vld [vmem:[#allocation2 + $0x8] sm:$0xff]
        %v941 = vld [vmem:[#allocation2 + $0x10] sm:$0xff]
        %v942 = vld [vmem:[#allocation2 + $0x18] sm:$0xff]
        %v943 = vld [vmem:[#allocation2 + $0x20] sm:$0xff]
        %v944 = vld [vmem:[#allocation2 + $0x28] sm:$0xff]
        %v945 = vld [vmem:[#allocation2 + $0x30] sm:$0xff]
        %v946 = vld [vmem:[#allocation2 + $0x38] sm:$0xff]
        %v947 = vld [vmem:[#allocation2 + $0x40] sm:$0xff]
        %v948 = vld [vmem:[#allocation2 + $0x48] sm:$0xff]
        %v949 = vld [vmem:[#allocation2 + $0x50] sm:$0xff]
        %v950 = vld [vmem:[#allocation2 + $0x58] sm:$0xff]
        %v951 = vld [vmem:[#allocation2 + $0x60] sm:$0xff]
        %v952 = vld [vmem:[#allocation2 + $0x68] sm:$0xff]
        %v953 = vld [vmem:[#allocation2 + $0x70] sm:$0xff]
        %v954 = vld [vmem:[#allocation2 + $0x78] sm:$0xff]
        %v955 = vld [vmem:[#allocation2 + $0x80] sm:$0xff]
        %v956 = vld [vmem:[#allocation2 + $0x88] sm:$0xff]
        %v957 = vld [vmem:[#allocation2 + $0x90] sm:$0xff]
        %v958 = vld [vmem:[#allocation2 + $0x98] sm:$0xff]
        %v959 = vld [vmem:[#allocation2 + $0xa0] sm:$0xff]
        %v960 = vld [vmem:[#allocation2 + $0xa8] sm:$0xff]
        %v961 = vld [vmem:[#allocation2 + $0xb0] sm:$0xff]
        %v962 = vld [vmem:[#allocation2 + $0xb8] sm:$0xff]
        %v963 = vld [vmem:[#allocation2 + $0xc0] sm:$0xff]
        %v964 = vld [vmem:[#allocation2 + $0xc8] sm:$0xff]
        %v965 = vld [vmem:[#allocation2 + $0xd0] sm:$0xff]
        %v966 = vld [vmem:[#allocation2 + $0xd8] sm:$0xff]
        %v967 = vld [vmem:[#allocation2 + $0xe0] sm:$0xff]
        %v968 = vld [vmem:[#allocation2 + $0xe8] sm:$0xff]
        %v969 = vld [vmem:[#allocation2 + $0xf0] sm:$0xff]
        %v970 = vld [vmem:[#allocation2 + $0xf8] sm:$0xff]
        %v971 = vld [vmem:[#allocation2 + $0x100] sm:$0xff]
        %v972 = vld [vmem:[#allocation2 + $0x108] sm:$0xff]
        %v973 = vld [vmem:[#allocation2 + $0x110] sm:$0xff]
        %v974 = vld [vmem:[#allocation2 + $0x118] sm:$0xff]
        %v975 = vld [vmem:[#allocation2 + $0x120] sm:$0xff]
        %v976 = vld [vmem:[#allocation2 + $0x128] sm:$0xff]
        %v977 = vld [vmem:[#allocation2 + $0x130] sm:$0xff]
        %v978 = vld [vmem:[#allocation2 + $0x138] sm:$0xff]
        %v979 = vld [vmem:[#allocation2 + $0x140] sm:$0xff]
        %v980 = vld [vmem:[#allocation2 + $0x148] sm:$0xff]
        %v981 = vld [vmem:[#allocation2 + $0x150] sm:$0xff]
        %v982 = vld [vmem:[#allocation2 + $0x158] sm:$0xff]
        %v983 = vld [vmem:[#allocation2 + $0x160] sm:$0xff]
        %v984 = vld [vmem:[#allocation2 + $0x168] sm:$0xff]
        %v985 = vld [vmem:[#allocation2 + $0x170] sm:$0xff]
        %v986 = vld [vmem:[#allocation2 + $0x178] sm:$0xff]
        %v987 = vld [vmem:[#allocation2 + $0x180] sm:$0xff]
        %v988 = vld [vmem:[#allocation2 + $0x188] sm:$0xff]
        %v989 = vld [vmem:[#allocation2 + $0x190] sm:$0xff]
        %v990 = vld [vmem:[#allocation2 + $0x198] sm:$0xff]
        %v991 = vld [vmem:[#allocation2 + $0x1a0] sm:$0xff]
        %v992 = vld [vmem:[#allocation2 + $0x1a8] sm:$0xff]
        %v993 = vld [vmem:[#allocation2 + $0x1b0] sm:$0xff]
        %v994 = vld [vmem:[#allocation2 + $0x1b8] sm:$0xff]
        %v995 = vld [vmem:[#allocation2 + $0x1c0] sm:$0xff]
        %v996 = vld [vmem:[#allocation2 + $0x1c8] sm:$0xff]
        %v997 = vld [vmem:[#allocation2 + $0x1d0] sm:$0xff]
        %v998 = vld [vmem:[#allocation2 + $0x1d8] sm:$0xff]
        %v999 = vld [vmem:[#allocation2 + $0x1e0] sm:$0xff]
        %v1000 = vld [vmem:[#allocation2 + $0x1e8] sm:$0xff]
        %v1001 = vld [vmem:[#allocation2 + $0x1f0] sm:$0xff]
        %v1002 = vld [vmem:[#allocation2 + $0x1f8] sm:$0xff]
        %v1003 = vld [vmem:[%s5] sm:$0x3]
        %v1005 = vperm.slane %v938, 0
        %v1006 = vperm.slane %v938, 1
        %v1010 = vperm.slane %v1003, 0
        %v1011 = vperm.slane %v1003, 1
        %1014 = vmatpush.msra.mxu0 %v969
        %1015 = vmatpush.msra.mxu0 %v967
        %1016 = vmatpush.msra.mxu0 %v965
        %1017 = vmatpush.msra.mxu0 %v963
        %1018 = vmatpush.msra.mxu0 %v961
        %1019 = vmatpush.msra.mxu0 %v959
        %1020 = vmatpush.msra.mxu0 %v957
        %1021 = vmatpush.msra.mxu0 %v955
        %1022 = vmatpush.msra.mxu0 %v953
        %1023 = vmatpush.msra.mxu0 %v951
        %1024 = vmatpush.msra.mxu0 %v949
        %1025 = vmatpush.msra.mxu0 %v947
        %1026 = vmatpush.msra.mxu0 %v945
        %1027 = vmatpush.msra.mxu0 %v943
        %1028 = vmatpush.msra.mxu0 %v941
        %1029 = vmatpush.msra.mxu0 %v939
        %1030 = vmatmul.f32.gmra.mxu0 %v1005
        %v1031 = vpop.f32.mrf.mxu0
        %v1032 = vadd.f32 %v1010, %v1031
        %1033 = vdwg.mxu0
        %1034 = vmatpush.msra.mxu0 %v1001
        %1035 = vmatpush.msra.mxu0 %v999
        %1036 = vmatpush.msra.mxu0 %v997
        %1037 = vmatpush.msra.mxu0 %v995
        %1038 = vmatpush.msra.mxu0 %v993
        %1039 = vmatpush.msra.mxu0 %v991
        %1040 = vmatpush.msra.mxu0 %v989
        %1041 = vmatpush.msra.mxu0 %v987
        %1042 = vmatpush.msra.mxu0 %v985
        %1043 = vmatpush.msra.mxu0 %v983
        %1044 = vmatpush.msra.mxu0 %v981
        %1045 = vmatpush.msra.mxu0 %v979
        %1046 = vmatpush.msra.mxu0 %v977
        %1047 = vmatpush.msra.mxu0 %v975
        %1048 = vmatpush.msra.mxu0 %v973
        %1049 = vmatpush.msra.mxu0 %v971
        %1050 = vmatmul.f32.gmra.mxu0 %v1006
        %v1051 = vpop.f32.mrf.mxu0
        %v1052 = vadd.f32 %v1032, %v1051
        %1053 = vdwg.mxu0
        %1054 = vmatpush.msra.mxu0 %v970
        %1055 = vmatpush.msra.mxu0 %v968
        %1056 = vmatpush.msra.mxu0 %v966
        %1057 = vmatpush.msra.mxu0 %v964
        %1058 = vmatpush.msra.mxu0 %v962
        %1059 = vmatpush.msra.mxu0 %v960
        %1060 = vmatpush.msra.mxu0 %v958
        %1061 = vmatpush.msra.mxu0 %v956
        %1062 = vmatpush.msra.mxu0 %v954
        %1063 = vmatpush.msra.mxu0 %v952
        %1064 = vmatpush.msra.mxu0 %v950
        %1065 = vmatpush.msra.mxu0 %v948
        %1066 = vmatpush.msra.mxu0 %v946
        %1067 = vmatpush.msra.mxu0 %v944
        %1068 = vmatpush.msra.mxu0 %v942
        %1069 = vmatpush.msra.mxu0 %v940
        %1070 = vmatmul.f32.gmra.mxu0 %v1005
        %v1071 = vpop.f32.mrf.mxu0
        %v1072 = vadd.f32 %v1011, %v1071
        %1073 = vdwg.mxu0
        %1074 = vmatpush.msra.mxu0 %v1002
        %1075 = vmatpush.msra.mxu0 %v1000
        %1076 = vmatpush.msra.mxu0 %v998
        %1077 = vmatpush.msra.mxu0 %v996
        %1078 = vmatpush.msra.mxu0 %v994
        %1079 = vmatpush.msra.mxu0 %v992
        %1080 = vmatpush.msra.mxu0 %v990
        %1081 = vmatpush.msra.mxu0 %v988
        %1082 = vmatpush.msra.mxu0 %v986
        %1083 = vmatpush.msra.mxu0 %v984
        %1084 = vmatpush.msra.mxu0 %v982
        %1085 = vmatpush.msra.mxu0 %v980
        %1086 = vmatpush.msra.mxu0 %v978
        %1087 = vmatpush.msra.mxu0 %v976
        %1088 = vmatpush.msra.mxu0 %v974
        %1089 = vmatpush.msra.mxu0 %v972
        %1090 = vmatmul.f32.gmra.mxu0 %v1006
        %v1091 = vpop.f32.mrf.mxu0
        %v1092 = vadd.f32 %v1072, %v1091
        %1093 = vdwg.mxu0
        %v1094 = vmax.f32 %v1052, 0.0
        %v1095 = vmax.f32 %v1092, 0.0
        %v1096 = vld [vmem:[#allocation4] sm:$0xff]
        %v1097 = vld [vmem:[#allocation4 + $0x8] sm:$0xff]
        %v1098 = vld [vmem:[#allocation4 + $0x10] sm:$0xff]
        %v1099 = vld [vmem:[#allocation4 + $0x18] sm:$0xff]
        %v1100 = vld [vmem:[#allocation4 + $0x20] sm:$0xff]
        %v1101 = vld [vmem:[#allocation4 + $0x28] sm:$0xff]
        %v1102 = vld [vmem:[#allocation4 + $0x30] sm:$0xff]
        %v1103 = vld [vmem:[#allocation4 + $0x38] sm:$0xff]
        %v1104 = vld [vmem:[#allocation4 + $0x40] sm:$0xff]
        %v1105 = vld [vmem:[#allocation4 + $0x48] sm:$0xff]
        %v1106 = vld [vmem:[#allocation4 + $0x50] sm:$0xff]
        %v1107 = vld [vmem:[#allocation4 + $0x58] sm:$0xff]
        %v1108 = vld [vmem:[#allocation4 + $0x60] sm:$0xff]
        %v1109 = vld [vmem:[#allocation4 + $0x68] sm:$0xff]
        %v1110 = vld [vmem:[#allocation4 + $0x70] sm:$0xff]
        %v1111 = vld [vmem:[#allocation4 + $0x78] sm:$0xff]
        %v1112 = vld [vmem:[#allocation4 + $0x80] sm:$0xff]
        %v1113 = vld [vmem:[#allocation4 + $0x88] sm:$0xff]
        %v1114 = vld [vmem:[#allocation4 + $0x90] sm:$0xff]
        %v1115 = vld [vmem:[#allocation4 + $0x98] sm:$0xff]
        %v1116 = vld [vmem:[#allocation4 + $0xa0] sm:$0xff]
        %v1117 = vld [vmem:[#allocation4 + $0xa8] sm:$0xff]
        %v1118 = vld [vmem:[#allocation4 + $0xb0] sm:$0xff]
        %v1119 = vld [vmem:[#allocation4 + $0xb8] sm:$0xff]
        %v1120 = vld [vmem:[#allocation4 + $0xc0] sm:$0xff]
        %v1121 = vld [vmem:[#allocation4 + $0xc8] sm:$0xff]
        %v1122 = vld [vmem:[#allocation4 + $0xd0] sm:$0xff]
        %v1123 = vld [vmem:[#allocation4 + $0xd8] sm:$0xff]
        %v1124 = vld [vmem:[#allocation4 + $0xe0] sm:$0xff]
        %v1125 = vld [vmem:[#allocation4 + $0xe8] sm:$0xff]
        %v1126 = vld [vmem:[#allocation4 + $0xf0] sm:$0xff]
        %v1127 = vld [vmem:[#allocation4 + $0xf8] sm:$0xff]
        %v1128 = vld [vmem:[#allocation4 + $0x100] sm:$0xff]
        %v1129 = vld [vmem:[#allocation4 + $0x108] sm:$0xff]
        %v1130 = vld [vmem:[#allocation4 + $0x110] sm:$0xff]
        %v1131 = vld [vmem:[#allocation4 + $0x118] sm:$0xff]
        %v1132 = vld [vmem:[#allocation4 + $0x120] sm:$0xff]
        %v1133 = vld [vmem:[#allocation4 + $0x128] sm:$0xff]
        %v1134 = vld [vmem:[#allocation4 + $0x130] sm:$0xff]
        %v1135 = vld [vmem:[#allocation4 + $0x138] sm:$0xff]
        %v1136 = vld [vmem:[#allocation4 + $0x140] sm:$0xff]
        %v1137 = vld [vmem:[#allocation4 + $0x148] sm:$0xff]
        %v1138 = vld [vmem:[#allocation4 + $0x150] sm:$0xff]
        %v1139 = vld [vmem:[#allocation4 + $0x158] sm:$0xff]
        %v1140 = vld [vmem:[#allocation4 + $0x160] sm:$0xff]
        %v1141 = vld [vmem:[#allocation4 + $0x168] sm:$0xff]
        %v1142 = vld [vmem:[#allocation4 + $0x170] sm:$0xff]
        %v1143 = vld [vmem:[#allocation4 + $0x178] sm:$0xff]
        %v1144 = vld [vmem:[#allocation4 + $0x180] sm:$0xff]
        %v1145 = vld [vmem:[#allocation4 + $0x188] sm:$0xff]
        %v1146 = vld [vmem:[#allocation4 + $0x190] sm:$0xff]
        %v1147 = vld [vmem:[#allocation4 + $0x198] sm:$0xff]
        %v1148 = vld [vmem:[#allocation4 + $0x1a0] sm:$0xff]
        %v1149 = vld [vmem:[#allocation4 + $0x1a8] sm:$0xff]
        %v1150 = vld [vmem:[#allocation4 + $0x1b0] sm:$0xff]
        %v1151 = vld [vmem:[#allocation4 + $0x1b8] sm:$0xff]
        %v1152 = vld [vmem:[#allocation4 + $0x1c0] sm:$0xff]
        %v1153 = vld [vmem:[#allocation4 + $0x1c8] sm:$0xff]
        %v1154 = vld [vmem:[#allocation4 + $0x1d0] sm:$0xff]
        %v1155 = vld [vmem:[#allocation4 + $0x1d8] sm:$0xff]
        %v1156 = vld [vmem:[#allocation4 + $0x1e0] sm:$0xff]
        %v1157 = vld [vmem:[#allocation4 + $0x1e8] sm:$0xff]
        %v1158 = vld [vmem:[#allocation4 + $0x1f0] sm:$0xff]
        %v1159 = vld [vmem:[#allocation4 + $0x1f8] sm:$0xff]
        %s1160 = scalar_lea.vmem %s5, 2
        %v1161 = vld [vmem:[%s1160] sm:$0x3]
        %v1163 = vperm.slane %v1161, 0
        %v1164 = vperm.slane %v1161, 1
        %1167 = vmatpush.msra.mxu0 %v1126
        %1168 = vmatpush.msra.mxu0 %v1124
        %1169 = vmatpush.msra.mxu0 %v1122
        %1170 = vmatpush.msra.mxu0 %v1120
        %1171 = vmatpush.msra.mxu0 %v1118
        %1172 = vmatpush.msra.mxu0 %v1116
        %1173 = vmatpush.msra.mxu0 %v1114
        %1174 = vmatpush.msra.mxu0 %v1112
        %1175 = vmatpush.msra.mxu0 %v1110
        %1176 = vmatpush.msra.mxu0 %v1108
        %1177 = vmatpush.msra.mxu0 %v1106
        %1178 = vmatpush.msra.mxu0 %v1104
        %1179 = vmatpush.msra.mxu0 %v1102
        %1180 = vmatpush.msra.mxu0 %v1100
        %1181 = vmatpush.msra.mxu0 %v1098
        %1182 = vmatpush.msra.mxu0 %v1096
        %1183 = vmatmul.f32.gmra.mxu0 %v1094
        %v1184 = vpop.f32.mrf.mxu0
        %v1185 = vadd.f32 %v1163, %v1184
        %1186 = vdwg.mxu0
        %1187 = vmatpush.msra.mxu0 %v1158
        %1188 = vmatpush.msra.mxu0 %v1156
        %1189 = vmatpush.msra.mxu0 %v1154
        %1190 = vmatpush.msra.mxu0 %v1152
        %1191 = vmatpush.msra.mxu0 %v1150
        %1192 = vmatpush.msra.mxu0 %v1148
        %1193 = vmatpush.msra.mxu0 %v1146
        %1194 = vmatpush.msra.mxu0 %v1144
        %1195 = vmatpush.msra.mxu0 %v1142
        %1196 = vmatpush.msra.mxu0 %v1140
        %1197 = vmatpush.msra.mxu0 %v1138
        %1198 = vmatpush.msra.mxu0 %v1136
        %1199 = vmatpush.msra.mxu0 %v1134
        %1200 = vmatpush.msra.mxu0 %v1132
        %1201 = vmatpush.msra.mxu0 %v1130
        %1202 = vmatpush.msra.mxu0 %v1128
        %1203 = vmatmul.f32.gmra.mxu0 %v1095
        %v1204 = vpop.f32.mrf.mxu0
        %v1205 = vadd.f32 %v1185, %v1204
        %1206 = vdwg.mxu0
        %1207 = vmatpush.msra.mxu0 %v1127
        %1208 = vmatpush.msra.mxu0 %v1125
        %1209 = vmatpush.msra.mxu0 %v1123
        %1210 = vmatpush.msra.mxu0 %v1121
        %1211 = vmatpush.msra.mxu0 %v1119
        %1212 = vmatpush.msra.mxu0 %v1117
        %1213 = vmatpush.msra.mxu0 %v1115
        %1214 = vmatpush.msra.mxu0 %v1113
        %1215 = vmatpush.msra.mxu0 %v1111
        %1216 = vmatpush.msra.mxu0 %v1109
        %1217 = vmatpush.msra.mxu0 %v1107
        %1218 = vmatpush.msra.mxu0 %v1105
        %1219 = vmatpush.msra.mxu0 %v1103
        %1220 = vmatpush.msra.mxu0 %v1101
        %1221 = vmatpush.msra.mxu0 %v1099
        %1222 = vmatpush.msra.mxu0 %v1097
        %1223 = vmatmul.f32.gmra.mxu0 %v1094
        %v1224 = vpop.f32.mrf.mxu0
        %v1225 = vadd.f32 %v1164, %v1224
        %1226 = vdwg.mxu0
        %1227 = vmatpush.msra.mxu0 %v1159
        %1228 = vmatpush.msra.mxu0 %v1157
        %1229 = vmatpush.msra.mxu0 %v1155
        %1230 = vmatpush.msra.mxu0 %v1153
        %1231 = vmatpush.msra.mxu0 %v1151
        %1232 = vmatpush.msra.mxu0 %v1149
        %1233 = vmatpush.msra.mxu0 %v1147
        %1234 = vmatpush.msra.mxu0 %v1145
        %1235 = vmatpush.msra.mxu0 %v1143
        %1236 = vmatpush.msra.mxu0 %v1141
        %1237 = vmatpush.msra.mxu0 %v1139
        %1238 = vmatpush.msra.mxu0 %v1137
        %1239 = vmatpush.msra.mxu0 %v1135
        %1240 = vmatpush.msra.mxu0 %v1133
        %1241 = vmatpush.msra.mxu0 %v1131
        %1242 = vmatpush.msra.mxu0 %v1129
        %1243 = vmatmul.f32.gmra.mxu0 %v1095
        %v1244 = vpop.f32.mrf.mxu0
        %v1245 = vadd.f32 %v1225, %v1244
        %1246 = vdwg.mxu0
        %v1247 = vmax.f32 %v1205, 0.0
        %v1248 = vmax.f32 %v1245, 0.0
        %v1249 = vld [vmem:[#allocation6] sm:$0xff]
        %v1250 = vld [vmem:[#allocation6 + $0x8] sm:$0xff]
        %v1251 = vld [vmem:[#allocation6 + $0x10] sm:$0xff]
        %v1252 = vld [vmem:[#allocation6 + $0x18] sm:$0xff]
        %v1253 = vld [vmem:[#allocation6 + $0x20] sm:$0xff]
        %v1254 = vld [vmem:[#allocation6 + $0x28] sm:$0xff]
        %v1255 = vld [vmem:[#allocation6 + $0x30] sm:$0xff]
        %v1256 = vld [vmem:[#allocation6 + $0x38] sm:$0xff]
        %v1257 = vld [vmem:[#allocation6 + $0x40] sm:$0xff]
        %v1258 = vld [vmem:[#allocation6 + $0x48] sm:$0xff]
        %v1259 = vld [vmem:[#allocation6 + $0x50] sm:$0xff]
        %v1260 = vld [vmem:[#allocation6 + $0x58] sm:$0xff]
        %v1261 = vld [vmem:[#allocation6 + $0x60] sm:$0xff]
        %v1262 = vld [vmem:[#allocation6 + $0x68] sm:$0xff]
        %v1263 = vld [vmem:[#allocation6 + $0x70] sm:$0xff]
        %v1264 = vld [vmem:[#allocation6 + $0x78] sm:$0xff]
        %v1265 = vld [vmem:[#allocation6 + $0x80] sm:$0xff]
        %v1266 = vld [vmem:[#allocation6 + $0x88] sm:$0xff]
        %v1267 = vld [vmem:[#allocation6 + $0x90] sm:$0xff]
        %v1268 = vld [vmem:[#allocation6 + $0x98] sm:$0xff]
        %v1269 = vld [vmem:[#allocation6 + $0xa0] sm:$0xff]
        %v1270 = vld [vmem:[#allocation6 + $0xa8] sm:$0xff]
        %v1271 = vld [vmem:[#allocation6 + $0xb0] sm:$0xff]
        %v1272 = vld [vmem:[#allocation6 + $0xb8] sm:$0xff]
        %v1273 = vld [vmem:[#allocation6 + $0xc0] sm:$0xff]
        %v1274 = vld [vmem:[#allocation6 + $0xc8] sm:$0xff]
        %v1275 = vld [vmem:[#allocation6 + $0xd0] sm:$0xff]
        %v1276 = vld [vmem:[#allocation6 + $0xd8] sm:$0xff]
        %v1277 = vld [vmem:[#allocation6 + $0xe0] sm:$0xff]
        %v1278 = vld [vmem:[#allocation6 + $0xe8] sm:$0xff]
        %v1279 = vld [vmem:[#allocation6 + $0xf0] sm:$0xff]
        %v1280 = vld [vmem:[#allocation6 + $0xf8] sm:$0xff]
        %v1281 = vld [vmem:[#allocation6 + $0x100] sm:$0xff]
        %v1282 = vld [vmem:[#allocation6 + $0x108] sm:$0xff]
        %v1283 = vld [vmem:[#allocation6 + $0x110] sm:$0xff]
        %v1284 = vld [vmem:[#allocation6 + $0x118] sm:$0xff]
        %v1285 = vld [vmem:[#allocation6 + $0x120] sm:$0xff]
        %v1286 = vld [vmem:[#allocation6 + $0x128] sm:$0xff]
        %v1287 = vld [vmem:[#allocation6 + $0x130] sm:$0xff]
        %v1288 = vld [vmem:[#allocation6 + $0x138] sm:$0xff]
        %v1289 = vld [vmem:[#allocation6 + $0x140] sm:$0xff]
        %v1290 = vld [vmem:[#allocation6 + $0x148] sm:$0xff]
        %v1291 = vld [vmem:[#allocation6 + $0x150] sm:$0xff]
        %v1292 = vld [vmem:[#allocation6 + $0x158] sm:$0xff]
        %v1293 = vld [vmem:[#allocation6 + $0x160] sm:$0xff]
        %v1294 = vld [vmem:[#allocation6 + $0x168] sm:$0xff]
        %v1295 = vld [vmem:[#allocation6 + $0x170] sm:$0xff]
        %v1296 = vld [vmem:[#allocation6 + $0x178] sm:$0xff]
        %v1297 = vld [vmem:[#allocation6 + $0x180] sm:$0xff]
        %v1298 = vld [vmem:[#allocation6 + $0x188] sm:$0xff]
        %v1299 = vld [vmem:[#allocation6 + $0x190] sm:$0xff]
        %v1300 = vld [vmem:[#allocation6 + $0x198] sm:$0xff]
        %v1301 = vld [vmem:[#allocation6 + $0x1a0] sm:$0xff]
        %v1302 = vld [vmem:[#allocation6 + $0x1a8] sm:$0xff]
        %v1303 = vld [vmem:[#allocation6 + $0x1b0] sm:$0xff]
        %v1304 = vld [vmem:[#allocation6 + $0x1b8] sm:$0xff]
        %v1305 = vld [vmem:[#allocation6 + $0x1c0] sm:$0xff]
        %v1306 = vld [vmem:[#allocation6 + $0x1c8] sm:$0xff]
        %v1307 = vld [vmem:[#allocation6 + $0x1d0] sm:$0xff]
        %v1308 = vld [vmem:[#allocation6 + $0x1d8] sm:$0xff]
        %v1309 = vld [vmem:[#allocation6 + $0x1e0] sm:$0xff]
        %v1310 = vld [vmem:[#allocation6 + $0x1e8] sm:$0xff]
        %v1311 = vld [vmem:[#allocation6 + $0x1f0] sm:$0xff]
        %v1312 = vld [vmem:[#allocation6 + $0x1f8] sm:$0xff]
        %s1313 = scalar_lea.vmem %s5, 4
        %v1314 = vld [vmem:[%s1313] sm:$0x3]
        %v1316 = vperm.slane %v1314, 0
        %v1317 = vperm.slane %v1314, 1
        %1320 = vmatpush.msra.mxu0 %v1279
        %1321 = vmatpush.msra.mxu0 %v1277
        %1322 = vmatpush.msra.mxu0 %v1275
        %1323 = vmatpush.msra.mxu0 %v1273
        %1324 = vmatpush.msra.mxu0 %v1271
        %1325 = vmatpush.msra.mxu0 %v1269
        %1326 = vmatpush.msra.mxu0 %v1267
        %1327 = vmatpush.msra.mxu0 %v1265
        %1328 = vmatpush.msra.mxu0 %v1263
        %1329 = vmatpush.msra.mxu0 %v1261
        %1330 = vmatpush.msra.mxu0 %v1259
        %1331 = vmatpush.msra.mxu0 %v1257
        %1332 = vmatpush.msra.mxu0 %v1255
        %1333 = vmatpush.msra.mxu0 %v1253
        %1334 = vmatpush.msra.mxu0 %v1251
        %1335 = vmatpush.msra.mxu0 %v1249
        %1336 = vmatmul.f32.gmra.mxu0 %v1247
        %v1337 = vpop.f32.mrf.mxu0
        %v1338 = vadd.f32 %v1316, %v1337
        %1339 = vdwg.mxu0
        %1340 = vmatpush.msra.mxu0 %v1311
        %1341 = vmatpush.msra.mxu0 %v1309
        %1342 = vmatpush.msra.mxu0 %v1307
        %1343 = vmatpush.msra.mxu0 %v1305
        %1344 = vmatpush.msra.mxu0 %v1303
        %1345 = vmatpush.msra.mxu0 %v1301
        %1346 = vmatpush.msra.mxu0 %v1299
        %1347 = vmatpush.msra.mxu0 %v1297
        %1348 = vmatpush.msra.mxu0 %v1295
        %1349 = vmatpush.msra.mxu0 %v1293
        %1350 = vmatpush.msra.mxu0 %v1291
        %1351 = vmatpush.msra.mxu0 %v1289
        %1352 = vmatpush.msra.mxu0 %v1287
        %1353 = vmatpush.msra.mxu0 %v1285
        %1354 = vmatpush.msra.mxu0 %v1283
        %1355 = vmatpush.msra.mxu0 %v1281
        %1356 = vmatmul.f32.gmra.mxu0 %v1248
        %v1357 = vpop.f32.mrf.mxu0
        %v1358 = vadd.f32 %v1338, %v1357
        %1359 = vdwg.mxu0
        %1360 = vmatpush.msra.mxu0 %v1280
        %1361 = vmatpush.msra.mxu0 %v1278
        %1362 = vmatpush.msra.mxu0 %v1276
        %1363 = vmatpush.msra.mxu0 %v1274
        %1364 = vmatpush.msra.mxu0 %v1272
        %1365 = vmatpush.msra.mxu0 %v1270
        %1366 = vmatpush.msra.mxu0 %v1268
        %1367 = vmatpush.msra.mxu0 %v1266
        %1368 = vmatpush.msra.mxu0 %v1264
        %1369 = vmatpush.msra.mxu0 %v1262
        %1370 = vmatpush.msra.mxu0 %v1260
        %1371 = vmatpush.msra.mxu0 %v1258
        %1372 = vmatpush.msra.mxu0 %v1256
        %1373 = vmatpush.msra.mxu0 %v1254
        %1374 = vmatpush.msra.mxu0 %v1252
        %1375 = vmatpush.msra.mxu0 %v1250
        %1376 = vmatmul.f32.gmra.mxu0 %v1247
        %v1377 = vpop.f32.mrf.mxu0
        %v1378 = vadd.f32 %v1317, %v1377
        %1379 = vdwg.mxu0
        %1380 = vmatpush.msra.mxu0 %v1312
        %1381 = vmatpush.msra.mxu0 %v1310
        %1382 = vmatpush.msra.mxu0 %v1308
        %1383 = vmatpush.msra.mxu0 %v1306
        %1384 = vmatpush.msra.mxu0 %v1304
        %1385 = vmatpush.msra.mxu0 %v1302
        %1386 = vmatpush.msra.mxu0 %v1300
        %1387 = vmatpush.msra.mxu0 %v1298
        %1388 = vmatpush.msra.mxu0 %v1296
        %1389 = vmatpush.msra.mxu0 %v1294
        %1390 = vmatpush.msra.mxu0 %v1292
        %1391 = vmatpush.msra.mxu0 %v1290
        %1392 = vmatpush.msra.mxu0 %v1288
        %1393 = vmatpush.msra.mxu0 %v1286
        %1394 = vmatpush.msra.mxu0 %v1284
        %1395 = vmatpush.msra.mxu0 %v1282
        %1396 = vmatmul.f32.gmra.mxu0 %v1248
        %v1397 = vpop.f32.mrf.mxu0
        %v1398 = vadd.f32 %v1378, %v1397
        %1399 = vdwg.mxu0
        %v1400 = vmax.f32 %v1358, 0.0
        %v1401 = vmax.f32 %v1398, 0.0
        %v1402 = vld [vmem:[%s6] sm:$0xff]
        %v1403 = vld [vmem:[%s6 + $0x8] sm:$0xff]
        %v1404 = vld [vmem:[%s6 + $0x10] sm:$0xff]
        %v1405 = vld [vmem:[%s6 + $0x18] sm:$0xff]
        %v1406 = vld [vmem:[%s6 + $0x20] sm:$0xff]
        %v1407 = vld [vmem:[%s6 + $0x28] sm:$0xff]
        %v1408 = vld [vmem:[%s6 + $0x30] sm:$0xff]
        %v1409 = vld [vmem:[%s6 + $0x38] sm:$0xff]
        %v1410 = vld [vmem:[%s6 + $0x40] sm:$0xff]
        %v1411 = vld [vmem:[%s6 + $0x48] sm:$0xff]
        %v1412 = vld [vmem:[%s6 + $0x50] sm:$0xff]
        %v1413 = vld [vmem:[%s6 + $0x58] sm:$0xff]
        %v1414 = vld [vmem:[%s7] sm:$0x1]
        %1416 = vrot.lane.b32.xlu0 %v1401, 80
        %v1417 = vpop.permute.xlu0 %1416
        %vm1419 = vcmask 261120
        %v1420 = vsel %vm1419, %v1400, 0.0
        %vm1421 = vcmask 392192
        %v1422 = vsel %vm1421, %v1420, %v1417
        %vm1423 = vcmask 654336
        %v1424 = vsel %vm1423, %v1422, 0.0
        %vm1425 = vcmask 785408
        %v1427 = vsel %vm1425, %v1424, 0
        %1429 = vmatpush.msra.mxu0 0.0
        %1430 = vmatpush.msra.mxu0 0.0
        %1431 = vmatpush.msra.mxu0 0.0
        %1432 = vmatpush.msra.mxu0 0.0
        %1433 = vmatpush.msra.mxu0 %v1413
        %1434 = vmatpush.msra.mxu0 %v1412
        %1435 = vmatpush.msra.mxu0 %v1411
        %1436 = vmatpush.msra.mxu0 %v1410
        %1437 = vmatpush.msra.mxu0 %v1409
        %1438 = vmatpush.msra.mxu0 %v1408
        %1439 = vmatpush.msra.mxu0 %v1407
        %1440 = vmatpush.msra.mxu0 %v1406
        %1441 = vmatpush.msra.mxu0 %v1405
        %1442 = vmatpush.msra.mxu0 %v1404
        %1443 = vmatpush.msra.mxu0 %v1403
        %1444 = vmatpush.msra.mxu0 %v1402
        %1445 = vmatmul.f32.gmra.mxu0 %v1427
        %v1446 = vpop.f32.mrf.mxu0
        %v1447 = vadd.f32 %v1414, %v1446
        %1448 = vdwg.mxu0
        %v1449 = vsub.f32 0.0, %v1447
        %v1450 = vmul.f32 %v1449, 1.442695
        %v1451 = vpow.pop %v1450
        %v1452 = vadd.f32 %v1451, 1.0
        %v1453 = vrcp.pop %v1452
        %v1454 = vmul.f32 %v1452, %v1453
        %v1455 = vsub.f32 1.0, %v1454
        %v1456 = vmul.f32 %v1453, %v1455
        %v1457 = vadd.f32 %v1453, %v1456
        %vm1458 = vweird.f32 %v1452
        %vm1459 = vweird.f32 %v1453
        %vm1460 = vmor %vm1458, %vm1459
        %v1461 = vsel %vm1460, %v1453, %v1457
        %v1462 = vand.u32 2147483647, %v1452
        %vm1463 = vcmp.eq.f32.partialorder %v1462, 8.507059e+37
        %v1464 = vand.u32 %v1452, 2147483648
        %v1465 = vor.u32 1.1754944e-38, %v1464
        %v1466 = vsel %vm1463, %v1465, %v1461
        %v1467 = vmul.f32 1.0, %v1466
        %v1468 = vtanh.pop %v1447
        %v1469 = vmul.f32 %v1467, 0.0
        %1471 = vrot.lane.b32.xlu0 %v1468, 96
        %v1472 = vpop.permute.xlu0 %1471
        %v1474 = vmul.f32 %v1467, %v1472
        %1476 = vrot.lane.b32.xlu0 %v1474, 16
        %v1477 = vpop.permute.xlu0 %1476
        %v1479 = vadd.f32 %v1469, %v1477
        %v1480 = vtanh.pop %v1479
        %1482 = vrot.lane.b32.xlu0 %v1480, 32
        %v1483 = vpop.permute.xlu0 %1482
        %v1485 = vmul.f32 %v1467, %v1483
        %1487 = vrot.lane.b32.xlu0 %v1400, 96
        %v1488 = vpop.permute.xlu0 %1487
        %1491 = vrot.lane.b32.xlu0 %v1485, 112
        %v1492 = vpop.permute.xlu0 %1491
        %1494 = vrot.lane.b32.xlu0 %v1401, 112
        %v1495 = vpop.permute.xlu0 %1494
        %1497 = vrot.lane.b32.xlu0 %v1485, 96
        %v1498 = vpop.permute.xlu0 %1497
        %v1500 = vsel %vm1419, %v1488, %v1492
        %v1501 = vsel %vm1421, %v1500, %v1495
        %v1502 = vsel %vm1423, %v1501, %v1498
        %v1504 = vsel %vm1425, %v1502, 0
        %1506 = vmatpush.msra.mxu0 0.0
        %1507 = vmatpush.msra.mxu0 0.0
        %1508 = vmatpush.msra.mxu0 0.0
        %1509 = vmatpush.msra.mxu0 0.0
        %1510 = vmatpush.msra.mxu0 %v1413
        %1511 = vmatpush.msra.mxu0 %v1412
        %1512 = vmatpush.msra.mxu0 %v1411
        %1513 = vmatpush.msra.mxu0 %v1410
        %1514 = vmatpush.msra.mxu0 %v1409
        %1515 = vmatpush.msra.mxu0 %v1408
        %1516 = vmatpush.msra.mxu0 %v1407
        %1517 = vmatpush.msra.mxu0 %v1406
        %1518 = vmatpush.msra.mxu0 %v1405
        %1519 = vmatpush.msra.mxu0 %v1404
        %1520 = vmatpush.msra.mxu0 %v1403
        %1521 = vmatpush.msra.mxu0 %v1402
        %1522 = vmatmul.f32.gmra.mxu0 %v1504
        %v1523 = vpop.f32.mrf.mxu0
        %v1524 = vadd.f32 %v1414, %v1523
        %1525 = vdwg.mxu0
        %v1526 = vsub.f32 0.0, %v1524
        %v1527 = vmul.f32 %v1526, 1.442695
        %v1528 = vpow.pop %v1527
        %v1529 = vadd.f32 %v1528, 1.0
        %v1530 = vrcp.pop %v1529
        %v1531 = vmul.f32 %v1529, %v1530
        %v1532 = vsub.f32 1.0, %v1531
        %v1533 = vmul.f32 %v1530, %v1532
        %v1534 = vadd.f32 %v1530, %v1533
        %vm1535 = vweird.f32 %v1529
        %vm1536 = vweird.f32 %v1530
        %vm1537 = vmor %vm1535, %vm1536
        %v1538 = vsel %vm1537, %v1530, %v1534
        %v1539 = vand.u32 2147483647, %v1529
        %vm1540 = vcmp.eq.f32.partialorder %v1539, 8.507059e+37
        %v1541 = vand.u32 %v1529, 2147483648
        %v1542 = vor.u32 1.1754944e-38, %v1541
        %v1543 = vsel %vm1540, %v1542, %v1538
        %v1544 = vmul.f32 1.0, %v1543
        %v1545 = vtanh.pop %v1524
        %v1546 = vmul.f32 %v1544, %v1479
        %1548 = vrot.lane.b32.xlu0 %v1545, 96
        %v1549 = vpop.permute.xlu0 %1548
        %v1551 = vmul.f32 %v1544, %v1549
        %1553 = vrot.lane.b32.xlu0 %v1551, 16
        %v1554 = vpop.permute.xlu0 %1553
        %v1556 = vadd.f32 %v1546, %v1554
        %v1557 = vtanh.pop %v1556
        %1559 = vrot.lane.b32.xlu0 %v1557, 32
        %v1560 = vpop.permute.xlu0 %1559
        %v1562 = vmul.f32 %v1544, %v1560
        %1563 = vrot.lane.b32.xlu0 %v1400, 64
        %v1564 = vpop.permute.xlu0 %1563
        %1567 = vrot.lane.b32.xlu0 %v1562, 112
        %v1568 = vpop.permute.xlu0 %1567
        %1570 = vrot.lane.b32.xlu0 %v1401, 16
        %v1571 = vpop.permute.xlu0 %1570
        %1573 = vrot.lane.b32.xlu0 %v1562, 96
        %v1574 = vpop.permute.xlu0 %1573
        %v1576 = vsel %vm1419, %v1564, %v1568
        %v1577 = vsel %vm1421, %v1576, %v1571
        %v1578 = vsel %vm1423, %v1577, %v1574
        %v1580 = vsel %vm1425, %v1578, 0
        %1582 = vmatpush.msra.mxu0 0.0
        %1583 = vmatpush.msra.mxu0 0.0
        %1584 = vmatpush.msra.mxu0 0.0
        %1585 = vmatpush.msra.mxu0 0.0
        %1586 = vmatpush.msra.mxu0 %v1413
        %1587 = vmatpush.msra.mxu0 %v1412
        %1588 = vmatpush.msra.mxu0 %v1411
        %1589 = vmatpush.msra.mxu0 %v1410
        %1590 = vmatpush.msra.mxu0 %v1409
        %1591 = vmatpush.msra.mxu0 %v1408
        %1592 = vmatpush.msra.mxu0 %v1407
        %1593 = vmatpush.msra.mxu0 %v1406
        %1594 = vmatpush.msra.mxu0 %v1405
        %1595 = vmatpush.msra.mxu0 %v1404
        %1596 = vmatpush.msra.mxu0 %v1403
        %1597 = vmatpush.msra.mxu0 %v1402
        %1598 = vmatmul.f32.gmra.mxu0 %v1580
        %v1599 = vpop.f32.mrf.mxu0
        %v1600 = vadd.f32 %v1414, %v1599
        %1601 = vdwg.mxu0
        %v1602 = vsub.f32 0.0, %v1600
        %v1603 = vmul.f32 %v1602, 1.442695
        %v1604 = vpow.pop %v1603
        %v1605 = vadd.f32 %v1604, 1.0
        %v1606 = vrcp.pop %v1605
        %v1607 = vmul.f32 %v1605, %v1606
        %v1608 = vsub.f32 1.0, %v1607
        %v1609 = vmul.f32 %v1606, %v1608
        %v1610 = vadd.f32 %v1606, %v1609
        %vm1611 = vweird.f32 %v1605
        %vm1612 = vweird.f32 %v1606
        %vm1613 = vmor %vm1611, %vm1612
        %v1614 = vsel %vm1613, %v1606, %v1610
        %v1615 = vand.u32 2147483647, %v1605
        %vm1616 = vcmp.eq.f32.partialorder %v1615, 8.507059e+37
        %v1617 = vand.u32 %v1605, 2147483648
        %v1618 = vor.u32 1.1754944e-38, %v1617
        %v1619 = vsel %vm1616, %v1618, %v1614
        %v1620 = vmul.f32 1.0, %v1619
        %v1621 = vtanh.pop %v1600
        %v1622 = vmul.f32 %v1620, %v1556
        %1624 = vrot.lane.b32.xlu0 %v1621, 96
        %v1625 = vpop.permute.xlu0 %1624
        %v1627 = vmul.f32 %v1620, %v1625
        %1629 = vrot.lane.b32.xlu0 %v1627, 16
        %v1630 = vpop.permute.xlu0 %1629
        %v1632 = vadd.f32 %v1622, %v1630
        %v1633 = vtanh.pop %v1632
        %1635 = vrot.lane.b32.xlu0 %v1633, 32
        %v1636 = vpop.permute.xlu0 %1635
        %v1638 = vmul.f32 %v1620, %v1636
        %1639 = vrot.lane.b32.xlu0 %v1400, 32
        %v1640 = vpop.permute.xlu0 %1639
        %1643 = vrot.lane.b32.xlu0 %v1638, 112
        %v1644 = vpop.permute.xlu0 %1643
        %1646 = vrot.lane.b32.xlu0 %v1401, 48
        %v1647 = vpop.permute.xlu0 %1646
        %1649 = vrot.lane.b32.xlu0 %v1638, 96
        %v1650 = vpop.permute.xlu0 %1649
        %v1652 = vsel %vm1419, %v1640, %v1644
        %v1653 = vsel %vm1421, %v1652, %v1647
        %v1654 = vsel %vm1423, %v1653, %v1650
        %v1656 = vsel %vm1425, %v1654, 0
        %1658 = vmatpush.msra.mxu0 0.0
        %1659 = vmatpush.msra.mxu0 0.0
        %1660 = vmatpush.msra.mxu0 0.0
        %1661 = vmatpush.msra.mxu0 0.0
        %1662 = vmatpush.msra.mxu0 %v1413
        %1663 = vmatpush.msra.mxu0 %v1412
        %1664 = vmatpush.msra.mxu0 %v1411
        %1665 = vmatpush.msra.mxu0 %v1410
        %1666 = vmatpush.msra.mxu0 %v1409
        %1667 = vmatpush.msra.mxu0 %v1408
        %1668 = vmatpush.msra.mxu0 %v1407
        %1669 = vmatpush.msra.mxu0 %v1406
        %1670 = vmatpush.msra.mxu0 %v1405
        %1671 = vmatpush.msra.mxu0 %v1404
        %1672 = vmatpush.msra.mxu0 %v1403
        %1673 = vmatpush.msra.mxu0 %v1402
        %1674 = vmatmul.f32.gmra.mxu0 %v1656
        %v1675 = vpop.f32.mrf.mxu0
        %v1676 = vadd.f32 %v1414, %v1675
        %1677 = vdwg.mxu0
        %v1678 = vsub.f32 0.0, %v1676
        %v1679 = vmul.f32 %v1678, 1.442695
        %v1680 = vpow.pop %v1679
        %v1681 = vadd.f32 %v1680, 1.0
        %v1682 = vrcp.pop %v1681
        %v1683 = vmul.f32 %v1681, %v1682
        %v1684 = vsub.f32 1.0, %v1683
        %v1685 = vmul.f32 %v1682, %v1684
        %v1686 = vadd.f32 %v1682, %v1685
        %vm1687 = vweird.f32 %v1681
        %vm1688 = vweird.f32 %v1682
        %vm1689 = vmor %vm1687, %vm1688
        %v1690 = vsel %vm1689, %v1682, %v1686
        %v1691 = vand.u32 2147483647, %v1681
        %vm1692 = vcmp.eq.f32.partialorder %v1691, 8.507059e+37
        %v1693 = vand.u32 %v1681, 2147483648
        %v1694 = vor.u32 1.1754944e-38, %v1693
        %v1695 = vsel %vm1692, %v1694, %v1690
        %v1696 = vmul.f32 1.0, %v1695
        %v1697 = vtanh.pop %v1676
        %v1698 = vmul.f32 %v1696, %v1632
        %1700 = vrot.lane.b32.xlu0 %v1697, 96
        %v1701 = vpop.permute.xlu0 %1700
        %v1703 = vmul.f32 %v1696, %v1701
        %1705 = vrot.lane.b32.xlu0 %v1703, 16
        %v1706 = vpop.permute.xlu0 %1705
        %v1708 = vadd.f32 %v1698, %v1706
        %v1709 = vtanh.pop %v1708
        %1711 = vrot.lane.b32.xlu0 %v1709, 32
        %v1712 = vpop.permute.xlu0 %1711
        %v1714 = vmul.f32 %v1696, %v1712
        %1716 = vrot.lane.b32.xlu0 %v1714, 112
        %v1717 = vpop.permute.xlu0 %1716
        %1719 = vrot.lane.b32.xlu0 %v1400, 80
        %v1720 = vpop.permute.xlu0 %1719
        %1722 = vrot.lane.b32.xlu0 %v1714, 96
        %v1723 = vpop.permute.xlu0 %1722
        %v1725 = vsel %vm1419, %v1401, %v1717
        %v1726 = vsel %vm1421, %v1725, %v1720
        %v1727 = vsel %vm1423, %v1726, %v1723
        %v1729 = vsel %vm1425, %v1727, 0
        %1731 = vmatpush.msra.mxu0 0.0
        %1732 = vmatpush.msra.mxu0 0.0
        %1733 = vmatpush.msra.mxu0 0.0
        %1734 = vmatpush.msra.mxu0 0.0
        %1735 = vmatpush.msra.mxu0 %v1413
        %1736 = vmatpush.msra.mxu0 %v1412
        %1737 = vmatpush.msra.mxu0 %v1411
        %1738 = vmatpush.msra.mxu0 %v1410
        %1739 = vmatpush.msra.mxu0 %v1409
        %1740 = vmatpush.msra.mxu0 %v1408
        %1741 = vmatpush.msra.mxu0 %v1407
        %1742 = vmatpush.msra.mxu0 %v1406
        %1743 = vmatpush.msra.mxu0 %v1405
        %1744 = vmatpush.msra.mxu0 %v1404
        %1745 = vmatpush.msra.mxu0 %v1403
        %1746 = vmatpush.msra.mxu0 %v1402
        %1747 = vmatmul.f32.gmra.mxu0 %v1729
        %v1748 = vpop.f32.mrf.mxu0
        %v1749 = vadd.f32 %v1414, %v1748
        %1750 = vdwg.mxu0
        %v1751 = vsub.f32 0.0, %v1749
        %v1752 = vmul.f32 %v1751, 1.442695
        %v1753 = vpow.pop %v1752
        %v1754 = vadd.f32 %v1753, 1.0
        %v1755 = vrcp.pop %v1754
        %v1756 = vmul.f32 %v1754, %v1755
        %v1757 = vsub.f32 1.0, %v1756
        %v1758 = vmul.f32 %v1755, %v1757
        %v1759 = vadd.f32 %v1755, %v1758
        %vm1760 = vweird.f32 %v1754
        %vm1761 = vweird.f32 %v1755
        %vm1762 = vmor %vm1760, %vm1761
        %v1763 = vsel %vm1762, %v1755, %v1759
        %v1764 = vand.u32 2147483647, %v1754
        %vm1765 = vcmp.eq.f32.partialorder %v1764, 8.507059e+37
        %v1766 = vand.u32 %v1754, 2147483648
        %v1767 = vor.u32 1.1754944e-38, %v1766
        %v1768 = vsel %vm1765, %v1767, %v1763
        %v1769 = vmul.f32 1.0, %v1768
        %v1770 = vtanh.pop %v1749
        %v1771 = vmul.f32 %v1769, %v1708
        %1773 = vrot.lane.b32.xlu0 %v1770, 96
        %v1774 = vpop.permute.xlu0 %1773
        %v1776 = vmul.f32 %v1769, %v1774
        %1778 = vrot.lane.b32.xlu0 %v1776, 16
        %v1779 = vpop.permute.xlu0 %1778
        %v1781 = vadd.f32 %v1771, %v1779
        %v1782 = vtanh.pop %v1781
        %1784 = vrot.lane.b32.xlu0 %v1782, 32
        %v1785 = vpop.permute.xlu0 %1784
        %v1787 = vmul.f32 %v1769, %v1785
        %1788 = vrot.lane.b32.xlu0 %v1401, 96
        %v1789 = vpop.permute.xlu0 %1788
        %1792 = vrot.lane.b32.xlu0 %v1787, 112
        %v1793 = vpop.permute.xlu0 %1792
        %1795 = vrot.lane.b32.xlu0 %v1400, 112
        %v1796 = vpop.permute.xlu0 %1795
        %1798 = vrot.lane.b32.xlu0 %v1787, 96
        %v1799 = vpop.permute.xlu0 %1798
        %v1801 = vsel %vm1419, %v1789, %v1793
        %v1802 = vsel %vm1421, %v1801, %v1796
        %v1803 = vsel %vm1423, %v1802, %v1799
        %v1805 = vsel %vm1425, %v1803, 0
        %1807 = vmatpush.msra.mxu0 0.0
        %1808 = vmatpush.msra.mxu0 0.0
        %1809 = vmatpush.msra.mxu0 0.0
        %1810 = vmatpush.msra.mxu0 0.0
        %1811 = vmatpush.msra.mxu0 %v1413
        %1812 = vmatpush.msra.mxu0 %v1412
        %1813 = vmatpush.msra.mxu0 %v1411
        %1814 = vmatpush.msra.mxu0 %v1410
        %1815 = vmatpush.msra.mxu0 %v1409
        %1816 = vmatpush.msra.mxu0 %v1408
        %1817 = vmatpush.msra.mxu0 %v1407
        %1818 = vmatpush.msra.mxu0 %v1406
        %1819 = vmatpush.msra.mxu0 %v1405
        %1820 = vmatpush.msra.mxu0 %v1404
        %1821 = vmatpush.msra.mxu0 %v1403
        %1822 = vmatpush.msra.mxu0 %v1402
        %1823 = vmatmul.f32.gmra.mxu0 %v1805
        %v1824 = vpop.f32.mrf.mxu0
        %v1825 = vadd.f32 %v1414, %v1824
        %1826 = vdwg.mxu0
        %v1827 = vsub.f32 0.0, %v1825
        %v1828 = vmul.f32 %v1827, 1.442695
        %v1829 = vpow.pop %v1828
        %v1830 = vadd.f32 %v1829, 1.0
        %v1831 = vrcp.pop %v1830
        %v1832 = vmul.f32 %v1830, %v1831
        %v1833 = vsub.f32 1.0, %v1832
        %v1834 = vmul.f32 %v1831, %v1833
        %v1835 = vadd.f32 %v1831, %v1834
        %vm1836 = vweird.f32 %v1830
        %vm1837 = vweird.f32 %v1831
        %vm1838 = vmor %vm1836, %vm1837
        %v1839 = vsel %vm1838, %v1831, %v1835
        %v1840 = vand.u32 2147483647, %v1830
        %vm1841 = vcmp.eq.f32.partialorder %v1840, 8.507059e+37
        %v1842 = vand.u32 %v1830, 2147483648
        %v1843 = vor.u32 1.1754944e-38, %v1842
        %v1844 = vsel %vm1841, %v1843, %v1839
        %v1845 = vmul.f32 1.0, %v1844
        %v1846 = vtanh.pop %v1825
        %v1847 = vmul.f32 %v1845, %v1781
        %1849 = vrot.lane.b32.xlu0 %v1846, 96
        %v1850 = vpop.permute.xlu0 %1849
        %v1852 = vmul.f32 %v1845, %v1850
        %1854 = vrot.lane.b32.xlu0 %v1852, 16
        %v1855 = vpop.permute.xlu0 %1854
        %v1857 = vadd.f32 %v1847, %v1855
        %v1858 = vtanh.pop %v1857
        %1860 = vrot.lane.b32.xlu0 %v1858, 32
        %v1861 = vpop.permute.xlu0 %1860
        %v1863 = vmul.f32 %v1845, %v1861
        %1864 = vrot.lane.b32.xlu0 %v1401, 64
        %v1865 = vpop.permute.xlu0 %1864
        %1868 = vrot.lane.b32.xlu0 %v1863, 112
        %v1869 = vpop.permute.xlu0 %1868
        %1871 = vrot.lane.b32.xlu0 %v1400, 16
        %v1872 = vpop.permute.xlu0 %1871
        %1874 = vrot.lane.b32.xlu0 %v1863, 96
        %v1875 = vpop.permute.xlu0 %1874
        %v1877 = vsel %vm1419, %v1865, %v1869
        %v1878 = vsel %vm1421, %v1877, %v1872
        %v1879 = vsel %vm1423, %v1878, %v1875
        %v1881 = vsel %vm1425, %v1879, 0
        %1883 = vmatpush.msra.mxu0 0.0
        %1884 = vmatpush.msra.mxu0 0.0
        %1885 = vmatpush.msra.mxu0 0.0
        %1886 = vmatpush.msra.mxu0 0.0
        %1887 = vmatpush.msra.mxu0 %v1413
        %1888 = vmatpush.msra.mxu0 %v1412
        %1889 = vmatpush.msra.mxu0 %v1411
        %1890 = vmatpush.msra.mxu0 %v1410
        %1891 = vmatpush.msra.mxu0 %v1409
        %1892 = vmatpush.msra.mxu0 %v1408
        %1893 = vmatpush.msra.mxu0 %v1407
        %1894 = vmatpush.msra.mxu0 %v1406
        %1895 = vmatpush.msra.mxu0 %v1405
        %1896 = vmatpush.msra.mxu0 %v1404
        %1897 = vmatpush.msra.mxu0 %v1403
        %1898 = vmatpush.msra.mxu0 %v1402
        %1899 = vmatmul.f32.gmra.mxu0 %v1881
        %v1900 = vpop.f32.mrf.mxu0
        %v1901 = vadd.f32 %v1414, %v1900
        %1902 = vdwg.mxu0
        %v1903 = vsub.f32 0.0, %v1901
        %v1904 = vmul.f32 %v1903, 1.442695
        %v1905 = vpow.pop %v1904
        %v1906 = vadd.f32 %v1905, 1.0
        %v1907 = vrcp.pop %v1906
        %v1908 = vmul.f32 %v1906, %v1907
        %v1909 = vsub.f32 1.0, %v1908
        %v1910 = vmul.f32 %v1907, %v1909
        %v1911 = vadd.f32 %v1907, %v1910
        %vm1912 = vweird.f32 %v1906
        %vm1913 = vweird.f32 %v1907
        %vm1914 = vmor %vm1912, %vm1913
        %v1915 = vsel %vm1914, %v1907, %v1911
        %v1916 = vand.u32 2147483647, %v1906
        %vm1917 = vcmp.eq.f32.partialorder %v1916, 8.507059e+37
        %v1918 = vand.u32 %v1906, 2147483648
        %v1919 = vor.u32 1.1754944e-38, %v1918
        %v1920 = vsel %vm1917, %v1919, %v1915
        %v1921 = vmul.f32 1.0, %v1920
        %v1922 = vtanh.pop %v1901
        %v1923 = vmul.f32 %v1921, %v1857
        %1925 = vrot.lane.b32.xlu0 %v1922, 96
        %v1926 = vpop.permute.xlu0 %1925
        %v1928 = vmul.f32 %v1921, %v1926
        %1930 = vrot.lane.b32.xlu0 %v1928, 16
        %v1931 = vpop.permute.xlu0 %1930
        %v1933 = vadd.f32 %v1923, %v1931
        %v1934 = vtanh.pop %v1933
        %1936 = vrot.lane.b32.xlu0 %v1934, 32
        %v1937 = vpop.permute.xlu0 %1936
        %v1939 = vmul.f32 %v1921, %v1937
        %1940 = vrot.lane.b32.xlu0 %v1401, 32
        %v1941 = vpop.permute.xlu0 %1940
        %1944 = vrot.lane.b32.xlu0 %v1939, 112
        %v1945 = vpop.permute.xlu0 %1944
        %1947 = vrot.lane.b32.xlu0 %v1400, 48
        %v1948 = vpop.permute.xlu0 %1947
        %1950 = vrot.lane.b32.xlu0 %v1939, 96
        %v1951 = vpop.permute.xlu0 %1950
        %v1953 = vsel %vm1419, %v1941, %v1945
        %v1954 = vsel %vm1421, %v1953, %v1948
        %v1955 = vsel %vm1423, %v1954, %v1951
        %v1957 = vsel %vm1425, %v1955, 0
        %1959 = vmatpush.msra.mxu0 0.0
        %1960 = vmatpush.msra.mxu0 0.0
        %1961 = vmatpush.msra.mxu0 0.0
        %1962 = vmatpush.msra.mxu0 0.0
        %1963 = vmatpush.msra.mxu0 %v1413
        %1964 = vmatpush.msra.mxu0 %v1412
        %1965 = vmatpush.msra.mxu0 %v1411
        %1966 = vmatpush.msra.mxu0 %v1410
        %1967 = vmatpush.msra.mxu0 %v1409
        %1968 = vmatpush.msra.mxu0 %v1408
        %1969 = vmatpush.msra.mxu0 %v1407
        %1970 = vmatpush.msra.mxu0 %v1406
        %1971 = vmatpush.msra.mxu0 %v1405
        %1972 = vmatpush.msra.mxu0 %v1404
        %1973 = vmatpush.msra.mxu0 %v1403
        %1974 = vmatpush.msra.mxu0 %v1402
        %1975 = vmatmul.f32.gmra.mxu0 %v1957
        %v1976 = vpop.f32.mrf.mxu0
        %v1977 = vadd.f32 %v1414, %v1976
        %1978 = vdwg.mxu0
        %v1979 = vsub.f32 0.0, %v1977
        %v1980 = vmul.f32 %v1979, 1.442695
        %v1981 = vpow.pop %v1980
        %v1982 = vadd.f32 %v1981, 1.0
        %v1983 = vrcp.pop %v1982
        %v1984 = vmul.f32 %v1982, %v1983
        %v1985 = vsub.f32 1.0, %v1984
        %v1986 = vmul.f32 %v1983, %v1985
        %v1987 = vadd.f32 %v1983, %v1986
        %vm1988 = vweird.f32 %v1982
        %vm1989 = vweird.f32 %v1983
        %vm1990 = vmor %vm1988, %vm1989
        %v1991 = vsel %vm1990, %v1983, %v1987
        %v1992 = vand.u32 2147483647, %v1982
        %vm1993 = vcmp.eq.f32.partialorder %v1992, 8.507059e+37
        %v1994 = vand.u32 %v1982, 2147483648
        %v1995 = vor.u32 1.1754944e-38, %v1994
        %v1996 = vsel %vm1993, %v1995, %v1991
        %v1997 = vmul.f32 1.0, %v1996
        %v1998 = vtanh.pop %v1977
        %v1999 = vmul.f32 %v1997, %v1933
        %2001 = vrot.lane.b32.xlu0 %v1998, 96
        %v2002 = vpop.permute.xlu0 %2001
        %v2004 = vmul.f32 %v1997, %v2002
        %2006 = vrot.lane.b32.xlu0 %v2004, 16
        %v2007 = vpop.permute.xlu0 %2006
        %v2009 = vadd.f32 %v1999, %v2007
        %v2010 = vtanh.pop %v2009
        %2012 = vrot.lane.b32.xlu0 %v2010, 32
        %v2013 = vpop.permute.xlu0 %2012
        %v2015 = vmul.f32 %v1997, %v2013
        %2016 = vrot.lane.b32.xlu0 %v1485, 80
        %v2017 = vpop.permute.xlu0 %2016
        %2020 = vrot.lane.b32.xlu0 %v2015, 32
        %v2021 = vpop.permute.xlu0 %2020
        %2023 = vrot.lane.b32.xlu0 %v1939, 64
        %v2024 = vpop.permute.xlu0 %2023
        %2026 = vrot.lane.b32.xlu0 %v1638, 16
        %v2027 = vpop.permute.xlu0 %2026
        %2029 = vrot.lane.b32.xlu0 %v1714, 48
        %v2030 = vpop.permute.xlu0 %2029
        %2032 = vrot.lane.b32.xlu0 %v1787, 80
        %v2033 = vpop.permute.xlu0 %2032
        %2035 = vrot.lane.b32.xlu0 %v1714, 32
        %v2036 = vpop.permute.xlu0 %2035
        %2038 = vrot.lane.b32.xlu0 %v1638, 64
        %v2039 = vpop.permute.xlu0 %2038
        %2041 = vrot.lane.b32.xlu0 %v1939, 16
        %v2042 = vpop.permute.xlu0 %2041
        %2044 = vrot.lane.b32.xlu0 %v2015, 48
        %v2045 = vpop.permute.xlu0 %2044
        %vm2047 = vcmask 130048
        %v2048 = vsel %vm2047, %v2017, %v2021
        %v2049 = vsel %vm1419, %v2048, %v1568
        %v2050 = vsel %vm1421, %v2049, %v2024
        %vm2051 = vcmask 523264
        %v2052 = vsel %vm2051, %v2050, %v2027
        %v2053 = vsel %vm1423, %v2052, %v1875
        %v2054 = vsel %vm1425, %v2053, %v2030
        %vm2055 = vcmask 916480
        %v2056 = vsel %vm2055, %v2054, %v1787
        %v2057 = vsel %vm2047, %v2033, %v2036
        %v2058 = vsel %vm1419, %v2057, %v1869
        %v2059 = vsel %vm1421, %v2058, %v2039
        %v2060 = vsel %vm2051, %v2059, %v2042
        %v2061 = vsel %vm1423, %v2060, %v1574
        %v2062 = vsel %vm1425, %v2061, %v2045
        %v2063 = vsel %vm2055, %v2062, %v1485
        %v2064 = vld [vmem:[#allocation7] sm:$0xff]
        %v2065 = vld [vmem:[#allocation7 + $0x8] sm:$0xff]
        %v2066 = vld [vmem:[#allocation7 + $0x10] sm:$0xff]
        %v2067 = vld [vmem:[#allocation7 + $0x18] sm:$0xff]
        %v2068 = vld [vmem:[#allocation7 + $0x20] sm:$0xff]
        %v2069 = vld [vmem:[#allocation7 + $0x28] sm:$0xff]
        %v2070 = vld [vmem:[#allocation7 + $0x30] sm:$0xff]
        %v2071 = vld [vmem:[#allocation7 + $0x38] sm:$0xff]
        %v2072 = vld [vmem:[#allocation7 + $0x40] sm:$0xff]
        %v2073 = vld [vmem:[#allocation7 + $0x48] sm:$0xff]
        %v2074 = vld [vmem:[#allocation7 + $0x50] sm:$0xff]
        %v2075 = vld [vmem:[#allocation7 + $0x58] sm:$0xff]
        %v2076 = vld [vmem:[#allocation7 + $0x60] sm:$0xff]
        %v2077 = vld [vmem:[#allocation7 + $0x68] sm:$0xff]
        %v2078 = vld [vmem:[#allocation7 + $0x70] sm:$0xff]
        %v2079 = vld [vmem:[#allocation7 + $0x78] sm:$0xff]
        %v2080 = vld [vmem:[#allocation7 + $0x80] sm:$0xff]
        %v2081 = vld [vmem:[#allocation7 + $0x88] sm:$0xff]
        %v2082 = vld [vmem:[#allocation7 + $0x90] sm:$0xff]
        %v2083 = vld [vmem:[#allocation7 + $0x98] sm:$0xff]
        %v2084 = vld [vmem:[#allocation7 + $0xa0] sm:$0xff]
        %v2085 = vld [vmem:[#allocation7 + $0xa8] sm:$0xff]
        %v2086 = vld [vmem:[#allocation7 + $0xb0] sm:$0xff]
        %v2087 = vld [vmem:[#allocation7 + $0xb8] sm:$0xff]
        %v2088 = vld [vmem:[#allocation7 + $0xc0] sm:$0xff]
        %v2089 = vld [vmem:[#allocation7 + $0xc8] sm:$0xff]
        %v2090 = vld [vmem:[#allocation7 + $0xd0] sm:$0xff]
        %v2091 = vld [vmem:[#allocation7 + $0xd8] sm:$0xff]
        %v2092 = vld [vmem:[#allocation7 + $0xe0] sm:$0xff]
        %v2093 = vld [vmem:[#allocation7 + $0xe8] sm:$0xff]
        %v2094 = vld [vmem:[#allocation7 + $0xf0] sm:$0xff]
        %v2095 = vld [vmem:[#allocation7 + $0xf8] sm:$0xff]
        %2096 = vmatpush.msra.mxu0 %v2079
        %2097 = vmatpush.msra.mxu0 %v2078
        %2098 = vmatpush.msra.mxu0 %v2077
        %2099 = vmatpush.msra.mxu0 %v2076
        %2100 = vmatpush.msra.mxu0 %v2075
        %2101 = vmatpush.msra.mxu0 %v2074
        %2102 = vmatpush.msra.mxu0 %v2073
        %2103 = vmatpush.msra.mxu0 %v2072
        %2104 = vmatpush.msra.mxu0 %v2071
        %2105 = vmatpush.msra.mxu0 %v2070
        %2106 = vmatpush.msra.mxu0 %v2069
        %2107 = vmatpush.msra.mxu0 %v2068
        %2108 = vmatpush.msra.mxu0 %v2067
        %2109 = vmatpush.msra.mxu0 %v2066
        %2110 = vmatpush.msra.mxu0 %v2065
        %2111 = vmatpush.msra.mxu0 %v2064
        %2112 = vmatmul.f32.gmra.mxu0 %v2056
        %v2113 = vpop.f32.mrf.mxu0
        %v2114 = vadd.f32 0.0, %v2113
        %2115 = vdwg.mxu0
        %2116 = vmatpush.msra.mxu0 %v2095
        %2117 = vmatpush.msra.mxu0 %v2094
        %2118 = vmatpush.msra.mxu0 %v2093
        %2119 = vmatpush.msra.mxu0 %v2092
        %2120 = vmatpush.msra.mxu0 %v2091
        %2121 = vmatpush.msra.mxu0 %v2090
        %2122 = vmatpush.msra.mxu0 %v2089
        %2123 = vmatpush.msra.mxu0 %v2088
        %2124 = vmatpush.msra.mxu0 %v2087
        %2125 = vmatpush.msra.mxu0 %v2086
        %2126 = vmatpush.msra.mxu0 %v2085
        %2127 = vmatpush.msra.mxu0 %v2084
        %2128 = vmatpush.msra.mxu0 %v2083
        %2129 = vmatpush.msra.mxu0 %v2082
        %2130 = vmatpush.msra.mxu0 %v2081
        %2131 = vmatpush.msra.mxu0 %v2080
        %2132 = vmatmul.f32.gmra.mxu0 %v2063
        %v2133 = vpop.f32.mrf.mxu0
        %v2134 = vadd.f32 %v2114, %v2133
        %2135 = vdwg.mxu0
        %v2136 = vld [vmem:[%s934] sm:$0x1]
        %v2137 = vld [vmem:[%s9] sm:$0xff]
        %v2138 = vld [vmem:[%s9 + $0x8] sm:$0xff]
        %v2139 = vld [vmem:[%s9 + $0x10] sm:$0xff]
        %v2140 = vld [vmem:[%s9 + $0x18] sm:$0xff]
        %v2141 = vld [vmem:[%s9 + $0x20] sm:$0xff]
        %v2142 = vld [vmem:[%s9 + $0x28] sm:$0xff]
        %v2143 = vld [vmem:[%s10] sm:$0xff]
        %v2144 = vld [vmem:[%s10 + $0x8] sm:$0xff]
        %v2145 = vld [vmem:[%s10 + $0x10] sm:$0xff]
        %v2146 = vld [vmem:[%s10 + $0x18] sm:$0xff]
        %v2147 = vld [vmem:[%s10 + $0x20] sm:$0xff]
        %v2148 = vld [vmem:[%s10 + $0x28] sm:$0xff]
        %v2149 = vld [vmem:[%s10 + $0x30] sm:$0xff]
        %v2150 = vld [vmem:[%s10 + $0x38] sm:$0xff]
        %v2151 = vld [vmem:[%s10 + $0x40] sm:$0xff]
        %v2152 = vld [vmem:[%s10 + $0x48] sm:$0xff]
        %v2153 = vld [vmem:[%s10 + $0x50] sm:$0xff]
        %v2154 = vld [vmem:[%s10 + $0x58] sm:$0xff]
        %v2155 = vld [vmem:[%s10 + $0x60] sm:$0xff]
        %v2156 = vld [vmem:[%s10 + $0x68] sm:$0xff]
        %v2157 = vld [vmem:[%s10 + $0x70] sm:$0xff]
        %v2158 = vld [vmem:[%s10 + $0x78] sm:$0xff]
        %v2159 = vld [vmem:[#allocation9] sm:$0xff]
        %v2160 = vld [vmem:[#allocation9 + $0x8] sm:$0xff]
        %v2161 = vld [vmem:[#allocation9 + $0x10] sm:$0xff]
        %v2162 = vld [vmem:[#allocation9 + $0x18] sm:$0xff]
        %v2163 = vld [vmem:[#allocation9 + $0x20] sm:$0xff]
        %v2164 = vld [vmem:[#allocation9 + $0x28] sm:$0xff]
        %v2165 = vld [vmem:[#allocation9 + $0x30] sm:$0xff]
        %v2166 = vld [vmem:[#allocation9 + $0x38] sm:$0xff]
        %v2167 = vld [vmem:[#allocation9 + $0x40] sm:$0xff]
        %v2168 = vld [vmem:[#allocation9 + $0x48] sm:$0xff]
        %v2169 = vld [vmem:[#allocation9 + $0x50] sm:$0xff]
        %v2170 = vld [vmem:[#allocation9 + $0x58] sm:$0xff]
        %v2171 = vld [vmem:[#allocation10] sm:$0xff]
        %v2172 = vld [vmem:[#allocation10 + $0x8] sm:$0xff]
        %v2173 = vld [vmem:[#allocation10 + $0x10] sm:$0xff]
        %v2174 = vld [vmem:[#allocation10 + $0x18] sm:$0xff]
        %v2175 = vld [vmem:[#allocation10 + $0x20] sm:$0xff]
        %v2176 = vld [vmem:[#allocation10 + $0x28] sm:$0xff]
        %v2177 = vld [vmem:[#allocation10 + $0x30] sm:$0xff]
        %v2178 = vld [vmem:[#allocation10 + $0x38] sm:$0xff]
        %v2179 = vld [vmem:[#allocation10 + $0x40] sm:$0xff]
        %v2180 = vld [vmem:[#allocation10 + $0x48] sm:$0xff]
        %v2181 = vld [vmem:[#allocation10 + $0x50] sm:$0xff]
        %v2182 = vld [vmem:[#allocation10 + $0x58] sm:$0xff]
        %v2183 = vld [vmem:[%s17] sm:$0xff]
        %v2184 = vld [vmem:[%s17 + $0x8] sm:$0xff]
        %v2185 = vld [vmem:[%s17 + $0x10] sm:$0xff]
        %v2186 = vld [vmem:[%s17 + $0x18] sm:$0xff]
        %v2187 = vld [vmem:[%s17 + $0x20] sm:$0xff]
        %v2188 = vld [vmem:[%s17 + $0x28] sm:$0xff]
        %v2189 = vld [vmem:[%s17 + $0x30] sm:$0xff]
        %v2190 = vld [vmem:[%s17 + $0x38] sm:$0xff]
        %v2191 = vld [vmem:[%s11] sm:$0xff]
        %v2192 = vld [vmem:[%s11 + $0x8] sm:$0xff]
        %v2193 = vld [vmem:[%s12] sm:$0xff]
        %v2194 = vld [vmem:[%s12 + $0x8] sm:$0xff]
        %v2195 = vld [vmem:[%s12 + $0x10] sm:$0xff]
        %v2196 = vld [vmem:[%s12 + $0x18] sm:$0xff]
        %v2197 = vld [vmem:[%s13] sm:$0x1]
        %s2198 = scalar_lea.vmem %s13, 1
        %v2199 = vld [vmem:[%s2198] sm:$0x1]
        %v2200 = vld [vmem:[%s16] sm:$0x1]
        %s2201 = scalar_lea.vmem %s16, 1
        %v2202 = vld [vmem:[%s2201] sm:$0x1]
        %v2203 = vld [vmem:[%s18] sm:$0x1]
        %v2205 = vsel %vm2047, 0.0, 0
        %2207 = vmatpush.msra.mxu0 0.0
        %2208 = vmatpush.msra.mxu0 0.0
        %2209 = vmatpush.msra.mxu0 0.0
        %2210 = vmatpush.msra.mxu0 0.0
        %2211 = vmatpush.msra.mxu0 0.0
        %2212 = vmatpush.msra.mxu0 0.0
        %2213 = vmatpush.msra.mxu0 0.0
        %2214 = vmatpush.msra.mxu0 0.0
        %2215 = vmatpush.msra.mxu0 0.0
        %2216 = vmatpush.msra.mxu0 0.0
        %2217 = vmatpush.msra.mxu0 0.0
        %2218 = vmatpush.msra.mxu0 0.0
        %2219 = vmatpush.msra.mxu0 0.0
        %2220 = vmatpush.msra.mxu0 0.0
        %2221 = vmatpush.msra.mxu0 %v2192
        %2222 = vmatpush.msra.mxu0 %v2191
        %2223 = vmatmul.f32.gmra.mxu0 %v2205
        %v2224 = vpop.f32.mrf.mxu0
        %v2225 = vadd.f32 %v2197, %v2224
        %2226 = vdwg.mxu0
        %v2227 = vmax.f32 %v2225, 0.0
        %v2229 = vsel %vm1419, %v2227, 0
        %2231 = vmatpush.msra.mxu0 0.0
        %2232 = vmatpush.msra.mxu0 0.0
        %2233 = vmatpush.msra.mxu0 0.0
        %2234 = vmatpush.msra.mxu0 0.0
        %2235 = vmatpush.msra.mxu0 0.0
        %2236 = vmatpush.msra.mxu0 0.0
        %2237 = vmatpush.msra.mxu0 0.0
        %2238 = vmatpush.msra.mxu0 0.0
        %2239 = vmatpush.msra.mxu0 0.0
        %2240 = vmatpush.msra.mxu0 0.0
        %2241 = vmatpush.msra.mxu0 0.0
        %2242 = vmatpush.msra.mxu0 0.0
        %2243 = vmatpush.msra.mxu0 %v2196
        %2244 = vmatpush.msra.mxu0 %v2195
        %2245 = vmatpush.msra.mxu0 %v2194
        %2246 = vmatpush.msra.mxu0 %v2193
        %2247 = vmatmul.f32.gmra.mxu0 %v2229
        %v2248 = vpop.f32.mrf.mxu0
        %v2249 = vadd.f32 %v2199, %v2248
        %2250 = vdwg.mxu0
        %v2251 = vmax.f32 %v2249, 0.0
        %v2252 = vsel %vm1419, %v2251, 0.0
        %v2253 = vsel %vm2051, %v2252, 0.0
        %v2255 = vsel %vm1425, %v2253, 0
        %2257 = vmatpush.msra.mxu0 0.0
        %2258 = vmatpush.msra.mxu0 0.0
        %2259 = vmatpush.msra.mxu0 0.0
        %2260 = vmatpush.msra.mxu0 0.0
        %2261 = vmatpush.msra.mxu0 %v2170
        %2262 = vmatpush.msra.mxu0 %v2169
        %2263 = vmatpush.msra.mxu0 %v2168
        %2264 = vmatpush.msra.mxu0 %v2167
        %2265 = vmatpush.msra.mxu0 %v2166
        %2266 = vmatpush.msra.mxu0 %v2165
        %2267 = vmatpush.msra.mxu0 %v2164
        %2268 = vmatpush.msra.mxu0 %v2163
        %2269 = vmatpush.msra.mxu0 %v2162
        %2270 = vmatpush.msra.mxu0 %v2161
        %2271 = vmatpush.msra.mxu0 %v2160
        %2272 = vmatpush.msra.mxu0 %v2159
        %2273 = vmatmul.f32.gmra.mxu0 %v2255
        %v2274 = vpop.f32.mrf.mxu0
        %v2275 = vadd.f32 %v2200, %v2274
        %2276 = vdwg.mxu0
        %v2277 = vsub.f32 0.0, %v2275
        %v2278 = vmul.f32 %v2277, 1.442695
        %v2279 = vpow.pop %v2278
        %v2280 = vadd.f32 %v2279, 1.0
        %v2281 = vrcp.pop %v2280
        %v2282 = vmul.f32 %v2280, %v2281
        %v2283 = vsub.f32 1.0, %v2282
        %v2284 = vmul.f32 %v2281, %v2283
        %v2285 = vadd.f32 %v2281, %v2284
        %vm2286 = vweird.f32 %v2280
        %vm2287 = vweird.f32 %v2281
        %vm2288 = vmor %vm2286, %vm2287
        %v2289 = vsel %vm2288, %v2281, %v2285
        %v2290 = vand.u32 2147483647, %v2280
        %vm2291 = vcmp.eq.f32.partialorder %v2290, 8.507059e+37
        %v2292 = vand.u32 %v2280, 2147483648
        %v2293 = vor.u32 1.1754944e-38, %v2292
        %v2294 = vsel %vm2291, %v2293, %v2289
        %v2295 = vmul.f32 1.0, %v2294
        %v2296 = vtanh.pop %v2275
        %v2297 = vmul.f32 %v2295, 0.0
        %2299 = vrot.lane.b32.xlu0 %v2296, 64
        %v2300 = vpop.permute.xlu0 %2299
        %v2302 = vmul.f32 %v2295, %v2300
        %2304 = vrot.lane.b32.xlu0 %v2302, 32
        %v2305 = vpop.permute.xlu0 %2304
        %v2307 = vadd.f32 %v2297, %v2305
        %v2308 = vtanh.pop %v2307
        %2310 = vrot.lane.b32.xlu0 %v2308, 64
        %v2311 = vpop.permute.xlu0 %2310
        %v2313 = vmul.f32 %v2295, %v2311
        %2315 = vrot.lane.b32.xlu0 %v2313, 32
        %v2316 = vpop.permute.xlu0 %2315
        %v2318 = vsel %vm1419, %v2316, 0.0
        %vm2319 = vcmask 326656
        %v2320 = vsel %vm2319, %v2318, 0.0
        %v2322 = vsel %vm1421, %v2320, 0
        %2324 = vmatpush.msra.mxu0 0.0
        %2325 = vmatpush.msra.mxu0 0.0
        %2326 = vmatpush.msra.mxu0 0.0
        %2327 = vmatpush.msra.mxu0 0.0
        %2328 = vmatpush.msra.mxu0 0.0
        %2329 = vmatpush.msra.mxu0 0.0
        %2330 = vmatpush.msra.mxu0 0.0
        %2331 = vmatpush.msra.mxu0 0.0
        %2332 = vmatpush.msra.mxu0 0.0
        %2333 = vmatpush.msra.mxu0 0.0
        %2334 = vmatpush.msra.mxu0 %v2142
        %2335 = vmatpush.msra.mxu0 %v2141
        %2336 = vmatpush.msra.mxu0 %v2140
        %2337 = vmatpush.msra.mxu0 %v2139
        %2338 = vmatpush.msra.mxu0 %v2138
        %2339 = vmatpush.msra.mxu0 %v2137
        %2340 = vmatmul.f32.gmra.mxu0 %v2322
        %v2341 = vpop.f32.mrf.mxu0
        %v2342 = vadd.f32 %v2134, %v2341
        %2343 = vdwg.mxu0
        %v2344 = vtanh.pop %v2342
        %2345 = vmatpush.msra.mxu0 %v2158
        %2346 = vmatpush.msra.mxu0 %v2157
        %2347 = vmatpush.msra.mxu0 %v2156
        %2348 = vmatpush.msra.mxu0 %v2155
        %2349 = vmatpush.msra.mxu0 %v2154
        %2350 = vmatpush.msra.mxu0 %v2153
        %2351 = vmatpush.msra.mxu0 %v2152
        %2352 = vmatpush.msra.mxu0 %v2151
        %2353 = vmatpush.msra.mxu0 %v2150
        %2354 = vmatpush.msra.mxu0 %v2149
        %2355 = vmatpush.msra.mxu0 %v2148
        %2356 = vmatpush.msra.mxu0 %v2147
        %2357 = vmatpush.msra.mxu0 %v2146
        %2358 = vmatpush.msra.mxu0 %v2145
        %2359 = vmatpush.msra.mxu0 %v2144
        %2360 = vmatpush.msra.mxu0 %v2143
        %2361 = vmatmul.f32.gmra.mxu0 %v2344
        %v2362 = vpop.f32.mrf.mxu0
        %v2363 = vadd.f32 %v2136, %v2362
        %2364 = vdwg.mxu0
        %vm2365 = vcmask 57344
        %v2366 = vsel %vm2365, %v2363, -inf
        %2367 = vmax.xlane.f32.xlu0 %v2366
        %v2368 = vpop.xlane.xlu0 %2367
        %v2369 = vsub.f32 %v2363, %v2368
        %v2370 = vmul.f32 %v2369, 1.442695
        %v2371 = vpow.pop %v2370
        %v2372 = vsel %vm2365, %v2371, 0.0
        %2373 = vadd.xlane.f32.xlu0 %v2372
        %v2374 = vpop.xlane.xlu0 %2373
        %v2375 = vrcp.pop %v2374
        %v2376 = vmul.f32 %v2374, %v2375
        %v2377 = vsub.f32 1.0, %v2376
        %v2378 = vmul.f32 %v2375, %v2377
        %v2379 = vadd.f32 %v2375, %v2378
        %vm2380 = vweird.f32 %v2374
        %vm2381 = vweird.f32 %v2375
        %vm2382 = vmor %vm2380, %vm2381
        %v2383 = vsel %vm2382, %v2375, %v2379
        %v2384 = vand.u32 2147483647, %v2374
        %vm2385 = vcmp.eq.f32.partialorder %v2384, 8.507059e+37
        %v2386 = vand.u32 %v2374, 2147483648
        %v2387 = vor.u32 1.1754944e-38, %v2386
        %v2388 = vsel %vm2385, %v2387, %v2383
        %v2389 = vmul.f32 %v2371, %v2388
        %v2390 = vadd.f32 %v2389, 0.0
        %2392 = vset.pattern.permute.xlu0 0
        %2393 = vperm.xlu0 %2392, %v2389
        %v2394 = vpop.permute.xlu0 %2393
        %v2396 = vmul.f32 %v2394, %v2056
        %2397 = vset.pattern.permute.xlu0 1
        %2398 = vperm.xlu0 %2397, %v2389
        %v2399 = vpop.permute.xlu0 %2398
        %v2401 = vmul.f32 %v2399, %v2056
        %2403 = vrot.lane.b32.xlu0 %v2401, 96
        %v2404 = vpop.permute.xlu0 %2403
        %v2406 = vadd.f32 %v2396, %v2404
        %2407 = vset.pattern.permute.xlu0 2
        %2408 = vperm.xlu0 %2407, %v2389
        %v2409 = vpop.permute.xlu0 %2408
        %v2411 = vmul.f32 %v2409, %v2056
        %2413 = vrot.lane.b32.xlu0 %v2411, 64
        %v2414 = vpop.permute.xlu0 %2413
        %v2416 = vadd.f32 %v2406, %v2414
        %2417 = vset.pattern.permute.xlu0 3
        %2418 = vperm.xlu0 %2417, %v2389
        %v2419 = vpop.permute.xlu0 %2418
        %v2421 = vmul.f32 %v2419, %v2056
        %2423 = vrot.lane.b32.xlu0 %v2421, 32
        %v2424 = vpop.permute.xlu0 %2423
        %v2426 = vadd.f32 %v2416, %v2424
        %2427 = vset.pattern.permute.xlu0 4
        %2428 = vperm.xlu0 %2427, %v2389
        %v2429 = vpop.permute.xlu0 %2428
        %v2431 = vmul.f32 %v2429, %v2063
        %v2432 = vadd.f32 %v2426, %v2431
        %2433 = vset.pattern.permute.xlu0 5
        %2434 = vperm.xlu0 %2433, %v2389
        %v2435 = vpop.permute.xlu0 %2434
        %v2437 = vmul.f32 %v2435, %v2063
        %2439 = vrot.lane.b32.xlu0 %v2437, 96
        %v2440 = vpop.permute.xlu0 %2439
        %v2442 = vadd.f32 %v2432, %v2440
        %2443 = vset.pattern.permute.xlu0 6
        %2444 = vperm.xlu0 %2443, %v2389
        %v2445 = vpop.permute.xlu0 %2444
        %v2447 = vmul.f32 %v2445, %v2063
        %2449 = vrot.lane.b32.xlu0 %v2447, 64
        %v2450 = vpop.permute.xlu0 %2449
        %v2452 = vadd.f32 %v2442, %v2450
        %2453 = vset.pattern.permute.xlu0 7
        %2454 = vperm.xlu0 %2453, %v2389
        %v2455 = vpop.permute.xlu0 %2454
        %v2457 = vmul.f32 %v2455, %v2063
        %2459 = vrot.lane.b32.xlu0 %v2457, 32
        %v2460 = vpop.permute.xlu0 %2459
        %v2462 = vadd.f32 %v2452, %v2460
        %2464 = vrot.lane.b32.xlu0 %v2462, 32
        %v2465 = vpop.permute.xlu0 %2464
        %v2467 = vsel %vm1419, %v2316, %v2465
        %v2468 = vsel %vm2051, %v2467, 0.0
        %v2470 = vsel %vm1425, %v2468, 0
        %2472 = vmatpush.msra.mxu0 0.0
        %2473 = vmatpush.msra.mxu0 0.0
        %2474 = vmatpush.msra.mxu0 0.0
        %2475 = vmatpush.msra.mxu0 0.0
        %2476 = vmatpush.msra.mxu0 %v2182
        %2477 = vmatpush.msra.mxu0 %v2181
        %2478 = vmatpush.msra.mxu0 %v2180
        %2479 = vmatpush.msra.mxu0 %v2179
        %2480 = vmatpush.msra.mxu0 %v2178
        %2481 = vmatpush.msra.mxu0 %v2177
        %2482 = vmatpush.msra.mxu0 %v2176
        %2483 = vmatpush.msra.mxu0 %v2175
        %2484 = vmatpush.msra.mxu0 %v2174
        %2485 = vmatpush.msra.mxu0 %v2173
        %2486 = vmatpush.msra.mxu0 %v2172
        %2487 = vmatpush.msra.mxu0 %v2171
        %2488 = vmatmul.f32.gmra.mxu0 %v2470
        %v2489 = vpop.f32.mrf.mxu0
        %v2490 = vadd.f32 %v2202, %v2489
        %2491 = vdwg.mxu0
        %v2492 = vsub.f32 0.0, %v2490
        %v2493 = vmul.f32 %v2492, 1.442695
        %v2494 = vpow.pop %v2493
        %v2495 = vadd.f32 %v2494, 1.0
        %v2496 = vrcp.pop %v2495
        %v2497 = vmul.f32 %v2495, %v2496
        %v2498 = vsub.f32 1.0, %v2497
        %v2499 = vmul.f32 %v2496, %v2498
        %v2500 = vadd.f32 %v2496, %v2499
        %vm2501 = vweird.f32 %v2495
        %vm2502 = vweird.f32 %v2496
        %vm2503 = vmor %vm2501, %vm2502
        %v2504 = vsel %vm2503, %v2496, %v2500
        %v2505 = vand.u32 2147483647, %v2495
        %vm2506 = vcmp.eq.f32.partialorder %v2505, 8.507059e+37
        %v2507 = vand.u32 %v2495, 2147483648
        %v2508 = vor.u32 1.1754944e-38, %v2507
        %v2509 = vsel %vm2506, %v2508, %v2504
        %v2510 = vmul.f32 1.0, %v2509
        %v2511 = vtanh.pop %v2490
        %v2512 = vmul.f32 %v2510, 0.0
        %2514 = vrot.lane.b32.xlu0 %v2511, 64
        %v2515 = vpop.permute.xlu0 %2514
        %v2517 = vmul.f32 %v2510, %v2515
        %2519 = vrot.lane.b32.xlu0 %v2517, 32
        %v2520 = vpop.permute.xlu0 %2519
        %v2522 = vadd.f32 %v2512, %v2520
        %v2523 = vtanh.pop %v2522
        %2525 = vrot.lane.b32.xlu0 %v2523, 64
        %v2526 = vpop.permute.xlu0 %2525
        %v2528 = vmul.f32 %v2510, %v2526
        %2530 = vrot.lane.b32.xlu0 %v2528, 32
        %v2531 = vpop.permute.xlu0 %2530
        %v2533 = vsel %vm1419, %v2531, %v2465
        %v2535 = vsel %vm2051, %v2533, 0
        %2537 = vmatpush.msra.mxu0 0.0
        %2538 = vmatpush.msra.mxu0 0.0
        %2539 = vmatpush.msra.mxu0 0.0
        %2540 = vmatpush.msra.mxu0 0.0
        %2541 = vmatpush.msra.mxu0 0.0
        %2542 = vmatpush.msra.mxu0 0.0
        %2543 = vmatpush.msra.mxu0 0.0
        %2544 = vmatpush.msra.mxu0 0.0
        %2545 = vmatpush.msra.mxu0 %v2190
        %2546 = vmatpush.msra.mxu0 %v2189
        %2547 = vmatpush.msra.mxu0 %v2188
        %2548 = vmatpush.msra.mxu0 %v2187
        %2549 = vmatpush.msra.mxu0 %v2186
        %2550 = vmatpush.msra.mxu0 %v2185
        %2551 = vmatpush.msra.mxu0 %v2184
        %2552 = vmatpush.msra.mxu0 %v2183
        %2553 = vmatmul.f32.gmra.mxu0 %v2535
        %v2554 = vpop.f32.mrf.mxu0
        %v2555 = vadd.f32 %v2203, %v2554
        %2556 = vdwg.mxu0
        %v2558 = vsel %vm2047, %v2555, 0
        %2560 = vmatpush.msra.mxu0 0.0
        %2561 = vmatpush.msra.mxu0 0.0
        %2562 = vmatpush.msra.mxu0 0.0
        %2563 = vmatpush.msra.mxu0 0.0
        %2564 = vmatpush.msra.mxu0 0.0
        %2565 = vmatpush.msra.mxu0 0.0
        %2566 = vmatpush.msra.mxu0 0.0
        %2567 = vmatpush.msra.mxu0 0.0
        %2568 = vmatpush.msra.mxu0 0.0
        %2569 = vmatpush.msra.mxu0 0.0
        %2570 = vmatpush.msra.mxu0 0.0
        %2571 = vmatpush.msra.mxu0 0.0
        %2572 = vmatpush.msra.mxu0 0.0
        %2573 = vmatpush.msra.mxu0 0.0
        %2574 = vmatpush.msra.mxu0 %v2192
        %2575 = vmatpush.msra.mxu0 %v2191
        %2576 = vmatmul.f32.gmra.mxu0 %v2558
        %v2577 = vpop.f32.mrf.mxu0
        %v2578 = vadd.f32 %v2197, %v2577
        %2579 = vdwg.mxu0
        %v2580 = vmax.f32 %v2578, 0.0
        %v2582 = vsel %vm1419, %v2580, 0
        %2584 = vmatpush.msra.mxu0 0.0
        %2585 = vmatpush.msra.mxu0 0.0
        %2586 = vmatpush.msra.mxu0 0.0
        %2587 = vmatpush.msra.mxu0 0.0
        %2588 = vmatpush.msra.mxu0 0.0
        %2589 = vmatpush.msra.mxu0 0.0
        %2590 = vmatpush.msra.mxu0 0.0
        %2591 = vmatpush.msra.mxu0 0.0
        %2592 = vmatpush.msra.mxu0 0.0
        %2593 = vmatpush.msra.mxu0 0.0
        %2594 = vmatpush.msra.mxu0 0.0
        %2595 = vmatpush.msra.mxu0 0.0
        %2596 = vmatpush.msra.mxu0 %v2196
        %2597 = vmatpush.msra.mxu0 %v2195
        %2598 = vmatpush.msra.mxu0 %v2194
        %2599 = vmatpush.msra.mxu0 %v2193
        %2600 = vmatmul.f32.gmra.mxu0 %v2582
        %v2601 = vpop.f32.mrf.mxu0
        %v2602 = vadd.f32 %v2199, %v2601
        %2603 = vdwg.mxu0
        %v2604 = vmax.f32 %v2602, 0.0
        %2605 = vrot.lane.b32.xlu0 %v2313, 96
        %v2606 = vpop.permute.xlu0 %2605
        %v2608 = vsel %vm1419, %v2604, %v2465
        %v2609 = vsel %vm2051, %v2608, %v2606
        %v2611 = vsel %vm1425, %v2609, 0
        %2613 = vmatpush.msra.mxu0 0.0
        %2614 = vmatpush.msra.mxu0 0.0
        %2615 = vmatpush.msra.mxu0 0.0
        %2616 = vmatpush.msra.mxu0 0.0
        %2617 = vmatpush.msra.mxu0 %v2170
        %2618 = vmatpush.msra.mxu0 %v2169
        %2619 = vmatpush.msra.mxu0 %v2168
        %2620 = vmatpush.msra.mxu0 %v2167
        %2621 = vmatpush.msra.mxu0 %v2166
        %2622 = vmatpush.msra.mxu0 %v2165
        %2623 = vmatpush.msra.mxu0 %v2164
        %2624 = vmatpush.msra.mxu0 %v2163
        %2625 = vmatpush.msra.mxu0 %v2162
        %2626 = vmatpush.msra.mxu0 %v2161
        %2627 = vmatpush.msra.mxu0 %v2160
        %2628 = vmatpush.msra.mxu0 %v2159
        %2629 = vmatmul.f32.gmra.mxu0 %v2611
        %v2630 = vpop.f32.mrf.mxu0
        %v2631 = vadd.f32 %v2200, %v2630
        %2632 = vdwg.mxu0
        %v2633 = vsub.f32 0.0, %v2631
        %v2634 = vmul.f32 %v2633, 1.442695
        %v2635 = vpow.pop %v2634
        %v2636 = vadd.f32 %v2635, 1.0
        %v2637 = vrcp.pop %v2636
        %v2638 = vmul.f32 %v2636, %v2637
        %v2639 = vsub.f32 1.0, %v2638
        %v2640 = vmul.f32 %v2637, %v2639
        %v2641 = vadd.f32 %v2637, %v2640
        %vm2642 = vweird.f32 %v2636
        %vm2643 = vweird.f32 %v2637
        %vm2644 = vmor %vm2642, %vm2643
        %v2645 = vsel %vm2644, %v2637, %v2641
        %v2646 = vand.u32 2147483647, %v2636
        %vm2647 = vcmp.eq.f32.partialorder %v2646, 8.507059e+37
        %v2648 = vand.u32 %v2636, 2147483648
        %v2649 = vor.u32 1.1754944e-38, %v2648
        %v2650 = vsel %vm2647, %v2649, %v2645
        %v2651 = vmul.f32 1.0, %v2650
        %v2652 = vtanh.pop %v2631
        %v2653 = vmul.f32 %v2651, %v2307
        %2655 = vrot.lane.b32.xlu0 %v2652, 64
        %v2656 = vpop.permute.xlu0 %2655
        %v2658 = vmul.f32 %v2651, %v2656
        %2660 = vrot.lane.b32.xlu0 %v2658, 32
        %v2661 = vpop.permute.xlu0 %2660
        %v2663 = vadd.f32 %v2653, %v2661
        %v2664 = vtanh.pop %v2663
        %2666 = vrot.lane.b32.xlu0 %v2664, 64
        %v2667 = vpop.permute.xlu0 %2666
        %v2669 = vmul.f32 %v2651, %v2667
        %2671 = vrot.lane.b32.xlu0 %v2669, 32
        %v2672 = vpop.permute.xlu0 %2671
        %2674 = vrot.lane.b32.xlu0 %v2389, 32
        %v2675 = vpop.permute.xlu0 %2674
        %2678 = vrot.lane.b32.xlu0 %v2390, 40
        %v2679 = vpop.permute.xlu0 %2678
        %v2681 = vsel %vm1419, %v2672, %v2675
        %v2682 = vsel %vm2319, %v2681, %v2679
        %v2684 = vsel %vm1421, %v2682, 0
        %2686 = vmatpush.msra.mxu0 0.0
        %2687 = vmatpush.msra.mxu0 0.0
        %2688 = vmatpush.msra.mxu0 0.0
        %2689 = vmatpush.msra.mxu0 0.0
        %2690 = vmatpush.msra.mxu0 0.0
        %2691 = vmatpush.msra.mxu0 0.0
        %2692 = vmatpush.msra.mxu0 0.0
        %2693 = vmatpush.msra.mxu0 0.0
        %2694 = vmatpush.msra.mxu0 0.0
        %2695 = vmatpush.msra.mxu0 0.0
        %2696 = vmatpush.msra.mxu0 %v2142
        %2697 = vmatpush.msra.mxu0 %v2141
        %2698 = vmatpush.msra.mxu0 %v2140
        %2699 = vmatpush.msra.mxu0 %v2139
        %2700 = vmatpush.msra.mxu0 %v2138
        %2701 = vmatpush.msra.mxu0 %v2137
        %2702 = vmatmul.f32.gmra.mxu0 %v2684
        %v2703 = vpop.f32.mrf.mxu0
        %v2704 = vadd.f32 %v2134, %v2703
        %2705 = vdwg.mxu0
        %v2706 = vtanh.pop %v2704
        %2707 = vmatpush.msra.mxu0 %v2158
        %2708 = vmatpush.msra.mxu0 %v2157
        %2709 = vmatpush.msra.mxu0 %v2156
        %2710 = vmatpush.msra.mxu0 %v2155
        %2711 = vmatpush.msra.mxu0 %v2154
        %2712 = vmatpush.msra.mxu0 %v2153
        %2713 = vmatpush.msra.mxu0 %v2152
        %2714 = vmatpush.msra.mxu0 %v2151
        %2715 = vmatpush.msra.mxu0 %v2150
        %2716 = vmatpush.msra.mxu0 %v2149
        %2717 = vmatpush.msra.mxu0 %v2148
        %2718 = vmatpush.msra.mxu0 %v2147
        %2719 = vmatpush.msra.mxu0 %v2146
        %2720 = vmatpush.msra.mxu0 %v2145
        %2721 = vmatpush.msra.mxu0 %v2144
        %2722 = vmatpush.msra.mxu0 %v2143
        %2723 = vmatmul.f32.gmra.mxu0 %v2706
        %v2724 = vpop.f32.mrf.mxu0
        %v2725 = vadd.f32 %v2136, %v2724
        %2726 = vdwg.mxu0
        %v2727 = vsel %vm2365, %v2725, -inf
        %2728 = vmax.xlane.f32.xlu0 %v2727
        %v2729 = vpop.xlane.xlu0 %2728
        %v2730 = vsub.f32 %v2725, %v2729
        %v2731 = vmul.f32 %v2730, 1.442695
        %v2732 = vpow.pop %v2731
        %v2733 = vsel %vm2365, %v2732, 0.0
        %2734 = vadd.xlane.f32.xlu0 %v2733
        %v2735 = vpop.xlane.xlu0 %2734
        %v2736 = vrcp.pop %v2735
        %v2737 = vmul.f32 %v2735, %v2736
        %v2738 = vsub.f32 1.0, %v2737
        %v2739 = vmul.f32 %v2736, %v2738
        %v2740 = vadd.f32 %v2736, %v2739
        %vm2741 = vweird.f32 %v2735
        %vm2742 = vweird.f32 %v2736
        %vm2743 = vmor %vm2741, %vm2742
        %v2744 = vsel %vm2743, %v2736, %v2740
        %v2745 = vand.u32 2147483647, %v2735
        %vm2746 = vcmp.eq.f32.partialorder %v2745, 8.507059e+37
        %v2747 = vand.u32 %v2735, 2147483648
        %v2748 = vor.u32 1.1754944e-38, %v2747
        %v2749 = vsel %vm2746, %v2748, %v2744
        %v2750 = vmul.f32 %v2732, %v2749
        %v2751 = vadd.f32 %v2390, %v2750
        %2753 = vset.pattern.permute.xlu0 0
        %2754 = vperm.xlu0 %2753, %v2750
        %v2755 = vpop.permute.xlu0 %2754
        %v2757 = vmul.f32 %v2755, %v2056
        %2758 = vset.pattern.permute.xlu0 1
        %2759 = vperm.xlu0 %2758, %v2750
        %v2760 = vpop.permute.xlu0 %2759
        %v2762 = vmul.f32 %v2760, %v2056
        %2764 = vrot.lane.b32.xlu0 %v2762, 96
        %v2765 = vpop.permute.xlu0 %2764
        %v2767 = vadd.f32 %v2757, %v2765
        %2768 = vset.pattern.permute.xlu0 2
        %2769 = vperm.xlu0 %2768, %v2750
        %v2770 = vpop.permute.xlu0 %2769
        %v2772 = vmul.f32 %v2770, %v2056
        %2774 = vrot.lane.b32.xlu0 %v2772, 64
        %v2775 = vpop.permute.xlu0 %2774
        %v2777 = vadd.f32 %v2767, %v2775
        %2778 = vset.pattern.permute.xlu0 3
        %2779 = vperm.xlu0 %2778, %v2750
        %v2780 = vpop.permute.xlu0 %2779
        %v2782 = vmul.f32 %v2780, %v2056
        %2784 = vrot.lane.b32.xlu0 %v2782, 32
        %v2785 = vpop.permute.xlu0 %2784
        %v2787 = vadd.f32 %v2777, %v2785
        %2788 = vset.pattern.permute.xlu0 4
        %2789 = vperm.xlu0 %2788, %v2750
        %v2790 = vpop.permute.xlu0 %2789
        %v2792 = vmul.f32 %v2790, %v2063
        %v2793 = vadd.f32 %v2787, %v2792
        %2794 = vset.pattern.permute.xlu0 5
        %2795 = vperm.xlu0 %2794, %v2750
        %v2796 = vpop.permute.xlu0 %2795
        %v2798 = vmul.f32 %v2796, %v2063
        %2800 = vrot.lane.b32.xlu0 %v2798, 96
        %v2801 = vpop.permute.xlu0 %2800
        %v2803 = vadd.f32 %v2793, %v2801
        %2804 = vset.pattern.permute.xlu0 6
        %2805 = vperm.xlu0 %2804, %v2750
        %v2806 = vpop.permute.xlu0 %2805
        %v2808 = vmul.f32 %v2806, %v2063
        %2810 = vrot.lane.b32.xlu0 %v2808, 64
        %v2811 = vpop.permute.xlu0 %2810
        %v2813 = vadd.f32 %v2803, %v2811
        %2814 = vset.pattern.permute.xlu0 7
        %2815 = vperm.xlu0 %2814, %v2750
        %v2816 = vpop.permute.xlu0 %2815
        %v2818 = vmul.f32 %v2816, %v2063
        %2820 = vrot.lane.b32.xlu0 %v2818, 32
        %v2821 = vpop.permute.xlu0 %2820
        %v2823 = vadd.f32 %v2813, %v2821
        %2825 = vrot.lane.b32.xlu0 %v2823, 32
        %v2826 = vpop.permute.xlu0 %2825
        %2828 = vrot.lane.b32.xlu0 %v2528, 96
        %v2829 = vpop.permute.xlu0 %2828
        %v2831 = vsel %vm1419, %v2672, %v2826
        %v2832 = vsel %vm2051, %v2831, %v2829
        %v2834 = vsel %vm1425, %v2832, 0
        %2836 = vmatpush.msra.mxu0 0.0
        %2837 = vmatpush.msra.mxu0 0.0
        %2838 = vmatpush.msra.mxu0 0.0
        %2839 = vmatpush.msra.mxu0 0.0
        %2840 = vmatpush.msra.mxu0 %v2182
        %2841 = vmatpush.msra.mxu0 %v2181
        %2842 = vmatpush.msra.mxu0 %v2180
        %2843 = vmatpush.msra.mxu0 %v2179
        %2844 = vmatpush.msra.mxu0 %v2178
        %2845 = vmatpush.msra.mxu0 %v2177
        %2846 = vmatpush.msra.mxu0 %v2176
        %2847 = vmatpush.msra.mxu0 %v2175
        %2848 = vmatpush.msra.mxu0 %v2174
        %2849 = vmatpush.msra.mxu0 %v2173
        %2850 = vmatpush.msra.mxu0 %v2172
        %2851 = vmatpush.msra.mxu0 %v2171
        %2852 = vmatmul.f32.gmra.mxu0 %v2834
        %v2853 = vpop.f32.mrf.mxu0
        %v2854 = vadd.f32 %v2202, %v2853
        %2855 = vdwg.mxu0
        %v2856 = vsub.f32 0.0, %v2854
        %v2857 = vmul.f32 %v2856, 1.442695
        %v2858 = vpow.pop %v2857
        %v2859 = vadd.f32 %v2858, 1.0
        %v2860 = vrcp.pop %v2859
        %v2861 = vmul.f32 %v2859, %v2860
        %v2862 = vsub.f32 1.0, %v2861
        %v2863 = vmul.f32 %v2860, %v2862
        %v2864 = vadd.f32 %v2860, %v2863
        %vm2865 = vweird.f32 %v2859
        %vm2866 = vweird.f32 %v2860
        %vm2867 = vmor %vm2865, %vm2866
        %v2868 = vsel %vm2867, %v2860, %v2864
        %v2869 = vand.u32 2147483647, %v2859
        %vm2870 = vcmp.eq.f32.partialorder %v2869, 8.507059e+37
        %v2871 = vand.u32 %v2859, 2147483648
        %v2872 = vor.u32 1.1754944e-38, %v2871
        %v2873 = vsel %vm2870, %v2872, %v2868
        %v2874 = vmul.f32 1.0, %v2873
        %v2875 = vtanh.pop %v2854
        %v2876 = vmul.f32 %v2874, %v2522
        %2878 = vrot.lane.b32.xlu0 %v2875, 64
        %v2879 = vpop.permute.xlu0 %2878
        %v2881 = vmul.f32 %v2874, %v2879
        %2883 = vrot.lane.b32.xlu0 %v2881, 32
        %v2884 = vpop.permute.xlu0 %2883
        %v2886 = vadd.f32 %v2876, %v2884
        %v2887 = vtanh.pop %v2886
        %2889 = vrot.lane.b32.xlu0 %v2887, 64
        %v2890 = vpop.permute.xlu0 %2889
        %v2892 = vmul.f32 %v2874, %v2890
        %2894 = vrot.lane.b32.xlu0 %v2892, 32
        %v2895 = vpop.permute.xlu0 %2894
        %v2897 = vsel %vm1419, %v2895, %v2826
        %v2899 = vsel %vm2051, %v2897, 0
        %2901 = vmatpush.msra.mxu0 0.0
        %2902 = vmatpush.msra.mxu0 0.0
        %2903 = vmatpush.msra.mxu0 0.0
        %2904 = vmatpush.msra.mxu0 0.0
        %2905 = vmatpush.msra.mxu0 0.0
        %2906 = vmatpush.msra.mxu0 0.0
        %2907 = vmatpush.msra.mxu0 0.0
        %2908 = vmatpush.msra.mxu0 0.0
        %2909 = vmatpush.msra.mxu0 %v2190
        %2910 = vmatpush.msra.mxu0 %v2189
        %2911 = vmatpush.msra.mxu0 %v2188
        %2912 = vmatpush.msra.mxu0 %v2187
        %2913 = vmatpush.msra.mxu0 %v2186
        %2914 = vmatpush.msra.mxu0 %v2185
        %2915 = vmatpush.msra.mxu0 %v2184
        %2916 = vmatpush.msra.mxu0 %v2183
        %2917 = vmatmul.f32.gmra.mxu0 %v2899
        %v2918 = vpop.f32.mrf.mxu0
        %v2919 = vadd.f32 %v2203, %v2918
        %2920 = vdwg.mxu0
        %v2922 = vsel %vm2047, %v2919, 0
        %2924 = vmatpush.msra.mxu0 0.0
        %2925 = vmatpush.msra.mxu0 0.0
        %2926 = vmatpush.msra.mxu0 0.0
        %2927 = vmatpush.msra.mxu0 0.0
        %2928 = vmatpush.msra.mxu0 0.0
        %2929 = vmatpush.msra.mxu0 0.0
        %2930 = vmatpush.msra.mxu0 0.0
        %2931 = vmatpush.msra.mxu0 0.0
        %2932 = vmatpush.msra.mxu0 0.0
        %2933 = vmatpush.msra.mxu0 0.0
        %2934 = vmatpush.msra.mxu0 0.0
        %2935 = vmatpush.msra.mxu0 0.0
        %2936 = vmatpush.msra.mxu0 0.0
        %2937 = vmatpush.msra.mxu0 0.0
        %2938 = vmatpush.msra.mxu0 %v2192
        %2939 = vmatpush.msra.mxu0 %v2191
        %2940 = vmatmul.f32.gmra.mxu0 %v2922
        %v2941 = vpop.f32.mrf.mxu0
        %v2942 = vadd.f32 %v2197, %v2941
        %2943 = vdwg.mxu0
        %v2944 = vmax.f32 %v2942, 0.0
        %v2946 = vsel %vm1419, %v2944, 0
        %2948 = vmatpush.msra.mxu0 0.0
        %2949 = vmatpush.msra.mxu0 0.0
        %2950 = vmatpush.msra.mxu0 0.0
        %2951 = vmatpush.msra.mxu0 0.0
        %2952 = vmatpush.msra.mxu0 0.0
        %2953 = vmatpush.msra.mxu0 0.0
        %2954 = vmatpush.msra.mxu0 0.0
        %2955 = vmatpush.msra.mxu0 0.0
        %2956 = vmatpush.msra.mxu0 0.0
        %2957 = vmatpush.msra.mxu0 0.0
        %2958 = vmatpush.msra.mxu0 0.0
        %2959 = vmatpush.msra.mxu0 0.0
        %2960 = vmatpush.msra.mxu0 %v2196
        %2961 = vmatpush.msra.mxu0 %v2195
        %2962 = vmatpush.msra.mxu0 %v2194
        %2963 = vmatpush.msra.mxu0 %v2193
        %2964 = vmatmul.f32.gmra.mxu0 %v2946
        %v2965 = vpop.f32.mrf.mxu0
        %v2966 = vadd.f32 %v2199, %v2965
        %2967 = vdwg.mxu0
        %v2968 = vmax.f32 %v2966, 0.0
        %2969 = vrot.lane.b32.xlu0 %v2669, 96
        %v2970 = vpop.permute.xlu0 %2969
        %v2972 = vsel %vm1419, %v2968, %v2826
        %v2973 = vsel %vm2051, %v2972, %v2970
        %v2975 = vsel %vm1425, %v2973, 0
        %2977 = vmatpush.msra.mxu0 0.0
        %2978 = vmatpush.msra.mxu0 0.0
        %2979 = vmatpush.msra.mxu0 0.0
        %2980 = vmatpush.msra.mxu0 0.0
        %2981 = vmatpush.msra.mxu0 %v2170
        %2982 = vmatpush.msra.mxu0 %v2169
        %2983 = vmatpush.msra.mxu0 %v2168
        %2984 = vmatpush.msra.mxu0 %v2167
        %2985 = vmatpush.msra.mxu0 %v2166
        %2986 = vmatpush.msra.mxu0 %v2165
        %2987 = vmatpush.msra.mxu0 %v2164
        %2988 = vmatpush.msra.mxu0 %v2163
        %2989 = vmatpush.msra.mxu0 %v2162
        %2990 = vmatpush.msra.mxu0 %v2161
        %2991 = vmatpush.msra.mxu0 %v2160
        %2992 = vmatpush.msra.mxu0 %v2159
        %2993 = vmatmul.f32.gmra.mxu0 %v2975
        %v2994 = vpop.f32.mrf.mxu0
        %v2995 = vadd.f32 %v2200, %v2994
        %2996 = vdwg.mxu0
        %v2997 = vsub.f32 0.0, %v2995
        %v2998 = vmul.f32 %v2997, 1.442695
        %v2999 = vpow.pop %v2998
        %v3000 = vadd.f32 %v2999, 1.0
        %v3001 = vrcp.pop %v3000
        %v3002 = vmul.f32 %v3000, %v3001
        %v3003 = vsub.f32 1.0, %v3002
        %v3004 = vmul.f32 %v3001, %v3003
        %v3005 = vadd.f32 %v3001, %v3004
        %vm3006 = vweird.f32 %v3000
        %vm3007 = vweird.f32 %v3001
        %vm3008 = vmor %vm3006, %vm3007
        %v3009 = vsel %vm3008, %v3001, %v3005
        %v3010 = vand.u32 2147483647, %v3000
        %vm3011 = vcmp.eq.f32.partialorder %v3010, 8.507059e+37
        %v3012 = vand.u32 %v3000, 2147483648
        %v3013 = vor.u32 1.1754944e-38, %v3012
        %v3014 = vsel %vm3011, %v3013, %v3009
        %v3015 = vmul.f32 1.0, %v3014
        %v3016 = vtanh.pop %v2995
        %v3017 = vmul.f32 %v3015, %v2663
        %3019 = vrot.lane.b32.xlu0 %v3016, 64
        %v3020 = vpop.permute.xlu0 %3019
        %v3022 = vmul.f32 %v3015, %v3020
        %3024 = vrot.lane.b32.xlu0 %v3022, 32
        %v3025 = vpop.permute.xlu0 %3024
        %v3027 = vadd.f32 %v3017, %v3025
        %v3028 = vtanh.pop %v3027
        %3030 = vrot.lane.b32.xlu0 %v3028, 64
        %v3031 = vpop.permute.xlu0 %3030
        %v3033 = vmul.f32 %v3015, %v3031
        %3035 = vrot.lane.b32.xlu0 %v3033, 32
        %v3036 = vpop.permute.xlu0 %3035
        %3038 = vrot.lane.b32.xlu0 %v2750, 32
        %v3039 = vpop.permute.xlu0 %3038
        %3042 = vrot.lane.b32.xlu0 %v2751, 40
        %v3043 = vpop.permute.xlu0 %3042
        %v3045 = vsel %vm1419, %v3036, %v3039
        %v3046 = vsel %vm2319, %v3045, %v3043
        %v3048 = vsel %vm1421, %v3046, 0
        %3050 = vmatpush.msra.mxu0 0.0
        %3051 = vmatpush.msra.mxu0 0.0
        %3052 = vmatpush.msra.mxu0 0.0
        %3053 = vmatpush.msra.mxu0 0.0
        %3054 = vmatpush.msra.mxu0 0.0
        %3055 = vmatpush.msra.mxu0 0.0
        %3056 = vmatpush.msra.mxu0 0.0
        %3057 = vmatpush.msra.mxu0 0.0
        %3058 = vmatpush.msra.mxu0 0.0
        %3059 = vmatpush.msra.mxu0 0.0
        %3060 = vmatpush.msra.mxu0 %v2142
        %3061 = vmatpush.msra.mxu0 %v2141
        %3062 = vmatpush.msra.mxu0 %v2140
        %3063 = vmatpush.msra.mxu0 %v2139
        %3064 = vmatpush.msra.mxu0 %v2138
        %3065 = vmatpush.msra.mxu0 %v2137
        %3066 = vmatmul.f32.gmra.mxu0 %v3048
        %v3067 = vpop.f32.mrf.mxu0
        %v3068 = vadd.f32 %v2134, %v3067
        %3069 = vdwg.mxu0
        %v3070 = vtanh.pop %v3068
        %3071 = vmatpush.msra.mxu0 %v2158
        %3072 = vmatpush.msra.mxu0 %v2157
        %3073 = vmatpush.msra.mxu0 %v2156
        %3074 = vmatpush.msra.mxu0 %v2155
        %3075 = vmatpush.msra.mxu0 %v2154
        %3076 = vmatpush.msra.mxu0 %v2153
        %3077 = vmatpush.msra.mxu0 %v2152
        %3078 = vmatpush.msra.mxu0 %v2151
        %3079 = vmatpush.msra.mxu0 %v2150
        %3080 = vmatpush.msra.mxu0 %v2149
        %3081 = vmatpush.msra.mxu0 %v2148
        %3082 = vmatpush.msra.mxu0 %v2147
        %3083 = vmatpush.msra.mxu0 %v2146
        %3084 = vmatpush.msra.mxu0 %v2145
        %3085 = vmatpush.msra.mxu0 %v2144
        %3086 = vmatpush.msra.mxu0 %v2143
        %3087 = vmatmul.f32.gmra.mxu0 %v3070
        %v3088 = vpop.f32.mrf.mxu0
        %v3089 = vadd.f32 %v2136, %v3088
        %3090 = vdwg.mxu0
        %v3091 = vsel %vm2365, %v3089, -inf
        %3092 = vmax.xlane.f32.xlu0 %v3091
        %v3093 = vpop.xlane.xlu0 %3092
        %v3094 = vsub.f32 %v3089, %v3093
        %v3095 = vmul.f32 %v3094, 1.442695
        %v3096 = vpow.pop %v3095
        %v3097 = vsel %vm2365, %v3096, 0.0
        %3098 = vadd.xlane.f32.xlu0 %v3097
        %v3099 = vpop.xlane.xlu0 %3098
        %v3100 = vrcp.pop %v3099
        %v3101 = vmul.f32 %v3099, %v3100
        %v3102 = vsub.f32 1.0, %v3101
        %v3103 = vmul.f32 %v3100, %v3102
        %v3104 = vadd.f32 %v3100, %v3103
        %vm3105 = vweird.f32 %v3099
        %vm3106 = vweird.f32 %v3100
        %vm3107 = vmor %vm3105, %vm3106
        %v3108 = vsel %vm3107, %v3100, %v3104
        %v3109 = vand.u32 2147483647, %v3099
        %vm3110 = vcmp.eq.f32.partialorder %v3109, 8.507059e+37
        %v3111 = vand.u32 %v3099, 2147483648
        %v3112 = vor.u32 1.1754944e-38, %v3111
        %v3113 = vsel %vm3110, %v3112, %v3108
        %v3114 = vmul.f32 %v3096, %v3113
        %v3115 = vadd.f32 %v2751, %v3114
        %3117 = vset.pattern.permute.xlu0 0
        %3118 = vperm.xlu0 %3117, %v3114
        %v3119 = vpop.permute.xlu0 %3118
        %v3121 = vmul.f32 %v3119, %v2056
        %3122 = vset.pattern.permute.xlu0 1
        %3123 = vperm.xlu0 %3122, %v3114
        %v3124 = vpop.permute.xlu0 %3123
        %v3126 = vmul.f32 %v3124, %v2056
        %3128 = vrot.lane.b32.xlu0 %v3126, 96
        %v3129 = vpop.permute.xlu0 %3128
        %v3131 = vadd.f32 %v3121, %v3129
        %3132 = vset.pattern.permute.xlu0 2
        %3133 = vperm.xlu0 %3132, %v3114
        %v3134 = vpop.permute.xlu0 %3133
        %v3136 = vmul.f32 %v3134, %v2056
        %3138 = vrot.lane.b32.xlu0 %v3136, 64
        %v3139 = vpop.permute.xlu0 %3138
        %v3141 = vadd.f32 %v3131, %v3139
        %3142 = vset.pattern.permute.xlu0 3
        %3143 = vperm.xlu0 %3142, %v3114
        %v3144 = vpop.permute.xlu0 %3143
        %v3146 = vmul.f32 %v3144, %v2056
        %3148 = vrot.lane.b32.xlu0 %v3146, 32
        %v3149 = vpop.permute.xlu0 %3148
        %v3151 = vadd.f32 %v3141, %v3149
        %3152 = vset.pattern.permute.xlu0 4
        %3153 = vperm.xlu0 %3152, %v3114
        %v3154 = vpop.permute.xlu0 %3153
        %v3156 = vmul.f32 %v3154, %v2063
        %v3157 = vadd.f32 %v3151, %v3156
        %3158 = vset.pattern.permute.xlu0 5
        %3159 = vperm.xlu0 %3158, %v3114
        %v3160 = vpop.permute.xlu0 %3159
        %v3162 = vmul.f32 %v3160, %v2063
        %3164 = vrot.lane.b32.xlu0 %v3162, 96
        %v3165 = vpop.permute.xlu0 %3164
        %v3167 = vadd.f32 %v3157, %v3165
        %3168 = vset.pattern.permute.xlu0 6
        %3169 = vperm.xlu0 %3168, %v3114
        %v3170 = vpop.permute.xlu0 %3169
        %v3172 = vmul.f32 %v3170, %v2063
        %3174 = vrot.lane.b32.xlu0 %v3172, 64
        %v3175 = vpop.permute.xlu0 %3174
        %v3177 = vadd.f32 %v3167, %v3175
        %3178 = vset.pattern.permute.xlu0 7
        %3179 = vperm.xlu0 %3178, %v3114
        %v3180 = vpop.permute.xlu0 %3179
        %v3182 = vmul.f32 %v3180, %v2063
        %3184 = vrot.lane.b32.xlu0 %v3182, 32
        %v3185 = vpop.permute.xlu0 %3184
        %v3187 = vadd.f32 %v3177, %v3185
        %3189 = vrot.lane.b32.xlu0 %v3187, 32
        %v3190 = vpop.permute.xlu0 %3189
        %3192 = vrot.lane.b32.xlu0 %v2892, 96
        %v3193 = vpop.permute.xlu0 %3192
        %v3195 = vsel %vm1419, %v3036, %v3190
        %v3196 = vsel %vm2051, %v3195, %v3193
        %v3198 = vsel %vm1425, %v3196, 0
        %3200 = vmatpush.msra.mxu0 0.0
        %3201 = vmatpush.msra.mxu0 0.0
        %3202 = vmatpush.msra.mxu0 0.0
        %3203 = vmatpush.msra.mxu0 0.0
        %3204 = vmatpush.msra.mxu0 %v2182
        %3205 = vmatpush.msra.mxu0 %v2181
        %3206 = vmatpush.msra.mxu0 %v2180
        %3207 = vmatpush.msra.mxu0 %v2179
        %3208 = vmatpush.msra.mxu0 %v2178
        %3209 = vmatpush.msra.mxu0 %v2177
        %3210 = vmatpush.msra.mxu0 %v2176
        %3211 = vmatpush.msra.mxu0 %v2175
        %3212 = vmatpush.msra.mxu0 %v2174
        %3213 = vmatpush.msra.mxu0 %v2173
        %3214 = vmatpush.msra.mxu0 %v2172
        %3215 = vmatpush.msra.mxu0 %v2171
        %3216 = vmatmul.f32.gmra.mxu0 %v3198
        %v3217 = vpop.f32.mrf.mxu0
        %v3218 = vadd.f32 %v2202, %v3217
        %3219 = vdwg.mxu0
        %v3220 = vsub.f32 0.0, %v3218
        %v3221 = vmul.f32 %v3220, 1.442695
        %v3222 = vpow.pop %v3221
        %v3223 = vadd.f32 %v3222, 1.0
        %v3224 = vrcp.pop %v3223
        %v3225 = vmul.f32 %v3223, %v3224
        %v3226 = vsub.f32 1.0, %v3225
        %v3227 = vmul.f32 %v3224, %v3226
        %v3228 = vadd.f32 %v3224, %v3227
        %vm3229 = vweird.f32 %v3223
        %vm3230 = vweird.f32 %v3224
        %vm3231 = vmor %vm3229, %vm3230
        %v3232 = vsel %vm3231, %v3224, %v3228
        %v3233 = vand.u32 2147483647, %v3223
        %vm3234 = vcmp.eq.f32.partialorder %v3233, 8.507059e+37
        %v3235 = vand.u32 %v3223, 2147483648
        %v3236 = vor.u32 1.1754944e-38, %v3235
        %v3237 = vsel %vm3234, %v3236, %v3232
        %v3238 = vmul.f32 1.0, %v3237
        %v3239 = vtanh.pop %v3218
        %v3240 = vmul.f32 %v3238, %v2886
        %3242 = vrot.lane.b32.xlu0 %v3239, 64
        %v3243 = vpop.permute.xlu0 %3242
        %v3245 = vmul.f32 %v3238, %v3243
        %3247 = vrot.lane.b32.xlu0 %v3245, 32
        %v3248 = vpop.permute.xlu0 %3247
        %v3250 = vadd.f32 %v3240, %v3248
        %v3251 = vtanh.pop %v3250
        %3253 = vrot.lane.b32.xlu0 %v3251, 64
        %v3254 = vpop.permute.xlu0 %3253
        %v3256 = vmul.f32 %v3238, %v3254
        %3258 = vrot.lane.b32.xlu0 %v3256, 32
        %v3259 = vpop.permute.xlu0 %3258
        %v3261 = vsel %vm1419, %v3259, %v3190
        %v3263 = vsel %vm2051, %v3261, 0
        %3265 = vmatpush.msra.mxu0 0.0
        %3266 = vmatpush.msra.mxu0 0.0
        %3267 = vmatpush.msra.mxu0 0.0
        %3268 = vmatpush.msra.mxu0 0.0
        %3269 = vmatpush.msra.mxu0 0.0
        %3270 = vmatpush.msra.mxu0 0.0
        %3271 = vmatpush.msra.mxu0 0.0
        %3272 = vmatpush.msra.mxu0 0.0
        %3273 = vmatpush.msra.mxu0 %v2190
        %3274 = vmatpush.msra.mxu0 %v2189
        %3275 = vmatpush.msra.mxu0 %v2188
        %3276 = vmatpush.msra.mxu0 %v2187
        %3277 = vmatpush.msra.mxu0 %v2186
        %3278 = vmatpush.msra.mxu0 %v2185
        %3279 = vmatpush.msra.mxu0 %v2184
        %3280 = vmatpush.msra.mxu0 %v2183
        %3281 = vmatmul.f32.gmra.mxu0 %v3263
        %v3282 = vpop.f32.mrf.mxu0
        %v3283 = vadd.f32 %v2203, %v3282
        %3284 = vdwg.mxu0
        %v3286 = vsel %vm2047, %v3283, 0
        %3288 = vmatpush.msra.mxu0 0.0
        %3289 = vmatpush.msra.mxu0 0.0
        %3290 = vmatpush.msra.mxu0 0.0
        %3291 = vmatpush.msra.mxu0 0.0
        %3292 = vmatpush.msra.mxu0 0.0
        %3293 = vmatpush.msra.mxu0 0.0
        %3294 = vmatpush.msra.mxu0 0.0
        %3295 = vmatpush.msra.mxu0 0.0
        %3296 = vmatpush.msra.mxu0 0.0
        %3297 = vmatpush.msra.mxu0 0.0
        %3298 = vmatpush.msra.mxu0 0.0
        %3299 = vmatpush.msra.mxu0 0.0
        %3300 = vmatpush.msra.mxu0 0.0
        %3301 = vmatpush.msra.mxu0 0.0
        %3302 = vmatpush.msra.mxu0 %v2192
        %3303 = vmatpush.msra.mxu0 %v2191
        %3304 = vmatmul.f32.gmra.mxu0 %v3286
        %v3305 = vpop.f32.mrf.mxu0
        %v3306 = vadd.f32 %v2197, %v3305
        %3307 = vdwg.mxu0
        %v3308 = vmax.f32 %v3306, 0.0
        %v3310 = vsel %vm1419, %v3308, 0
        %3312 = vmatpush.msra.mxu0 0.0
        %3313 = vmatpush.msra.mxu0 0.0
        %3314 = vmatpush.msra.mxu0 0.0
        %3315 = vmatpush.msra.mxu0 0.0
        %3316 = vmatpush.msra.mxu0 0.0
        %3317 = vmatpush.msra.mxu0 0.0
        %3318 = vmatpush.msra.mxu0 0.0
        %3319 = vmatpush.msra.mxu0 0.0
        %3320 = vmatpush.msra.mxu0 0.0
        %3321 = vmatpush.msra.mxu0 0.0
        %3322 = vmatpush.msra.mxu0 0.0
        %3323 = vmatpush.msra.mxu0 0.0
        %3324 = vmatpush.msra.mxu0 %v2196
        %3325 = vmatpush.msra.mxu0 %v2195
        %3326 = vmatpush.msra.mxu0 %v2194
        %3327 = vmatpush.msra.mxu0 %v2193
        %3328 = vmatmul.f32.gmra.mxu0 %v3310
        %v3329 = vpop.f32.mrf.mxu0
        %v3330 = vadd.f32 %v2199, %v3329
        %3331 = vdwg.mxu0
        %v3332 = vmax.f32 %v3330, 0.0
        %3333 = vrot.lane.b32.xlu0 %v3033, 96
        %v3334 = vpop.permute.xlu0 %3333
        %v3336 = vsel %vm1419, %v3332, %v3190
        %v3337 = vsel %vm2051, %v3336, %v3334
        %v3339 = vsel %vm1425, %v3337, 0
        %3341 = vmatpush.msra.mxu0 0.0
        %3342 = vmatpush.msra.mxu0 0.0
        %3343 = vmatpush.msra.mxu0 0.0
        %3344 = vmatpush.msra.mxu0 0.0
        %3345 = vmatpush.msra.mxu0 %v2170
        %3346 = vmatpush.msra.mxu0 %v2169
        %3347 = vmatpush.msra.mxu0 %v2168
        %3348 = vmatpush.msra.mxu0 %v2167
        %3349 = vmatpush.msra.mxu0 %v2166
        %3350 = vmatpush.msra.mxu0 %v2165
        %3351 = vmatpush.msra.mxu0 %v2164
        %3352 = vmatpush.msra.mxu0 %v2163
        %3353 = vmatpush.msra.mxu0 %v2162
        %3354 = vmatpush.msra.mxu0 %v2161
        %3355 = vmatpush.msra.mxu0 %v2160
        %3356 = vmatpush.msra.mxu0 %v2159
        %3357 = vmatmul.f32.gmra.mxu0 %v3339
        %v3358 = vpop.f32.mrf.mxu0
        %v3359 = vadd.f32 %v2200, %v3358
        %3360 = vdwg.mxu0
        %v3361 = vsub.f32 0.0, %v3359
        %v3362 = vmul.f32 %v3361, 1.442695
        %v3363 = vpow.pop %v3362
        %v3364 = vadd.f32 %v3363, 1.0
        %v3365 = vrcp.pop %v3364
        %v3366 = vmul.f32 %v3364, %v3365
        %v3367 = vsub.f32 1.0, %v3366
        %v3368 = vmul.f32 %v3365, %v3367
        %v3369 = vadd.f32 %v3365, %v3368
        %vm3370 = vweird.f32 %v3364
        %vm3371 = vweird.f32 %v3365
        %vm3372 = vmor %vm3370, %vm3371
        %v3373 = vsel %vm3372, %v3365, %v3369
        %v3374 = vand.u32 2147483647, %v3364
        %vm3375 = vcmp.eq.f32.partialorder %v3374, 8.507059e+37
        %v3376 = vand.u32 %v3364, 2147483648
        %v3377 = vor.u32 1.1754944e-38, %v3376
        %v3378 = vsel %vm3375, %v3377, %v3373
        %v3379 = vmul.f32 1.0, %v3378
        %v3380 = vtanh.pop %v3359
        %v3381 = vmul.f32 %v3379, %v3027
        %3383 = vrot.lane.b32.xlu0 %v3380, 64
        %v3384 = vpop.permute.xlu0 %3383
        %v3386 = vmul.f32 %v3379, %v3384
        %3388 = vrot.lane.b32.xlu0 %v3386, 32
        %v3389 = vpop.permute.xlu0 %3388
        %v3391 = vadd.f32 %v3381, %v3389
        %v3392 = vtanh.pop %v3391
        %3394 = vrot.lane.b32.xlu0 %v3392, 64
        %v3395 = vpop.permute.xlu0 %3394
        %v3397 = vmul.f32 %v3379, %v3395
        %3399 = vrot.lane.b32.xlu0 %v3397, 32
        %v3400 = vpop.permute.xlu0 %3399
        %3402 = vrot.lane.b32.xlu0 %v3114, 32
        %v3403 = vpop.permute.xlu0 %3402
        %3406 = vrot.lane.b32.xlu0 %v3115, 40
        %v3407 = vpop.permute.xlu0 %3406
        %v3409 = vsel %vm1419, %v3400, %v3403
        %v3410 = vsel %vm2319, %v3409, %v3407
        %v3412 = vsel %vm1421, %v3410, 0
        %3414 = vmatpush.msra.mxu0 0.0
        %3415 = vmatpush.msra.mxu0 0.0
        %3416 = vmatpush.msra.mxu0 0.0
        %3417 = vmatpush.msra.mxu0 0.0
        %3418 = vmatpush.msra.mxu0 0.0
        %3419 = vmatpush.msra.mxu0 0.0
        %3420 = vmatpush.msra.mxu0 0.0
        %3421 = vmatpush.msra.mxu0 0.0
        %3422 = vmatpush.msra.mxu0 0.0
        %3423 = vmatpush.msra.mxu0 0.0
        %3424 = vmatpush.msra.mxu0 %v2142
        %3425 = vmatpush.msra.mxu0 %v2141
        %3426 = vmatpush.msra.mxu0 %v2140
        %3427 = vmatpush.msra.mxu0 %v2139
        %3428 = vmatpush.msra.mxu0 %v2138
        %3429 = vmatpush.msra.mxu0 %v2137
        %3430 = vmatmul.f32.gmra.mxu0 %v3412
        %v3431 = vpop.f32.mrf.mxu0
        %v3432 = vadd.f32 %v2134, %v3431
        %3433 = vdwg.mxu0
        %v3434 = vtanh.pop %v3432
        %3435 = vmatpush.msra.mxu0 %v2158
        %3436 = vmatpush.msra.mxu0 %v2157
        %3437 = vmatpush.msra.mxu0 %v2156
        %3438 = vmatpush.msra.mxu0 %v2155
        %3439 = vmatpush.msra.mxu0 %v2154
        %3440 = vmatpush.msra.mxu0 %v2153
        %3441 = vmatpush.msra.mxu0 %v2152
        %3442 = vmatpush.msra.mxu0 %v2151
        %3443 = vmatpush.msra.mxu0 %v2150
        %3444 = vmatpush.msra.mxu0 %v2149
        %3445 = vmatpush.msra.mxu0 %v2148
        %3446 = vmatpush.msra.mxu0 %v2147
        %3447 = vmatpush.msra.mxu0 %v2146
        %3448 = vmatpush.msra.mxu0 %v2145
        %3449 = vmatpush.msra.mxu0 %v2144
        %3450 = vmatpush.msra.mxu0 %v2143
        %3451 = vmatmul.f32.gmra.mxu0 %v3434
        %v3452 = vpop.f32.mrf.mxu0
        %v3453 = vadd.f32 %v2136, %v3452
        %3454 = vdwg.mxu0
        %v3455 = vsel %vm2365, %v3453, -inf
        %3456 = vmax.xlane.f32.xlu0 %v3455
        %v3457 = vpop.xlane.xlu0 %3456
        %v3458 = vsub.f32 %v3453, %v3457
        %v3459 = vmul.f32 %v3458, 1.442695
        %v3460 = vpow.pop %v3459
        %v3461 = vsel %vm2365, %v3460, 0.0
        %3462 = vadd.xlane.f32.xlu0 %v3461
        %v3463 = vpop.xlane.xlu0 %3462
        %v3464 = vrcp.pop %v3463
        %v3465 = vmul.f32 %v3463, %v3464
        %v3466 = vsub.f32 1.0, %v3465
        %v3467 = vmul.f32 %v3464, %v3466
        %v3468 = vadd.f32 %v3464, %v3467
        %vm3469 = vweird.f32 %v3463
        %vm3470 = vweird.f32 %v3464
        %vm3471 = vmor %vm3469, %vm3470
        %v3472 = vsel %vm3471, %v3464, %v3468
        %v3473 = vand.u32 2147483647, %v3463
        %vm3474 = vcmp.eq.f32.partialorder %v3473, 8.507059e+37
        %v3475 = vand.u32 %v3463, 2147483648
        %v3476 = vor.u32 1.1754944e-38, %v3475
        %v3477 = vsel %vm3474, %v3476, %v3472
        %v3478 = vmul.f32 %v3460, %v3477
        %v3479 = vadd.f32 %v3115, %v3478
        %3481 = vset.pattern.permute.xlu0 0
        %3482 = vperm.xlu0 %3481, %v3478
        %v3483 = vpop.permute.xlu0 %3482
        %v3485 = vmul.f32 %v3483, %v2056
        %3486 = vset.pattern.permute.xlu0 1
        %3487 = vperm.xlu0 %3486, %v3478
        %v3488 = vpop.permute.xlu0 %3487
        %v3490 = vmul.f32 %v3488, %v2056
        %3492 = vrot.lane.b32.xlu0 %v3490, 96
        %v3493 = vpop.permute.xlu0 %3492
        %v3495 = vadd.f32 %v3485, %v3493
        %3496 = vset.pattern.permute.xlu0 2
        %3497 = vperm.xlu0 %3496, %v3478
        %v3498 = vpop.permute.xlu0 %3497
        %v3500 = vmul.f32 %v3498, %v2056
        %3502 = vrot.lane.b32.xlu0 %v3500, 64
        %v3503 = vpop.permute.xlu0 %3502
        %v3505 = vadd.f32 %v3495, %v3503
        %3506 = vset.pattern.permute.xlu0 3
        %3507 = vperm.xlu0 %3506, %v3478
        %v3508 = vpop.permute.xlu0 %3507
        %v3510 = vmul.f32 %v3508, %v2056
        %3512 = vrot.lane.b32.xlu0 %v3510, 32
        %v3513 = vpop.permute.xlu0 %3512
        %v3515 = vadd.f32 %v3505, %v3513
        %3516 = vset.pattern.permute.xlu0 4
        %3517 = vperm.xlu0 %3516, %v3478
        %v3518 = vpop.permute.xlu0 %3517
        %v3520 = vmul.f32 %v3518, %v2063
        %v3521 = vadd.f32 %v3515, %v3520
        %3522 = vset.pattern.permute.xlu0 5
        %3523 = vperm.xlu0 %3522, %v3478
        %v3524 = vpop.permute.xlu0 %3523
        %v3526 = vmul.f32 %v3524, %v2063
        %3528 = vrot.lane.b32.xlu0 %v3526, 96
        %v3529 = vpop.permute.xlu0 %3528
        %v3531 = vadd.f32 %v3521, %v3529
        %3532 = vset.pattern.permute.xlu0 6
        %3533 = vperm.xlu0 %3532, %v3478
        %v3534 = vpop.permute.xlu0 %3533
        %v3536 = vmul.f32 %v3534, %v2063
        %3538 = vrot.lane.b32.xlu0 %v3536, 64
        %v3539 = vpop.permute.xlu0 %3538
        %v3541 = vadd.f32 %v3531, %v3539
        %3542 = vset.pattern.permute.xlu0 7
        %3543 = vperm.xlu0 %3542, %v3478
        %v3544 = vpop.permute.xlu0 %3543
        %v3546 = vmul.f32 %v3544, %v2063
        %3548 = vrot.lane.b32.xlu0 %v3546, 32
        %v3549 = vpop.permute.xlu0 %3548
        %v3551 = vadd.f32 %v3541, %v3549
        %3553 = vrot.lane.b32.xlu0 %v3551, 32
        %v3554 = vpop.permute.xlu0 %3553
        %3556 = vrot.lane.b32.xlu0 %v3256, 96
        %v3557 = vpop.permute.xlu0 %3556
        %v3559 = vsel %vm1419, %v3400, %v3554
        %v3560 = vsel %vm2051, %v3559, %v3557
        %v3562 = vsel %vm1425, %v3560, 0
        %3564 = vmatpush.msra.mxu0 0.0
        %3565 = vmatpush.msra.mxu0 0.0
        %3566 = vmatpush.msra.mxu0 0.0
        %3567 = vmatpush.msra.mxu0 0.0
        %3568 = vmatpush.msra.mxu0 %v2182
        %3569 = vmatpush.msra.mxu0 %v2181
        %3570 = vmatpush.msra.mxu0 %v2180
        %3571 = vmatpush.msra.mxu0 %v2179
        %3572 = vmatpush.msra.mxu0 %v2178
        %3573 = vmatpush.msra.mxu0 %v2177
        %3574 = vmatpush.msra.mxu0 %v2176
        %3575 = vmatpush.msra.mxu0 %v2175
        %3576 = vmatpush.msra.mxu0 %v2174
        %3577 = vmatpush.msra.mxu0 %v2173
        %3578 = vmatpush.msra.mxu0 %v2172
        %3579 = vmatpush.msra.mxu0 %v2171
        %3580 = vmatmul.f32.gmra.mxu0 %v3562
        %v3581 = vpop.f32.mrf.mxu0
        %v3582 = vadd.f32 %v2202, %v3581
        %3583 = vdwg.mxu0
        %v3584 = vsub.f32 0.0, %v3582
        %v3585 = vmul.f32 %v3584, 1.442695
        %v3586 = vpow.pop %v3585
        %v3587 = vadd.f32 %v3586, 1.0
        %v3588 = vrcp.pop %v3587
        %v3589 = vmul.f32 %v3587, %v3588
        %v3590 = vsub.f32 1.0, %v3589
        %v3591 = vmul.f32 %v3588, %v3590
        %v3592 = vadd.f32 %v3588, %v3591
        %vm3593 = vweird.f32 %v3587
        %vm3594 = vweird.f32 %v3588
        %vm3595 = vmor %vm3593, %vm3594
        %v3596 = vsel %vm3595, %v3588, %v3592
        %v3597 = vand.u32 2147483647, %v3587
        %vm3598 = vcmp.eq.f32.partialorder %v3597, 8.507059e+37
        %v3599 = vand.u32 %v3587, 2147483648
        %v3600 = vor.u32 1.1754944e-38, %v3599
        %v3601 = vsel %vm3598, %v3600, %v3596
        %v3602 = vmul.f32 1.0, %v3601
        %v3603 = vtanh.pop %v3582
        %v3604 = vmul.f32 %v3602, %v3250
        %3606 = vrot.lane.b32.xlu0 %v3603, 64
        %v3607 = vpop.permute.xlu0 %3606
        %v3609 = vmul.f32 %v3602, %v3607
        %3611 = vrot.lane.b32.xlu0 %v3609, 32
        %v3612 = vpop.permute.xlu0 %3611
        %v3614 = vadd.f32 %v3604, %v3612
        %v3615 = vtanh.pop %v3614
        %3617 = vrot.lane.b32.xlu0 %v3615, 64
        %v3618 = vpop.permute.xlu0 %3617
        %v3620 = vmul.f32 %v3602, %v3618
        %3622 = vrot.lane.b32.xlu0 %v3620, 32
        %v3623 = vpop.permute.xlu0 %3622
        %v3625 = vsel %vm1419, %v3623, %v3554
        %v3627 = vsel %vm2051, %v3625, 0
        %3629 = vmatpush.msra.mxu0 0.0
        %3630 = vmatpush.msra.mxu0 0.0
        %3631 = vmatpush.msra.mxu0 0.0
        %3632 = vmatpush.msra.mxu0 0.0
        %3633 = vmatpush.msra.mxu0 0.0
        %3634 = vmatpush.msra.mxu0 0.0
        %3635 = vmatpush.msra.mxu0 0.0
        %3636 = vmatpush.msra.mxu0 0.0
        %3637 = vmatpush.msra.mxu0 %v2190
        %3638 = vmatpush.msra.mxu0 %v2189
        %3639 = vmatpush.msra.mxu0 %v2188
        %3640 = vmatpush.msra.mxu0 %v2187
        %3641 = vmatpush.msra.mxu0 %v2186
        %3642 = vmatpush.msra.mxu0 %v2185
        %3643 = vmatpush.msra.mxu0 %v2184
        %3644 = vmatpush.msra.mxu0 %v2183
        %3645 = vmatmul.f32.gmra.mxu0 %v3627
        %v3646 = vpop.f32.mrf.mxu0
        %v3647 = vadd.f32 %v2203, %v3646
        %3648 = vdwg.mxu0
        %v3650 = vsel %vm2047, %v3647, 0
        %3652 = vmatpush.msra.mxu0 0.0
        %3653 = vmatpush.msra.mxu0 0.0
        %3654 = vmatpush.msra.mxu0 0.0
        %3655 = vmatpush.msra.mxu0 0.0
        %3656 = vmatpush.msra.mxu0 0.0
        %3657 = vmatpush.msra.mxu0 0.0
        %3658 = vmatpush.msra.mxu0 0.0
        %3659 = vmatpush.msra.mxu0 0.0
        %3660 = vmatpush.msra.mxu0 0.0
        %3661 = vmatpush.msra.mxu0 0.0
        %3662 = vmatpush.msra.mxu0 0.0
        %3663 = vmatpush.msra.mxu0 0.0
        %3664 = vmatpush.msra.mxu0 0.0
        %3665 = vmatpush.msra.mxu0 0.0
        %3666 = vmatpush.msra.mxu0 %v2192
        %3667 = vmatpush.msra.mxu0 %v2191
        %3668 = vmatmul.f32.gmra.mxu0 %v3650
        %v3669 = vpop.f32.mrf.mxu0
        %v3670 = vadd.f32 %v2197, %v3669
        %3671 = vdwg.mxu0
        %v3672 = vmax.f32 %v3670, 0.0
        %v3674 = vsel %vm1419, %v3672, 0
        %3676 = vmatpush.msra.mxu0 0.0
        %3677 = vmatpush.msra.mxu0 0.0
        %3678 = vmatpush.msra.mxu0 0.0
        %3679 = vmatpush.msra.mxu0 0.0
        %3680 = vmatpush.msra.mxu0 0.0
        %3681 = vmatpush.msra.mxu0 0.0
        %3682 = vmatpush.msra.mxu0 0.0
        %3683 = vmatpush.msra.mxu0 0.0
        %3684 = vmatpush.msra.mxu0 0.0
        %3685 = vmatpush.msra.mxu0 0.0
        %3686 = vmatpush.msra.mxu0 0.0
        %3687 = vmatpush.msra.mxu0 0.0
        %3688 = vmatpush.msra.mxu0 %v2196
        %3689 = vmatpush.msra.mxu0 %v2195
        %3690 = vmatpush.msra.mxu0 %v2194
        %3691 = vmatpush.msra.mxu0 %v2193
        %3692 = vmatmul.f32.gmra.mxu0 %v3674
        %v3693 = vpop.f32.mrf.mxu0
        %v3694 = vadd.f32 %v2199, %v3693
        %3695 = vdwg.mxu0
        %v3696 = vmax.f32 %v3694, 0.0
        %3697 = vrot.lane.b32.xlu0 %v3397, 96
        %v3698 = vpop.permute.xlu0 %3697
        %v3700 = vsel %vm1419, %v3696, %v3554
        %v3701 = vsel %vm2051, %v3700, %v3698
        %v3703 = vsel %vm1425, %v3701, 0
        %3705 = vmatpush.msra.mxu0 0.0
        %3706 = vmatpush.msra.mxu0 0.0
        %3707 = vmatpush.msra.mxu0 0.0
        %3708 = vmatpush.msra.mxu0 0.0
        %3709 = vmatpush.msra.mxu0 %v2170
        %3710 = vmatpush.msra.mxu0 %v2169
        %3711 = vmatpush.msra.mxu0 %v2168
        %3712 = vmatpush.msra.mxu0 %v2167
        %3713 = vmatpush.msra.mxu0 %v2166
        %3714 = vmatpush.msra.mxu0 %v2165
        %3715 = vmatpush.msra.mxu0 %v2164
        %3716 = vmatpush.msra.mxu0 %v2163
        %3717 = vmatpush.msra.mxu0 %v2162
        %3718 = vmatpush.msra.mxu0 %v2161
        %3719 = vmatpush.msra.mxu0 %v2160
        %3720 = vmatpush.msra.mxu0 %v2159
        %3721 = vmatmul.f32.gmra.mxu0 %v3703
        %v3722 = vpop.f32.mrf.mxu0
        %v3723 = vadd.f32 %v2200, %v3722
        %3724 = vdwg.mxu0
        %v3725 = vsub.f32 0.0, %v3723
        %v3726 = vmul.f32 %v3725, 1.442695
        %v3727 = vpow.pop %v3726
        %v3728 = vadd.f32 %v3727, 1.0
        %v3729 = vrcp.pop %v3728
        %v3730 = vmul.f32 %v3728, %v3729
        %v3731 = vsub.f32 1.0, %v3730
        %v3732 = vmul.f32 %v3729, %v3731
        %v3733 = vadd.f32 %v3729, %v3732
        %vm3734 = vweird.f32 %v3728
        %vm3735 = vweird.f32 %v3729
        %vm3736 = vmor %vm3734, %vm3735
        %v3737 = vsel %vm3736, %v3729, %v3733
        %v3738 = vand.u32 2147483647, %v3728
        %vm3739 = vcmp.eq.f32.partialorder %v3738, 8.507059e+37
        %v3740 = vand.u32 %v3728, 2147483648
        %v3741 = vor.u32 1.1754944e-38, %v3740
        %v3742 = vsel %vm3739, %v3741, %v3737
        %v3743 = vmul.f32 1.0, %v3742
        %v3744 = vtanh.pop %v3723
        %v3745 = vmul.f32 %v3743, %v3391
        %3747 = vrot.lane.b32.xlu0 %v3744, 64
        %v3748 = vpop.permute.xlu0 %3747
        %v3750 = vmul.f32 %v3743, %v3748
        %3752 = vrot.lane.b32.xlu0 %v3750, 32
        %v3753 = vpop.permute.xlu0 %3752
        %v3755 = vadd.f32 %v3745, %v3753
        %v3756 = vtanh.pop %v3755
        %3758 = vrot.lane.b32.xlu0 %v3756, 64
        %v3759 = vpop.permute.xlu0 %3758
        %v3761 = vmul.f32 %v3743, %v3759
        %3763 = vrot.lane.b32.xlu0 %v3761, 32
        %v3764 = vpop.permute.xlu0 %3763
        %3766 = vrot.lane.b32.xlu0 %v3478, 32
        %v3767 = vpop.permute.xlu0 %3766
        %3770 = vrot.lane.b32.xlu0 %v3479, 40
        %v3771 = vpop.permute.xlu0 %3770
        %v3773 = vsel %vm1419, %v3764, %v3767
        %v3774 = vsel %vm2319, %v3773, %v3771
        %v3776 = vsel %vm1421, %v3774, 0
        %3778 = vmatpush.msra.mxu0 0.0
        %3779 = vmatpush.msra.mxu0 0.0
        %3780 = vmatpush.msra.mxu0 0.0
        %3781 = vmatpush.msra.mxu0 0.0
        %3782 = vmatpush.msra.mxu0 0.0
        %3783 = vmatpush.msra.mxu0 0.0
        %3784 = vmatpush.msra.mxu0 0.0
        %3785 = vmatpush.msra.mxu0 0.0
        %3786 = vmatpush.msra.mxu0 0.0
        %3787 = vmatpush.msra.mxu0 0.0
        %3788 = vmatpush.msra.mxu0 %v2142
        %3789 = vmatpush.msra.mxu0 %v2141
        %3790 = vmatpush.msra.mxu0 %v2140
        %3791 = vmatpush.msra.mxu0 %v2139
        %3792 = vmatpush.msra.mxu0 %v2138
        %3793 = vmatpush.msra.mxu0 %v2137
        %3794 = vmatmul.f32.gmra.mxu0 %v3776
        %v3795 = vpop.f32.mrf.mxu0
        %v3796 = vadd.f32 %v2134, %v3795
        %3797 = vdwg.mxu0
        %v3798 = vtanh.pop %v3796
        %3799 = vmatpush.msra.mxu0 %v2158
        %3800 = vmatpush.msra.mxu0 %v2157
        %3801 = vmatpush.msra.mxu0 %v2156
        %3802 = vmatpush.msra.mxu0 %v2155
        %3803 = vmatpush.msra.mxu0 %v2154
        %3804 = vmatpush.msra.mxu0 %v2153
        %3805 = vmatpush.msra.mxu0 %v2152
        %3806 = vmatpush.msra.mxu0 %v2151
        %3807 = vmatpush.msra.mxu0 %v2150
        %3808 = vmatpush.msra.mxu0 %v2149
        %3809 = vmatpush.msra.mxu0 %v2148
        %3810 = vmatpush.msra.mxu0 %v2147
        %3811 = vmatpush.msra.mxu0 %v2146
        %3812 = vmatpush.msra.mxu0 %v2145
        %3813 = vmatpush.msra.mxu0 %v2144
        %3814 = vmatpush.msra.mxu0 %v2143
        %3815 = vmatmul.f32.gmra.mxu0 %v3798
        %v3816 = vpop.f32.mrf.mxu0
        %v3817 = vadd.f32 %v2136, %v3816
        %3818 = vdwg.mxu0
        %v3819 = vsel %vm2365, %v3817, -inf
        %3820 = vmax.xlane.f32.xlu0 %v3819
        %v3821 = vpop.xlane.xlu0 %3820
        %v3822 = vsub.f32 %v3817, %v3821
        %v3823 = vmul.f32 %v3822, 1.442695
        %v3824 = vpow.pop %v3823
        %v3825 = vsel %vm2365, %v3824, 0.0
        %3826 = vadd.xlane.f32.xlu0 %v3825
        %v3827 = vpop.xlane.xlu0 %3826
        %v3828 = vrcp.pop %v3827
        %v3829 = vmul.f32 %v3827, %v3828
        %v3830 = vsub.f32 1.0, %v3829
        %v3831 = vmul.f32 %v3828, %v3830
        %v3832 = vadd.f32 %v3828, %v3831
        %vm3833 = vweird.f32 %v3827
        %vm3834 = vweird.f32 %v3828
        %vm3835 = vmor %vm3833, %vm3834
        %v3836 = vsel %vm3835, %v3828, %v3832
        %v3837 = vand.u32 2147483647, %v3827
        %vm3838 = vcmp.eq.f32.partialorder %v3837, 8.507059e+37
        %v3839 = vand.u32 %v3827, 2147483648
        %v3840 = vor.u32 1.1754944e-38, %v3839
        %v3841 = vsel %vm3838, %v3840, %v3836
        %v3842 = vmul.f32 %v3824, %v3841
        %v3843 = vadd.f32 %v3479, %v3842
        %3845 = vset.pattern.permute.xlu0 0
        %3846 = vperm.xlu0 %3845, %v3842
        %v3847 = vpop.permute.xlu0 %3846
        %v3849 = vmul.f32 %v3847, %v2056
        %3850 = vset.pattern.permute.xlu0 1
        %3851 = vperm.xlu0 %3850, %v3842
        %v3852 = vpop.permute.xlu0 %3851
        %v3854 = vmul.f32 %v3852, %v2056
        %3856 = vrot.lane.b32.xlu0 %v3854, 96
        %v3857 = vpop.permute.xlu0 %3856
        %v3859 = vadd.f32 %v3849, %v3857
        %3860 = vset.pattern.permute.xlu0 2
        %3861 = vperm.xlu0 %3860, %v3842
        %v3862 = vpop.permute.xlu0 %3861
        %v3864 = vmul.f32 %v3862, %v2056
        %3866 = vrot.lane.b32.xlu0 %v3864, 64
        %v3867 = vpop.permute.xlu0 %3866
        %v3869 = vadd.f32 %v3859, %v3867
        %3870 = vset.pattern.permute.xlu0 3
        %3871 = vperm.xlu0 %3870, %v3842
        %v3872 = vpop.permute.xlu0 %3871
        %v3874 = vmul.f32 %v3872, %v2056
        %3876 = vrot.lane.b32.xlu0 %v3874, 32
        %v3877 = vpop.permute.xlu0 %3876
        %v3879 = vadd.f32 %v3869, %v3877
        %3880 = vset.pattern.permute.xlu0 4
        %3881 = vperm.xlu0 %3880, %v3842
        %v3882 = vpop.permute.xlu0 %3881
        %v3884 = vmul.f32 %v3882, %v2063
        %v3885 = vadd.f32 %v3879, %v3884
        %3886 = vset.pattern.permute.xlu0 5
        %3887 = vperm.xlu0 %3886, %v3842
        %v3888 = vpop.permute.xlu0 %3887
        %v3890 = vmul.f32 %v3888, %v2063
        %3892 = vrot.lane.b32.xlu0 %v3890, 96
        %v3893 = vpop.permute.xlu0 %3892
        %v3895 = vadd.f32 %v3885, %v3893
        %3896 = vset.pattern.permute.xlu0 6
        %3897 = vperm.xlu0 %3896, %v3842
        %v3898 = vpop.permute.xlu0 %3897
        %v3900 = vmul.f32 %v3898, %v2063
        %3902 = vrot.lane.b32.xlu0 %v3900, 64
        %v3903 = vpop.permute.xlu0 %3902
        %v3905 = vadd.f32 %v3895, %v3903
        %3906 = vset.pattern.permute.xlu0 7
        %3907 = vperm.xlu0 %3906, %v3842
        %v3908 = vpop.permute.xlu0 %3907
        %v3910 = vmul.f32 %v3908, %v2063
        %3912 = vrot.lane.b32.xlu0 %v3910, 32
        %v3913 = vpop.permute.xlu0 %3912
        %v3915 = vadd.f32 %v3905, %v3913
        %3917 = vrot.lane.b32.xlu0 %v3915, 32
        %v3918 = vpop.permute.xlu0 %3917
        %3920 = vrot.lane.b32.xlu0 %v3620, 96
        %v3921 = vpop.permute.xlu0 %3920
        %v3923 = vsel %vm1419, %v3764, %v3918
        %v3924 = vsel %vm2051, %v3923, %v3921
        %v3926 = vsel %vm1425, %v3924, 0
        %3928 = vmatpush.msra.mxu0 0.0
        %3929 = vmatpush.msra.mxu0 0.0
        %3930 = vmatpush.msra.mxu0 0.0
        %3931 = vmatpush.msra.mxu0 0.0
        %3932 = vmatpush.msra.mxu0 %v2182
        %3933 = vmatpush.msra.mxu0 %v2181
        %3934 = vmatpush.msra.mxu0 %v2180
        %3935 = vmatpush.msra.mxu0 %v2179
        %3936 = vmatpush.msra.mxu0 %v2178
        %3937 = vmatpush.msra.mxu0 %v2177
        %3938 = vmatpush.msra.mxu0 %v2176
        %3939 = vmatpush.msra.mxu0 %v2175
        %3940 = vmatpush.msra.mxu0 %v2174
        %3941 = vmatpush.msra.mxu0 %v2173
        %3942 = vmatpush.msra.mxu0 %v2172
        %3943 = vmatpush.msra.mxu0 %v2171
        %3944 = vmatmul.f32.gmra.mxu0 %v3926
        %v3945 = vpop.f32.mrf.mxu0
        %v3946 = vadd.f32 %v2202, %v3945
        %3947 = vdwg.mxu0
        %v3948 = vsub.f32 0.0, %v3946
        %v3949 = vmul.f32 %v3948, 1.442695
        %v3950 = vpow.pop %v3949
        %v3951 = vadd.f32 %v3950, 1.0
        %v3952 = vrcp.pop %v3951
        %v3953 = vmul.f32 %v3951, %v3952
        %v3954 = vsub.f32 1.0, %v3953
        %v3955 = vmul.f32 %v3952, %v3954
        %v3956 = vadd.f32 %v3952, %v3955
        %vm3957 = vweird.f32 %v3951
        %vm3958 = vweird.f32 %v3952
        %vm3959 = vmor %vm3957, %vm3958
        %v3960 = vsel %vm3959, %v3952, %v3956
        %v3961 = vand.u32 2147483647, %v3951
        %vm3962 = vcmp.eq.f32.partialorder %v3961, 8.507059e+37
        %v3963 = vand.u32 %v3951, 2147483648
        %v3964 = vor.u32 1.1754944e-38, %v3963
        %v3965 = vsel %vm3962, %v3964, %v3960
        %v3966 = vmul.f32 1.0, %v3965
        %v3967 = vtanh.pop %v3946
        %v3968 = vmul.f32 %v3966, %v3614
        %3970 = vrot.lane.b32.xlu0 %v3967, 64
        %v3971 = vpop.permute.xlu0 %3970
        %v3973 = vmul.f32 %v3966, %v3971
        %3975 = vrot.lane.b32.xlu0 %v3973, 32
        %v3976 = vpop.permute.xlu0 %3975
        %v3978 = vadd.f32 %v3968, %v3976
        %v3979 = vtanh.pop %v3978
        %3981 = vrot.lane.b32.xlu0 %v3979, 64
        %v3982 = vpop.permute.xlu0 %3981
        %v3984 = vmul.f32 %v3966, %v3982
        %3986 = vrot.lane.b32.xlu0 %v3984, 32
        %v3987 = vpop.permute.xlu0 %3986
        %v3989 = vsel %vm1419, %v3987, %v3918
        %v3991 = vsel %vm2051, %v3989, 0
        %3993 = vmatpush.msra.mxu0 0.0
        %3994 = vmatpush.msra.mxu0 0.0
        %3995 = vmatpush.msra.mxu0 0.0
        %3996 = vmatpush.msra.mxu0 0.0
        %3997 = vmatpush.msra.mxu0 0.0
        %3998 = vmatpush.msra.mxu0 0.0
        %3999 = vmatpush.msra.mxu0 0.0
        %4000 = vmatpush.msra.mxu0 0.0
        %4001 = vmatpush.msra.mxu0 %v2190
        %4002 = vmatpush.msra.mxu0 %v2189
        %4003 = vmatpush.msra.mxu0 %v2188
        %4004 = vmatpush.msra.mxu0 %v2187
        %4005 = vmatpush.msra.mxu0 %v2186
        %4006 = vmatpush.msra.mxu0 %v2185
        %4007 = vmatpush.msra.mxu0 %v2184
        %4008 = vmatpush.msra.mxu0 %v2183
        %4009 = vmatmul.f32.gmra.mxu0 %v3991
        %v4010 = vpop.f32.mrf.mxu0
        %v4011 = vadd.f32 %v2203, %v4010
        %4012 = vdwg.mxu0
        %v4014 = vsel %vm2047, %v4011, 0
        %4016 = vmatpush.msra.mxu0 0.0
        %4017 = vmatpush.msra.mxu0 0.0
        %4018 = vmatpush.msra.mxu0 0.0
        %4019 = vmatpush.msra.mxu0 0.0
        %4020 = vmatpush.msra.mxu0 0.0
        %4021 = vmatpush.msra.mxu0 0.0
        %4022 = vmatpush.msra.mxu0 0.0
        %4023 = vmatpush.msra.mxu0 0.0
        %4024 = vmatpush.msra.mxu0 0.0
        %4025 = vmatpush.msra.mxu0 0.0
        %4026 = vmatpush.msra.mxu0 0.0
        %4027 = vmatpush.msra.mxu0 0.0
        %4028 = vmatpush.msra.mxu0 0.0
        %4029 = vmatpush.msra.mxu0 0.0
        %4030 = vmatpush.msra.mxu0 %v2192
        %4031 = vmatpush.msra.mxu0 %v2191
        %4032 = vmatmul.f32.gmra.mxu0 %v4014
        %v4033 = vpop.f32.mrf.mxu0
        %v4034 = vadd.f32 %v2197, %v4033
        %4035 = vdwg.mxu0
        %v4036 = vmax.f32 %v4034, 0.0
        %v4038 = vsel %vm1419, %v4036, 0
        %4040 = vmatpush.msra.mxu0 0.0
        %4041 = vmatpush.msra.mxu0 0.0
        %4042 = vmatpush.msra.mxu0 0.0
        %4043 = vmatpush.msra.mxu0 0.0
        %4044 = vmatpush.msra.mxu0 0.0
        %4045 = vmatpush.msra.mxu0 0.0
        %4046 = vmatpush.msra.mxu0 0.0
        %4047 = vmatpush.msra.mxu0 0.0
        %4048 = vmatpush.msra.mxu0 0.0
        %4049 = vmatpush.msra.mxu0 0.0
        %4050 = vmatpush.msra.mxu0 0.0
        %4051 = vmatpush.msra.mxu0 0.0
        %4052 = vmatpush.msra.mxu0 %v2196
        %4053 = vmatpush.msra.mxu0 %v2195
        %4054 = vmatpush.msra.mxu0 %v2194
        %4055 = vmatpush.msra.mxu0 %v2193
        %4056 = vmatmul.f32.gmra.mxu0 %v4038
        %v4057 = vpop.f32.mrf.mxu0
        %v4058 = vadd.f32 %v2199, %v4057
        %4059 = vdwg.mxu0
        %v4060 = vmax.f32 %v4058, 0.0
        %4061 = vrot.lane.b32.xlu0 %v3761, 96
        %v4062 = vpop.permute.xlu0 %4061
        %v4064 = vsel %vm1419, %v4060, %v3918
        %v4065 = vsel %vm2051, %v4064, %v4062
        %v4067 = vsel %vm1425, %v4065, 0
        %4069 = vmatpush.msra.mxu0 0.0
        %4070 = vmatpush.msra.mxu0 0.0
        %4071 = vmatpush.msra.mxu0 0.0
        %4072 = vmatpush.msra.mxu0 0.0
        %4073 = vmatpush.msra.mxu0 %v2170
        %4074 = vmatpush.msra.mxu0 %v2169
        %4075 = vmatpush.msra.mxu0 %v2168
        %4076 = vmatpush.msra.mxu0 %v2167
        %4077 = vmatpush.msra.mxu0 %v2166
        %4078 = vmatpush.msra.mxu0 %v2165
        %4079 = vmatpush.msra.mxu0 %v2164
        %4080 = vmatpush.msra.mxu0 %v2163
        %4081 = vmatpush.msra.mxu0 %v2162
        %4082 = vmatpush.msra.mxu0 %v2161
        %4083 = vmatpush.msra.mxu0 %v2160
        %4084 = vmatpush.msra.mxu0 %v2159
        %4085 = vmatmul.f32.gmra.mxu0 %v4067
        %v4086 = vpop.f32.mrf.mxu0
        %v4087 = vadd.f32 %v2200, %v4086
        %4088 = vdwg.mxu0
        %v4089 = vsub.f32 0.0, %v4087
        %v4090 = vmul.f32 %v4089, 1.442695
        %v4091 = vpow.pop %v4090
        %v4092 = vadd.f32 %v4091, 1.0
        %v4093 = vrcp.pop %v4092
        %v4094 = vmul.f32 %v4092, %v4093
        %v4095 = vsub.f32 1.0, %v4094
        %v4096 = vmul.f32 %v4093, %v4095
        %v4097 = vadd.f32 %v4093, %v4096
        %vm4098 = vweird.f32 %v4092
        %vm4099 = vweird.f32 %v4093
        %vm4100 = vmor %vm4098, %vm4099
        %v4101 = vsel %vm4100, %v4093, %v4097
        %v4102 = vand.u32 2147483647, %v4092
        %vm4103 = vcmp.eq.f32.partialorder %v4102, 8.507059e+37
        %v4104 = vand.u32 %v4092, 2147483648
        %v4105 = vor.u32 1.1754944e-38, %v4104
        %v4106 = vsel %vm4103, %v4105, %v4101
        %v4107 = vmul.f32 1.0, %v4106
        %v4108 = vtanh.pop %v4087
        %v4109 = vmul.f32 %v4107, %v3755
        %4111 = vrot.lane.b32.xlu0 %v4108, 64
        %v4112 = vpop.permute.xlu0 %4111
        %v4114 = vmul.f32 %v4107, %v4112
        %4116 = vrot.lane.b32.xlu0 %v4114, 32
        %v4117 = vpop.permute.xlu0 %4116
        %v4119 = vadd.f32 %v4109, %v4117
        %v4120 = vtanh.pop %v4119
        %4122 = vrot.lane.b32.xlu0 %v4120, 64
        %v4123 = vpop.permute.xlu0 %4122
        %v4125 = vmul.f32 %v4107, %v4123
        %4127 = vrot.lane.b32.xlu0 %v4125, 32
        %v4128 = vpop.permute.xlu0 %4127
        %4130 = vrot.lane.b32.xlu0 %v3842, 32
        %v4131 = vpop.permute.xlu0 %4130
        %4134 = vrot.lane.b32.xlu0 %v3843, 40
        %v4135 = vpop.permute.xlu0 %4134
        %v4137 = vsel %vm1419, %v4128, %v4131
        %v4138 = vsel %vm2319, %v4137, %v4135
        %v4140 = vsel %vm1421, %v4138, 0
        %4142 = vmatpush.msra.mxu0 0.0
        %4143 = vmatpush.msra.mxu0 0.0
        %4144 = vmatpush.msra.mxu0 0.0
        %4145 = vmatpush.msra.mxu0 0.0
        %4146 = vmatpush.msra.mxu0 0.0
        %4147 = vmatpush.msra.mxu0 0.0
        %4148 = vmatpush.msra.mxu0 0.0
        %4149 = vmatpush.msra.mxu0 0.0
        %4150 = vmatpush.msra.mxu0 0.0
        %4151 = vmatpush.msra.mxu0 0.0
        %4152 = vmatpush.msra.mxu0 %v2142
        %4153 = vmatpush.msra.mxu0 %v2141
        %4154 = vmatpush.msra.mxu0 %v2140
        %4155 = vmatpush.msra.mxu0 %v2139
        %4156 = vmatpush.msra.mxu0 %v2138
        %4157 = vmatpush.msra.mxu0 %v2137
        %4158 = vmatmul.f32.gmra.mxu0 %v4140
        %v4159 = vpop.f32.mrf.mxu0
        %v4160 = vadd.f32 %v2134, %v4159
        %4161 = vdwg.mxu0
        %v4162 = vtanh.pop %v4160
        %4163 = vmatpush.msra.mxu0 %v2158
        %4164 = vmatpush.msra.mxu0 %v2157
        %4165 = vmatpush.msra.mxu0 %v2156
        %4166 = vmatpush.msra.mxu0 %v2155
        %4167 = vmatpush.msra.mxu0 %v2154
        %4168 = vmatpush.msra.mxu0 %v2153
        %4169 = vmatpush.msra.mxu0 %v2152
        %4170 = vmatpush.msra.mxu0 %v2151
        %4171 = vmatpush.msra.mxu0 %v2150
        %4172 = vmatpush.msra.mxu0 %v2149
        %4173 = vmatpush.msra.mxu0 %v2148
        %4174 = vmatpush.msra.mxu0 %v2147
        %4175 = vmatpush.msra.mxu0 %v2146
        %4176 = vmatpush.msra.mxu0 %v2145
        %4177 = vmatpush.msra.mxu0 %v2144
        %4178 = vmatpush.msra.mxu0 %v2143
        %4179 = vmatmul.f32.gmra.mxu0 %v4162
        %v4180 = vpop.f32.mrf.mxu0
        %v4181 = vadd.f32 %v2136, %v4180
        %4182 = vdwg.mxu0
        %v4183 = vsel %vm2365, %v4181, -inf
        %4184 = vmax.xlane.f32.xlu0 %v4183
        %v4185 = vpop.xlane.xlu0 %4184
        %v4186 = vsub.f32 %v4181, %v4185
        %v4187 = vmul.f32 %v4186, 1.442695
        %v4188 = vpow.pop %v4187
        %v4189 = vsel %vm2365, %v4188, 0.0
        %4190 = vadd.xlane.f32.xlu0 %v4189
        %v4191 = vpop.xlane.xlu0 %4190
        %v4192 = vrcp.pop %v4191
        %v4193 = vmul.f32 %v4191, %v4192
        %v4194 = vsub.f32 1.0, %v4193
        %v4195 = vmul.f32 %v4192, %v4194
        %v4196 = vadd.f32 %v4192, %v4195
        %vm4197 = vweird.f32 %v4191
        %vm4198 = vweird.f32 %v4192
        %vm4199 = vmor %vm4197, %vm4198
        %v4200 = vsel %vm4199, %v4192, %v4196
        %v4201 = vand.u32 2147483647, %v4191
        %vm4202 = vcmp.eq.f32.partialorder %v4201, 8.507059e+37
        %v4203 = vand.u32 %v4191, 2147483648
        %v4204 = vor.u32 1.1754944e-38, %v4203
        %v4205 = vsel %vm4202, %v4204, %v4200
        %v4206 = vmul.f32 %v4188, %v4205
        %4208 = vset.pattern.permute.xlu0 0
        %4209 = vperm.xlu0 %4208, %v4206
        %v4210 = vpop.permute.xlu0 %4209
        %v4212 = vmul.f32 %v4210, %v2056
        %4213 = vset.pattern.permute.xlu0 1
        %4214 = vperm.xlu0 %4213, %v4206
        %v4215 = vpop.permute.xlu0 %4214
        %v4217 = vmul.f32 %v4215, %v2056
        %4219 = vrot.lane.b32.xlu0 %v4217, 96
        %v4220 = vpop.permute.xlu0 %4219
        %v4222 = vadd.f32 %v4212, %v4220
        %4223 = vset.pattern.permute.xlu0 2
        %4224 = vperm.xlu0 %4223, %v4206
        %v4225 = vpop.permute.xlu0 %4224
        %v4227 = vmul.f32 %v4225, %v2056
        %4229 = vrot.lane.b32.xlu0 %v4227, 64
        %v4230 = vpop.permute.xlu0 %4229
        %v4232 = vadd.f32 %v4222, %v4230
        %4233 = vset.pattern.permute.xlu0 3
        %4234 = vperm.xlu0 %4233, %v4206
        %v4235 = vpop.permute.xlu0 %4234
        %v4237 = vmul.f32 %v4235, %v2056
        %4239 = vrot.lane.b32.xlu0 %v4237, 32
        %v4240 = vpop.permute.xlu0 %4239
        %v4242 = vadd.f32 %v4232, %v4240
        %4243 = vset.pattern.permute.xlu0 4
        %4244 = vperm.xlu0 %4243, %v4206
        %v4245 = vpop.permute.xlu0 %4244
        %v4247 = vmul.f32 %v4245, %v2063
        %v4248 = vadd.f32 %v4242, %v4247
        %4249 = vset.pattern.permute.xlu0 5
        %4250 = vperm.xlu0 %4249, %v4206
        %v4251 = vpop.permute.xlu0 %4250
        %v4253 = vmul.f32 %v4251, %v2063
        %4255 = vrot.lane.b32.xlu0 %v4253, 96
        %v4256 = vpop.permute.xlu0 %4255
        %v4258 = vadd.f32 %v4248, %v4256
        %4259 = vset.pattern.permute.xlu0 6
        %4260 = vperm.xlu0 %4259, %v4206
        %v4261 = vpop.permute.xlu0 %4260
        %v4263 = vmul.f32 %v4261, %v2063
        %4265 = vrot.lane.b32.xlu0 %v4263, 64
        %v4266 = vpop.permute.xlu0 %4265
        %v4268 = vadd.f32 %v4258, %v4266
        %4269 = vset.pattern.permute.xlu0 7
        %4270 = vperm.xlu0 %4269, %v4206
        %v4271 = vpop.permute.xlu0 %4270
        %v4273 = vmul.f32 %v4271, %v2063
        %4275 = vrot.lane.b32.xlu0 %v4273, 32
        %v4276 = vpop.permute.xlu0 %4275
        %v4278 = vadd.f32 %v4268, %v4276
        %4280 = vrot.lane.b32.xlu0 %v4278, 32
        %v4281 = vpop.permute.xlu0 %4280
        %4283 = vrot.lane.b32.xlu0 %v3984, 96
        %v4284 = vpop.permute.xlu0 %4283
        %v4286 = vsel %vm1419, %v4128, %v4281
        %v4287 = vsel %vm2051, %v4286, %v4284
        %v4289 = vsel %vm1425, %v4287, 0
        %4291 = vmatpush.msra.mxu0 0.0
        %4292 = vmatpush.msra.mxu0 0.0
        %4293 = vmatpush.msra.mxu0 0.0
        %4294 = vmatpush.msra.mxu0 0.0
        %4295 = vmatpush.msra.mxu0 %v2182
        %4296 = vmatpush.msra.mxu0 %v2181
        %4297 = vmatpush.msra.mxu0 %v2180
        %4298 = vmatpush.msra.mxu0 %v2179
        %4299 = vmatpush.msra.mxu0 %v2178
        %4300 = vmatpush.msra.mxu0 %v2177
        %4301 = vmatpush.msra.mxu0 %v2176
        %4302 = vmatpush.msra.mxu0 %v2175
        %4303 = vmatpush.msra.mxu0 %v2174
        %4304 = vmatpush.msra.mxu0 %v2173
        %4305 = vmatpush.msra.mxu0 %v2172
        %4306 = vmatpush.msra.mxu0 %v2171
        %4307 = vmatmul.f32.gmra.mxu0 %v4289
        %v4308 = vpop.f32.mrf.mxu0
        %v4309 = vadd.f32 %v2202, %v4308
        %4310 = vdwg.mxu0
        %v4311 = vsub.f32 0.0, %v4309
        %v4312 = vmul.f32 %v4311, 1.442695
        %v4313 = vpow.pop %v4312
        %v4314 = vadd.f32 %v4313, 1.0
        %v4315 = vrcp.pop %v4314
        %v4316 = vmul.f32 %v4314, %v4315
        %v4317 = vsub.f32 1.0, %v4316
        %v4318 = vmul.f32 %v4315, %v4317
        %v4319 = vadd.f32 %v4315, %v4318
        %vm4320 = vweird.f32 %v4314
        %vm4321 = vweird.f32 %v4315
        %vm4322 = vmor %vm4320, %vm4321
        %v4323 = vsel %vm4322, %v4315, %v4319
        %v4324 = vand.u32 2147483647, %v4314
        %vm4325 = vcmp.eq.f32.partialorder %v4324, 8.507059e+37
        %v4326 = vand.u32 %v4314, 2147483648
        %v4327 = vor.u32 1.1754944e-38, %v4326
        %v4328 = vsel %vm4325, %v4327, %v4323
        %v4329 = vmul.f32 1.0, %v4328
        %v4330 = vtanh.pop %v4309
        %v4331 = vmul.f32 %v4329, %v3978
        %4333 = vrot.lane.b32.xlu0 %v4330, 64
        %v4334 = vpop.permute.xlu0 %4333
        %v4336 = vmul.f32 %v4329, %v4334
        %4338 = vrot.lane.b32.xlu0 %v4336, 32
        %v4339 = vpop.permute.xlu0 %4338
        %v4341 = vadd.f32 %v4331, %v4339
        %v4342 = vtanh.pop %v4341
        %4344 = vrot.lane.b32.xlu0 %v4342, 64
        %v4345 = vpop.permute.xlu0 %4344
        %v4347 = vmul.f32 %v4329, %v4345
        %4349 = vrot.lane.b32.xlu0 %v4347, 32
        %v4350 = vpop.permute.xlu0 %4349
        %v4352 = vsel %vm1419, %v4350, %v4281
        %v4354 = vsel %vm2051, %v4352, 0
        %4356 = vmatpush.msra.mxu0 0.0
        %4357 = vmatpush.msra.mxu0 0.0
        %4358 = vmatpush.msra.mxu0 0.0
        %4359 = vmatpush.msra.mxu0 0.0
        %4360 = vmatpush.msra.mxu0 0.0
        %4361 = vmatpush.msra.mxu0 0.0
        %4362 = vmatpush.msra.mxu0 0.0
        %4363 = vmatpush.msra.mxu0 0.0
        %4364 = vmatpush.msra.mxu0 %v2190
        %4365 = vmatpush.msra.mxu0 %v2189
        %4366 = vmatpush.msra.mxu0 %v2188
        %4367 = vmatpush.msra.mxu0 %v2187
        %4368 = vmatpush.msra.mxu0 %v2186
        %4369 = vmatpush.msra.mxu0 %v2185
        %4370 = vmatpush.msra.mxu0 %v2184
        %4371 = vmatpush.msra.mxu0 %v2183
        %4372 = vmatmul.f32.gmra.mxu0 %v4354
        %v4373 = vpop.f32.mrf.mxu0
        %v4374 = vadd.f32 %v2203, %v4373
        %4375 = vdwg.mxu0
        %4376 = vrot.lane.b32.xlu0 %v2919, 16
        %v4377 = vpop.permute.xlu0 %4376
        %4379 = vrot.lane.b32.xlu0 %v3283, 32
        %v4380 = vpop.permute.xlu0 %4379
        %4382 = vrot.lane.b32.xlu0 %v3647, 48
        %v4383 = vpop.permute.xlu0 %4382
        %4385 = vrot.lane.b32.xlu0 %v4011, 64
        %v4386 = vpop.permute.xlu0 %4385
        %4389 = vrot.lane.b32.xlu0 %v4374, 80
        %v4390 = vpop.permute.xlu0 %4389
        %v4392 = vsel %vm2047, %v2555, %v4377
        %v4393 = vsel %vm1419, %v4392, %v4380
        %v4394 = vsel %vm1421, %v4393, %v4383
        %v4395 = vsel %vm2051, %v4394, %v4386
        %v4396 = vsel %vm1423, %v4395, %v4390
        %v4397 = vld [vmem:[%s19] sm:$0xff]
        %v4398 = vld [vmem:[%s19 + $0x8] sm:$0xff]
        %v4399 = vld [vmem:[%s19 + $0x10] sm:$0xff]
        %v4400 = vld [vmem:[%s19 + $0x18] sm:$0xff]
        %v4401 = vld [vmem:[%s19 + $0x20] sm:$0xff]
        %v4402 = vld [vmem:[%s19 + $0x28] sm:$0xff]
        %v4403 = vld [vmem:[%s19 + $0x30] sm:$0xff]
        %v4404 = vld [vmem:[%s19 + $0x38] sm:$0xff]
        %v4405 = vld [vmem:[%s19 + $0x40] sm:$0xff]
        %v4406 = vld [vmem:[%s19 + $0x48] sm:$0xff]
        %v4407 = vld [vmem:[%s19 + $0x50] sm:$0xff]
        %v4408 = vld [vmem:[%s19 + $0x58] sm:$0xff]
        %v4409 = vld [vmem:[%s19 + $0x60] sm:$0xff]
        %v4410 = vld [vmem:[%s19 + $0x68] sm:$0xff]
        %v4411 = vld [vmem:[%s19 + $0x70] sm:$0xff]
        %v4412 = vld [vmem:[%s19 + $0x78] sm:$0xff]
        %v4413 = vld [vmem:[%s19 + $0x80] sm:$0xff]
        %v4414 = vld [vmem:[%s19 + $0x88] sm:$0xff]
        %v4415 = vld [vmem:[%s19 + $0x90] sm:$0xff]
        %v4416 = vld [vmem:[%s19 + $0x98] sm:$0xff]
        %v4417 = vld [vmem:[%s19 + $0xa0] sm:$0xff]
        %v4418 = vld [vmem:[%s19 + $0xa8] sm:$0xff]
        %v4419 = vld [vmem:[%s19 + $0xb0] sm:$0xff]
        %v4420 = vld [vmem:[%s19 + $0xb8] sm:$0xff]
        %v4421 = vld [vmem:[%s24] sm:$0x3]
        %v4423 = vperm.slane %v4421, 0
        %v4424 = vperm.slane %v4421, 1
        %v4428 = vsel %vm1425, %v4396, 0
        %4430 = vmatpush.msra.mxu0 0.0
        %4431 = vmatpush.msra.mxu0 0.0
        %4432 = vmatpush.msra.mxu0 0.0
        %4433 = vmatpush.msra.mxu0 0.0
        %4434 = vmatpush.msra.mxu0 %v4419
        %4435 = vmatpush.msra.mxu0 %v4417
        %4436 = vmatpush.msra.mxu0 %v4415
        %4437 = vmatpush.msra.mxu0 %v4413
        %4438 = vmatpush.msra.mxu0 %v4411
        %4439 = vmatpush.msra.mxu0 %v4409
        %4440 = vmatpush.msra.mxu0 %v4407
        %4441 = vmatpush.msra.mxu0 %v4405
        %4442 = vmatpush.msra.mxu0 %v4403
        %4443 = vmatpush.msra.mxu0 %v4401
        %4444 = vmatpush.msra.mxu0 %v4399
        %4445 = vmatpush.msra.mxu0 %v4397
        %4446 = vmatmul.f32.gmra.mxu0 %v4428
        %v4447 = vpop.f32.mrf.mxu0
        %v4448 = vadd.f32 %v4423, %v4447
        %4449 = vdwg.mxu0
        %4450 = vmatpush.msra.mxu0 0.0
        %4451 = vmatpush.msra.mxu0 0.0
        %4452 = vmatpush.msra.mxu0 0.0
        %4453 = vmatpush.msra.mxu0 0.0
        %4454 = vmatpush.msra.mxu0 %v4420
        %4455 = vmatpush.msra.mxu0 %v4418
        %4456 = vmatpush.msra.mxu0 %v4416
        %4457 = vmatpush.msra.mxu0 %v4414
        %4458 = vmatpush.msra.mxu0 %v4412
        %4459 = vmatpush.msra.mxu0 %v4410
        %4460 = vmatpush.msra.mxu0 %v4408
        %4461 = vmatpush.msra.mxu0 %v4406
        %4462 = vmatpush.msra.mxu0 %v4404
        %4463 = vmatpush.msra.mxu0 %v4402
        %4464 = vmatpush.msra.mxu0 %v4400
        %4465 = vmatpush.msra.mxu0 %v4398
        %4466 = vmatmul.f32.gmra.mxu0 %v4428
        %v4467 = vpop.f32.mrf.mxu0
        %v4468 = vadd.f32 %v4424, %v4467
        %4469 = vdwg.mxu0
        %v4470 = vtanh.pop %v4448
        %v4471 = vtanh.pop %v4468
        %v4472 = vld [vmem:[#allocation12] sm:$0xff]
        %v4473 = vld [vmem:[#allocation12 + $0x8] sm:$0xff]
        %v4474 = vld [vmem:[#allocation12 + $0x10] sm:$0xff]
        %v4475 = vld [vmem:[#allocation12 + $0x18] sm:$0xff]
        %v4476 = vld [vmem:[#allocation12 + $0x20] sm:$0xff]
        %v4477 = vld [vmem:[#allocation12 + $0x28] sm:$0xff]
        %v4478 = vld [vmem:[#allocation12 + $0x30] sm:$0xff]
        %v4479 = vld [vmem:[#allocation12 + $0x38] sm:$0xff]
        %v4480 = vld [vmem:[#allocation12 + $0x40] sm:$0xff]
        %v4481 = vld [vmem:[#allocation12 + $0x48] sm:$0xff]
        %v4482 = vld [vmem:[#allocation12 + $0x50] sm:$0xff]
        %v4483 = vld [vmem:[#allocation12 + $0x58] sm:$0xff]
        %v4484 = vld [vmem:[#allocation12 + $0x60] sm:$0xff]
        %v4485 = vld [vmem:[#allocation12 + $0x68] sm:$0xff]
        %v4486 = vld [vmem:[#allocation12 + $0x70] sm:$0xff]
        %v4487 = vld [vmem:[#allocation12 + $0x78] sm:$0xff]
        %v4488 = vld [vmem:[#allocation12 + $0x80] sm:$0xff]
        %v4489 = vld [vmem:[#allocation12 + $0x88] sm:$0xff]
        %v4490 = vld [vmem:[#allocation12 + $0x90] sm:$0xff]
        %v4491 = vld [vmem:[#allocation12 + $0x98] sm:$0xff]
        %v4492 = vld [vmem:[#allocation12 + $0xa0] sm:$0xff]
        %v4493 = vld [vmem:[#allocation12 + $0xa8] sm:$0xff]
        %v4494 = vld [vmem:[#allocation12 + $0xb0] sm:$0xff]
        %v4495 = vld [vmem:[#allocation12 + $0xb8] sm:$0xff]
        %v4496 = vld [vmem:[#allocation12 + $0xc0] sm:$0xff]
        %v4497 = vld [vmem:[#allocation12 + $0xc8] sm:$0xff]
        %v4498 = vld [vmem:[#allocation12 + $0xd0] sm:$0xff]
        %v4499 = vld [vmem:[#allocation12 + $0xd8] sm:$0xff]
        %v4500 = vld [vmem:[#allocation12 + $0xe0] sm:$0xff]
        %v4501 = vld [vmem:[#allocation12 + $0xe8] sm:$0xff]
        %v4502 = vld [vmem:[#allocation12 + $0xf0] sm:$0xff]
        %v4503 = vld [vmem:[#allocation12 + $0xf8] sm:$0xff]
        %v4504 = vld [vmem:[#allocation12 + $0x100] sm:$0xff]
        %v4505 = vld [vmem:[#allocation12 + $0x108] sm:$0xff]
        %v4506 = vld [vmem:[#allocation12 + $0x110] sm:$0xff]
        %v4507 = vld [vmem:[#allocation12 + $0x118] sm:$0xff]
        %v4508 = vld [vmem:[#allocation12 + $0x120] sm:$0xff]
        %v4509 = vld [vmem:[#allocation12 + $0x128] sm:$0xff]
        %v4510 = vld [vmem:[#allocation12 + $0x130] sm:$0xff]
        %v4511 = vld [vmem:[#allocation12 + $0x138] sm:$0xff]
        %v4512 = vld [vmem:[#allocation12 + $0x140] sm:$0xff]
        %v4513 = vld [vmem:[#allocation12 + $0x148] sm:$0xff]
        %v4514 = vld [vmem:[#allocation12 + $0x150] sm:$0xff]
        %v4515 = vld [vmem:[#allocation12 + $0x158] sm:$0xff]
        %v4516 = vld [vmem:[#allocation12 + $0x160] sm:$0xff]
        %v4517 = vld [vmem:[#allocation12 + $0x168] sm:$0xff]
        %v4518 = vld [vmem:[#allocation12 + $0x170] sm:$0xff]
        %v4519 = vld [vmem:[#allocation12 + $0x178] sm:$0xff]
        %s4520 = scalar_lea.vmem %s24, 2
        %v4521 = vld [vmem:[%s4520] sm:$0x3]
        %v4523 = vperm.slane %v4521, 0
        %v4524 = vperm.slane %v4521, 1
        %v4528 = vsel %vm2051, %v4471, 0
        %4530 = vmatpush.msra.mxu0 %v4502
        %4531 = vmatpush.msra.mxu0 %v4500
        %4532 = vmatpush.msra.mxu0 %v4498
        %4533 = vmatpush.msra.mxu0 %v4496
        %4534 = vmatpush.msra.mxu0 %v4494
        %4535 = vmatpush.msra.mxu0 %v4492
        %4536 = vmatpush.msra.mxu0 %v4490
        %4537 = vmatpush.msra.mxu0 %v4488
        %4538 = vmatpush.msra.mxu0 %v4486
        %4539 = vmatpush.msra.mxu0 %v4484
        %4540 = vmatpush.msra.mxu0 %v4482
        %4541 = vmatpush.msra.mxu0 %v4480
        %4542 = vmatpush.msra.mxu0 %v4478
        %4543 = vmatpush.msra.mxu0 %v4476
        %4544 = vmatpush.msra.mxu0 %v4474
        %4545 = vmatpush.msra.mxu0 %v4472
        %4546 = vmatmul.f32.gmra.mxu0 %v4470
        %v4547 = vpop.f32.mrf.mxu0
        %v4548 = vadd.f32 %v4523, %v4547
        %4549 = vdwg.mxu0
        %4550 = vmatpush.msra.mxu0 0.0
        %4551 = vmatpush.msra.mxu0 0.0
        %4552 = vmatpush.msra.mxu0 0.0
        %4553 = vmatpush.msra.mxu0 0.0
        %4554 = vmatpush.msra.mxu0 0.0
        %4555 = vmatpush.msra.mxu0 0.0
        %4556 = vmatpush.msra.mxu0 0.0
        %4557 = vmatpush.msra.mxu0 0.0
        %4558 = vmatpush.msra.mxu0 %v4518
        %4559 = vmatpush.msra.mxu0 %v4516
        %4560 = vmatpush.msra.mxu0 %v4514
        %4561 = vmatpush.msra.mxu0 %v4512
        %4562 = vmatpush.msra.mxu0 %v4510
        %4563 = vmatpush.msra.mxu0 %v4508
        %4564 = vmatpush.msra.mxu0 %v4506
        %4565 = vmatpush.msra.mxu0 %v4504
        %4566 = vmatmul.f32.gmra.mxu0 %v4528
        %v4567 = vpop.f32.mrf.mxu0
        %v4568 = vadd.f32 %v4548, %v4567
        %4569 = vdwg.mxu0
        %4570 = vmatpush.msra.mxu0 %v4503
        %4571 = vmatpush.msra.mxu0 %v4501
        %4572 = vmatpush.msra.mxu0 %v4499
        %4573 = vmatpush.msra.mxu0 %v4497
        %4574 = vmatpush.msra.mxu0 %v4495
        %4575 = vmatpush.msra.mxu0 %v4493
        %4576 = vmatpush.msra.mxu0 %v4491
        %4577 = vmatpush.msra.mxu0 %v4489
        %4578 = vmatpush.msra.mxu0 %v4487
        %4579 = vmatpush.msra.mxu0 %v4485
        %4580 = vmatpush.msra.mxu0 %v4483
        %4581 = vmatpush.msra.mxu0 %v4481
        %4582 = vmatpush.msra.mxu0 %v4479
        %4583 = vmatpush.msra.mxu0 %v4477
        %4584 = vmatpush.msra.mxu0 %v4475
        %4585 = vmatpush.msra.mxu0 %v4473
        %4586 = vmatmul.f32.gmra.mxu0 %v4470
        %v4587 = vpop.f32.mrf.mxu0
        %v4588 = vadd.f32 %v4524, %v4587
        %4589 = vdwg.mxu0
        %4590 = vmatpush.msra.mxu0 0.0
        %4591 = vmatpush.msra.mxu0 0.0
        %4592 = vmatpush.msra.mxu0 0.0
        %4593 = vmatpush.msra.mxu0 0.0
        %4594 = vmatpush.msra.mxu0 0.0
        %4595 = vmatpush.msra.mxu0 0.0
        %4596 = vmatpush.msra.mxu0 0.0
        %4597 = vmatpush.msra.mxu0 0.0
        %4598 = vmatpush.msra.mxu0 %v4519
        %4599 = vmatpush.msra.mxu0 %v4517
        %4600 = vmatpush.msra.mxu0 %v4515
        %4601 = vmatpush.msra.mxu0 %v4513
        %4602 = vmatpush.msra.mxu0 %v4511
        %4603 = vmatpush.msra.mxu0 %v4509
        %4604 = vmatpush.msra.mxu0 %v4507
        %4605 = vmatpush.msra.mxu0 %v4505
        %4606 = vmatmul.f32.gmra.mxu0 %v4528
        %v4607 = vpop.f32.mrf.mxu0
        %v4608 = vadd.f32 %v4588, %v4607
        %4609 = vdwg.mxu0
        %v4610 = vtanh.pop %v4568
        %v4611 = vtanh.pop %v4608
        %v4612 = vld [vmem:[#allocation13] sm:$0xff]
        %v4613 = vld [vmem:[#allocation13 + $0x8] sm:$0xff]
        %v4614 = vld [vmem:[#allocation13 + $0x10] sm:$0xff]
        %v4615 = vld [vmem:[#allocation13 + $0x18] sm:$0xff]
        %v4616 = vld [vmem:[#allocation13 + $0x20] sm:$0xff]
        %v4617 = vld [vmem:[#allocation13 + $0x28] sm:$0xff]
        %v4618 = vld [vmem:[#allocation13 + $0x30] sm:$0xff]
        %v4619 = vld [vmem:[#allocation13 + $0x38] sm:$0xff]
        %v4620 = vld [vmem:[#allocation13 + $0x40] sm:$0xff]
        %v4621 = vld [vmem:[#allocation13 + $0x48] sm:$0xff]
        %v4622 = vld [vmem:[#allocation13 + $0x50] sm:$0xff]
        %v4623 = vld [vmem:[#allocation13 + $0x58] sm:$0xff]
        %v4624 = vld [vmem:[#allocation13 + $0x60] sm:$0xff]
        %v4625 = vld [vmem:[#allocation13 + $0x68] sm:$0xff]
        %v4626 = vld [vmem:[#allocation13 + $0x70] sm:$0xff]
        %v4627 = vld [vmem:[#allocation13 + $0x78] sm:$0xff]
        %v4628 = vld [vmem:[#allocation13 + $0x80] sm:$0xff]
        %v4629 = vld [vmem:[#allocation13 + $0x88] sm:$0xff]
        %v4630 = vld [vmem:[#allocation13 + $0x90] sm:$0xff]
        %v4631 = vld [vmem:[#allocation13 + $0x98] sm:$0xff]
        %v4632 = vld [vmem:[#allocation13 + $0xa0] sm:$0xff]
        %v4633 = vld [vmem:[#allocation13 + $0xa8] sm:$0xff]
        %v4634 = vld [vmem:[#allocation13 + $0xb0] sm:$0xff]
        %v4635 = vld [vmem:[#allocation13 + $0xb8] sm:$0xff]
        %v4636 = vld [vmem:[#allocation13 + $0xc0] sm:$0xff]
        %v4637 = vld [vmem:[#allocation13 + $0xc8] sm:$0xff]
        %v4638 = vld [vmem:[#allocation13 + $0xd0] sm:$0xff]
        %v4639 = vld [vmem:[#allocation13 + $0xd8] sm:$0xff]
        %v4640 = vld [vmem:[#allocation13 + $0xe0] sm:$0xff]
        %v4641 = vld [vmem:[#allocation13 + $0xe8] sm:$0xff]
        %v4642 = vld [vmem:[#allocation13 + $0xf0] sm:$0xff]
        %v4643 = vld [vmem:[#allocation13 + $0xf8] sm:$0xff]
        %v4644 = vld [vmem:[#allocation13 + $0x100] sm:$0xff]
        %v4645 = vld [vmem:[#allocation13 + $0x108] sm:$0xff]
        %v4646 = vld [vmem:[#allocation13 + $0x110] sm:$0xff]
        %v4647 = vld [vmem:[#allocation13 + $0x118] sm:$0xff]
        %v4648 = vld [vmem:[#allocation13 + $0x120] sm:$0xff]
        %v4649 = vld [vmem:[#allocation13 + $0x128] sm:$0xff]
        %v4650 = vld [vmem:[#allocation13 + $0x130] sm:$0xff]
        %v4651 = vld [vmem:[#allocation13 + $0x138] sm:$0xff]
        %v4652 = vld [vmem:[#allocation13 + $0x140] sm:$0xff]
        %v4653 = vld [vmem:[#allocation13 + $0x148] sm:$0xff]
        %v4654 = vld [vmem:[#allocation13 + $0x150] sm:$0xff]
        %v4655 = vld [vmem:[#allocation13 + $0x158] sm:$0xff]
        %v4656 = vld [vmem:[#allocation13 + $0x160] sm:$0xff]
        %v4657 = vld [vmem:[#allocation13 + $0x168] sm:$0xff]
        %v4658 = vld [vmem:[#allocation13 + $0x170] sm:$0xff]
        %v4659 = vld [vmem:[#allocation13 + $0x178] sm:$0xff]
        %s4660 = scalar_lea.vmem %s24, 4
        %v4661 = vld [vmem:[%s4660] sm:$0x3]
        %v4663 = vperm.slane %v4661, 0
        %v4664 = vperm.slane %v4661, 1
        %v4668 = vsel %vm2051, %v4611, 0
        %4670 = vmatpush.msra.mxu0 %v4642
        %4671 = vmatpush.msra.mxu0 %v4640
        %4672 = vmatpush.msra.mxu0 %v4638
        %4673 = vmatpush.msra.mxu0 %v4636
        %4674 = vmatpush.msra.mxu0 %v4634
        %4675 = vmatpush.msra.mxu0 %v4632
        %4676 = vmatpush.msra.mxu0 %v4630
        %4677 = vmatpush.msra.mxu0 %v4628
        %4678 = vmatpush.msra.mxu0 %v4626
        %4679 = vmatpush.msra.mxu0 %v4624
        %4680 = vmatpush.msra.mxu0 %v4622
        %4681 = vmatpush.msra.mxu0 %v4620
        %4682 = vmatpush.msra.mxu0 %v4618
        %4683 = vmatpush.msra.mxu0 %v4616
        %4684 = vmatpush.msra.mxu0 %v4614
        %4685 = vmatpush.msra.mxu0 %v4612
        %4686 = vmatmul.f32.gmra.mxu0 %v4610
        %v4687 = vpop.f32.mrf.mxu0
        %v4688 = vadd.f32 %v4663, %v4687
        %4689 = vdwg.mxu0
        %4690 = vmatpush.msra.mxu0 0.0
        %4691 = vmatpush.msra.mxu0 0.0
        %4692 = vmatpush.msra.mxu0 0.0
        %4693 = vmatpush.msra.mxu0 0.0
        %4694 = vmatpush.msra.mxu0 0.0
        %4695 = vmatpush.msra.mxu0 0.0
        %4696 = vmatpush.msra.mxu0 0.0
        %4697 = vmatpush.msra.mxu0 0.0
        %4698 = vmatpush.msra.mxu0 %v4658
        %4699 = vmatpush.msra.mxu0 %v4656
        %4700 = vmatpush.msra.mxu0 %v4654
        %4701 = vmatpush.msra.mxu0 %v4652
        %4702 = vmatpush.msra.mxu0 %v4650
        %4703 = vmatpush.msra.mxu0 %v4648
        %4704 = vmatpush.msra.mxu0 %v4646
        %4705 = vmatpush.msra.mxu0 %v4644
        %4706 = vmatmul.f32.gmra.mxu0 %v4668
        %v4707 = vpop.f32.mrf.mxu0
        %v4708 = vadd.f32 %v4688, %v4707
        %4709 = vdwg.mxu0
        %4710 = vmatpush.msra.mxu0 %v4643
        %4711 = vmatpush.msra.mxu0 %v4641
        %4712 = vmatpush.msra.mxu0 %v4639
        %4713 = vmatpush.msra.mxu0 %v4637
        %4714 = vmatpush.msra.mxu0 %v4635
        %4715 = vmatpush.msra.mxu0 %v4633
        %4716 = vmatpush.msra.mxu0 %v4631
        %4717 = vmatpush.msra.mxu0 %v4629
        %4718 = vmatpush.msra.mxu0 %v4627
        %4719 = vmatpush.msra.mxu0 %v4625
        %4720 = vmatpush.msra.mxu0 %v4623
        %4721 = vmatpush.msra.mxu0 %v4621
        %4722 = vmatpush.msra.mxu0 %v4619
        %4723 = vmatpush.msra.mxu0 %v4617
        %4724 = vmatpush.msra.mxu0 %v4615
        %4725 = vmatpush.msra.mxu0 %v4613
        %4726 = vmatmul.f32.gmra.mxu0 %v4610
        %v4727 = vpop.f32.mrf.mxu0
        %v4728 = vadd.f32 %v4664, %v4727
        %4729 = vdwg.mxu0
        %4730 = vmatpush.msra.mxu0 0.0
        %4731 = vmatpush.msra.mxu0 0.0
        %4732 = vmatpush.msra.mxu0 0.0
        %4733 = vmatpush.msra.mxu0 0.0
        %4734 = vmatpush.msra.mxu0 0.0
        %4735 = vmatpush.msra.mxu0 0.0
        %4736 = vmatpush.msra.mxu0 0.0
        %4737 = vmatpush.msra.mxu0 0.0
        %4738 = vmatpush.msra.mxu0 %v4659
        %4739 = vmatpush.msra.mxu0 %v4657
        %4740 = vmatpush.msra.mxu0 %v4655
        %4741 = vmatpush.msra.mxu0 %v4653
        %4742 = vmatpush.msra.mxu0 %v4651
        %4743 = vmatpush.msra.mxu0 %v4649
        %4744 = vmatpush.msra.mxu0 %v4647
        %4745 = vmatpush.msra.mxu0 %v4645
        %4746 = vmatmul.f32.gmra.mxu0 %v4668
        %v4747 = vpop.f32.mrf.mxu0
        %v4748 = vadd.f32 %v4728, %v4747
        %4749 = vdwg.mxu0
        %v4750 = vtanh.pop %v4708
        %v4751 = vtanh.pop %v4748
        %v4752 = vld [vmem:[#allocation15] sm:$0xff]
        %v4753 = vld [vmem:[#allocation15 + $0x8] sm:$0xff]
        %v4754 = vld [vmem:[#allocation15 + $0x10] sm:$0xff]
        %v4755 = vld [vmem:[#allocation15 + $0x18] sm:$0xff]
        %v4756 = vld [vmem:[#allocation15 + $0x20] sm:$0xff]
        %v4757 = vld [vmem:[#allocation15 + $0x28] sm:$0xff]
        %v4758 = vld [vmem:[#allocation15 + $0x30] sm:$0xff]
        %v4759 = vld [vmem:[#allocation15 + $0x38] sm:$0xff]
        %v4760 = vld [vmem:[#allocation15 + $0x40] sm:$0xff]
        %v4761 = vld [vmem:[#allocation15 + $0x48] sm:$0xff]
        %v4762 = vld [vmem:[#allocation15 + $0x50] sm:$0xff]
        %v4763 = vld [vmem:[#allocation15 + $0x58] sm:$0xff]
        %v4764 = vld [vmem:[#allocation15 + $0x60] sm:$0xff]
        %v4765 = vld [vmem:[#allocation15 + $0x68] sm:$0xff]
        %v4766 = vld [vmem:[#allocation15 + $0x70] sm:$0xff]
        %v4767 = vld [vmem:[#allocation15 + $0x78] sm:$0xff]
        %v4768 = vld [vmem:[#allocation15 + $0x80] sm:$0xff]
        %v4769 = vld [vmem:[#allocation15 + $0x88] sm:$0xff]
        %v4770 = vld [vmem:[#allocation15 + $0x90] sm:$0xff]
        %v4771 = vld [vmem:[#allocation15 + $0x98] sm:$0xff]
        %v4772 = vld [vmem:[#allocation15 + $0xa0] sm:$0xff]
        %v4773 = vld [vmem:[#allocation15 + $0xa8] sm:$0xff]
        %v4774 = vld [vmem:[#allocation15 + $0xb0] sm:$0xff]
        %v4775 = vld [vmem:[#allocation15 + $0xb8] sm:$0xff]
        %v4776 = vld [vmem:[#allocation15 + $0xc0] sm:$0xff]
        %v4777 = vld [vmem:[#allocation15 + $0xc8] sm:$0xff]
        %v4778 = vld [vmem:[#allocation15 + $0xd0] sm:$0xff]
        %v4779 = vld [vmem:[#allocation15 + $0xd8] sm:$0xff]
        %v4780 = vld [vmem:[#allocation15 + $0xe0] sm:$0xff]
        %v4781 = vld [vmem:[#allocation15 + $0xe8] sm:$0xff]
        %v4782 = vld [vmem:[#allocation15 + $0xf0] sm:$0xff]
        %v4783 = vld [vmem:[#allocation15 + $0xf8] sm:$0xff]
        %v4784 = vld [vmem:[#allocation15 + $0x100] sm:$0xff]
        %v4785 = vld [vmem:[#allocation15 + $0x108] sm:$0xff]
        %v4786 = vld [vmem:[#allocation15 + $0x110] sm:$0xff]
        %v4787 = vld [vmem:[#allocation15 + $0x118] sm:$0xff]
        %v4788 = vld [vmem:[#allocation15 + $0x120] sm:$0xff]
        %v4789 = vld [vmem:[#allocation15 + $0x128] sm:$0xff]
        %v4790 = vld [vmem:[#allocation15 + $0x130] sm:$0xff]
        %v4791 = vld [vmem:[#allocation15 + $0x138] sm:$0xff]
        %v4792 = vld [vmem:[#allocation15 + $0x140] sm:$0xff]
        %v4793 = vld [vmem:[#allocation15 + $0x148] sm:$0xff]
        %v4794 = vld [vmem:[#allocation15 + $0x150] sm:$0xff]
        %v4795 = vld [vmem:[#allocation15 + $0x158] sm:$0xff]
        %v4796 = vld [vmem:[#allocation15 + $0x160] sm:$0xff]
        %v4797 = vld [vmem:[#allocation15 + $0x168] sm:$0xff]
        %v4798 = vld [vmem:[#allocation15 + $0x170] sm:$0xff]
        %v4799 = vld [vmem:[#allocation15 + $0x178] sm:$0xff]
        %s4800 = scalar_lea.vmem %s24, 6
        %v4801 = vld [vmem:[%s4800] sm:$0x3]
        %v4803 = vperm.slane %v4801, 0
        %v4804 = vperm.slane %v4801, 1
        %v4808 = vsel %vm2051, %v4751, 0
        %4810 = vmatpush.msra.mxu0 %v4782
        %4811 = vmatpush.msra.mxu0 %v4780
        %4812 = vmatpush.msra.mxu0 %v4778
        %4813 = vmatpush.msra.mxu0 %v4776
        %4814 = vmatpush.msra.mxu0 %v4774
        %4815 = vmatpush.msra.mxu0 %v4772
        %4816 = vmatpush.msra.mxu0 %v4770
        %4817 = vmatpush.msra.mxu0 %v4768
        %4818 = vmatpush.msra.mxu0 %v4766
        %4819 = vmatpush.msra.mxu0 %v4764
        %4820 = vmatpush.msra.mxu0 %v4762
        %4821 = vmatpush.msra.mxu0 %v4760
        %4822 = vmatpush.msra.mxu0 %v4758
        %4823 = vmatpush.msra.mxu0 %v4756
        %4824 = vmatpush.msra.mxu0 %v4754
        %4825 = vmatpush.msra.mxu0 %v4752
        %4826 = vmatmul.f32.gmra.mxu0 %v4750
        %v4827 = vpop.f32.mrf.mxu0
        %v4828 = vadd.f32 %v4803, %v4827
        %4829 = vdwg.mxu0
        %4830 = vmatpush.msra.mxu0 0.0
        %4831 = vmatpush.msra.mxu0 0.0
        %4832 = vmatpush.msra.mxu0 0.0
        %4833 = vmatpush.msra.mxu0 0.0
        %4834 = vmatpush.msra.mxu0 0.0
        %4835 = vmatpush.msra.mxu0 0.0
        %4836 = vmatpush.msra.mxu0 0.0
        %4837 = vmatpush.msra.mxu0 0.0
        %4838 = vmatpush.msra.mxu0 %v4798
        %4839 = vmatpush.msra.mxu0 %v4796
        %4840 = vmatpush.msra.mxu0 %v4794
        %4841 = vmatpush.msra.mxu0 %v4792
        %4842 = vmatpush.msra.mxu0 %v4790
        %4843 = vmatpush.msra.mxu0 %v4788
        %4844 = vmatpush.msra.mxu0 %v4786
        %4845 = vmatpush.msra.mxu0 %v4784
        %4846 = vmatmul.f32.gmra.mxu0 %v4808
        %v4847 = vpop.f32.mrf.mxu0
        %v4848 = vadd.f32 %v4828, %v4847
        %4849 = vdwg.mxu0
        %4850 = vmatpush.msra.mxu0 %v4783
        %4851 = vmatpush.msra.mxu0 %v4781
        %4852 = vmatpush.msra.mxu0 %v4779
        %4853 = vmatpush.msra.mxu0 %v4777
        %4854 = vmatpush.msra.mxu0 %v4775
        %4855 = vmatpush.msra.mxu0 %v4773
        %4856 = vmatpush.msra.mxu0 %v4771
        %4857 = vmatpush.msra.mxu0 %v4769
        %4858 = vmatpush.msra.mxu0 %v4767
        %4859 = vmatpush.msra.mxu0 %v4765
        %4860 = vmatpush.msra.mxu0 %v4763
        %4861 = vmatpush.msra.mxu0 %v4761
        %4862 = vmatpush.msra.mxu0 %v4759
        %4863 = vmatpush.msra.mxu0 %v4757
        %4864 = vmatpush.msra.mxu0 %v4755
        %4865 = vmatpush.msra.mxu0 %v4753
        %4866 = vmatmul.f32.gmra.mxu0 %v4750
        %v4867 = vpop.f32.mrf.mxu0
        %v4868 = vadd.f32 %v4804, %v4867
        %4869 = vdwg.mxu0
        %4870 = vmatpush.msra.mxu0 0.0
        %4871 = vmatpush.msra.mxu0 0.0
        %4872 = vmatpush.msra.mxu0 0.0
        %4873 = vmatpush.msra.mxu0 0.0
        %4874 = vmatpush.msra.mxu0 0.0
        %4875 = vmatpush.msra.mxu0 0.0
        %4876 = vmatpush.msra.mxu0 0.0
        %4877 = vmatpush.msra.mxu0 0.0
        %4878 = vmatpush.msra.mxu0 %v4799
        %4879 = vmatpush.msra.mxu0 %v4797
        %4880 = vmatpush.msra.mxu0 %v4795
        %4881 = vmatpush.msra.mxu0 %v4793
        %4882 = vmatpush.msra.mxu0 %v4791
        %4883 = vmatpush.msra.mxu0 %v4789
        %4884 = vmatpush.msra.mxu0 %v4787
        %4885 = vmatpush.msra.mxu0 %v4785
        %4886 = vmatmul.f32.gmra.mxu0 %v4808
        %v4887 = vpop.f32.mrf.mxu0
        %v4888 = vadd.f32 %v4868, %v4887
        %4889 = vdwg.mxu0
        %v4890 = vtanh.pop %v4848
        %v4891 = vtanh.pop %v4888
        %v4892 = vld [vmem:[#allocation16] sm:$0xff]
        %v4893 = vld [vmem:[#allocation16 + $0x8] sm:$0xff]
        %v4894 = vld [vmem:[#allocation16 + $0x10] sm:$0xff]
        %v4895 = vld [vmem:[#allocation16 + $0x18] sm:$0xff]
        %v4896 = vld [vmem:[#allocation16 + $0x20] sm:$0xff]
        %v4897 = vld [vmem:[#allocation16 + $0x28] sm:$0xff]
        %v4898 = vld [vmem:[#allocation16 + $0x30] sm:$0xff]
        %v4899 = vld [vmem:[#allocation16 + $0x38] sm:$0xff]
        %v4900 = vld [vmem:[#allocation16 + $0x40] sm:$0xff]
        %v4901 = vld [vmem:[#allocation16 + $0x48] sm:$0xff]
        %v4902 = vld [vmem:[#allocation16 + $0x50] sm:$0xff]
        %v4903 = vld [vmem:[#allocation16 + $0x58] sm:$0xff]
        %v4904 = vld [vmem:[#allocation16 + $0x60] sm:$0xff]
        %v4905 = vld [vmem:[#allocation16 + $0x68] sm:$0xff]
        %v4906 = vld [vmem:[#allocation16 + $0x70] sm:$0xff]
        %v4907 = vld [vmem:[#allocation16 + $0x78] sm:$0xff]
        %v4908 = vld [vmem:[#allocation16 + $0x80] sm:$0xff]
        %v4909 = vld [vmem:[#allocation16 + $0x88] sm:$0xff]
        %v4910 = vld [vmem:[#allocation16 + $0x90] sm:$0xff]
        %v4911 = vld [vmem:[#allocation16 + $0x98] sm:$0xff]
        %v4912 = vld [vmem:[#allocation16 + $0xa0] sm:$0xff]
        %v4913 = vld [vmem:[#allocation16 + $0xa8] sm:$0xff]
        %v4914 = vld [vmem:[#allocation16 + $0xb0] sm:$0xff]
        %v4915 = vld [vmem:[#allocation16 + $0xb8] sm:$0xff]
        %s4916 = scalar_lea.vmem %s24, 8
        %v4917 = vld [vmem:[%s4916] sm:$0x3]
        %v4919 = vsel %vm2051, %v4891, 0
        %4921 = vmatpush.msra.mxu0 %v4907
        %4922 = vmatpush.msra.mxu0 %v4906
        %4923 = vmatpush.msra.mxu0 %v4905
        %4924 = vmatpush.msra.mxu0 %v4904
        %4925 = vmatpush.msra.mxu0 %v4903
        %4926 = vmatpush.msra.mxu0 %v4902
        %4927 = vmatpush.msra.mxu0 %v4901
        %4928 = vmatpush.msra.mxu0 %v4900
        %4929 = vmatpush.msra.mxu0 %v4899
        %4930 = vmatpush.msra.mxu0 %v4898
        %4931 = vmatpush.msra.mxu0 %v4897
        %4932 = vmatpush.msra.mxu0 %v4896
        %4933 = vmatpush.msra.mxu0 %v4895
        %4934 = vmatpush.msra.mxu0 %v4894
        %4935 = vmatpush.msra.mxu0 %v4893
        %4936 = vmatpush.msra.mxu0 %v4892
        %4937 = vmatmul.f32.gmra.mxu0 %v4890
        %v4938 = vpop.f32.mrf.mxu0
        %v4939 = vadd.f32 %v4917, %v4938
        %4940 = vdwg.mxu0
        %4941 = vmatpush.msra.mxu0 0.0
        %4942 = vmatpush.msra.mxu0 0.0
        %4943 = vmatpush.msra.mxu0 0.0
        %4944 = vmatpush.msra.mxu0 0.0
        %4945 = vmatpush.msra.mxu0 0.0
        %4946 = vmatpush.msra.mxu0 0.0
        %4947 = vmatpush.msra.mxu0 0.0
        %4948 = vmatpush.msra.mxu0 0.0
        %4949 = vmatpush.msra.mxu0 %v4915
        %4950 = vmatpush.msra.mxu0 %v4914
        %4951 = vmatpush.msra.mxu0 %v4913
        %4952 = vmatpush.msra.mxu0 %v4912
        %4953 = vmatpush.msra.mxu0 %v4911
        %4954 = vmatpush.msra.mxu0 %v4910
        %4955 = vmatpush.msra.mxu0 %v4909
        %4956 = vmatpush.msra.mxu0 %v4908
        %4957 = vmatmul.f32.gmra.mxu0 %v4919
        %v4958 = vpop.f32.mrf.mxu0
        %v4959 = vadd.f32 %v4939, %v4958
        %4960 = vdwg.mxu0
        %v4961 = vadd.f32 %v4396, %v4959
        %vm4962 = vcmask 778240
        %4963 = vst.msk [vmem:[%s937] sm:$0x1] %vm4962, %v4961
        %p4964 = scmp.lt.s32.totalorder %s42, 1
        %s4965 = scalar_select %p4964, %s42, 1
        %s4966 = scalar_lea.vmem %s25, %s4965
        // Predicated region
        $region161: #{tacotron2_forward.1} parent=119 // pred_check
          %p4967 = pneg %p595
        $region162: #{tacotron2_forward.1} parent=119 // pred_check_branch
          %4969 = sbr.rel (%p4967) target = $region164
        $region163: #{tacotron2_forward.1} parent=119 // pred_region
          _
        $region164: #{tacotron2_forward.1} parent=119 // pred_fallthru
          _
      $region120: #{tacotron2_forward.1} parent=5 // pred_fallthru
        _
      %p4970 = scmp.le.s32.totalorder 2, %s37
      // Predicated region
      $region165: #{tacotron2_forward.1} parent=5 // pred_check
        %p4971 = pneg %p4970
      $region166: #{tacotron2_forward.1} parent=5 // pred_check_branch
        %4973 = sbr.rel (%p4971) target = $region168
      $region167: #{tacotron2_forward.1} parent=5 // pred_region
        %s4974 = ssub.s32 %s37, 2
        // Predicated region
        $region169: #{tacotron2_forward.1} parent=167 // pred_check
          %p4975 = pneg %p601
        $region170: #{tacotron2_forward.1} parent=167 // pred_check_branch
          %4977 = sbr.rel (%p4975) target = $region172
        $region171: #{tacotron2_forward.1} parent=167 // pred_region
          %p4978 = scmp.lt.s32.totalorder %s43, 1
          %s4979 = scalar_select %p4978, %s43, 1
          %s4980 = scalar_lea.vmem %s25, %s4979
        $region172: #{tacotron2_forward.1} parent=167 // pred_fallthru
          _
      $region168: #{tacotron2_forward.1} parent=5 // pred_fallthru
        _
    $region6: #{tacotron2_forward.1} parent=1 // loop_footer
      %s41 = sadd.s32 1, %s37
    $region7: #{tacotron2_forward.1} parent=1 // loop_footer_branch
      %36 = sbr.rel target = $region3
    $region8: #{tacotron2_forward.1} parent=1 // loop_exit
      _
    %4981 = vsyncpa [#allocation3], 1
    %s4982 = scalar_lea.sflag [#allocation3], 1
    %4983 = vsyncpa %s4982, 1
    %4984 = vsyncpa [#allocation5], 1
    %4985 = vsyncpa [#allocation8], 1
    %4986 = vsyncpa [#allocation11], 1
    %4987 = vsyncpa [#allocation14], 1
    %4988 = vsyncpa [#allocation17], 1

</llo_original>
